<compile_context>
chip_gen: v6e
topology: v6e:2x2x1
jax: 0.10.0
libtpu: 0.0.40
codegen_flags: <defaults>
</compile_context>

<pallas_src>
import functools

import jax
import jax.numpy as jnp
from jax.experimental import pallas as pl
from jax.experimental.pallas import tpu as pltpu

MXU_DTYPE = jnp.bfloat16               # MXU operand dtype (f32 accumulation)
_VMEM_LIMIT = 32 * 1024 * 1024         # explicit scoped-VMEM budget (safe on v5e/v6e/v7x)


# ----------------------------------------------------------------------------
# Kernel 1: 4x4 / stride-2 / pad-1 conv + bias + ReLU  (conv_stack_1, conv_stack_2)
# ----------------------------------------------------------------------------
def _conv4x4_s2_relu_kernel(xp_ref, w_ref, bias_ref, o_ref, *, wpp):
    """Per-image 4x4/s2/p1 conv + bias + ReLU as 16 accumulated MXU matmuls.

    xp_ref:   (1, 4, Pp+ext, Cin)  MXU_DTYPE.  The 4 stride-parity slabs of the
              zero-padded input, each flattened row-major over its (Hpp, Wpp)
              grid and zero-extended by `ext` rows so every tap offset is a
              plain contiguous 2-D slice (no strided access, no reshape).
    w_ref:    (16, Cin, Cout) MXU_DTYPE, tap index = i*4 + j (PyTorch (i, j)).
    bias_ref: (1, Cout) f32.
    o_ref:    (1, Pp, Cout).  Rows with y == Ho or x == Wo are don't-care and
              are sliced away by the wrapper.
    """
    pp = o_ref.shape[1]
    cout = w_ref.shape[2]
    acc = jnp.zeros((pp, cout), jnp.float32)
    # tap (i, j): i = pi + 2a, j = pj + 2b  ->  parity slab (pi, pj), row offset a*Wpp + b
    for p, (pi, pj) in enumerate(((0, 0), (0, 1), (1, 0), (1, 1))):
        for a in (0, 1):
            for b in (0, 1):
                tap = (pi + 2 * a) * 4 + (pj + 2 * b)
                off = a * wpp + b
                slab = xp_ref[0, p, off:off + pp, :]            # (Pp, Cin)
                acc = acc + jnp.dot(slab, w_ref[tap],
                                    preferred_element_type=jnp.float32)
    acc = jnp.maximum(acc + bias_ref[...], 0.0)
    o_ref[0] = acc.astype(o_ref.dtype)


def _conv4x4_s2_relu(x, w_taps, bias):
    """x: (N, H, W, Cin) NHWC (H, W even) -> (N, H//2, W//2, Cout), ReLU'd."""
    N, H, W, Cin = x.shape
    assert H % 2 == 0 and W % 2 == 0
    Cout = w_taps.shape[-1]
    Ho, Wo = H // 2, W // 2
    Hpp, Wpp = Ho + 1, Wo + 1
    Pp = Hpp * Wpp
    ext = Wpp + 1

    xp = jnp.pad(x, ((0, 0), (1, 1), (1, 1), (0, 0)))
    # Parity decomposition of the stride-2 conv: 4 slabs totalling ~1x the
    # padded input (no k*k im2col duplication in HBM).
    slabs = jnp.stack([xp[:, pi::2, pj::2, :] for pi in (0, 1) for pj in (0, 1)],
                      axis=1)                                    # (N, 4, Hpp, Wpp, Cin)
    slabs = slabs.reshape(N, 4, Pp, Cin)
    slabs = jnp.pad(slabs, ((0, 0), (0, 0), (0, ext), (0, 0)))   # zero row extension

    out = pl.pallas_call(
        functools.partial(_conv4x4_s2_relu_kernel, wpp=Wpp),
        out_shape=jax.ShapeDtypeStruct((N, Pp, Cout), x.dtype),
        grid=(N,),
        in_specs=[
            pl.BlockSpec((1, 4, Pp + ext, Cin), lambda n: (n, 0, 0, 0)),
            pl.BlockSpec((16, Cin, Cout), lambda n: (0, 0, 0)),   # VMEM-resident
            pl.BlockSpec((1, Cout), lambda n: (0, 0)),
        ],
        out_specs=pl.BlockSpec((1, Pp, Cout), lambda n: (n, 0, 0)),
        compiler_params=pltpu.CompilerParams(
            dimension_semantics=("parallel",),
            vmem_limit_bytes=_VMEM_LIMIT),
    )(slabs, w_taps, bias)
    # Drop the garbage y == Ho / x == Wo rows.
    return out.reshape(N, Hpp, Wpp, Cout)[:, :Ho, :Wo, :]


# ----------------------------------------------------------------------------
# Kernel 2: conv_stack_3 (3x3/s1/p1 + bias) + full ResidualStack + final ReLU
# ----------------------------------------------------------------------------
def _conv3_resstack_kernel(x_ref, mask_ref, w3_ref, b3_ref, rw1_ref, rw2_ref,
                           o_ref, abuf_ref, *, wp, n_res_layers):
    """Fused conv_stack_3 + n_res_layers residual layers + final ReLU (per image).

    x_ref:    (1, P, C)  MXU_DTYPE. conv_stack_2 output, zero-padded to the
              (Hp, Wp) grid and flattened row-major (P = Hp*Wp).
    mask_ref: (P, 1) f32, 1.0 on interior grid cells, 0.0 on padding cells.
    w3_ref:   (9, C, C) MXU_DTYPE,  b3_ref: (1, C) f32.
    rw1_ref:  (9, C, R) MXU_DTYPE,  rw2_ref: (R, C) MXU_DTYPE (shared weights).
    o_ref:    (1, P, C) f32. Padding rows are don't-care (wrapper keeps interior).
    abuf_ref: (P + 2*(wp+1), C) MXU_DTYPE VMEM scratch -- padded activation,
              extended by wp+1 zero rows so 3x3 taps are contiguous 2-D slices.
    """
    P = x_ref.shape[1]
    ext = wp + 1

    def conv3x3(w_ref):
        acc = jnp.zeros((P, w_ref.shape[2]), jnp.float32)
        for dy in range(3):
            for dx in range(3):
                off = ext + (dy - 1) * wp + (dx - 1)
                slab = abuf_ref[off:off + P, :]                   # (P, C)
                acc = acc + jnp.dot(slab, w_ref[dy * 3 + dx],
                                    preferred_element_type=jnp.float32)
        return acc

    abuf_ref[...] = jnp.zeros(abuf_ref.shape, abuf_ref.dtype)     # zero borders once
    abuf_ref[ext:ext + P, :] = x_ref[0]                           # already >= 0, zero-padded

    # conv_stack_3: 3x3, stride 1, pad 1, with bias, NO activation.
    h = conv3x3(w3_ref) + b3_ref[...]                             # (P, C) f32, regs-resident

    # ResidualStack: h += conv1x1(relu(conv3x3(relu(h)))), shared weights.
    # n_res_layers is a static compile-time constant -> fully unrolled in-kernel.
    mask = mask_ref[...]
    for _ in range(n_res_layers):
        abuf_ref[ext:ext + P, :] = (jnp.maximum(h, 0.0) * mask).astype(abuf_ref.dtype)
        u = jnp.maximum(conv3x3(rw1_ref), 0.0)                    # (P, R) f32
        h = h + jnp.dot(u.astype(rw2_ref.dtype), rw2_ref[...],
                        preferred_element_type=jnp.float32)

    # Final F.relu of the ResidualStack, fused here (no separate relu kernel).
    o_ref[0] = jnp.maximum(h, 0.0).astype(o_ref.dtype)


def _conv3_resstack(x, w3_taps, b3, rw1_taps, rw2, n_res_layers):
    """x: (N, Ho, Wo, C) -> (N, Ho, Wo, C) f32 (conv3 + residual stack + relu)."""
    N, Ho, Wo, C = x.shape
    R = rw1_taps.shape[-1]
    Hp, Wp = Ho + 2, Wo + 2
    P = Hp * Wp
    ext = Wp + 1

    xpad = jnp.pad(x, ((0, 0), (1, 1), (1, 1), (0, 0))).reshape(N, P, C)
    yy = jnp.arange(Hp).reshape(Hp, 1)
    xx = jnp.arange(Wp).reshape(1, Wp)
    interior = (yy >= 1) & (yy <= Ho) & (xx >= 1) & (xx <= Wo)
    mask = interior.astype(jnp.float32).reshape(P, 1)             # constant-folded under jit

    out = pl.pallas_call(
        functools.partial(_conv3_resstack_kernel, wp=Wp, n_res_layers=n_res_layers),
        out_shape=jax.ShapeDtypeStruct((N, P, C), jnp.float32),
        grid=(N,),
        in_specs=[
            pl.BlockSpec((1, P, C), lambda n: (n, 0, 0)),
            pl.BlockSpec((P, 1), lambda n: (0, 0)),
            pl.BlockSpec((9, C, C), lambda n: (0, 0, 0)),         # weights: constant
            pl.BlockSpec((1, C), lambda n: (0, 0)),               # index_map ->
            pl.BlockSpec((9, C, R), lambda n: (0, 0, 0)),         # DMA'd once,
            pl.BlockSpec((R, C), lambda n: (0, 0)),               # VMEM-resident
        ],
        out_specs=pl.BlockSpec((1, P, C), lambda n: (n, 0, 0)),
        scratch_shapes=[pltpu.VMEM((P + 2 * ext, C), x.dtype)],
        compiler_params=pltpu.CompilerParams(
            dimension_semantics=("parallel",),
            vmem_limit_bytes=_VMEM_LIMIT),
    )(xpad, mask, w3_taps, b3, rw1_taps, rw2)
    # Keep interior grid cells only.
    return out.reshape(N, Hp, Wp, C)[:, 1:1 + Ho, 1:1 + Wo, :]


# ----------------------------------------------------------------------------
# Parameters: deterministic synthetic init + hoisted one-time layout conversion
# ----------------------------------------------------------------------------
def init_params(key, in_dim, h_dim, res_h_dim):
    ks = jax.random.split(key, 8)

    def mk(k, shape, fan_in):
        return jax.random.normal(k, shape, jnp.float32) * (1.0 / jnp.sqrt(fan_in))

    p = {}
    p["w1"] = mk(ks[0], (h_dim // 2, in_dim, 4, 4), in_dim * 16)
    p["b1"] = mk(ks[1], (h_dim // 2,), in_dim * 16)
    p["w2"] = mk(ks[2], (h_dim, h_dim // 2, 4, 4), (h_dim // 2) * 16)
    p["b2"] = mk(ks[3], (h_dim,), (h_dim // 2) * 16)
    p["w3"] = mk(ks[4], (h_dim, h_dim, 3, 3), h_dim * 9)
    p["b3"] = mk(ks[5], (h_dim,), h_dim * 9)
    # ResidualStack shares ONE ResidualLayer's weights across all layers (bias=False).
    p["rw1"] = mk(ks[6], (res_h_dim, h_dim, 3, 3), h_dim * 9)
    p["rw2"] = mk(ks[7], (h_dim, res_h_dim, 1, 1), res_h_dim)
    return p


def prepare_params(p):
    """One-time weight prep (hoisted out of the forward): tap-major, MXU dtype."""

    def taps(w):  # PyTorch (O, Cin, kh, kw) -> (kh*kw, Cin, O), tap = i*kw + j
        O, Cin, kh, kw = w.shape
        return jnp.transpose(w, (2, 3, 1, 0)).reshape(kh * kw, Cin, O).astype(MXU_DTYPE)

    return {
        "w1": taps(p["w1"]), "b1": p["b1"].reshape(1, -1).astype(jnp.float32),
        "w2": taps(p["w2"]), "b2": p["b2"].reshape(1, -1).astype(jnp.float32),
        "w3": taps(p["w3"]), "b3": p["b3"].reshape(1, -1).astype(jnp.float32),
        "rw1": taps(p["rw1"]),
        "rw2": p["rw2"].reshape(p["rw2"].shape[0], p["rw2"].shape[1]).T.astype(MXU_DTYPE),
    }


# ----------------------------------------------------------------------------
# Encoder forward
# ----------------------------------------------------------------------------
@functools.partial(jax.jit, static_argnums=(2,))
def encoder_forward(x_nchw, prep, n_res_layers):
    x = jnp.transpose(x_nchw, (0, 2, 3, 1)).astype(MXU_DTYPE)      # NCHW -> NHWC
    a = _conv4x4_s2_relu(x, prep["w1"], prep["b1"])                # conv_stack_1 + ReLU
    b = _conv4x4_s2_relu(a, prep["w2"], prep["b2"])                # conv_stack_2 + ReLU
    d = _conv3_resstack(b, prep["w3"], prep["b3"],                 # conv_stack_3 +
                        prep["rw1"], prep["rw2"], n_res_layers)    # ResidualStack + ReLU
    return jnp.transpose(d, (0, 3, 1, 2))                          # NHWC -> NCHW, f32


if __name__ == "__main__":
    in_dim, h_dim, n_res_layers, res_h_dim = 3, 32, 2, 8
    key = jax.random.PRNGKey(0)
    kx, kp = jax.random.split(key)
    x = jax.random.normal(kx, (2, in_dim, 16, 16), jnp.float32)    # NCHW like PyTorch
    params = init_params(kp, in_dim, h_dim, res_h_dim)
    prep = prepare_params(params)                                  # hoisted, done once

    out = encoder_forward(x, prep, n_res_layers)
    out = jax.block_until_ready(out)
    assert out.shape == (2, h_dim, 4, 4), out.shape
    assert out.dtype == jnp.float32
    print("KERNEL_OK")
</pallas_src>

<mosaic_0001>
module attributes {stable_mosaic.version = 11 : i64} {
  func.func @_conv4x4_s2_relu_kernel(%arg0: i32, %arg1: memref<1x4x91x3xbf16, #tpu.memory_space<vmem>>, %arg2: memref<16x3x16xbf16, #tpu.memory_space<vmem>>, %arg3: memref<1x16xf32, #tpu.memory_space<vmem>>, %arg4: memref<1x81x16xbf16, #tpu.memory_space<vmem>>) attributes {dimension_semantics = [#tpu.dimension_semantics<parallel>], iteration_bounds = array<i64: 2>, scalar_prefetch = 0 : i64, scratch_operands = 0 : i64, tpu.core_type = #tpu.core_type<tc>, window_params = [{transform_indices = @transform_0, window_bounds = array<i64: 1, 4, 91, 3>}, {pipeline_mode = #tpu.pipeline_mode<synchronous>, transform_indices = @transform_1, window_bounds = array<i64: 16, 3, 16>}, {pipeline_mode = #tpu.pipeline_mode<synchronous>, transform_indices = @transform_2, window_bounds = array<i64: 1, 16>}, {transform_indices = @transform_3, window_bounds = array<i64: 1, 81, 16>}]} {
    %cst = arith.constant 0.000000e+00 : f32
    %0 = vector.broadcast %cst : f32 to vector<81x16xf32>
    %c0 = arith.constant 0 : index
    %c0_0 = arith.constant 0 : index
    %c0_1 = arith.constant 0 : index
    %c0_2 = arith.constant 0 : index
    %1 = vector.load %arg1[%c0, %c0_0, %c0_1, %c0_2] : memref<1x4x91x3xbf16, #tpu.memory_space<vmem>>, vector<1x1x81x3xbf16>
    %2 = vector.shape_cast %1 : vector<1x1x81x3xbf16> to vector<81x3xbf16>
    %c0_3 = arith.constant 0 : index
    %c0_4 = arith.constant 0 : index
    %c0_5 = arith.constant 0 : index
    %3 = vector.load %arg2[%c0_3, %c0_4, %c0_5] : memref<16x3x16xbf16, #tpu.memory_space<vmem>>, vector<1x3x16xbf16>
    %4 = vector.shape_cast %3 : vector<1x3x16xbf16> to vector<3x16xbf16>
    %cst_6 = arith.constant dense<0.000000e+00> : vector<81x16xf32>
    %5 = tpu.matmul %2, %4, %cst_6 {dimension_numbers = #tpu.dot_dimension_numbers<[1], [0], [0], [1], [0, 0, 1, 1], [], []>} : vector<81x3xbf16>, vector<3x16xbf16>, vector<81x16xf32> -> vector<81x16xf32>
    %6 = arith.addf %0, %5 : vector<81x16xf32>
    %c0_7 = arith.constant 0 : index
    %c0_8 = arith.constant 0 : index
    %c1 = arith.constant 1 : index
    %c0_9 = arith.constant 0 : index
    %7 = vector.load %arg1[%c0_7, %c0_8, %c1, %c0_9] : memref<1x4x91x3xbf16, #tpu.memory_space<vmem>>, vector<1x1x81x3xbf16>
    %8 = vector.shape_cast %7 : vector<1x1x81x3xbf16> to vector<81x3xbf16>
    %c2 = arith.constant 2 : index
    %c0_10 = arith.constant 0 : index
    %c0_11 = arith.constant 0 : index
    %9 = vector.load %arg2[%c2, %c0_10, %c0_11] : memref<16x3x16xbf16, #tpu.memory_space<vmem>>, vector<1x3x16xbf16>
    %10 = vector.shape_cast %9 : vector<1x3x16xbf16> to vector<3x16xbf16>
    %cst_12 = arith.constant dense<0.000000e+00> : vector<81x16xf32>
    %11 = tpu.matmul %8, %10, %cst_12 {dimension_numbers = #tpu.dot_dimension_numbers<[1], [0], [0], [1], [0, 0, 1, 1], [], []>} : vector<81x3xbf16>, vector<3x16xbf16>, vector<81x16xf32> -> vector<81x16xf32>
    %12 = arith.addf %6, %11 : vector<81x16xf32>
    %c0_13 = arith.constant 0 : index
    %c0_14 = arith.constant 0 : index
    %c9 = arith.constant 9 : index
    %c0_15 = arith.constant 0 : index
    %13 = vector.load %arg1[%c0_13, %c0_14, %c9, %c0_15] : memref<1x4x91x3xbf16, #tpu.memory_space<vmem>>, vector<1x1x81x3xbf16>
    %14 = vector.shape_cast %13 : vector<1x1x81x3xbf16> to vector<81x3xbf16>
    %c8 = arith.constant 8 : index
    %c0_16 = arith.constant 0 : index
    %c0_17 = arith.constant 0 : index
    %15 = vector.load %arg2[%c8, %c0_16, %c0_17] : memref<16x3x16xbf16, #tpu.memory_space<vmem>>, vector<1x3x16xbf16>
    %16 = vector.shape_cast %15 : vector<1x3x16xbf16> to vector<3x16xbf16>
    %cst_18 = arith.constant dense<0.000000e+00> : vector<81x16xf32>
    %17 = tpu.matmul %14, %16, %cst_18 {dimension_numbers = #tpu.dot_dimension_numbers<[1], [0], [0], [1], [0, 0, 1, 1], [], []>} : vector<81x3xbf16>, vector<3x16xbf16>, vector<81x16xf32> -> vector<81x16xf32>
    %18 = arith.addf %12, %17 : vector<81x16xf32>
    %c0_19 = arith.constant 0 : index
    %c0_20 = arith.constant 0 : index
    %c10 = arith.constant 10 : index
    %c0_21 = arith.constant 0 : index
    %19 = vector.load %arg1[%c0_19, %c0_20, %c10, %c0_21] : memref<1x4x91x3xbf16, #tpu.memory_space<vmem>>, vector<1x1x81x3xbf16>
    %20 = vector.shape_cast %19 : vector<1x1x81x3xbf16> to vector<81x3xbf16>
    %c10_22 = arith.constant 10 : index
    %c0_23 = arith.constant 0 : index
    %c0_24 = arith.constant 0 : index
    %21 = vector.load %arg2[%c10_22, %c0_23, %c0_24] : memref<16x3x16xbf16, #tpu.memory_space<vmem>>, vector<1x3x16xbf16>
    %22 = vector.shape_cast %21 : vector<1x3x16xbf16> to vector<3x16xbf16>
    %cst_25 = arith.constant dense<0.000000e+00> : vector<81x16xf32>
    %23 = tpu.matmul %20, %22, %cst_25 {dimension_numbers = #tpu.dot_dimension_numbers<[1], [0], [0], [1], [0, 0, 1, 1], [], []>} : vector<81x3xbf16>, vector<3x16xbf16>, vector<81x16xf32> -> vector<81x16xf32>
    %24 = arith.addf %18, %23 : vector<81x16xf32>
    %c0_26 = arith.constant 0 : index
    %c1_27 = arith.constant 1 : index
    %c0_28 = arith.constant 0 : index
    %c0_29 = arith.constant 0 : index
    %25 = vector.load %arg1[%c0_26, %c1_27, %c0_28, %c0_29] : memref<1x4x91x3xbf16, #tpu.memory_space<vmem>>, vector<1x1x81x3xbf16>
    %26 = vector.shape_cast %25 : vector<1x1x81x3xbf16> to vector<81x3xbf16>
    %c1_30 = arith.constant 1 : index
    %c0_31 = arith.constant 0 : index
    %c0_32 = arith.constant 0 : index
    %27 = vector.load %arg2[%c1_30, %c0_31, %c0_32] : memref<16x3x16xbf16, #tpu.memory_space<vmem>>, vector<1x3x16xbf16>
    %28 = vector.shape_cast %27 : vector<1x3x16xbf16> to vector<3x16xbf16>
    %cst_33 = arith.constant dense<0.000000e+00> : vector<81x16xf32>
    %29 = tpu.matmul %26, %28, %cst_33 {dimension_numbers = #tpu.dot_dimension_numbers<[1], [0], [0], [1], [0, 0, 1, 1], [], []>} : vector<81x3xbf16>, vector<3x16xbf16>, vector<81x16xf32> -> vector<81x16xf32>
    %30 = arith.addf %24, %29 : vector<81x16xf32>
    %c0_34 = arith.constant 0 : index
    %c1_35 = arith.constant 1 : index
    %c1_36 = arith.constant 1 : index
    %c0_37 = arith.constant 0 : index
    %31 = vector.load %arg1[%c0_34, %c1_35, %c1_36, %c0_37] : memref<1x4x91x3xbf16, #tpu.memory_space<vmem>>, vector<1x1x81x3xbf16>
    %32 = vector.shape_cast %31 : vector<1x1x81x3xbf16> to vector<81x3xbf16>
    %c3 = arith.constant 3 : index
    %c0_38 = arith.constant 0 : index
    %c0_39 = arith.constant 0 : index
    %33 = vector.load %arg2[%c3, %c0_38, %c0_39] : memref<16x3x16xbf16, #tpu.memory_space<vmem>>, vector<1x3x16xbf16>
    %34 = vector.shape_cast %33 : vector<1x3x16xbf16> to vector<3x16xbf16>
    %cst_40 = arith.constant dense<0.000000e+00> : vector<81x16xf32>
    %35 = tpu.matmul %32, %34, %cst_40 {dimension_numbers = #tpu.dot_dimension_numbers<[1], [0], [0], [1], [0, 0, 1, 1], [], []>} : vector<81x3xbf16>, vector<3x16xbf16>, vector<81x16xf32> -> vector<81x16xf32>
    %36 = arith.addf %30, %35 : vector<81x16xf32>
    %c0_41 = arith.constant 0 : index
    %c1_42 = arith.constant 1 : index
    %c9_43 = arith.constant 9 : index
    %c0_44 = arith.constant 0 : index
    %37 = vector.load %arg1[%c0_41, %c1_42, %c9_43, %c0_44] : memref<1x4x91x3xbf16, #tpu.memory_space<vmem>>, vector<1x1x81x3xbf16>
    %38 = vector.shape_cast %37 : vector<1x1x81x3xbf16> to vector<81x3xbf16>
    %c9_45 = arith.constant 9 : index
    %c0_46 = arith.constant 0 : index
    %c0_47 = arith.constant 0 : index
    %39 = vector.load %arg2[%c9_45, %c0_46, %c0_47] : memref<16x3x16xbf16, #tpu.memory_space<vmem>>, vector<1x3x16xbf16>
    %40 = vector.shape_cast %39 : vector<1x3x16xbf16> to vector<3x16xbf16>
    %cst_48 = arith.constant dense<0.000000e+00> : vector<81x16xf32>
    %41 = tpu.matmul %38, %40, %cst_48 {dimension_numbers = #tpu.dot_dimension_numbers<[1], [0], [0], [1], [0, 0, 1, 1], [], []>} : vector<81x3xbf16>, vector<3x16xbf16>, vector<81x16xf32> -> vector<81x16xf32>
    %42 = arith.addf %36, %41 : vector<81x16xf32>
    %c0_49 = arith.constant 0 : index
    %c1_50 = arith.constant 1 : index
    %c10_51 = arith.constant 10 : index
    %c0_52 = arith.constant 0 : index
    %43 = vector.load %arg1[%c0_49, %c1_50, %c10_51, %c0_52] : memref<1x4x91x3xbf16, #tpu.memory_space<vmem>>, vector<1x1x81x3xbf16>
    %44 = vector.shape_cast %43 : vector<1x1x81x3xbf16> to vector<81x3xbf16>
    %c11 = arith.constant 11 : index
    %c0_53 = arith.constant 0 : index
    %c0_54 = arith.constant 0 : index
    %45 = vector.load %arg2[%c11, %c0_53, %c0_54] : memref<16x3x16xbf16, #tpu.memory_space<vmem>>, vector<1x3x16xbf16>
    %46 = vector.shape_cast %45 : vector<1x3x16xbf16> to vector<3x16xbf16>
    %cst_55 = arith.constant dense<0.000000e+00> : vector<81x16xf32>
    %47 = tpu.matmul %44, %46, %cst_55 {dimension_numbers = #tpu.dot_dimension_numbers<[1], [0], [0], [1], [0, 0, 1, 1], [], []>} : vector<81x3xbf16>, vector<3x16xbf16>, vector<81x16xf32> -> vector<81x16xf32>
    %48 = arith.addf %42, %47 : vector<81x16xf32>
    %c0_56 = arith.constant 0 : index
    %c2_57 = arith.constant 2 : index
    %c0_58 = arith.constant 0 : index
    %c0_59 = arith.constant 0 : index
    %49 = vector.load %arg1[%c0_56, %c2_57, %c0_58, %c0_59] : memref<1x4x91x3xbf16, #tpu.memory_space<vmem>>, vector<1x1x81x3xbf16>
    %50 = vector.shape_cast %49 : vector<1x1x81x3xbf16> to vector<81x3xbf16>
    %c4 = arith.constant 4 : index
    %c0_60 = arith.constant 0 : index
    %c0_61 = arith.constant 0 : index
    %51 = vector.load %arg2[%c4, %c0_60, %c0_61] : memref<16x3x16xbf16, #tpu.memory_space<vmem>>, vector<1x3x16xbf16>
    %52 = vector.shape_cast %51 : vector<1x3x16xbf16> to vector<3x16xbf16>
    %cst_62 = arith.constant dense<0.000000e+00> : vector<81x16xf32>
    %53 = tpu.matmul %50, %52, %cst_62 {dimension_numbers = #tpu.dot_dimension_numbers<[1], [0], [0], [1], [0, 0, 1, 1], [], []>} : vector<81x3xbf16>, vector<3x16xbf16>, vector<81x16xf32> -> vector<81x16xf32>
    %54 = arith.addf %48, %53 : vector<81x16xf32>
    %c0_63 = arith.constant 0 : index
    %c2_64 = arith.constant 2 : index
    %c1_65 = arith.constant 1 : index
    %c0_66 = arith.constant 0 : index
    %55 = vector.load %arg1[%c0_63, %c2_64, %c1_65, %c0_66] : memref<1x4x91x3xbf16, #tpu.memory_space<vmem>>, vector<1x1x81x3xbf16>
    %56 = vector.shape_cast %55 : vector<1x1x81x3xbf16> to vector<81x3xbf16>
    %c6 = arith.constant 6 : index
    %c0_67 = arith.constant 0 : index
    %c0_68 = arith.constant 0 : index
    %57 = vector.load %arg2[%c6, %c0_67, %c0_68] : memref<16x3x16xbf16, #tpu.memory_space<vmem>>, vector<1x3x16xbf16>
    %58 = vector.shape_cast %57 : vector<1x3x16xbf16> to vector<3x16xbf16>
    %cst_69 = arith.constant dense<0.000000e+00> : vector<81x16xf32>
    %59 = tpu.matmul %56, %58, %cst_69 {dimension_numbers = #tpu.dot_dimension_numbers<[1], [0], [0], [1], [0, 0, 1, 1], [], []>} : vector<81x3xbf16>, vector<3x16xbf16>, vector<81x16xf32> -> vector<81x16xf32>
    %60 = arith.addf %54, %59 : vector<81x16xf32>
    %c0_70 = arith.constant 0 : index
    %c2_71 = arith.constant 2 : index
    %c9_72 = arith.constant 9 : index
    %c0_73 = arith.constant 0 : index
    %61 = vector.load %arg1[%c0_70, %c2_71, %c9_72, %c0_73] : memref<1x4x91x3xbf16, #tpu.memory_space<vmem>>, vector<1x1x81x3xbf16>
    %62 = vector.shape_cast %61 : vector<1x1x81x3xbf16> to vector<81x3xbf16>
    %c12 = arith.constant 12 : index
    %c0_74 = arith.constant 0 : index
    %c0_75 = arith.constant 0 : index
    %63 = vector.load %arg2[%c12, %c0_74, %c0_75] : memref<16x3x16xbf16, #tpu.memory_space<vmem>>, vector<1x3x16xbf16>
    %64 = vector.shape_cast %63 : vector<1x3x16xbf16> to vector<3x16xbf16>
    %cst_76 = arith.constant dense<0.000000e+00> : vector<81x16xf32>
    %65 = tpu.matmul %62, %64, %cst_76 {dimension_numbers = #tpu.dot_dimension_numbers<[1], [0], [0], [1], [0, 0, 1, 1], [], []>} : vector<81x3xbf16>, vector<3x16xbf16>, vector<81x16xf32> -> vector<81x16xf32>
    %66 = arith.addf %60, %65 : vector<81x16xf32>
    %c0_77 = arith.constant 0 : index
    %c2_78 = arith.constant 2 : index
    %c10_79 = arith.constant 10 : index
    %c0_80 = arith.constant 0 : index
    %67 = vector.load %arg1[%c0_77, %c2_78, %c10_79, %c0_80] : memref<1x4x91x3xbf16, #tpu.memory_space<vmem>>, vector<1x1x81x3xbf16>
    %68 = vector.shape_cast %67 : vector<1x1x81x3xbf16> to vector<81x3xbf16>
    %c14 = arith.constant 14 : index
    %c0_81 = arith.constant 0 : index
    %c0_82 = arith.constant 0 : index
    %69 = vector.load %arg2[%c14, %c0_81, %c0_82] : memref<16x3x16xbf16, #tpu.memory_space<vmem>>, vector<1x3x16xbf16>
    %70 = vector.shape_cast %69 : vector<1x3x16xbf16> to vector<3x16xbf16>
    %cst_83 = arith.constant dense<0.000000e+00> : vector<81x16xf32>
    %71 = tpu.matmul %68, %70, %cst_83 {dimension_numbers = #tpu.dot_dimension_numbers<[1], [0], [0], [1], [0, 0, 1, 1], [], []>} : vector<81x3xbf16>, vector<3x16xbf16>, vector<81x16xf32> -> vector<81x16xf32>
    %72 = arith.addf %66, %71 : vector<81x16xf32>
    %c0_84 = arith.constant 0 : index
    %c3_85 = arith.constant 3 : index
    %c0_86 = arith.constant 0 : index
    %c0_87 = arith.constant 0 : index
    %73 = vector.load %arg1[%c0_84, %c3_85, %c0_86, %c0_87] : memref<1x4x91x3xbf16, #tpu.memory_space<vmem>>, vector<1x1x81x3xbf16>
    %74 = vector.shape_cast %73 : vector<1x1x81x3xbf16> to vector<81x3xbf16>
    %c5 = arith.constant 5 : index
    %c0_88 = arith.constant 0 : index
    %c0_89 = arith.constant 0 : index
    %75 = vector.load %arg2[%c5, %c0_88, %c0_89] : memref<16x3x16xbf16, #tpu.memory_space<vmem>>, vector<1x3x16xbf16>
    %76 = vector.shape_cast %75 : vector<1x3x16xbf16> to vector<3x16xbf16>
    %cst_90 = arith.constant dense<0.000000e+00> : vector<81x16xf32>
    %77 = tpu.matmul %74, %76, %cst_90 {dimension_numbers = #tpu.dot_dimension_numbers<[1], [0], [0], [1], [0, 0, 1, 1], [], []>} : vector<81x3xbf16>, vector<3x16xbf16>, vector<81x16xf32> -> vector<81x16xf32>
    %78 = arith.addf %72, %77 : vector<81x16xf32>
    %c0_91 = arith.constant 0 : index
    %c3_92 = arith.constant 3 : index
    %c1_93 = arith.constant 1 : index
    %c0_94 = arith.constant 0 : index
    %79 = vector.load %arg1[%c0_91, %c3_92, %c1_93, %c0_94] : memref<1x4x91x3xbf16, #tpu.memory_space<vmem>>, vector<1x1x81x3xbf16>
    %80 = vector.shape_cast %79 : vector<1x1x81x3xbf16> to vector<81x3xbf16>
    %c7 = arith.constant 7 : index
    %c0_95 = arith.constant 0 : index
    %c0_96 = arith.constant 0 : index
    %81 = vector.load %arg2[%c7, %c0_95, %c0_96] : memref<16x3x16xbf16, #tpu.memory_space<vmem>>, vector<1x3x16xbf16>
    %82 = vector.shape_cast %81 : vector<1x3x16xbf16> to vector<3x16xbf16>
    %cst_97 = arith.constant dense<0.000000e+00> : vector<81x16xf32>
    %83 = tpu.matmul %80, %82, %cst_97 {dimension_numbers = #tpu.dot_dimension_numbers<[1], [0], [0], [1], [0, 0, 1, 1], [], []>} : vector<81x3xbf16>, vector<3x16xbf16>, vector<81x16xf32> -> vector<81x16xf32>
    %84 = arith.addf %78, %83 : vector<81x16xf32>
    %c0_98 = arith.constant 0 : index
    %c3_99 = arith.constant 3 : index
    %c9_100 = arith.constant 9 : index
    %c0_101 = arith.constant 0 : index
    %85 = vector.load %arg1[%c0_98, %c3_99, %c9_100, %c0_101] : memref<1x4x91x3xbf16, #tpu.memory_space<vmem>>, vector<1x1x81x3xbf16>
    %86 = vector.shape_cast %85 : vector<1x1x81x3xbf16> to vector<81x3xbf16>
    %c13 = arith.constant 13 : index
    %c0_102 = arith.constant 0 : index
    %c0_103 = arith.constant 0 : index
    %87 = vector.load %arg2[%c13, %c0_102, %c0_103] : memref<16x3x16xbf16, #tpu.memory_space<vmem>>, vector<1x3x16xbf16>
    %88 = vector.shape_cast %87 : vector<1x3x16xbf16> to vector<3x16xbf16>
    %cst_104 = arith.constant dense<0.000000e+00> : vector<81x16xf32>
    %89 = tpu.matmul %86, %88, %cst_104 {dimension_numbers = #tpu.dot_dimension_numbers<[1], [0], [0], [1], [0, 0, 1, 1], [], []>} : vector<81x3xbf16>, vector<3x16xbf16>, vector<81x16xf32> -> vector<81x16xf32>
    %90 = arith.addf %84, %89 : vector<81x16xf32>
    %c0_105 = arith.constant 0 : index
    %c3_106 = arith.constant 3 : index
    %c10_107 = arith.constant 10 : index
    %c0_108 = arith.constant 0 : index
    %91 = vector.load %arg1[%c0_105, %c3_106, %c10_107, %c0_108] : memref<1x4x91x3xbf16, #tpu.memory_space<vmem>>, vector<1x1x81x3xbf16>
    %92 = vector.shape_cast %91 : vector<1x1x81x3xbf16> to vector<81x3xbf16>
    %c15 = arith.constant 15 : index
    %c0_109 = arith.constant 0 : index
    %c0_110 = arith.constant 0 : index
    %93 = vector.load %arg2[%c15, %c0_109, %c0_110] : memref<16x3x16xbf16, #tpu.memory_space<vmem>>, vector<1x3x16xbf16>
    %94 = vector.shape_cast %93 : vector<1x3x16xbf16> to vector<3x16xbf16>
    %cst_111 = arith.constant dense<0.000000e+00> : vector<81x16xf32>
    %95 = tpu.matmul %92, %94, %cst_111 {dimension_numbers = #tpu.dot_dimension_numbers<[1], [0], [0], [1], [0, 0, 1, 1], [], []>} : vector<81x3xbf16>, vector<3x16xbf16>, vector<81x16xf32> -> vector<81x16xf32>
    %96 = arith.addf %90, %95 : vector<81x16xf32>
    %c0_112 = arith.constant 0 : index
    %c0_113 = arith.constant 0 : index
    %97 = vector.load %arg3[%c0_112, %c0_113] : memref<1x16xf32, #tpu.memory_space<vmem>>, vector<1x16xf32>
    %98 = vector.broadcast %97 : vector<1x16xf32> to vector<81x16xf32>
    %99 = arith.addf %96, %98 : vector<81x16xf32>
    %cst_114 = arith.constant 0.000000e+00 : f32
    %100 = vector.broadcast %cst_114 : f32 to vector<81x16xf32>
    %101 = arith.maximumf %99, %100 : vector<81x16xf32>
    %102 = arith.truncf %101 : vector<81x16xf32> to vector<81x16xbf16>
    %c0_115 = arith.constant 0 : index
    %c0_116 = arith.constant 0 : index
    %c0_117 = arith.constant 0 : index
    %103 = vector.load %arg4[%c0_115, %c0_116, %c0_117] : memref<1x81x16xbf16, #tpu.memory_space<vmem>>, vector<1x81x16xbf16>
    %104 = vector.shape_cast %103 : vector<1x81x16xbf16> to vector<81x16xbf16>
    %105 = vector.shape_cast %102 : vector<81x16xbf16> to vector<1x81x16xbf16>
    tpu.vector_store %arg4[%c0_115, %c0_116, %c0_117], %105 {strides = array<i32>} : memref<1x81x16xbf16, #tpu.memory_space<vmem>>, vector<1x81x16xbf16>,
    return
  }
  func.func @transform_0(%arg0: i32) -> (i32, i32, i32, i32) {
    %c0_i32 = arith.constant 0 : i32
    %c0_i32_0 = arith.constant 0 : i32
    %c0_i32_1 = arith.constant 0 : i32
    %c0_i32_2 = arith.constant 0 : i32
    return %arg0, %c0_i32, %c0_i32_0, %c0_i32_1 : i32, i32, i32, i32
  }
  func.func @transform_1(%arg0: i32) -> (i32, i32, i32) {
    %c0_i32 = arith.constant 0 : i32
    %c0_i32_0 = arith.constant 0 : i32
    %c0_i32_1 = arith.constant 0 : i32
    %c0_i32_2 = arith.constant 0 : i32
    return %c0_i32, %c0_i32_0, %c0_i32_1 : i32, i32, i32
  }
  func.func @transform_2(%arg0: i32) -> (i32, i32) {
    %c0_i32 = arith.constant 0 : i32
    %c0_i32_0 = arith.constant 0 : i32
    %c0_i32_1 = arith.constant 0 : i32
    return %c0_i32, %c0_i32_0 : i32, i32
  }
  func.func @transform_3(%arg0: i32) -> (i32, i32, i32) {
    %c0_i32 = arith.constant 0 : i32
    %c0_i32_0 = arith.constant 0 : i32
    %c0_i32_1 = arith.constant 0 : i32
    return %arg0, %c0_i32, %c0_i32_0 : i32, i32, i32
  }
}

module attributes {stable_mosaic.version = 11 : i64} {
  func.func @_conv4x4_s2_relu_kernel(%arg0: i32, %arg1: memref<1x4x31x16xbf16, #tpu.memory_space<vmem>>, %arg2: memref<16x16x32xbf16, #tpu.memory_space<vmem>>, %arg3: memref<1x32xf32, #tpu.memory_space<vmem>>, %arg4: memref<1x25x32xbf16, #tpu.memory_space<vmem>>) attributes {dimension_semantics = [#tpu.dimension_semantics<parallel>], iteration_bounds = array<i64: 2>, scalar_prefetch = 0 : i64, scratch_operands = 0 : i64, tpu.core_type = #tpu.core_type<tc>, window_params = [{transform_indices = @transform_0, window_bounds = array<i64: 1, 4, 31, 16>}, {pipeline_mode = #tpu.pipeline_mode<synchronous>, transform_indices = @transform_1, window_bounds = array<i64: 16, 16, 32>}, {pipeline_mode = #tpu.pipeline_mode<synchronous>, transform_indices = @transform_2, window_bounds = array<i64: 1, 32>}, {transform_indices = @transform_3, window_bounds = array<i64: 1, 25, 32>}]} {
    %cst = arith.constant 0.000000e+00 : f32
    %0 = vector.broadcast %cst : f32 to vector<25x32xf32>
    %c0 = arith.constant 0 : index
    %c0_0 = arith.constant 0 : index
    %c0_1 = arith.constant 0 : index
    %c0_2 = arith.constant 0 : index
    %1 = vector.load %arg1[%c0, %c0_0, %c0_1, %c0_2] : memref<1x4x31x16xbf16, #tpu.memory_space<vmem>>, vector<1x1x25x16xbf16>
    %2 = vector.shape_cast %1 : vector<1x1x25x16xbf16> to vector<25x16xbf16>
    %c0_3 = arith.constant 0 : index
    %c0_4 = arith.constant 0 : index
    %c0_5 = arith.constant 0 : index
    %3 = vector.load %arg2[%c0_3, %c0_4, %c0_5] : memref<16x16x32xbf16, #tpu.memory_space<vmem>>, vector<1x16x32xbf16>
    %4 = vector.shape_cast %3 : vector<1x16x32xbf16> to vector<16x32xbf16>
    %cst_6 = arith.constant dense<0.000000e+00> : vector<25x32xf32>
    %5 = tpu.matmul %2, %4, %cst_6 {dimension_numbers = #tpu.dot_dimension_numbers<[1], [0], [0], [1], [0, 0, 1, 1], [], []>} : vector<25x16xbf16>, vector<16x32xbf16>, vector<25x32xf32> -> vector<25x32xf32>
    %6 = arith.addf %0, %5 : vector<25x32xf32>
    %c0_7 = arith.constant 0 : index
    %c0_8 = arith.constant 0 : index
    %c1 = arith.constant 1 : index
    %c0_9 = arith.constant 0 : index
    %7 = vector.load %arg1[%c0_7, %c0_8, %c1, %c0_9] : memref<1x4x31x16xbf16, #tpu.memory_space<vmem>>, vector<1x1x25x16xbf16>
    %8 = vector.shape_cast %7 : vector<1x1x25x16xbf16> to vector<25x16xbf16>
    %c2 = arith.constant 2 : index
    %c0_10 = arith.constant 0 : index
    %c0_11 = arith.constant 0 : index
    %9 = vector.load %arg2[%c2, %c0_10, %c0_11] : memref<16x16x32xbf16, #tpu.memory_space<vmem>>, vector<1x16x32xbf16>
    %10 = vector.shape_cast %9 : vector<1x16x32xbf16> to vector<16x32xbf16>
    %cst_12 = arith.constant dense<0.000000e+00> : vector<25x32xf32>
    %11 = tpu.matmul %8, %10, %cst_12 {dimension_numbers = #tpu.dot_dimension_numbers<[1], [0], [0], [1], [0, 0, 1, 1], [], []>} : vector<25x16xbf16>, vector<16x32xbf16>, vector<25x32xf32> -> vector<25x32xf32>
    %12 = arith.addf %6, %11 : vector<25x32xf32>
    %c0_13 = arith.constant 0 : index
    %c0_14 = arith.constant 0 : index
    %c5 = arith.constant 5 : index
    %c0_15 = arith.constant 0 : index
    %13 = vector.load %arg1[%c0_13, %c0_14, %c5, %c0_15] : memref<1x4x31x16xbf16, #tpu.memory_space<vmem>>, vector<1x1x25x16xbf16>
    %14 = vector.shape_cast %13 : vector<1x1x25x16xbf16> to vector<25x16xbf16>
    %c8 = arith.constant 8 : index
    %c0_16 = arith.constant 0 : index
    %c0_17 = arith.constant 0 : index
    %15 = vector.load %arg2[%c8, %c0_16, %c0_17] : memref<16x16x32xbf16, #tpu.memory_space<vmem>>, vector<1x16x32xbf16>
    %16 = vector.shape_cast %15 : vector<1x16x32xbf16> to vector<16x32xbf16>
    %cst_18 = arith.constant dense<0.000000e+00> : vector<25x32xf32>
    %17 = tpu.matmul %14, %16, %cst_18 {dimension_numbers = #tpu.dot_dimension_numbers<[1], [0], [0], [1], [0, 0, 1, 1], [], []>} : vector<25x16xbf16>, vector<16x32xbf16>, vector<25x32xf32> -> vector<25x32xf32>
    %18 = arith.addf %12, %17 : vector<25x32xf32>
    %c0_19 = arith.constant 0 : index
    %c0_20 = arith.constant 0 : index
    %c6 = arith.constant 6 : index
    %c0_21 = arith.constant 0 : index
    %19 = vector.load %arg1[%c0_19, %c0_20, %c6, %c0_21] : memref<1x4x31x16xbf16, #tpu.memory_space<vmem>>, vector<1x1x25x16xbf16>
    %20 = vector.shape_cast %19 : vector<1x1x25x16xbf16> to vector<25x16xbf16>
    %c10 = arith.constant 10 : index
    %c0_22 = arith.constant 0 : index
    %c0_23 = arith.constant 0 : index
    %21 = vector.load %arg2[%c10, %c0_22, %c0_23] : memref<16x16x32xbf16, #tpu.memory_space<vmem>>, vector<1x16x32xbf16>
    %22 = vector.shape_cast %21 : vector<1x16x32xbf16> to vector<16x32xbf16>
    %cst_24 = arith.constant dense<0.000000e+00> : vector<25x32xf32>
    %23 = tpu.matmul %20, %22, %cst_24 {dimension_numbers = #tpu.dot_dimension_numbers<[1], [0], [0], [1], [0, 0, 1, 1], [], []>} : vector<25x16xbf16>, vector<16x32xbf16>, vector<25x32xf32> -> vector<25x32xf32>
    %24 = arith.addf %18, %23 : vector<25x32xf32>
    %c0_25 = arith.constant 0 : index
    %c1_26 = arith.constant 1 : index
    %c0_27 = arith.constant 0 : index
    %c0_28 = arith.constant 0 : index
    %25 = vector.load %arg1[%c0_25, %c1_26, %c0_27, %c0_28] : memref<1x4x31x16xbf16, #tpu.memory_space<vmem>>, vector<1x1x25x16xbf16>
    %26 = vector.shape_cast %25 : vector<1x1x25x16xbf16> to vector<25x16xbf16>
    %c1_29 = arith.constant 1 : index
    %c0_30 = arith.constant 0 : index
    %c0_31 = arith.constant 0 : index
    %27 = vector.load %arg2[%c1_29, %c0_30, %c0_31] : memref<16x16x32xbf16, #tpu.memory_space<vmem>>, vector<1x16x32xbf16>
    %28 = vector.shape_cast %27 : vector<1x16x32xbf16> to vector<16x32xbf16>
    %cst_32 = arith.constant dense<0.000000e+00> : vector<25x32xf32>
    %29 = tpu.matmul %26, %28, %cst_32 {dimension_numbers = #tpu.dot_dimension_numbers<[1], [0], [0], [1], [0, 0, 1, 1], [], []>} : vector<25x16xbf16>, vector<16x32xbf16>, vector<25x32xf32> -> vector<25x32xf32>
    %30 = arith.addf %24, %29 : vector<25x32xf32>
    %c0_33 = arith.constant 0 : index
    %c1_34 = arith.constant 1 : index
    %c1_35 = arith.constant 1 : index
    %c0_36 = arith.constant 0 : index
    %31 = vector.load %arg1[%c0_33, %c1_34, %c1_35, %c0_36] : memref<1x4x31x16xbf16, #tpu.memory_space<vmem>>, vector<1x1x25x16xbf16>
    %32 = vector.shape_cast %31 : vector<1x1x25x16xbf16> to vector<25x16xbf16>
    %c3 = arith.constant 3 : index
    %c0_37 = arith.constant 0 : index
    %c0_38 = arith.constant 0 : index
    %33 = vector.load %arg2[%c3, %c0_37, %c0_38] : memref<16x16x32xbf16, #tpu.memory_space<vmem>>, vector<1x16x32xbf16>
    %34 = vector.shape_cast %33 : vector<1x16x32xbf16> to vector<16x32xbf16>
    %cst_39 = arith.constant dense<0.000000e+00> : vector<25x32xf32>
    %35 = tpu.matmul %32, %34, %cst_39 {dimension_numbers = #tpu.dot_dimension_numbers<[1], [0], [0], [1], [0, 0, 1, 1], [], []>} : vector<25x16xbf16>, vector<16x32xbf16>, vector<25x32xf32> -> vector<25x32xf32>
    %36 = arith.addf %30, %35 : vector<25x32xf32>
    %c0_40 = arith.constant 0 : index
    %c1_41 = arith.constant 1 : index
    %c5_42 = arith.constant 5 : index
    %c0_43 = arith.constant 0 : index
    %37 = vector.load %arg1[%c0_40, %c1_41, %c5_42, %c0_43] : memref<1x4x31x16xbf16, #tpu.memory_space<vmem>>, vector<1x1x25x16xbf16>
    %38 = vector.shape_cast %37 : vector<1x1x25x16xbf16> to vector<25x16xbf16>
    %c9 = arith.constant 9 : index
    %c0_44 = arith.constant 0 : index
    %c0_45 = arith.constant 0 : index
    %39 = vector.load %arg2[%c9, %c0_44, %c0_45] : memref<16x16x32xbf16, #tpu.memory_space<vmem>>, vector<1x16x32xbf16>
    %40 = vector.shape_cast %39 : vector<1x16x32xbf16> to vector<16x32xbf16>
    %cst_46 = arith.constant dense<0.000000e+00> : vector<25x32xf32>
    %41 = tpu.matmul %38, %40, %cst_46 {dimension_numbers = #tpu.dot_dimension_numbers<[1], [0], [0], [1], [0, 0, 1, 1], [], []>} : vector<25x16xbf16>, vector<16x32xbf16>, vector<25x32xf32> -> vector<25x32xf32>
    %42 = arith.addf %36, %41 : vector<25x32xf32>
    %c0_47 = arith.constant 0 : index
    %c1_48 = arith.constant 1 : index
    %c6_49 = arith.constant 6 : index
    %c0_50 = arith.constant 0 : index
    %43 = vector.load %arg1[%c0_47, %c1_48, %c6_49, %c0_50] : memref<1x4x31x16xbf16, #tpu.memory_space<vmem>>, vector<1x1x25x16xbf16>
    %44 = vector.shape_cast %43 : vector<1x1x25x16xbf16> to vector<25x16xbf16>
    %c11 = arith.constant 11 : index
    %c0_51 = arith.constant 0 : index
    %c0_52 = arith.constant 0 : index
    %45 = vector.load %arg2[%c11, %c0_51, %c0_52] : memref<16x16x32xbf16, #tpu.memory_space<vmem>>, vector<1x16x32xbf16>
    %46 = vector.shape_cast %45 : vector<1x16x32xbf16> to vector<16x32xbf16>
    %cst_53 = arith.constant dense<0.000000e+00> : vector<25x32xf32>
    %47 = tpu.matmul %44, %46, %cst_53 {dimension_numbers = #tpu.dot_dimension_numbers<[1], [0], [0], [1], [0, 0, 1, 1], [], []>} : vector<25x16xbf16>, vector<16x32xbf16>, vector<25x32xf32> -> vector<25x32xf32>
    %48 = arith.addf %42, %47 : vector<25x32xf32>
    %c0_54 = arith.constant 0 : index
    %c2_55 = arith.constant 2 : index
    %c0_56 = arith.constant 0 : index
    %c0_57 = arith.constant 0 : index
    %49 = vector.load %arg1[%c0_54, %c2_55, %c0_56, %c0_57] : memref<1x4x31x16xbf16, #tpu.memory_space<vmem>>, vector<1x1x25x16xbf16>
    %50 = vector.shape_cast %49 : vector<1x1x25x16xbf16> to vector<25x16xbf16>
    %c4 = arith.constant 4 : index
    %c0_58 = arith.constant 0 : index
    %c0_59 = arith.constant 0 : index
    %51 = vector.load %arg2[%c4, %c0_58, %c0_59] : memref<16x16x32xbf16, #tpu.memory_space<vmem>>, vector<1x16x32xbf16>
    %52 = vector.shape_cast %51 : vector<1x16x32xbf16> to vector<16x32xbf16>
    %cst_60 = arith.constant dense<0.000000e+00> : vector<25x32xf32>
    %53 = tpu.matmul %50, %52, %cst_60 {dimension_numbers = #tpu.dot_dimension_numbers<[1], [0], [0], [1], [0, 0, 1, 1], [], []>} : vector<25x16xbf16>, vector<16x32xbf16>, vector<25x32xf32> -> vector<25x32xf32>
    %54 = arith.addf %48, %53 : vector<25x32xf32>
    %c0_61 = arith.constant 0 : index
    %c2_62 = arith.constant 2 : index
    %c1_63 = arith.constant 1 : index
    %c0_64 = arith.constant 0 : index
    %55 = vector.load %arg1[%c0_61, %c2_62, %c1_63, %c0_64] : memref<1x4x31x16xbf16, #tpu.memory_space<vmem>>, vector<1x1x25x16xbf16>
    %56 = vector.shape_cast %55 : vector<1x1x25x16xbf16> to vector<25x16xbf16>
    %c6_65 = arith.constant 6 : index
    %c0_66 = arith.constant 0 : index
    %c0_67 = arith.constant 0 : index
    %57 = vector.load %arg2[%c6_65, %c0_66, %c0_67] : memref<16x16x32xbf16, #tpu.memory_space<vmem>>, vector<1x16x32xbf16>
    %58 = vector.shape_cast %57 : vector<1x16x32xbf16> to vector<16x32xbf16>
    %cst_68 = arith.constant dense<0.000000e+00> : vector<25x32xf32>
    %59 = tpu.matmul %56, %58, %cst_68 {dimension_numbers = #tpu.dot_dimension_numbers<[1], [0], [0], [1], [0, 0, 1, 1], [], []>} : vector<25x16xbf16>, vector<16x32xbf16>, vector<25x32xf32> -> vector<25x32xf32>
    %60 = arith.addf %54, %59 : vector<25x32xf32>
    %c0_69 = arith.constant 0 : index
    %c2_70 = arith.constant 2 : index
    %c5_71 = arith.constant 5 : index
    %c0_72 = arith.constant 0 : index
    %61 = vector.load %arg1[%c0_69, %c2_70, %c5_71, %c0_72] : memref<1x4x31x16xbf16, #tpu.memory_space<vmem>>, vector<1x1x25x16xbf16>
    %62 = vector.shape_cast %61 : vector<1x1x25x16xbf16> to vector<25x16xbf16>
    %c12 = arith.constant 12 : index
    %c0_73 = arith.constant 0 : index
    %c0_74 = arith.constant 0 : index
    %63 = vector.load %arg2[%c12, %c0_73, %c0_74] : memref<16x16x32xbf16, #tpu.memory_space<vmem>>, vector<1x16x32xbf16>
    %64 = vector.shape_cast %63 : vector<1x16x32xbf16> to vector<16x32xbf16>
    %cst_75 = arith.constant dense<0.000000e+00> : vector<25x32xf32>
    %65 = tpu.matmul %62, %64, %cst_75 {dimension_numbers = #tpu.dot_dimension_numbers<[1], [0], [0], [1], [0, 0, 1, 1], [], []>} : vector<25x16xbf16>, vector<16x32xbf16>, vector<25x32xf32> -> vector<25x32xf32>
    %66 = arith.addf %60, %65 : vector<25x32xf32>
    %c0_76 = arith.constant 0 : index
    %c2_77 = arith.constant 2 : index
    %c6_78 = arith.constant 6 : index
    %c0_79 = arith.constant 0 : index
    %67 = vector.load %arg1[%c0_76, %c2_77, %c6_78, %c0_79] : memref<1x4x31x16xbf16, #tpu.memory_space<vmem>>, vector<1x1x25x16xbf16>
    %68 = vector.shape_cast %67 : vector<1x1x25x16xbf16> to vector<25x16xbf16>
    %c14 = arith.constant 14 : index
    %c0_80 = arith.constant 0 : index
    %c0_81 = arith.constant 0 : index
    %69 = vector.load %arg2[%c14, %c0_80, %c0_81] : memref<16x16x32xbf16, #tpu.memory_space<vmem>>, vector<1x16x32xbf16>
    %70 = vector.shape_cast %69 : vector<1x16x32xbf16> to vector<16x32xbf16>
    %cst_82 = arith.constant dense<0.000000e+00> : vector<25x32xf32>
    %71 = tpu.matmul %68, %70, %cst_82 {dimension_numbers = #tpu.dot_dimension_numbers<[1], [0], [0], [1], [0, 0, 1, 1], [], []>} : vector<25x16xbf16>, vector<16x32xbf16>, vector<25x32xf32> -> vector<25x32xf32>
    %72 = arith.addf %66, %71 : vector<25x32xf32>
    %c0_83 = arith.constant 0 : index
    %c3_84 = arith.constant 3 : index
    %c0_85 = arith.constant 0 : index
    %c0_86 = arith.constant 0 : index
    %73 = vector.load %arg1[%c0_83, %c3_84, %c0_85, %c0_86] : memref<1x4x31x16xbf16, #tpu.memory_space<vmem>>, vector<1x1x25x16xbf16>
    %74 = vector.shape_cast %73 : vector<1x1x25x16xbf16> to vector<25x16xbf16>
    %c5_87 = arith.constant 5 : index
    %c0_88 = arith.constant 0 : index
    %c0_89 = arith.constant 0 : index
    %75 = vector.load %arg2[%c5_87, %c0_88, %c0_89] : memref<16x16x32xbf16, #tpu.memory_space<vmem>>, vector<1x16x32xbf16>
    %76 = vector.shape_cast %75 : vector<1x16x32xbf16> to vector<16x32xbf16>
    %cst_90 = arith.constant dense<0.000000e+00> : vector<25x32xf32>
    %77 = tpu.matmul %74, %76, %cst_90 {dimension_numbers = #tpu.dot_dimension_numbers<[1], [0], [0], [1], [0, 0, 1, 1], [], []>} : vector<25x16xbf16>, vector<16x32xbf16>, vector<25x32xf32> -> vector<25x32xf32>
    %78 = arith.addf %72, %77 : vector<25x32xf32>
    %c0_91 = arith.constant 0 : index
    %c3_92 = arith.constant 3 : index
    %c1_93 = arith.constant 1 : index
    %c0_94 = arith.constant 0 : index
    %79 = vector.load %arg1[%c0_91, %c3_92, %c1_93, %c0_94] : memref<1x4x31x16xbf16, #tpu.memory_space<vmem>>, vector<1x1x25x16xbf16>
    %80 = vector.shape_cast %79 : vector<1x1x25x16xbf16> to vector<25x16xbf16>
    %c7 = arith.constant 7 : index
    %c0_95 = arith.constant 0 : index
    %c0_96 = arith.constant 0 : index
    %81 = vector.load %arg2[%c7, %c0_95, %c0_96] : memref<16x16x32xbf16, #tpu.memory_space<vmem>>, vector<1x16x32xbf16>
    %82 = vector.shape_cast %81 : vector<1x16x32xbf16> to vector<16x32xbf16>
    %cst_97 = arith.constant dense<0.000000e+00> : vector<25x32xf32>
    %83 = tpu.matmul %80, %82, %cst_97 {dimension_numbers = #tpu.dot_dimension_numbers<[1], [0], [0], [1], [0, 0, 1, 1], [], []>} : vector<25x16xbf16>, vector<16x32xbf16>, vector<25x32xf32> -> vector<25x32xf32>
    %84 = arith.addf %78, %83 : vector<25x32xf32>
    %c0_98 = arith.constant 0 : index
    %c3_99 = arith.constant 3 : index
    %c5_100 = arith.constant 5 : index
    %c0_101 = arith.constant 0 : index
    %85 = vector.load %arg1[%c0_98, %c3_99, %c5_100, %c0_101] : memref<1x4x31x16xbf16, #tpu.memory_space<vmem>>, vector<1x1x25x16xbf16>
    %86 = vector.shape_cast %85 : vector<1x1x25x16xbf16> to vector<25x16xbf16>
    %c13 = arith.constant 13 : index
    %c0_102 = arith.constant 0 : index
    %c0_103 = arith.constant 0 : index
    %87 = vector.load %arg2[%c13, %c0_102, %c0_103] : memref<16x16x32xbf16, #tpu.memory_space<vmem>>, vector<1x16x32xbf16>
    %88 = vector.shape_cast %87 : vector<1x16x32xbf16> to vector<16x32xbf16>
    %cst_104 = arith.constant dense<0.000000e+00> : vector<25x32xf32>
    %89 = tpu.matmul %86, %88, %cst_104 {dimension_numbers = #tpu.dot_dimension_numbers<[1], [0], [0], [1], [0, 0, 1, 1], [], []>} : vector<25x16xbf16>, vector<16x32xbf16>, vector<25x32xf32> -> vector<25x32xf32>
    %90 = arith.addf %84, %89 : vector<25x32xf32>
    %c0_105 = arith.constant 0 : index
    %c3_106 = arith.constant 3 : index
    %c6_107 = arith.constant 6 : index
    %c0_108 = arith.constant 0 : index
    %91 = vector.load %arg1[%c0_105, %c3_106, %c6_107, %c0_108] : memref<1x4x31x16xbf16, #tpu.memory_space<vmem>>, vector<1x1x25x16xbf16>
    %92 = vector.shape_cast %91 : vector<1x1x25x16xbf16> to vector<25x16xbf16>
    %c15 = arith.constant 15 : index
    %c0_109 = arith.constant 0 : index
    %c0_110 = arith.constant 0 : index
    %93 = vector.load %arg2[%c15, %c0_109, %c0_110] : memref<16x16x32xbf16, #tpu.memory_space<vmem>>, vector<1x16x32xbf16>
    %94 = vector.shape_cast %93 : vector<1x16x32xbf16> to vector<16x32xbf16>
    %cst_111 = arith.constant dense<0.000000e+00> : vector<25x32xf32>
    %95 = tpu.matmul %92, %94, %cst_111 {dimension_numbers = #tpu.dot_dimension_numbers<[1], [0], [0], [1], [0, 0, 1, 1], [], []>} : vector<25x16xbf16>, vector<16x32xbf16>, vector<25x32xf32> -> vector<25x32xf32>
    %96 = arith.addf %90, %95 : vector<25x32xf32>
    %c0_112 = arith.constant 0 : index
    %c0_113 = arith.constant 0 : index
    %97 = vector.load %arg3[%c0_112, %c0_113] : memref<1x32xf32, #tpu.memory_space<vmem>>, vector<1x32xf32>
    %98 = vector.broadcast %97 : vector<1x32xf32> to vector<25x32xf32>
    %99 = arith.addf %96, %98 : vector<25x32xf32>
    %cst_114 = arith.constant 0.000000e+00 : f32
    %100 = vector.broadcast %cst_114 : f32 to vector<25x32xf32>
    %101 = arith.maximumf %99, %100 : vector<25x32xf32>
    %102 = arith.truncf %101 : vector<25x32xf32> to vector<25x32xbf16>
    %c0_115 = arith.constant 0 : index
    %c0_116 = arith.constant 0 : index
    %c0_117 = arith.constant 0 : index
    %103 = vector.load %arg4[%c0_115, %c0_116, %c0_117] : memref<1x25x32xbf16, #tpu.memory_space<vmem>>, vector<1x25x32xbf16>
    %104 = vector.shape_cast %103 : vector<1x25x32xbf16> to vector<25x32xbf16>
    %105 = vector.shape_cast %102 : vector<25x32xbf16> to vector<1x25x32xbf16>
    tpu.vector_store %arg4[%c0_115, %c0_116, %c0_117], %105 {strides = array<i32>} : memref<1x25x32xbf16, #tpu.memory_space<vmem>>, vector<1x25x32xbf16>,
    return
  }
  func.func @transform_0(%arg0: i32) -> (i32, i32, i32, i32) {
    %c0_i32 = arith.constant 0 : i32
    %c0_i32_0 = arith.constant 0 : i32
    %c0_i32_1 = arith.constant 0 : i32
    %c0_i32_2 = arith.constant 0 : i32
    return %arg0, %c0_i32, %c0_i32_0, %c0_i32_1 : i32, i32, i32, i32
  }
  func.func @transform_1(%arg0: i32) -> (i32, i32, i32) {
    %c0_i32 = arith.constant 0 : i32
    %c0_i32_0 = arith.constant 0 : i32
    %c0_i32_1 = arith.constant 0 : i32
    %c0_i32_2 = arith.constant 0 : i32
    return %c0_i32, %c0_i32_0, %c0_i32_1 : i32, i32, i32
  }
  func.func @transform_2(%arg0: i32) -> (i32, i32) {
    %c0_i32 = arith.constant 0 : i32
    %c0_i32_0 = arith.constant 0 : i32
    %c0_i32_1 = arith.constant 0 : i32
    return %c0_i32, %c0_i32_0 : i32, i32
  }
  func.func @transform_3(%arg0: i32) -> (i32, i32, i32) {
    %c0_i32 = arith.constant 0 : i32
    %c0_i32_0 = arith.constant 0 : i32
    %c0_i32_1 = arith.constant 0 : i32
    return %arg0, %c0_i32, %c0_i32_0 : i32, i32, i32
  }
}

module attributes {stable_mosaic.version = 11 : i64} {
  func.func @_conv3_resstack_kernel(%arg0: i32, %arg1: memref<1x36x32xbf16, #tpu.memory_space<vmem>>, %arg2: memref<36x1xf32, #tpu.memory_space<vmem>>, %arg3: memref<9x32x32xbf16, #tpu.memory_space<vmem>>, %arg4: memref<1x32xf32, #tpu.memory_space<vmem>>, %arg5: memref<9x32x8xbf16, #tpu.memory_space<vmem>>, %arg6: memref<8x32xbf16, #tpu.memory_space<vmem>>, %arg7: memref<1x36x32xf32, #tpu.memory_space<vmem>>, %arg8: memref<50x32xbf16, #tpu.memory_space<vmem>>) attributes {dimension_semantics = [#tpu.dimension_semantics<parallel>], iteration_bounds = array<i64: 2>, scalar_prefetch = 0 : i64, scratch_operands = 1 : i64, tpu.core_type = #tpu.core_type<tc>, window_params = [{transform_indices = @transform_0, window_bounds = array<i64: 1, 36, 32>}, {pipeline_mode = #tpu.pipeline_mode<synchronous>, transform_indices = @transform_1, window_bounds = array<i64: 36, 1>}, {pipeline_mode = #tpu.pipeline_mode<synchronous>, transform_indices = @transform_2, window_bounds = array<i64: 9, 32, 32>}, {pipeline_mode = #tpu.pipeline_mode<synchronous>, transform_indices = @transform_3, window_bounds = array<i64: 1, 32>}, {pipeline_mode = #tpu.pipeline_mode<synchronous>, transform_indices = @transform_4, window_bounds = array<i64: 9, 32, 8>}, {pipeline_mode = #tpu.pipeline_mode<synchronous>, transform_indices = @transform_5, window_bounds = array<i64: 8, 32>}, {transform_indices = @transform_6, window_bounds = array<i64: 1, 36, 32>}]} {
    %cst = arith.constant 0.000000e+00 : bf16
    %0 = vector.broadcast %cst : bf16 to vector<50x32xbf16>
    %c0 = arith.constant 0 : index
    %c0_0 = arith.constant 0 : index
    %1 = vector.load %arg8[%c0, %c0_0] : memref<50x32xbf16, #tpu.memory_space<vmem>>, vector<50x32xbf16>
    tpu.vector_store %arg8[%c0, %c0_0], %0 {strides = array<i32>} : memref<50x32xbf16, #tpu.memory_space<vmem>>, vector<50x32xbf16>,
    %c0_1 = arith.constant 0 : index
    %c0_2 = arith.constant 0 : index
    %c0_3 = arith.constant 0 : index
    %2 = vector.load %arg1[%c0_1, %c0_2, %c0_3] : memref<1x36x32xbf16, #tpu.memory_space<vmem>>, vector<1x36x32xbf16>
    %3 = vector.shape_cast %2 : vector<1x36x32xbf16> to vector<36x32xbf16>
    %c7 = arith.constant 7 : index
    %c0_4 = arith.constant 0 : index
    %4 = vector.load %arg8[%c7, %c0_4] : memref<50x32xbf16, #tpu.memory_space<vmem>>, vector<36x32xbf16>
    tpu.vector_store %arg8[%c7, %c0_4], %3 {strides = array<i32>} : memref<50x32xbf16, #tpu.memory_space<vmem>>, vector<36x32xbf16>,
    %cst_5 = arith.constant 0.000000e+00 : f32
    %5 = vector.broadcast %cst_5 : f32 to vector<36x32xf32>
    %c0_6 = arith.constant 0 : index
    %c0_7 = arith.constant 0 : index
    %6 = vector.load %arg8[%c0_6, %c0_7] : memref<50x32xbf16, #tpu.memory_space<vmem>>, vector<36x32xbf16>
    %c0_8 = arith.constant 0 : index
    %c0_9 = arith.constant 0 : index
    %c0_10 = arith.constant 0 : index
    %7 = vector.load %arg3[%c0_8, %c0_9, %c0_10] : memref<9x32x32xbf16, #tpu.memory_space<vmem>>, vector<1x32x32xbf16>
    %8 = vector.shape_cast %7 : vector<1x32x32xbf16> to vector<32x32xbf16>
    %cst_11 = arith.constant dense<0.000000e+00> : vector<36x32xf32>
    %9 = tpu.matmul %6, %8, %cst_11 {dimension_numbers = #tpu.dot_dimension_numbers<[1], [0], [0], [1], [0, 0, 1, 1], [], []>} : vector<36x32xbf16>, vector<32x32xbf16>, vector<36x32xf32> -> vector<36x32xf32>
    %10 = arith.addf %5, %9 : vector<36x32xf32>
    %c1 = arith.constant 1 : index
    %c0_12 = arith.constant 0 : index
    %11 = vector.load %arg8[%c1, %c0_12] : memref<50x32xbf16, #tpu.memory_space<vmem>>, vector<36x32xbf16>
    %c1_13 = arith.constant 1 : index
    %c0_14 = arith.constant 0 : index
    %c0_15 = arith.constant 0 : index
    %12 = vector.load %arg3[%c1_13, %c0_14, %c0_15] : memref<9x32x32xbf16, #tpu.memory_space<vmem>>, vector<1x32x32xbf16>
    %13 = vector.shape_cast %12 : vector<1x32x32xbf16> to vector<32x32xbf16>
    %cst_16 = arith.constant dense<0.000000e+00> : vector<36x32xf32>
    %14 = tpu.matmul %11, %13, %cst_16 {dimension_numbers = #tpu.dot_dimension_numbers<[1], [0], [0], [1], [0, 0, 1, 1], [], []>} : vector<36x32xbf16>, vector<32x32xbf16>, vector<36x32xf32> -> vector<36x32xf32>
    %15 = arith.addf %10, %14 : vector<36x32xf32>
    %c2 = arith.constant 2 : index
    %c0_17 = arith.constant 0 : index
    %16 = vector.load %arg8[%c2, %c0_17] : memref<50x32xbf16, #tpu.memory_space<vmem>>, vector<36x32xbf16>
    %c2_18 = arith.constant 2 : index
    %c0_19 = arith.constant 0 : index
    %c0_20 = arith.constant 0 : index
    %17 = vector.load %arg3[%c2_18, %c0_19, %c0_20] : memref<9x32x32xbf16, #tpu.memory_space<vmem>>, vector<1x32x32xbf16>
    %18 = vector.shape_cast %17 : vector<1x32x32xbf16> to vector<32x32xbf16>
    %cst_21 = arith.constant dense<0.000000e+00> : vector<36x32xf32>
    %19 = tpu.matmul %16, %18, %cst_21 {dimension_numbers = #tpu.dot_dimension_numbers<[1], [0], [0], [1], [0, 0, 1, 1], [], []>} : vector<36x32xbf16>, vector<32x32xbf16>, vector<36x32xf32> -> vector<36x32xf32>
    %20 = arith.addf %15, %19 : vector<36x32xf32>
    %c6 = arith.constant 6 : index
    %c0_22 = arith.constant 0 : index
    %21 = vector.load %arg8[%c6, %c0_22] : memref<50x32xbf16, #tpu.memory_space<vmem>>, vector<36x32xbf16>
    %c3 = arith.constant 3 : index
    %c0_23 = arith.constant 0 : index
    %c0_24 = arith.constant 0 : index
    %22 = vector.load %arg3[%c3, %c0_23, %c0_24] : memref<9x32x32xbf16, #tpu.memory_space<vmem>>, vector<1x32x32xbf16>
    %23 = vector.shape_cast %22 : vector<1x32x32xbf16> to vector<32x32xbf16>
    %cst_25 = arith.constant dense<0.000000e+00> : vector<36x32xf32>
    %24 = tpu.matmul %21, %23, %cst_25 {dimension_numbers = #tpu.dot_dimension_numbers<[1], [0], [0], [1], [0, 0, 1, 1], [], []>} : vector<36x32xbf16>, vector<32x32xbf16>, vector<36x32xf32> -> vector<36x32xf32>
    %25 = arith.addf %20, %24 : vector<36x32xf32>
    %c7_26 = arith.constant 7 : index
    %c0_27 = arith.constant 0 : index
    %26 = vector.load %arg8[%c7_26, %c0_27] : memref<50x32xbf16, #tpu.memory_space<vmem>>, vector<36x32xbf16>
    %c4 = arith.constant 4 : index
    %c0_28 = arith.constant 0 : index
    %c0_29 = arith.constant 0 : index
    %27 = vector.load %arg3[%c4, %c0_28, %c0_29] : memref<9x32x32xbf16, #tpu.memory_space<vmem>>, vector<1x32x32xbf16>
    %28 = vector.shape_cast %27 : vector<1x32x32xbf16> to vector<32x32xbf16>
    %cst_30 = arith.constant dense<0.000000e+00> : vector<36x32xf32>
    %29 = tpu.matmul %26, %28, %cst_30 {dimension_numbers = #tpu.dot_dimension_numbers<[1], [0], [0], [1], [0, 0, 1, 1], [], []>} : vector<36x32xbf16>, vector<32x32xbf16>, vector<36x32xf32> -> vector<36x32xf32>
    %30 = arith.addf %25, %29 : vector<36x32xf32>
    %c8 = arith.constant 8 : index
    %c0_31 = arith.constant 0 : index
    %31 = vector.load %arg8[%c8, %c0_31] : memref<50x32xbf16, #tpu.memory_space<vmem>>, vector<36x32xbf16>
    %c5 = arith.constant 5 : index
    %c0_32 = arith.constant 0 : index
    %c0_33 = arith.constant 0 : index
    %32 = vector.load %arg3[%c5, %c0_32, %c0_33] : memref<9x32x32xbf16, #tpu.memory_space<vmem>>, vector<1x32x32xbf16>
    %33 = vector.shape_cast %32 : vector<1x32x32xbf16> to vector<32x32xbf16>
    %cst_34 = arith.constant dense<0.000000e+00> : vector<36x32xf32>
    %34 = tpu.matmul %31, %33, %cst_34 {dimension_numbers = #tpu.dot_dimension_numbers<[1], [0], [0], [1], [0, 0, 1, 1], [], []>} : vector<36x32xbf16>, vector<32x32xbf16>, vector<36x32xf32> -> vector<36x32xf32>
    %35 = arith.addf %30, %34 : vector<36x32xf32>
    %c12 = arith.constant 12 : index
    %c0_35 = arith.constant 0 : index
    %36 = vector.load %arg8[%c12, %c0_35] : memref<50x32xbf16, #tpu.memory_space<vmem>>, vector<36x32xbf16>
    %c6_36 = arith.constant 6 : index
    %c0_37 = arith.constant 0 : index
    %c0_38 = arith.constant 0 : index
    %37 = vector.load %arg3[%c6_36, %c0_37, %c0_38] : memref<9x32x32xbf16, #tpu.memory_space<vmem>>, vector<1x32x32xbf16>
    %38 = vector.shape_cast %37 : vector<1x32x32xbf16> to vector<32x32xbf16>
    %cst_39 = arith.constant dense<0.000000e+00> : vector<36x32xf32>
    %39 = tpu.matmul %36, %38, %cst_39 {dimension_numbers = #tpu.dot_dimension_numbers<[1], [0], [0], [1], [0, 0, 1, 1], [], []>} : vector<36x32xbf16>, vector<32x32xbf16>, vector<36x32xf32> -> vector<36x32xf32>
    %40 = arith.addf %35, %39 : vector<36x32xf32>
    %c13 = arith.constant 13 : index
    %c0_40 = arith.constant 0 : index
    %41 = vector.load %arg8[%c13, %c0_40] : memref<50x32xbf16, #tpu.memory_space<vmem>>, vector<36x32xbf16>
    %c7_41 = arith.constant 7 : index
    %c0_42 = arith.constant 0 : index
    %c0_43 = arith.constant 0 : index
    %42 = vector.load %arg3[%c7_41, %c0_42, %c0_43] : memref<9x32x32xbf16, #tpu.memory_space<vmem>>, vector<1x32x32xbf16>
    %43 = vector.shape_cast %42 : vector<1x32x32xbf16> to vector<32x32xbf16>
    %cst_44 = arith.constant dense<0.000000e+00> : vector<36x32xf32>
    %44 = tpu.matmul %41, %43, %cst_44 {dimension_numbers = #tpu.dot_dimension_numbers<[1], [0], [0], [1], [0, 0, 1, 1], [], []>} : vector<36x32xbf16>, vector<32x32xbf16>, vector<36x32xf32> -> vector<36x32xf32>
    %45 = arith.addf %40, %44 : vector<36x32xf32>
    %c14 = arith.constant 14 : index
    %c0_45 = arith.constant 0 : index
    %46 = vector.load %arg8[%c14, %c0_45] : memref<50x32xbf16, #tpu.memory_space<vmem>>, vector<36x32xbf16>
    %c8_46 = arith.constant 8 : index
    %c0_47 = arith.constant 0 : index
    %c0_48 = arith.constant 0 : index
    %47 = vector.load %arg3[%c8_46, %c0_47, %c0_48] : memref<9x32x32xbf16, #tpu.memory_space<vmem>>, vector<1x32x32xbf16>
    %48 = vector.shape_cast %47 : vector<1x32x32xbf16> to vector<32x32xbf16>
    %cst_49 = arith.constant dense<0.000000e+00> : vector<36x32xf32>
    %49 = tpu.matmul %46, %48, %cst_49 {dimension_numbers = #tpu.dot_dimension_numbers<[1], [0], [0], [1], [0, 0, 1, 1], [], []>} : vector<36x32xbf16>, vector<32x32xbf16>, vector<36x32xf32> -> vector<36x32xf32>
    %50 = arith.addf %45, %49 : vector<36x32xf32>
    %c0_50 = arith.constant 0 : index
    %c0_51 = arith.constant 0 : index
    %51 = vector.load %arg4[%c0_50, %c0_51] : memref<1x32xf32, #tpu.memory_space<vmem>>, vector<1x32xf32>
    %52 = vector.broadcast %51 : vector<1x32xf32> to vector<36x32xf32>
    %53 = arith.addf %50, %52 : vector<36x32xf32>
    %c0_52 = arith.constant 0 : index
    %c0_53 = arith.constant 0 : index
    %54 = vector.load %arg2[%c0_52, %c0_53] : memref<36x1xf32, #tpu.memory_space<vmem>>, vector<36x1xf32>
    %cst_54 = arith.constant 0.000000e+00 : f32
    %55 = vector.broadcast %cst_54 : f32 to vector<36x32xf32>
    %56 = arith.maximumf %53, %55 : vector<36x32xf32>
    %57 = vector.broadcast %54 : vector<36x1xf32> to vector<36x32xf32>
    %58 = arith.mulf %56, %57 : vector<36x32xf32>
    %59 = arith.truncf %58 : vector<36x32xf32> to vector<36x32xbf16>
    %c7_55 = arith.constant 7 : index
    %c0_56 = arith.constant 0 : index
    %60 = vector.load %arg8[%c7_55, %c0_56] : memref<50x32xbf16, #tpu.memory_space<vmem>>, vector<36x32xbf16>
    tpu.vector_store %arg8[%c7_55, %c0_56], %59 {strides = array<i32>} : memref<50x32xbf16, #tpu.memory_space<vmem>>, vector<36x32xbf16>,
    %cst_57 = arith.constant 0.000000e+00 : f32
    %61 = vector.broadcast %cst_57 : f32 to vector<36x8xf32>
    %c0_58 = arith.constant 0 : index
    %c0_59 = arith.constant 0 : index
    %62 = vector.load %arg8[%c0_58, %c0_59] : memref<50x32xbf16, #tpu.memory_space<vmem>>, vector<36x32xbf16>
    %c0_60 = arith.constant 0 : index
    %c0_61 = arith.constant 0 : index
    %c0_62 = arith.constant 0 : index
    %63 = vector.load %arg5[%c0_60, %c0_61, %c0_62] : memref<9x32x8xbf16, #tpu.memory_space<vmem>>, vector<1x32x8xbf16>
    %64 = vector.shape_cast %63 : vector<1x32x8xbf16> to vector<32x8xbf16>
    %cst_63 = arith.constant dense<0.000000e+00> : vector<36x8xf32>
    %65 = tpu.matmul %62, %64, %cst_63 {dimension_numbers = #tpu.dot_dimension_numbers<[1], [0], [0], [1], [0, 0, 1, 1], [], []>} : vector<36x32xbf16>, vector<32x8xbf16>, vector<36x8xf32> -> vector<36x8xf32>
    %66 = arith.addf %61, %65 : vector<36x8xf32>
    %c1_64 = arith.constant 1 : index
    %c0_65 = arith.constant 0 : index
    %67 = vector.load %arg8[%c1_64, %c0_65] : memref<50x32xbf16, #tpu.memory_space<vmem>>, vector<36x32xbf16>
    %c1_66 = arith.constant 1 : index
    %c0_67 = arith.constant 0 : index
    %c0_68 = arith.constant 0 : index
    %68 = vector.load %arg5[%c1_66, %c0_67, %c0_68] : memref<9x32x8xbf16, #tpu.memory_space<vmem>>, vector<1x32x8xbf16>
    %69 = vector.shape_cast %68 : vector<1x32x8xbf16> to vector<32x8xbf16>
    %cst_69 = arith.constant dense<0.000000e+00> : vector<36x8xf32>
    %70 = tpu.matmul %67, %69, %cst_69 {dimension_numbers = #tpu.dot_dimension_numbers<[1], [0], [0], [1], [0, 0, 1, 1], [], []>} : vector<36x32xbf16>, vector<32x8xbf16>, vector<36x8xf32> -> vector<36x8xf32>
    %71 = arith.addf %66, %70 : vector<36x8xf32>
    %c2_70 = arith.constant 2 : index
    %c0_71 = arith.constant 0 : index
    %72 = vector.load %arg8[%c2_70, %c0_71] : memref<50x32xbf16, #tpu.memory_space<vmem>>, vector<36x32xbf16>
    %c2_72 = arith.constant 2 : index
    %c0_73 = arith.constant 0 : index
    %c0_74 = arith.constant 0 : index
    %73 = vector.load %arg5[%c2_72, %c0_73, %c0_74] : memref<9x32x8xbf16, #tpu.memory_space<vmem>>, vector<1x32x8xbf16>
    %74 = vector.shape_cast %73 : vector<1x32x8xbf16> to vector<32x8xbf16>
    %cst_75 = arith.constant dense<0.000000e+00> : vector<36x8xf32>
    %75 = tpu.matmul %72, %74, %cst_75 {dimension_numbers = #tpu.dot_dimension_numbers<[1], [0], [0], [1], [0, 0, 1, 1], [], []>} : vector<36x32xbf16>, vector<32x8xbf16>, vector<36x8xf32> -> vector<36x8xf32>
    %76 = arith.addf %71, %75 : vector<36x8xf32>
    %c6_76 = arith.constant 6 : index
    %c0_77 = arith.constant 0 : index
    %77 = vector.load %arg8[%c6_76, %c0_77] : memref<50x32xbf16, #tpu.memory_space<vmem>>, vector<36x32xbf16>
    %c3_78 = arith.constant 3 : index
    %c0_79 = arith.constant 0 : index
    %c0_80 = arith.constant 0 : index
    %78 = vector.load %arg5[%c3_78, %c0_79, %c0_80] : memref<9x32x8xbf16, #tpu.memory_space<vmem>>, vector<1x32x8xbf16>
    %79 = vector.shape_cast %78 : vector<1x32x8xbf16> to vector<32x8xbf16>
    %cst_81 = arith.constant dense<0.000000e+00> : vector<36x8xf32>
    %80 = tpu.matmul %77, %79, %cst_81 {dimension_numbers = #tpu.dot_dimension_numbers<[1], [0], [0], [1], [0, 0, 1, 1], [], []>} : vector<36x32xbf16>, vector<32x8xbf16>, vector<36x8xf32> -> vector<36x8xf32>
    %81 = arith.addf %76, %80 : vector<36x8xf32>
    %c7_82 = arith.constant 7 : index
    %c0_83 = arith.constant 0 : index
    %82 = vector.load %arg8[%c7_82, %c0_83] : memref<50x32xbf16, #tpu.memory_space<vmem>>, vector<36x32xbf16>
    %c4_84 = arith.constant 4 : index
    %c0_85 = arith.constant 0 : index
    %c0_86 = arith.constant 0 : index
    %83 = vector.load %arg5[%c4_84, %c0_85, %c0_86] : memref<9x32x8xbf16, #tpu.memory_space<vmem>>, vector<1x32x8xbf16>
    %84 = vector.shape_cast %83 : vector<1x32x8xbf16> to vector<32x8xbf16>
    %cst_87 = arith.constant dense<0.000000e+00> : vector<36x8xf32>
    %85 = tpu.matmul %82, %84, %cst_87 {dimension_numbers = #tpu.dot_dimension_numbers<[1], [0], [0], [1], [0, 0, 1, 1], [], []>} : vector<36x32xbf16>, vector<32x8xbf16>, vector<36x8xf32> -> vector<36x8xf32>
    %86 = arith.addf %81, %85 : vector<36x8xf32>
    %c8_88 = arith.constant 8 : index
    %c0_89 = arith.constant 0 : index
    %87 = vector.load %arg8[%c8_88, %c0_89] : memref<50x32xbf16, #tpu.memory_space<vmem>>, vector<36x32xbf16>
    %c5_90 = arith.constant 5 : index
    %c0_91 = arith.constant 0 : index
    %c0_92 = arith.constant 0 : index
    %88 = vector.load %arg5[%c5_90, %c0_91, %c0_92] : memref<9x32x8xbf16, #tpu.memory_space<vmem>>, vector<1x32x8xbf16>
    %89 = vector.shape_cast %88 : vector<1x32x8xbf16> to vector<32x8xbf16>
    %cst_93 = arith.constant dense<0.000000e+00> : vector<36x8xf32>
    %90 = tpu.matmul %87, %89, %cst_93 {dimension_numbers = #tpu.dot_dimension_numbers<[1], [0], [0], [1], [0, 0, 1, 1], [], []>} : vector<36x32xbf16>, vector<32x8xbf16>, vector<36x8xf32> -> vector<36x8xf32>
    %91 = arith.addf %86, %90 : vector<36x8xf32>
    %c12_94 = arith.constant 12 : index
    %c0_95 = arith.constant 0 : index
    %92 = vector.load %arg8[%c12_94, %c0_95] : memref<50x32xbf16, #tpu.memory_space<vmem>>, vector<36x32xbf16>
    %c6_96 = arith.constant 6 : index
    %c0_97 = arith.constant 0 : index
    %c0_98 = arith.constant 0 : index
    %93 = vector.load %arg5[%c6_96, %c0_97, %c0_98] : memref<9x32x8xbf16, #tpu.memory_space<vmem>>, vector<1x32x8xbf16>
    %94 = vector.shape_cast %93 : vector<1x32x8xbf16> to vector<32x8xbf16>
    %cst_99 = arith.constant dense<0.000000e+00> : vector<36x8xf32>
    %95 = tpu.matmul %92, %94, %cst_99 {dimension_numbers = #tpu.dot_dimension_numbers<[1], [0], [0], [1], [0, 0, 1, 1], [], []>} : vector<36x32xbf16>, vector<32x8xbf16>, vector<36x8xf32> -> vector<36x8xf32>
    %96 = arith.addf %91, %95 : vector<36x8xf32>
    %c13_100 = arith.constant 13 : index
    %c0_101 = arith.constant 0 : index
    %97 = vector.load %arg8[%c13_100, %c0_101] : memref<50x32xbf16, #tpu.memory_space<vmem>>, vector<36x32xbf16>
    %c7_102 = arith.constant 7 : index
    %c0_103 = arith.constant 0 : index
    %c0_104 = arith.constant 0 : index
    %98 = vector.load %arg5[%c7_102, %c0_103, %c0_104] : memref<9x32x8xbf16, #tpu.memory_space<vmem>>, vector<1x32x8xbf16>
    %99 = vector.shape_cast %98 : vector<1x32x8xbf16> to vector<32x8xbf16>
    %cst_105 = arith.constant dense<0.000000e+00> : vector<36x8xf32>
    %100 = tpu.matmul %97, %99, %cst_105 {dimension_numbers = #tpu.dot_dimension_numbers<[1], [0], [0], [1], [0, 0, 1, 1], [], []>} : vector<36x32xbf16>, vector<32x8xbf16>, vector<36x8xf32> -> vector<36x8xf32>
    %101 = arith.addf %96, %100 : vector<36x8xf32>
    %c14_106 = arith.constant 14 : index
    %c0_107 = arith.constant 0 : index
    %102 = vector.load %arg8[%c14_106, %c0_107] : memref<50x32xbf16, #tpu.memory_space<vmem>>, vector<36x32xbf16>
    %c8_108 = arith.constant 8 : index
    %c0_109 = arith.constant 0 : index
    %c0_110 = arith.constant 0 : index
    %103 = vector.load %arg5[%c8_108, %c0_109, %c0_110] : memref<9x32x8xbf16, #tpu.memory_space<vmem>>, vector<1x32x8xbf16>
    %104 = vector.shape_cast %103 : vector<1x32x8xbf16> to vector<32x8xbf16>
    %cst_111 = arith.constant dense<0.000000e+00> : vector<36x8xf32>
    %105 = tpu.matmul %102, %104, %cst_111 {dimension_numbers = #tpu.dot_dimension_numbers<[1], [0], [0], [1], [0, 0, 1, 1], [], []>} : vector<36x32xbf16>, vector<32x8xbf16>, vector<36x8xf32> -> vector<36x8xf32>
    %106 = arith.addf %101, %105 : vector<36x8xf32>
    %cst_112 = arith.constant 0.000000e+00 : f32
    %107 = vector.broadcast %cst_112 : f32 to vector<36x8xf32>
    %108 = arith.maximumf %106, %107 : vector<36x8xf32>
    %109 = arith.truncf %108 : vector<36x8xf32> to vector<36x8xbf16>
    %c0_113 = arith.constant 0 : index
    %c0_114 = arith.constant 0 : index
    %110 = vector.load %arg6[%c0_113, %c0_114] : memref<8x32xbf16, #tpu.memory_space<vmem>>, vector<8x32xbf16>
    %cst_115 = arith.constant dense<0.000000e+00> : vector<36x32xf32>
    %111 = tpu.matmul %109, %110, %cst_115 {dimension_numbers = #tpu.dot_dimension_numbers<[1], [0], [0], [1], [0, 0, 1, 1], [], []>} : vector<36x8xbf16>, vector<8x32xbf16>, vector<36x32xf32> -> vector<36x32xf32>
    %112 = arith.addf %53, %111 : vector<36x32xf32>
    %cst_116 = arith.constant 0.000000e+00 : f32
    %113 = vector.broadcast %cst_116 : f32 to vector<36x32xf32>
    %114 = arith.maximumf %112, %113 : vector<36x32xf32>
    %115 = vector.broadcast %54 : vector<36x1xf32> to vector<36x32xf32>
    %116 = arith.mulf %114, %115 : vector<36x32xf32>
    %117 = arith.truncf %116 : vector<36x32xf32> to vector<36x32xbf16>
    %c7_117 = arith.constant 7 : index
    %c0_118 = arith.constant 0 : index
    %118 = vector.load %arg8[%c7_117, %c0_118] : memref<50x32xbf16, #tpu.memory_space<vmem>>, vector<36x32xbf16>
    tpu.vector_store %arg8[%c7_117, %c0_118], %117 {strides = array<i32>} : memref<50x32xbf16, #tpu.memory_space<vmem>>, vector<36x32xbf16>,
    %cst_119 = arith.constant 0.000000e+00 : f32
    %119 = vector.broadcast %cst_119 : f32 to vector<36x8xf32>
    %c0_120 = arith.constant 0 : index
    %c0_121 = arith.constant 0 : index
    %120 = vector.load %arg8[%c0_120, %c0_121] : memref<50x32xbf16, #tpu.memory_space<vmem>>, vector<36x32xbf16>
    %c0_122 = arith.constant 0 : index
    %c0_123 = arith.constant 0 : index
    %c0_124 = arith.constant 0 : index
    %121 = vector.load %arg5[%c0_122, %c0_123, %c0_124] : memref<9x32x8xbf16, #tpu.memory_space<vmem>>, vector<1x32x8xbf16>
    %122 = vector.shape_cast %121 : vector<1x32x8xbf16> to vector<32x8xbf16>
    %cst_125 = arith.constant dense<0.000000e+00> : vector<36x8xf32>
    %123 = tpu.matmul %120, %122, %cst_125 {dimension_numbers = #tpu.dot_dimension_numbers<[1], [0], [0], [1], [0, 0, 1, 1], [], []>} : vector<36x32xbf16>, vector<32x8xbf16>, vector<36x8xf32> -> vector<36x8xf32>
    %124 = arith.addf %119, %123 : vector<36x8xf32>
    %c1_126 = arith.constant 1 : index
    %c0_127 = arith.constant 0 : index
    %125 = vector.load %arg8[%c1_126, %c0_127] : memref<50x32xbf16, #tpu.memory_space<vmem>>, vector<36x32xbf16>
    %c1_128 = arith.constant 1 : index
    %c0_129 = arith.constant 0 : index
    %c0_130 = arith.constant 0 : index
    %126 = vector.load %arg5[%c1_128, %c0_129, %c0_130] : memref<9x32x8xbf16, #tpu.memory_space<vmem>>, vector<1x32x8xbf16>
    %127 = vector.shape_cast %126 : vector<1x32x8xbf16> to vector<32x8xbf16>
    %cst_131 = arith.constant dense<0.000000e+00> : vector<36x8xf32>
    %128 = tpu.matmul %125, %127, %cst_131 {dimension_numbers = #tpu.dot_dimension_numbers<[1], [0], [0], [1], [0, 0, 1, 1], [], []>} : vector<36x32xbf16>, vector<32x8xbf16>, vector<36x8xf32> -> vector<36x8xf32>
    %129 = arith.addf %124, %128 : vector<36x8xf32>
    %c2_132 = arith.constant 2 : index
    %c0_133 = arith.constant 0 : index
    %130 = vector.load %arg8[%c2_132, %c0_133] : memref<50x32xbf16, #tpu.memory_space<vmem>>, vector<36x32xbf16>
    %c2_134 = arith.constant 2 : index
    %c0_135 = arith.constant 0 : index
    %c0_136 = arith.constant 0 : index
    %131 = vector.load %arg5[%c2_134, %c0_135, %c0_136] : memref<9x32x8xbf16, #tpu.memory_space<vmem>>, vector<1x32x8xbf16>
    %132 = vector.shape_cast %131 : vector<1x32x8xbf16> to vector<32x8xbf16>
    %cst_137 = arith.constant dense<0.000000e+00> : vector<36x8xf32>
    %133 = tpu.matmul %130, %132, %cst_137 {dimension_numbers = #tpu.dot_dimension_numbers<[1], [0], [0], [1], [0, 0, 1, 1], [], []>} : vector<36x32xbf16>, vector<32x8xbf16>, vector<36x8xf32> -> vector<36x8xf32>
    %134 = arith.addf %129, %133 : vector<36x8xf32>
    %c6_138 = arith.constant 6 : index
    %c0_139 = arith.constant 0 : index
    %135 = vector.load %arg8[%c6_138, %c0_139] : memref<50x32xbf16, #tpu.memory_space<vmem>>, vector<36x32xbf16>
    %c3_140 = arith.constant 3 : index
    %c0_141 = arith.constant 0 : index
    %c0_142 = arith.constant 0 : index
    %136 = vector.load %arg5[%c3_140, %c0_141, %c0_142] : memref<9x32x8xbf16, #tpu.memory_space<vmem>>, vector<1x32x8xbf16>
    %137 = vector.shape_cast %136 : vector<1x32x8xbf16> to vector<32x8xbf16>
    %cst_143 = arith.constant dense<0.000000e+00> : vector<36x8xf32>
    %138 = tpu.matmul %135, %137, %cst_143 {dimension_numbers = #tpu.dot_dimension_numbers<[1], [0], [0], [1], [0, 0, 1, 1], [], []>} : vector<36x32xbf16>, vector<32x8xbf16>, vector<36x8xf32> -> vector<36x8xf32>
    %139 = arith.addf %134, %138 : vector<36x8xf32>
    %c7_144 = arith.constant 7 : index
    %c0_145 = arith.constant 0 : index
    %140 = vector.load %arg8[%c7_144, %c0_145] : memref<50x32xbf16, #tpu.memory_space<vmem>>, vector<36x32xbf16>
    %c4_146 = arith.constant 4 : index
    %c0_147 = arith.constant 0 : index
    %c0_148 = arith.constant 0 : index
    %141 = vector.load %arg5[%c4_146, %c0_147, %c0_148] : memref<9x32x8xbf16, #tpu.memory_space<vmem>>, vector<1x32x8xbf16>
    %142 = vector.shape_cast %141 : vector<1x32x8xbf16> to vector<32x8xbf16>
    %cst_149 = arith.constant dense<0.000000e+00> : vector<36x8xf32>
    %143 = tpu.matmul %140, %142, %cst_149 {dimension_numbers = #tpu.dot_dimension_numbers<[1], [0], [0], [1], [0, 0, 1, 1], [], []>} : vector<36x32xbf16>, vector<32x8xbf16>, vector<36x8xf32> -> vector<36x8xf32>
    %144 = arith.addf %139, %143 : vector<36x8xf32>
    %c8_150 = arith.constant 8 : index
    %c0_151 = arith.constant 0 : index
    %145 = vector.load %arg8[%c8_150, %c0_151] : memref<50x32xbf16, #tpu.memory_space<vmem>>, vector<36x32xbf16>
    %c5_152 = arith.constant 5 : index
    %c0_153 = arith.constant 0 : index
    %c0_154 = arith.constant 0 : index
    %146 = vector.load %arg5[%c5_152, %c0_153, %c0_154] : memref<9x32x8xbf16, #tpu.memory_space<vmem>>, vector<1x32x8xbf16>
    %147 = vector.shape_cast %146 : vector<1x32x8xbf16> to vector<32x8xbf16>
    %cst_155 = arith.constant dense<0.000000e+00> : vector<36x8xf32>
    %148 = tpu.matmul %145, %147, %cst_155 {dimension_numbers = #tpu.dot_dimension_numbers<[1], [0], [0], [1], [0, 0, 1, 1], [], []>} : vector<36x32xbf16>, vector<32x8xbf16>, vector<36x8xf32> -> vector<36x8xf32>
    %149 = arith.addf %144, %148 : vector<36x8xf32>
    %c12_156 = arith.constant 12 : index
    %c0_157 = arith.constant 0 : index
    %150 = vector.load %arg8[%c12_156, %c0_157] : memref<50x32xbf16, #tpu.memory_space<vmem>>, vector<36x32xbf16>
    %c6_158 = arith.constant 6 : index
    %c0_159 = arith.constant 0 : index
    %c0_160 = arith.constant 0 : index
    %151 = vector.load %arg5[%c6_158, %c0_159, %c0_160] : memref<9x32x8xbf16, #tpu.memory_space<vmem>>, vector<1x32x8xbf16>
    %152 = vector.shape_cast %151 : vector<1x32x8xbf16> to vector<32x8xbf16>
    %cst_161 = arith.constant dense<0.000000e+00> : vector<36x8xf32>
    %153 = tpu.matmul %150, %152, %cst_161 {dimension_numbers = #tpu.dot_dimension_numbers<[1], [0], [0], [1], [0, 0, 1, 1], [], []>} : vector<36x32xbf16>, vector<32x8xbf16>, vector<36x8xf32> -> vector<36x8xf32>
    %154 = arith.addf %149, %153 : vector<36x8xf32>
    %c13_162 = arith.constant 13 : index
    %c0_163 = arith.constant 0 : index
    %155 = vector.load %arg8[%c13_162, %c0_163] : memref<50x32xbf16, #tpu.memory_space<vmem>>, vector<36x32xbf16>
    %c7_164 = arith.constant 7 : index
    %c0_165 = arith.constant 0 : index
    %c0_166 = arith.constant 0 : index
    %156 = vector.load %arg5[%c7_164, %c0_165, %c0_166] : memref<9x32x8xbf16, #tpu.memory_space<vmem>>, vector<1x32x8xbf16>
    %157 = vector.shape_cast %156 : vector<1x32x8xbf16> to vector<32x8xbf16>
    %cst_167 = arith.constant dense<0.000000e+00> : vector<36x8xf32>
    %158 = tpu.matmul %155, %157, %cst_167 {dimension_numbers = #tpu.dot_dimension_numbers<[1], [0], [0], [1], [0, 0, 1, 1], [], []>} : vector<36x32xbf16>, vector<32x8xbf16>, vector<36x8xf32> -> vector<36x8xf32>
    %159 = arith.addf %154, %158 : vector<36x8xf32>
    %c14_168 = arith.constant 14 : index
    %c0_169 = arith.constant 0 : index
    %160 = vector.load %arg8[%c14_168, %c0_169] : memref<50x32xbf16, #tpu.memory_space<vmem>>, vector<36x32xbf16>
    %c8_170 = arith.constant 8 : index
    %c0_171 = arith.constant 0 : index
    %c0_172 = arith.constant 0 : index
    %161 = vector.load %arg5[%c8_170, %c0_171, %c0_172] : memref<9x32x8xbf16, #tpu.memory_space<vmem>>, vector<1x32x8xbf16>
    %162 = vector.shape_cast %161 : vector<1x32x8xbf16> to vector<32x8xbf16>
    %cst_173 = arith.constant dense<0.000000e+00> : vector<36x8xf32>
    %163 = tpu.matmul %160, %162, %cst_173 {dimension_numbers = #tpu.dot_dimension_numbers<[1], [0], [0], [1], [0, 0, 1, 1], [], []>} : vector<36x32xbf16>, vector<32x8xbf16>, vector<36x8xf32> -> vector<36x8xf32>
    %164 = arith.addf %159, %163 : vector<36x8xf32>
    %cst_174 = arith.constant 0.000000e+00 : f32
    %165 = vector.broadcast %cst_174 : f32 to vector<36x8xf32>
    %166 = arith.maximumf %164, %165 : vector<36x8xf32>
    %167 = arith.truncf %166 : vector<36x8xf32> to vector<36x8xbf16>
    %c0_175 = arith.constant 0 : index
    %c0_176 = arith.constant 0 : index
    %168 = vector.load %arg6[%c0_175, %c0_176] : memref<8x32xbf16, #tpu.memory_space<vmem>>, vector<8x32xbf16>
    %cst_177 = arith.constant dense<0.000000e+00> : vector<36x32xf32>
    %169 = tpu.matmul %167, %168, %cst_177 {dimension_numbers = #tpu.dot_dimension_numbers<[1], [0], [0], [1], [0, 0, 1, 1], [], []>} : vector<36x8xbf16>, vector<8x32xbf16>, vector<36x32xf32> -> vector<36x32xf32>
    %170 = arith.addf %112, %169 : vector<36x32xf32>
    %cst_178 = arith.constant 0.000000e+00 : f32
    %171 = vector.broadcast %cst_178 : f32 to vector<36x32xf32>
    %172 = arith.maximumf %170, %171 : vector<36x32xf32>
    %c0_179 = arith.constant 0 : index
    %c0_180 = arith.constant 0 : index
    %c0_181 = arith.constant 0 : index
    %173 = vector.load %arg7[%c0_179, %c0_180, %c0_181] : memref<1x36x32xf32, #tpu.memory_space<vmem>>, vector<1x36x32xf32>
    %174 = vector.shape_cast %173 : vector<1x36x32xf32> to vector<36x32xf32>
    %175 = vector.shape_cast %172 : vector<36x32xf32> to vector<1x36x32xf32>
    tpu.vector_store %arg7[%c0_179, %c0_180, %c0_181], %175 {strides = array<i32>} : memref<1x36x32xf32, #tpu.memory_space<vmem>>, vector<1x36x32xf32>,
    return
  }
  func.func @transform_0(%arg0: i32) -> (i32, i32, i32) {
    %c0_i32 = arith.constant 0 : i32
    %c0_i32_0 = arith.constant 0 : i32
    %c0_i32_1 = arith.constant 0 : i32
    return %arg0, %c0_i32, %c0_i32_0 : i32, i32, i32
  }
  func.func @transform_1(%arg0: i32) -> (i32, i32) {
    %c0_i32 = arith.constant 0 : i32
    %c0_i32_0 = arith.constant 0 : i32
    %c0_i32_1 = arith.constant 0 : i32
    return %c0_i32, %c0_i32_0 : i32, i32
  }
  func.func @transform_2(%arg0: i32) -> (i32, i32, i32) {
    %c0_i32 = arith.constant 0 : i32
    %c0_i32_0 = arith.constant 0 : i32
    %c0_i32_1 = arith.constant 0 : i32
    %c0_i32_2 = arith.constant 0 : i32
    return %c0_i32, %c0_i32_0, %c0_i32_1 : i32, i32, i32
  }
  func.func @transform_3(%arg0: i32) -> (i32, i32) {
    %c0_i32 = arith.constant 0 : i32
    %c0_i32_0 = arith.constant 0 : i32
    %c0_i32_1 = arith.constant 0 : i32
    return %c0_i32, %c0_i32_0 : i32, i32
  }
  func.func @transform_4(%arg0: i32) -> (i32, i32, i32) {
    %c0_i32 = arith.constant 0 : i32
    %c0_i32_0 = arith.constant 0 : i32
    %c0_i32_1 = arith.constant 0 : i32
    %c0_i32_2 = arith.constant 0 : i32
    return %c0_i32, %c0_i32_0, %c0_i32_1 : i32, i32, i32
  }
  func.func @transform_5(%arg0: i32) -> (i32, i32) {
    %c0_i32 = arith.constant 0 : i32
    %c0_i32_0 = arith.constant 0 : i32
    %c0_i32_1 = arith.constant 0 : i32
    return %c0_i32, %c0_i32_0 : i32, i32
  }
  func.func @transform_6(%arg0: i32) -> (i32, i32, i32) {
    %c0_i32 = arith.constant 0 : i32
    %c0_i32_0 = arith.constant 0 : i32
    %c0_i32_1 = arith.constant 0 : i32
    return %arg0, %c0_i32, %c0_i32_0 : i32, i32, i32
  }
}

</mosaic_0001>

<llo_original>
// kernel: encoder_forward.4
$region0: #{encoder_forward.4}
  #allocation0 [shape = 'u32[]', space=smem, size = 0x4, offset = 0x4, fixed_abs, tag = 'smem constant byte address 0x4 - core index']
  #allocation1 [shape = 'u32[144,128]{1,0:T(1,128)}', space=vmem, size = 0x12000, scoped, tag = 'internal scratch']
  %s0 = inlined_call_operand.vmem [shape: bf16[2,4,31,16], index: 0, kind: input, shape index: {}]
  %s1 = inlined_call_operand.vmem [shape: bf16[16,16,32], index: 1, kind: input, shape index: {}]
  %s2 = inlined_call_operand.vmem [shape: f32[1,32], index: 2, kind: input, shape index: {}]
  %s3 = inlined_call_operand.vmem [shape: bf16[2,25,32], index: 3, kind: output, shape index: {}]
  %s4 = sld [smem:[#allocation0]]
  $region45: #{encoder_forward.4} parent=0
    _
  %s6 = ssub.s32 1, %s4
  %s7 = scalar_select 0, %s6, %s4
  loop: start=0, step=1, limit=4
  $region2: #{encoder_forward.4} parent=0 // loop_pre_header
    _
  $region3: #{encoder_forward.4} parent=0 // loop_header
    %s9 = sphi 0, %s13
    %p10 = scmp.ge.s32.totalorder %s9, 4
    %s19 = sphi 0, %s21
    %s22 = sphi 0, %s19
    %s23 = sphi 0, %s22
    %s39 = sphi 0, %s23
    %s43 = sphi 0, %s43
    %s45 = sphi 0, %s43
    %s46 = sphi 0, %s45
    %s60 = sphi 0, %s46
    %s64 = sphi 0, %s64
    %s66 = sphi 0, %s64
    %s67 = sphi 0, %s66
    %s81 = sphi 0, %s67
    %s87 = sphi 0, %s89
    %s90 = sphi 0, %s87
    %s91 = sphi 0, %s90
    %s107 = sphi 0, %s91
  $region4: #{encoder_forward.4} parent=0 // loop_header_branch
    %12 = sbr.rel (%p10) target = $region8
  $region5: #{encoder_forward.4} parent=0 // loop_body
    %s14 = ssub.s32 %s9, 1
    %s15 = ssub.s32 %s9, 2
    %s16 = sadd.s32 %s9, 1
    %s17 = ssub.s32 %s9, %s16
    %p18 = scmp.eq.s32.totalorder %s17, 0
    %s20 = sadd.s32 %s19, 1
    %s21 = scalar_select %p18, %s19, %s20
    %p24 = pneg %p18
    %p25 = scmp.eq.s32.totalorder %s9, 1
    %p26 = por %p24, %p25
    %p27 = scmp.ne.s32.totalorder %s19, %s22
    %p28 = scmp.eq.s32.totalorder %s9, 0
    %p29 = por %p27, %p28
    %p30 = scmp.ne.s32.totalorder %s19, %s22
    %p31 = scmp.eq.s32.totalorder %s14, 1
    %p32 = por %p30, %p31
    %p33 = scmp.ne.s32.totalorder %s22, %s23
    %p34 = scmp.eq.s32.totalorder %s14, 0
    %p35 = por %p33, %p34
    %p36 = scmp.ne.s32.totalorder %s22, %s23
    %p37 = scmp.eq.s32.totalorder %s15, 1
    %p38 = por %p36, %p37
    %p40 = scmp.ne.s32.totalorder %s23, %s39
    %p41 = scmp.eq.s32.totalorder %s15, 0
    %p42 = por %p40, %p41
    %s44 = sadd.s32 %s43, 1
    %p47 = scmp.eq.s32.totalorder %s9, 1
    %p48 = scmp.ne.s32.totalorder %s43, %s45
    %p49 = scmp.eq.s32.totalorder %s9, 0
    %p50 = por %p48, %p49
    %p51 = scmp.ne.s32.totalorder %s43, %s45
    %p52 = scmp.eq.s32.totalorder %s14, 1
    %p53 = por %p51, %p52
    %p54 = scmp.ne.s32.totalorder %s45, %s46
    %p55 = scmp.eq.s32.totalorder %s14, 0
    %p56 = por %p54, %p55
    %p57 = scmp.ne.s32.totalorder %s45, %s46
    %p58 = scmp.eq.s32.totalorder %s15, 1
    %p59 = por %p57, %p58
    %p61 = scmp.ne.s32.totalorder %s46, %s60
    %p62 = scmp.eq.s32.totalorder %s15, 0
    %p63 = por %p61, %p62
    %s65 = sadd.s32 %s64, 1
    %p68 = scmp.eq.s32.totalorder %s9, 1
    %p69 = scmp.ne.s32.totalorder %s64, %s66
    %p70 = scmp.eq.s32.totalorder %s9, 0
    %p71 = por %p69, %p70
    %p72 = scmp.ne.s32.totalorder %s64, %s66
    %p73 = scmp.eq.s32.totalorder %s14, 1
    %p74 = por %p72, %p73
    %p75 = scmp.ne.s32.totalorder %s66, %s67
    %p76 = scmp.eq.s32.totalorder %s14, 0
    %p77 = por %p75, %p76
    %p78 = scmp.ne.s32.totalorder %s66, %s67
    %p79 = scmp.eq.s32.totalorder %s15, 1
    %p80 = por %p78, %p79
    %p82 = scmp.ne.s32.totalorder %s67, %s81
    %p83 = scmp.eq.s32.totalorder %s15, 0
    %p84 = por %p82, %p83
    %s85 = ssub.s32 %s9, %s16
    %p86 = scmp.eq.s32.totalorder %s85, 0
    %s88 = sadd.s32 %s87, 1
    %s89 = scalar_select %p86, %s87, %s88
    %p92 = pneg %p86
    %p93 = scmp.eq.s32.totalorder %s9, 1
    %p94 = por %p92, %p93
    %p95 = scmp.ne.s32.totalorder %s87, %s90
    %p96 = scmp.eq.s32.totalorder %s9, 0
    %p97 = por %p95, %p96
    %p98 = scmp.ne.s32.totalorder %s87, %s90
    %p99 = scmp.eq.s32.totalorder %s14, 1
    %p100 = por %p98, %p99
    %p101 = scmp.ne.s32.totalorder %s90, %s91
    %p102 = scmp.eq.s32.totalorder %s14, 0
    %p103 = por %p101, %p102
    %p104 = scmp.ne.s32.totalorder %s90, %s91
    %p105 = scmp.eq.s32.totalorder %s15, 1
    %p106 = por %p104, %p105
    %p108 = scmp.ne.s32.totalorder %s91, %s107
    %p109 = scmp.eq.s32.totalorder %s15, 0
    %p110 = por %p108, %p109
    %p111 = scmp.le.s32.totalorder 1, %s9
    %p112 = scmp.lt.s32.totalorder %s9, 3
    %p113 = pnand %p111, %p112
    %p114 = pneg %p113
    // Predicated region
    $region9: #{encoder_forward.4} parent=5 // pred_check
      _
    $region10: #{encoder_forward.4} parent=5 // pred_check_branch
      %116 = sbr.rel (%p113) target = $region12
    $region11: #{encoder_forward.4} parent=5 // pred_region
      %s117 = ssub.s32 %s9, 1
      // Predicated region
      $region13: #{encoder_forward.4} parent=11 // pred_check
        %p118 = pneg %p56
      $region14: #{encoder_forward.4} parent=11 // pred_check_branch
        %120 = sbr.rel (%p118) target = $region16
      $region15: #{encoder_forward.4} parent=11 // pred_region
        _
      $region16: #{encoder_forward.4} parent=11 // pred_fallthru
        _
      // Predicated region
      $region17: #{encoder_forward.4} parent=11 // pred_check
        %p121 = pneg %p77
      $region18: #{encoder_forward.4} parent=11 // pred_check_branch
        %123 = sbr.rel (%p121) target = $region20
      $region19: #{encoder_forward.4} parent=11 // pred_region
        _
      $region20: #{encoder_forward.4} parent=11 // pred_fallthru
        _
    $region12: #{encoder_forward.4} parent=5 // pred_fallthru
      _
    %p124 = scmp.lt.s32.totalorder %s9, 2
    // Predicated region
    $region21: #{encoder_forward.4} parent=5 // pred_check
      %p125 = pneg %p124
    $region22: #{encoder_forward.4} parent=5 // pred_check_branch
      %127 = sbr.rel (%p125) target = $region24
    $region23: #{encoder_forward.4} parent=5 // pred_region
      // Predicated region
      $region25: #{encoder_forward.4} parent=23 // pred_check
        %p128 = pneg %p29
      $region26: #{encoder_forward.4} parent=23 // pred_check_branch
        %130 = sbr.rel (%p128) target = $region28
      $region27: #{encoder_forward.4} parent=23 // pred_region
        %p131 = scmp.lt.s32.totalorder %s9, 1
        %s132 = scalar_select %p131, %s9, 1
        %s133 = smul.addr %s132, 16
        %s134 = smul.addr %s133, 4
        %s135 = scalar_lea.vmem %s0, %s134
      $region28: #{encoder_forward.4} parent=23 // pred_fallthru
        _
    $region24: #{encoder_forward.4} parent=5 // pred_fallthru
      _
    %p136 = scmp.le.s32.totalorder 1, %s9
    %p137 = scmp.lt.s32.totalorder %s9, 3
    %p138 = pnand %p136, %p137
    %p139 = pneg %p138
    // Predicated region
    $region29: #{encoder_forward.4} parent=5 // pred_check
      _
    $region30: #{encoder_forward.4} parent=5 // pred_check_branch
      %141 = sbr.rel (%p138) target = $region32
    $region31: #{encoder_forward.4} parent=5 // pred_region
      %s142 = ssub.s32 %s9, 1
      %p143 = scmp.lt.s32.totalorder %s14, 1
      %s144 = scalar_select %p143, %s14, 1
      %s145 = smul.addr %s144, 16
      %s146 = smul.addr %s145, 4
      %s147 = scalar_lea.vmem %s0, %s146
      %p148 = pneg %p35
      %p149 = pneg %p32
      %p150 = pneg %p56
      %p151 = pneg %p53
      %p152 = pneg %p77
      %p153 = pneg %p74
      %p154 = pneg %p103
      %p155 = pneg %p100
      %p156 = scmp.lt.s32.totalorder %s14, 1
      %s157 = scalar_select %p156, %s14, 1
      %s158 = smul.addr %s157, 4
      %s159 = smul.addr %s158, 4
      %s160 = scalar_lea.vmem %s3, %s159
      %p161 = scmp.lt.s32.totalorder %s14, 1
      %s162 = scalar_select %p161, %s14, 1
      %s163 = smul.addr %s162, 16
      %s164 = smul.addr %s163, 4
      %s165 = scalar_lea.vmem %s0, %s164
      %p166 = scmp.lt.s32.totalorder %s14, 1
      %s167 = scalar_select %p166, %s14, 1
      %s168 = smul.addr %s167, 4
      %s169 = smul.addr %s168, 4
      %s170 = scalar_lea.vmem %s3, %s169
      %v172 = vld [vmem:[%s165] sm:$0xf]
      %v173 = vld [vmem:[%s165 + $0x4] sm:$0xf]
      %v174 = vld [vmem:[%s165 + $0x8] sm:$0xf]
      %v175 = vld [vmem:[%s165 + $0xc] sm:$0x1]
      %v176 = vld [vmem:[%s1] sm:$0xf]
      %v177 = vld [vmem:[%s1 + $0x4] sm:$0xf]
      %s178 = scalar_lea.vmem %s1, 16
      %v179 = vld [vmem:[%s178] sm:$0xf]
      %v180 = vld [vmem:[%s178 + $0x4] sm:$0xf]
      %v185 = vunpack.c.l.b16 %v172
      %v186 = vunpack.c.l.b16 %v173
      %v187 = vunpack.c.l.b16 %v174
      %v188 = vunpack.c.l.b16 %v175
      %v189 = vpack.c.b16 %v186, %v185
      %v190 = vpack.c.b16 %v188, %v187
      %vm191 = vsmask.f32 7424
      %v193 = vshrl.u32 %v189, 16
      %v195 = vshll.u32 %v189, 16
      %v197 = vrot.slane %v195, 1
      %v198 = vor.u32 %v193, %v197
      %v200 = vshll.u32 %v190, 16
      %v202 = vrot.slane %v200, 1
      %v203 = vsel %vm191, %v198, %v202
      %v204 = vshrl.u32 %v190, 16
      %v206 = vor.u32 %v204, %v202
      %v209 = vunpack.c.l.b16 %v179
      %v210 = vunpack.c.l.b16 %v180
      %v211 = vpack.c.b16 %v210, %v209
      %vm213 = vcmask 130048
      %v215 = vsel %vm213, %v203, 0
      %v218 = vsel %vm213, %v206, 0
      %220 = vmatprep.subr.bf16.mxu0 0
      %221 = vmatpush1.bf16.msra.mxu0 0
      %222 = vmatprep.subr.bf16.mxu0 0
      %223 = vmatpush1.bf16.msra.mxu0 0
      %224 = vmatprep.subr.bf16.mxu0 0
      %225 = vmatpush1.bf16.msra.mxu0 0
      %226 = vmatprep.subr.bf16.mxu0 0
      %227 = vmatpush1.bf16.msra.mxu0 0
      %228 = vmatprep.subr.bf16.mxu0 0
      %229 = vmatpush1.bf16.msra.mxu0 0
      %230 = vmatprep.subr.bf16.mxu0 0
      %231 = vmatpush1.bf16.msra.mxu0 0
      %232 = vmatprep.subr.bf16.mxu0 0
      %233 = vmatpush1.bf16.msra.mxu0 0
      %234 = vmatprep.subr.bf16.mxu0 0
      %235 = vmatpush1.bf16.msra.mxu0 %v211
      %236 = vmatprep.subr.bf16.mxu0 0
      %237 = vmatpush2.bf16.msra.mxu0 0
      %238 = vmatprep.subr.bf16.mxu0 0
      %239 = vmatpush2.bf16.msra.mxu0 0
      %240 = vmatprep.subr.bf16.mxu0 0
      %241 = vmatpush2.bf16.msra.mxu0 0
      %242 = vmatprep.subr.bf16.mxu0 0
      %243 = vmatpush2.bf16.msra.mxu0 0
      %244 = vmatprep.subr.bf16.mxu0 0
      %245 = vmatpush2.bf16.msra.mxu0 0
      %246 = vmatprep.subr.bf16.mxu0 0
      %247 = vmatpush2.bf16.msra.mxu0 0
      %248 = vmatprep.subr.bf16.mxu0 0
      %249 = vmatpush2.bf16.msra.mxu0 0
      %250 = vmatprep.subr.bf16.mxu0 0
      %251 = vmatpush2.bf16.msra.mxu0 0
      %252 = vmatprep.mubr.bf16.mxu0 0
      %253 = vmatmul.mubr.bf16.gmra.mxu0 %v215
      %v254 = vpop.f32.mrf.mxu0
      %v255 = vadd.f32 0.0, %v254
      %v256 = vpop.f32.mrf.mxu0
      %v257 = vpop.f32.mrf.mxu0
      %v258 = vadd.f32 0.0, %v257
      %v259 = vpop.f32.mrf.mxu0
      %260 = vmatprep.mubr.bf16.mxu0 0
      %261 = vmatmul.mubr.bf16.gmra.mxu0 %v218
      %v262 = vpop.f32.mrf.mxu0
      %v263 = vadd.f32 0.0, %v262
      %v264 = vpop.f32.mrf.mxu0
      %v265 = vpop.f32.mrf.mxu0
      %v266 = vadd.f32 0.0, %v265
      %v267 = vpop.f32.mrf.mxu0
      %268 = vdwg.mxu0
      %v271 = vunpack.c.l.b16 %v176
      %v272 = vunpack.c.l.b16 %v177
      %v273 = vpack.c.b16 %v272, %v271
      %v275 = vsel %vm213, %v189, 0
      %v277 = vsel %vm213, %v190, 0
      %279 = vmatprep.subr.bf16.mxu0 0
      %280 = vmatpush1.bf16.msra.mxu0 0
      %281 = vmatprep.subr.bf16.mxu0 0
      %282 = vmatpush1.bf16.msra.mxu0 0
      %283 = vmatprep.subr.bf16.mxu0 0
      %284 = vmatpush1.bf16.msra.mxu0 0
      %285 = vmatprep.subr.bf16.mxu0 0
      %286 = vmatpush1.bf16.msra.mxu0 0
      %287 = vmatprep.subr.bf16.mxu0 0
      %288 = vmatpush1.bf16.msra.mxu0 0
      %289 = vmatprep.subr.bf16.mxu0 0
      %290 = vmatpush1.bf16.msra.mxu0 0
      %291 = vmatprep.subr.bf16.mxu0 0
      %292 = vmatpush1.bf16.msra.mxu0 0
      %293 = vmatprep.subr.bf16.mxu0 0
      %294 = vmatpush1.bf16.msra.mxu0 %v273
      %295 = vmatprep.subr.bf16.mxu0 0
      %296 = vmatpush2.bf16.msra.mxu0 0
      %297 = vmatprep.subr.bf16.mxu0 0
      %298 = vmatpush2.bf16.msra.mxu0 0
      %299 = vmatprep.subr.bf16.mxu0 0
      %300 = vmatpush2.bf16.msra.mxu0 0
      %301 = vmatprep.subr.bf16.mxu0 0
      %302 = vmatpush2.bf16.msra.mxu0 0
      %303 = vmatprep.subr.bf16.mxu0 0
      %304 = vmatpush2.bf16.msra.mxu0 0
      %305 = vmatprep.subr.bf16.mxu0 0
      %306 = vmatpush2.bf16.msra.mxu0 0
      %307 = vmatprep.subr.bf16.mxu0 0
      %308 = vmatpush2.bf16.msra.mxu0 0
      %309 = vmatprep.subr.bf16.mxu0 0
      %310 = vmatpush2.bf16.msra.mxu0 0
      %311 = vmatprep.mubr.bf16.mxu0 0
      %312 = vmatmul.mubr.bf16.gmra.mxu0 %v275
      %v313 = vpop.f32.mrf.mxu0
      %v314 = vadd.f32 %v255, %v313
      %v315 = vpop.f32.mrf.mxu0
      %v316 = vpop.f32.mrf.mxu0
      %v317 = vadd.f32 %v258, %v316
      %v318 = vpop.f32.mrf.mxu0
      %319 = vmatprep.mubr.bf16.mxu0 0
      %320 = vmatmul.mubr.bf16.gmra.mxu0 %v277
      %v321 = vpop.f32.mrf.mxu0
      %v322 = vadd.f32 %v263, %v321
      %v323 = vpop.f32.mrf.mxu0
      %v324 = vpop.f32.mrf.mxu0
      %v325 = vadd.f32 %v266, %v324
      %v326 = vpop.f32.mrf.mxu0
      %327 = vdwg.mxu0
      %v328 = vld [vmem:[%s165] sm:$0xc]
      %v329 = vld [vmem:[%s165 + $0xc] sm:$0x7]
      %s330 = scalar_lea.vmem %s1, 64
      %v331 = vld [vmem:[%s330] sm:$0xf]
      %v332 = vld [vmem:[%s330 + $0x4] sm:$0xf]
      %v335 = vunpack.c.l.b16 %v328
      %v336 = vunpack.c.l.b16 %v329
      %v337 = vpack.c.b16 %v186, %v335
      %v338 = vpack.c.b16 %v336, %v187
      %vm339 = vsmask.f32 5376
      %v341 = vshrl.u32 %v337, 16
      %v343 = vrot.slane %v341, 2
      %v344 = vshll.u32 %v337, 16
      %v346 = vrot.slane %v344, 3
      %v347 = vor.u32 %v343, %v346
      %v349 = vshrl.u32 %v338, 16
      %v351 = vrot.slane %v349, 2
      %v352 = vshll.u32 %v338, 16
      %v354 = vrot.slane %v352, 3
      %v355 = vor.u32 %v351, %v354
      %v356 = vsel %vm339, %v347, %v355
      %v359 = vunpack.c.l.b16 %v331
      %v360 = vunpack.c.l.b16 %v332
      %v361 = vpack.c.b16 %v360, %v359
      %v364 = vsel %vm213, %v356, 0
      %v367 = vsel %vm213, %v355, 0
      %369 = vmatprep.subr.bf16.mxu0 0
      %370 = vmatpush1.bf16.msra.mxu0 0
      %371 = vmatprep.subr.bf16.mxu0 0
      %372 = vmatpush1.bf16.msra.mxu0 0
      %373 = vmatprep.subr.bf16.mxu0 0
      %374 = vmatpush1.bf16.msra.mxu0 0
      %375 = vmatprep.subr.bf16.mxu0 0
      %376 = vmatpush1.bf16.msra.mxu0 0
      %377 = vmatprep.subr.bf16.mxu0 0
      %378 = vmatpush1.bf16.msra.mxu0 0
      %379 = vmatprep.subr.bf16.mxu0 0
      %380 = vmatpush1.bf16.msra.mxu0 0
      %381 = vmatprep.subr.bf16.mxu0 0
      %382 = vmatpush1.bf16.msra.mxu0 0
      %383 = vmatprep.subr.bf16.mxu0 0
      %384 = vmatpush1.bf16.msra.mxu0 %v361
      %385 = vmatprep.subr.bf16.mxu0 0
      %386 = vmatpush2.bf16.msra.mxu0 0
      %387 = vmatprep.subr.bf16.mxu0 0
      %388 = vmatpush2.bf16.msra.mxu0 0
      %389 = vmatprep.subr.bf16.mxu0 0
      %390 = vmatpush2.bf16.msra.mxu0 0
      %391 = vmatprep.subr.bf16.mxu0 0
      %392 = vmatpush2.bf16.msra.mxu0 0
      %393 = vmatprep.subr.bf16.mxu0 0
      %394 = vmatpush2.bf16.msra.mxu0 0
      %395 = vmatprep.subr.bf16.mxu0 0
      %396 = vmatpush2.bf16.msra.mxu0 0
      %397 = vmatprep.subr.bf16.mxu0 0
      %398 = vmatpush2.bf16.msra.mxu0 0
      %399 = vmatprep.subr.bf16.mxu0 0
      %400 = vmatpush2.bf16.msra.mxu0 0
      %401 = vmatprep.mubr.bf16.mxu0 0
      %402 = vmatmul.mubr.bf16.gmra.mxu0 %v364
      %v403 = vpop.f32.mrf.mxu0
      %v404 = vadd.f32 0.0, %v403
      %v405 = vpop.f32.mrf.mxu0
      %v406 = vpop.f32.mrf.mxu0
      %v407 = vadd.f32 0.0, %v406
      %v408 = vpop.f32.mrf.mxu0
      %409 = vmatprep.mubr.bf16.mxu0 0
      %410 = vmatmul.mubr.bf16.gmra.mxu0 %v367
      %v411 = vpop.f32.mrf.mxu0
      %v412 = vadd.f32 0.0, %v411
      %v413 = vpop.f32.mrf.mxu0
      %v414 = vpop.f32.mrf.mxu0
      %v415 = vadd.f32 0.0, %v414
      %v416 = vpop.f32.mrf.mxu0
      %417 = vdwg.mxu0
      %v418 = vadd.f32 %v314, %v404
      %v419 = vadd.f32 %v317, %v407
      %v420 = vadd.f32 %v322, %v412
      %v421 = vadd.f32 %v325, %v415
      %v422 = vld [vmem:[%s165] sm:$0x8]
      %v423 = vld [vmem:[%s165 + $0xc] sm:$0xf]
      %s424 = scalar_lea.vmem %s1, 80
      %v425 = vld [vmem:[%s424] sm:$0xf]
      %v426 = vld [vmem:[%s424 + $0x4] sm:$0xf]
      %v429 = vunpack.c.l.b16 %v422
      %v430 = vunpack.c.l.b16 %v423
      %v431 = vpack.c.b16 %v186, %v429
      %v432 = vpack.c.b16 %v430, %v187
      %vm433 = vcmask 1044480
      %v434 = vrot.slane %v431, 3
      %v435 = vrot.slane %v432, 3
      %v436 = vsel %vm433, %v434, %v435
      %v439 = vunpack.c.l.b16 %v425
      %v440 = vunpack.c.l.b16 %v426
      %v441 = vpack.c.b16 %v440, %v439
      %v444 = vsel %vm213, %v436, 0
      %v447 = vsel %vm213, %v435, 0
      %449 = vmatprep.subr.bf16.mxu0 0
      %450 = vmatpush1.bf16.msra.mxu0 0
      %451 = vmatprep.subr.bf16.mxu0 0
      %452 = vmatpush1.bf16.msra.mxu0 0
      %453 = vmatprep.subr.bf16.mxu0 0
      %454 = vmatpush1.bf16.msra.mxu0 0
      %455 = vmatprep.subr.bf16.mxu0 0
      %456 = vmatpush1.bf16.msra.mxu0 0
      %457 = vmatprep.subr.bf16.mxu0 0
      %458 = vmatpush1.bf16.msra.mxu0 0
      %459 = vmatprep.subr.bf16.mxu0 0
      %460 = vmatpush1.bf16.msra.mxu0 0
      %461 = vmatprep.subr.bf16.mxu0 0
      %462 = vmatpush1.bf16.msra.mxu0 0
      %463 = vmatprep.subr.bf16.mxu0 0
      %464 = vmatpush1.bf16.msra.mxu0 %v441
      %465 = vmatprep.subr.bf16.mxu0 0
      %466 = vmatpush2.bf16.msra.mxu0 0
      %467 = vmatprep.subr.bf16.mxu0 0
      %468 = vmatpush2.bf16.msra.mxu0 0
      %469 = vmatprep.subr.bf16.mxu0 0
      %470 = vmatpush2.bf16.msra.mxu0 0
      %471 = vmatprep.subr.bf16.mxu0 0
      %472 = vmatpush2.bf16.msra.mxu0 0
      %473 = vmatprep.subr.bf16.mxu0 0
      %474 = vmatpush2.bf16.msra.mxu0 0
      %475 = vmatprep.subr.bf16.mxu0 0
      %476 = vmatpush2.bf16.msra.mxu0 0
      %477 = vmatprep.subr.bf16.mxu0 0
      %478 = vmatpush2.bf16.msra.mxu0 0
      %479 = vmatprep.subr.bf16.mxu0 0
      %480 = vmatpush2.bf16.msra.mxu0 0
      %481 = vmatprep.mubr.bf16.mxu0 0
      %482 = vmatmul.mubr.bf16.gmra.mxu0 %v444
      %v483 = vpop.f32.mrf.mxu0
      %v484 = vadd.f32 0.0, %v483
      %v485 = vpop.f32.mrf.mxu0
      %v486 = vpop.f32.mrf.mxu0
      %v487 = vadd.f32 0.0, %v486
      %v488 = vpop.f32.mrf.mxu0
      %489 = vmatprep.mubr.bf16.mxu0 0
      %490 = vmatmul.mubr.bf16.gmra.mxu0 %v447
      %v491 = vpop.f32.mrf.mxu0
      %v492 = vadd.f32 0.0, %v491
      %v493 = vpop.f32.mrf.mxu0
      %v494 = vpop.f32.mrf.mxu0
      %v495 = vadd.f32 0.0, %v494
      %v496 = vpop.f32.mrf.mxu0
      %497 = vdwg.mxu0
      %v498 = vadd.f32 %v418, %v484
      %v499 = vadd.f32 %v419, %v487
      %v500 = vadd.f32 %v420, %v492
      %v501 = vadd.f32 %v421, %v495
      %s502 = scalar_lea.vmem %s165, 16
      %v503 = vld [vmem:[%s502] sm:$0xf]
      %v504 = vld [vmem:[%s502 + $0x4] sm:$0xf]
      %v505 = vld [vmem:[%s502 + $0x8] sm:$0xf]
      %v506 = vld [vmem:[%s502 + $0xc] sm:$0x1]
      %s507 = scalar_lea.vmem %s1, 8
      %v508 = vld [vmem:[%s507] sm:$0xf]
      %v509 = vld [vmem:[%s507 + $0x4] sm:$0xf]
      %v514 = vunpack.c.l.b16 %v503
      %v515 = vunpack.c.l.b16 %v504
      %v516 = vunpack.c.l.b16 %v505
      %v517 = vunpack.c.l.b16 %v506
      %v518 = vpack.c.b16 %v515, %v514
      %v519 = vpack.c.b16 %v517, %v516
      %v522 = vunpack.c.l.b16 %v508
      %v523 = vunpack.c.l.b16 %v509
      %v524 = vpack.c.b16 %v523, %v522
      %v527 = vsel %vm213, %v518, 0
      %v530 = vsel %vm213, %v519, 0
      %532 = vmatprep.subr.bf16.mxu0 0
      %533 = vmatpush1.bf16.msra.mxu0 0
      %534 = vmatprep.subr.bf16.mxu0 0
      %535 = vmatpush1.bf16.msra.mxu0 0
      %536 = vmatprep.subr.bf16.mxu0 0
      %537 = vmatpush1.bf16.msra.mxu0 0
      %538 = vmatprep.subr.bf16.mxu0 0
      %539 = vmatpush1.bf16.msra.mxu0 0
      %540 = vmatprep.subr.bf16.mxu0 0
      %541 = vmatpush1.bf16.msra.mxu0 0
      %542 = vmatprep.subr.bf16.mxu0 0
      %543 = vmatpush1.bf16.msra.mxu0 0
      %544 = vmatprep.subr.bf16.mxu0 0
      %545 = vmatpush1.bf16.msra.mxu0 0
      %546 = vmatprep.subr.bf16.mxu0 0
      %547 = vmatpush1.bf16.msra.mxu0 %v524
      %548 = vmatprep.subr.bf16.mxu0 0
      %549 = vmatpush2.bf16.msra.mxu0 0
      %550 = vmatprep.subr.bf16.mxu0 0
      %551 = vmatpush2.bf16.msra.mxu0 0
      %552 = vmatprep.subr.bf16.mxu0 0
      %553 = vmatpush2.bf16.msra.mxu0 0
      %554 = vmatprep.subr.bf16.mxu0 0
      %555 = vmatpush2.bf16.msra.mxu0 0
      %556 = vmatprep.subr.bf16.mxu0 0
      %557 = vmatpush2.bf16.msra.mxu0 0
      %558 = vmatprep.subr.bf16.mxu0 0
      %559 = vmatpush2.bf16.msra.mxu0 0
      %560 = vmatprep.subr.bf16.mxu0 0
      %561 = vmatpush2.bf16.msra.mxu0 0
      %562 = vmatprep.subr.bf16.mxu0 0
      %563 = vmatpush2.bf16.msra.mxu0 0
      %564 = vmatprep.mubr.bf16.mxu0 0
      %565 = vmatmul.mubr.bf16.gmra.mxu0 %v527
      %v566 = vpop.f32.mrf.mxu0
      %v567 = vadd.f32 0.0, %v566
      %v568 = vpop.f32.mrf.mxu0
      %v569 = vpop.f32.mrf.mxu0
      %v570 = vadd.f32 0.0, %v569
      %v571 = vpop.f32.mrf.mxu0
      %572 = vmatprep.mubr.bf16.mxu0 0
      %573 = vmatmul.mubr.bf16.gmra.mxu0 %v530
      %v574 = vpop.f32.mrf.mxu0
      %v575 = vadd.f32 0.0, %v574
      %v576 = vpop.f32.mrf.mxu0
      %v577 = vpop.f32.mrf.mxu0
      %v578 = vadd.f32 0.0, %v577
      %v579 = vpop.f32.mrf.mxu0
      %580 = vdwg.mxu0
      %v581 = vadd.f32 %v498, %v567
      %v582 = vadd.f32 %v499, %v570
      %v583 = vadd.f32 %v500, %v575
      %v584 = vadd.f32 %v501, %v578
      %s585 = scalar_lea.vmem %s1, 24
      %v586 = vld [vmem:[%s585] sm:$0xf]
      %v587 = vld [vmem:[%s585 + $0x4] sm:$0xf]
      %v588 = vshrl.u32 %v518, 16
      %v590 = vshll.u32 %v518, 16
      %v592 = vrot.slane %v590, 1
      %v593 = vor.u32 %v588, %v592
      %v594 = vshll.u32 %v519, 16
      %v596 = vrot.slane %v594, 1
      %v597 = vsel %vm191, %v593, %v596
      %v598 = vshrl.u32 %v519, 16
      %v600 = vor.u32 %v598, %v596
      %v603 = vunpack.c.l.b16 %v586
      %v604 = vunpack.c.l.b16 %v587
      %v605 = vpack.c.b16 %v604, %v603
      %v608 = vsel %vm213, %v597, 0
      %v611 = vsel %vm213, %v600, 0
      %613 = vmatprep.subr.bf16.mxu0 0
      %614 = vmatpush1.bf16.msra.mxu0 0
      %615 = vmatprep.subr.bf16.mxu0 0
      %616 = vmatpush1.bf16.msra.mxu0 0
      %617 = vmatprep.subr.bf16.mxu0 0
      %618 = vmatpush1.bf16.msra.mxu0 0
      %619 = vmatprep.subr.bf16.mxu0 0
      %620 = vmatpush1.bf16.msra.mxu0 0
      %621 = vmatprep.subr.bf16.mxu0 0
      %622 = vmatpush1.bf16.msra.mxu0 0
      %623 = vmatprep.subr.bf16.mxu0 0
      %624 = vmatpush1.bf16.msra.mxu0 0
      %625 = vmatprep.subr.bf16.mxu0 0
      %626 = vmatpush1.bf16.msra.mxu0 0
      %627 = vmatprep.subr.bf16.mxu0 0
      %628 = vmatpush1.bf16.msra.mxu0 %v605
      %629 = vmatprep.subr.bf16.mxu0 0
      %630 = vmatpush2.bf16.msra.mxu0 0
      %631 = vmatprep.subr.bf16.mxu0 0
      %632 = vmatpush2.bf16.msra.mxu0 0
      %633 = vmatprep.subr.bf16.mxu0 0
      %634 = vmatpush2.bf16.msra.mxu0 0
      %635 = vmatprep.subr.bf16.mxu0 0
      %636 = vmatpush2.bf16.msra.mxu0 0
      %637 = vmatprep.subr.bf16.mxu0 0
      %638 = vmatpush2.bf16.msra.mxu0 0
      %639 = vmatprep.subr.bf16.mxu0 0
      %640 = vmatpush2.bf16.msra.mxu0 0
      %641 = vmatprep.subr.bf16.mxu0 0
      %642 = vmatpush2.bf16.msra.mxu0 0
      %643 = vmatprep.subr.bf16.mxu0 0
      %644 = vmatpush2.bf16.msra.mxu0 0
      %645 = vmatprep.mubr.bf16.mxu0 0
      %646 = vmatmul.mubr.bf16.gmra.mxu0 %v608
      %v647 = vpop.f32.mrf.mxu0
      %v648 = vadd.f32 0.0, %v647
      %v649 = vpop.f32.mrf.mxu0
      %v650 = vpop.f32.mrf.mxu0
      %v651 = vadd.f32 0.0, %v650
      %v652 = vpop.f32.mrf.mxu0
      %653 = vmatprep.mubr.bf16.mxu0 0
      %654 = vmatmul.mubr.bf16.gmra.mxu0 %v611
      %v655 = vpop.f32.mrf.mxu0
      %v656 = vadd.f32 0.0, %v655
      %v657 = vpop.f32.mrf.mxu0
      %v658 = vpop.f32.mrf.mxu0
      %v659 = vadd.f32 0.0, %v658
      %v660 = vpop.f32.mrf.mxu0
      %661 = vdwg.mxu0
      %v662 = vadd.f32 %v581, %v648
      %v663 = vadd.f32 %v582, %v651
      %v664 = vadd.f32 %v583, %v656
      %v665 = vadd.f32 %v584, %v659
      %v666 = vld [vmem:[%s502] sm:$0xc]
      %v667 = vld [vmem:[%s502 + $0xc] sm:$0x7]
      %s668 = scalar_lea.vmem %s1, 72
      %v669 = vld [vmem:[%s668] sm:$0xf]
      %v670 = vld [vmem:[%s668 + $0x4] sm:$0xf]
      %v673 = vunpack.c.l.b16 %v666
      %v674 = vunpack.c.l.b16 %v667
      %v675 = vpack.c.b16 %v515, %v673
      %v676 = vpack.c.b16 %v674, %v516
      %v678 = vshrl.u32 %v675, 16
      %v680 = vrot.slane %v678, 2
      %v681 = vshll.u32 %v675, 16
      %v683 = vrot.slane %v681, 3
      %v684 = vor.u32 %v680, %v683
      %v686 = vshrl.u32 %v676, 16
      %v688 = vrot.slane %v686, 2
      %v689 = vshll.u32 %v676, 16
      %v691 = vrot.slane %v689, 3
      %v692 = vor.u32 %v688, %v691
      %v693 = vsel %vm339, %v684, %v692
      %v696 = vunpack.c.l.b16 %v669
      %v697 = vunpack.c.l.b16 %v670
      %v698 = vpack.c.b16 %v697, %v696
      %v701 = vsel %vm213, %v693, 0
      %v704 = vsel %vm213, %v692, 0
      %706 = vmatprep.subr.bf16.mxu0 0
      %707 = vmatpush1.bf16.msra.mxu0 0
      %708 = vmatprep.subr.bf16.mxu0 0
      %709 = vmatpush1.bf16.msra.mxu0 0
      %710 = vmatprep.subr.bf16.mxu0 0
      %711 = vmatpush1.bf16.msra.mxu0 0
      %712 = vmatprep.subr.bf16.mxu0 0
      %713 = vmatpush1.bf16.msra.mxu0 0
      %714 = vmatprep.subr.bf16.mxu0 0
      %715 = vmatpush1.bf16.msra.mxu0 0
      %716 = vmatprep.subr.bf16.mxu0 0
      %717 = vmatpush1.bf16.msra.mxu0 0
      %718 = vmatprep.subr.bf16.mxu0 0
      %719 = vmatpush1.bf16.msra.mxu0 0
      %720 = vmatprep.subr.bf16.mxu0 0
      %721 = vmatpush1.bf16.msra.mxu0 %v698
      %722 = vmatprep.subr.bf16.mxu0 0
      %723 = vmatpush2.bf16.msra.mxu0 0
      %724 = vmatprep.subr.bf16.mxu0 0
      %725 = vmatpush2.bf16.msra.mxu0 0
      %726 = vmatprep.subr.bf16.mxu0 0
      %727 = vmatpush2.bf16.msra.mxu0 0
      %728 = vmatprep.subr.bf16.mxu0 0
      %729 = vmatpush2.bf16.msra.mxu0 0
      %730 = vmatprep.subr.bf16.mxu0 0
      %731 = vmatpush2.bf16.msra.mxu0 0
      %732 = vmatprep.subr.bf16.mxu0 0
      %733 = vmatpush2.bf16.msra.mxu0 0
      %734 = vmatprep.subr.bf16.mxu0 0
      %735 = vmatpush2.bf16.msra.mxu0 0
      %736 = vmatprep.subr.bf16.mxu0 0
      %737 = vmatpush2.bf16.msra.mxu0 0
      %738 = vmatprep.mubr.bf16.mxu0 0
      %739 = vmatmul.mubr.bf16.gmra.mxu0 %v701
      %v740 = vpop.f32.mrf.mxu0
      %v741 = vadd.f32 0.0, %v740
      %v742 = vpop.f32.mrf.mxu0
      %v743 = vpop.f32.mrf.mxu0
      %v744 = vadd.f32 0.0, %v743
      %v745 = vpop.f32.mrf.mxu0
      %746 = vmatprep.mubr.bf16.mxu0 0
      %747 = vmatmul.mubr.bf16.gmra.mxu0 %v704
      %v748 = vpop.f32.mrf.mxu0
      %v749 = vadd.f32 0.0, %v748
      %v750 = vpop.f32.mrf.mxu0
      %v751 = vpop.f32.mrf.mxu0
      %v752 = vadd.f32 0.0, %v751
      %v753 = vpop.f32.mrf.mxu0
      %754 = vdwg.mxu0
      %v755 = vadd.f32 %v662, %v741
      %v756 = vadd.f32 %v663, %v744
      %v757 = vadd.f32 %v664, %v749
      %v758 = vadd.f32 %v665, %v752
      %v759 = vld [vmem:[%s502] sm:$0x8]
      %v760 = vld [vmem:[%s502 + $0xc] sm:$0xf]
      %s761 = scalar_lea.vmem %s1, 88
      %v762 = vld [vmem:[%s761] sm:$0xf]
      %v763 = vld [vmem:[%s761 + $0x4] sm:$0xf]
      %v766 = vunpack.c.l.b16 %v759
      %v767 = vunpack.c.l.b16 %v760
      %v768 = vpack.c.b16 %v515, %v766
      %v769 = vpack.c.b16 %v767, %v516
      %v770 = vrot.slane %v768, 3
      %v771 = vrot.slane %v769, 3
      %v772 = vsel %vm433, %v770, %v771
      %v775 = vunpack.c.l.b16 %v762
      %v776 = vunpack.c.l.b16 %v763
      %v777 = vpack.c.b16 %v776, %v775
      %v780 = vsel %vm213, %v772, 0
      %v783 = vsel %vm213, %v771, 0
      %785 = vmatprep.subr.bf16.mxu0 0
      %786 = vmatpush1.bf16.msra.mxu0 0
      %787 = vmatprep.subr.bf16.mxu0 0
      %788 = vmatpush1.bf16.msra.mxu0 0
      %789 = vmatprep.subr.bf16.mxu0 0
      %790 = vmatpush1.bf16.msra.mxu0 0
      %791 = vmatprep.subr.bf16.mxu0 0
      %792 = vmatpush1.bf16.msra.mxu0 0
      %793 = vmatprep.subr.bf16.mxu0 0
      %794 = vmatpush1.bf16.msra.mxu0 0
      %795 = vmatprep.subr.bf16.mxu0 0
      %796 = vmatpush1.bf16.msra.mxu0 0
      %797 = vmatprep.subr.bf16.mxu0 0
      %798 = vmatpush1.bf16.msra.mxu0 0
      %799 = vmatprep.subr.bf16.mxu0 0
      %800 = vmatpush1.bf16.msra.mxu0 %v777
      %801 = vmatprep.subr.bf16.mxu0 0
      %802 = vmatpush2.bf16.msra.mxu0 0
      %803 = vmatprep.subr.bf16.mxu0 0
      %804 = vmatpush2.bf16.msra.mxu0 0
      %805 = vmatprep.subr.bf16.mxu0 0
      %806 = vmatpush2.bf16.msra.mxu0 0
      %807 = vmatprep.subr.bf16.mxu0 0
      %808 = vmatpush2.bf16.msra.mxu0 0
      %809 = vmatprep.subr.bf16.mxu0 0
      %810 = vmatpush2.bf16.msra.mxu0 0
      %811 = vmatprep.subr.bf16.mxu0 0
      %812 = vmatpush2.bf16.msra.mxu0 0
      %813 = vmatprep.subr.bf16.mxu0 0
      %814 = vmatpush2.bf16.msra.mxu0 0
      %815 = vmatprep.subr.bf16.mxu0 0
      %816 = vmatpush2.bf16.msra.mxu0 0
      %817 = vmatprep.mubr.bf16.mxu0 0
      %818 = vmatmul.mubr.bf16.gmra.mxu0 %v780
      %v819 = vpop.f32.mrf.mxu0
      %v820 = vadd.f32 0.0, %v819
      %v821 = vpop.f32.mrf.mxu0
      %v822 = vpop.f32.mrf.mxu0
      %v823 = vadd.f32 0.0, %v822
      %v824 = vpop.f32.mrf.mxu0
      %825 = vmatprep.mubr.bf16.mxu0 0
      %826 = vmatmul.mubr.bf16.gmra.mxu0 %v783
      %v827 = vpop.f32.mrf.mxu0
      %v828 = vadd.f32 0.0, %v827
      %v829 = vpop.f32.mrf.mxu0
      %v830 = vpop.f32.mrf.mxu0
      %v831 = vadd.f32 0.0, %v830
      %v832 = vpop.f32.mrf.mxu0
      %833 = vdwg.mxu0
      %v834 = vadd.f32 %v755, %v820
      %v835 = vadd.f32 %v756, %v823
      %v836 = vadd.f32 %v757, %v828
      %v837 = vadd.f32 %v758, %v831
      %s838 = scalar_lea.vmem %s165, 32
      %v839 = vld [vmem:[%s838] sm:$0xf]
      %v840 = vld [vmem:[%s838 + $0x4] sm:$0xf]
      %v841 = vld [vmem:[%s838 + $0x8] sm:$0xf]
      %v842 = vld [vmem:[%s838 + $0xc] sm:$0x1]
      %s843 = scalar_lea.vmem %s1, 32
      %v844 = vld [vmem:[%s843] sm:$0xf]
      %v845 = vld [vmem:[%s843 + $0x4] sm:$0xf]
      %v850 = vunpack.c.l.b16 %v839
      %v851 = vunpack.c.l.b16 %v840
      %v852 = vunpack.c.l.b16 %v841
      %v853 = vunpack.c.l.b16 %v842
      %v854 = vpack.c.b16 %v851, %v850
      %v855 = vpack.c.b16 %v853, %v852
      %v858 = vunpack.c.l.b16 %v844
      %v859 = vunpack.c.l.b16 %v845
      %v860 = vpack.c.b16 %v859, %v858
      %v863 = vsel %vm213, %v854, 0
      %v866 = vsel %vm213, %v855, 0
      %868 = vmatprep.subr.bf16.mxu0 0
      %869 = vmatpush1.bf16.msra.mxu0 0
      %870 = vmatprep.subr.bf16.mxu0 0
      %871 = vmatpush1.bf16.msra.mxu0 0
      %872 = vmatprep.subr.bf16.mxu0 0
      %873 = vmatpush1.bf16.msra.mxu0 0
      %874 = vmatprep.subr.bf16.mxu0 0
      %875 = vmatpush1.bf16.msra.mxu0 0
      %876 = vmatprep.subr.bf16.mxu0 0
      %877 = vmatpush1.bf16.msra.mxu0 0
      %878 = vmatprep.subr.bf16.mxu0 0
      %879 = vmatpush1.bf16.msra.mxu0 0
      %880 = vmatprep.subr.bf16.mxu0 0
      %881 = vmatpush1.bf16.msra.mxu0 0
      %882 = vmatprep.subr.bf16.mxu0 0
      %883 = vmatpush1.bf16.msra.mxu0 %v860
      %884 = vmatprep.subr.bf16.mxu0 0
      %885 = vmatpush2.bf16.msra.mxu0 0
      %886 = vmatprep.subr.bf16.mxu0 0
      %887 = vmatpush2.bf16.msra.mxu0 0
      %888 = vmatprep.subr.bf16.mxu0 0
      %889 = vmatpush2.bf16.msra.mxu0 0
      %890 = vmatprep.subr.bf16.mxu0 0
      %891 = vmatpush2.bf16.msra.mxu0 0
      %892 = vmatprep.subr.bf16.mxu0 0
      %893 = vmatpush2.bf16.msra.mxu0 0
      %894 = vmatprep.subr.bf16.mxu0 0
      %895 = vmatpush2.bf16.msra.mxu0 0
      %896 = vmatprep.subr.bf16.mxu0 0
      %897 = vmatpush2.bf16.msra.mxu0 0
      %898 = vmatprep.subr.bf16.mxu0 0
      %899 = vmatpush2.bf16.msra.mxu0 0
      %900 = vmatprep.mubr.bf16.mxu0 0
      %901 = vmatmul.mubr.bf16.gmra.mxu0 %v863
      %v902 = vpop.f32.mrf.mxu0
      %v903 = vadd.f32 0.0, %v902
      %v904 = vpop.f32.mrf.mxu0
      %v905 = vpop.f32.mrf.mxu0
      %v906 = vadd.f32 0.0, %v905
      %v907 = vpop.f32.mrf.mxu0
      %908 = vmatprep.mubr.bf16.mxu0 0
      %909 = vmatmul.mubr.bf16.gmra.mxu0 %v866
      %v910 = vpop.f32.mrf.mxu0
      %v911 = vadd.f32 0.0, %v910
      %v912 = vpop.f32.mrf.mxu0
      %v913 = vpop.f32.mrf.mxu0
      %v914 = vadd.f32 0.0, %v913
      %v915 = vpop.f32.mrf.mxu0
      %916 = vdwg.mxu0
      %v917 = vadd.f32 %v834, %v903
      %v918 = vadd.f32 %v835, %v906
      %v919 = vadd.f32 %v836, %v911
      %v920 = vadd.f32 %v837, %v914
      %s921 = scalar_lea.vmem %s1, 48
      %v922 = vld [vmem:[%s921] sm:$0xf]
      %v923 = vld [vmem:[%s921 + $0x4] sm:$0xf]
      %v924 = vshrl.u32 %v854, 16
      %v926 = vshll.u32 %v854, 16
      %v928 = vrot.slane %v926, 1
      %v929 = vor.u32 %v924, %v928
      %v930 = vshll.u32 %v855, 16
      %v932 = vrot.slane %v930, 1
      %v933 = vsel %vm191, %v929, %v932
      %v934 = vshrl.u32 %v855, 16
      %v936 = vor.u32 %v934, %v932
      %v939 = vunpack.c.l.b16 %v922
      %v940 = vunpack.c.l.b16 %v923
      %v941 = vpack.c.b16 %v940, %v939
      %v944 = vsel %vm213, %v933, 0
      %v947 = vsel %vm213, %v936, 0
      %949 = vmatprep.subr.bf16.mxu0 0
      %950 = vmatpush1.bf16.msra.mxu0 0
      %951 = vmatprep.subr.bf16.mxu0 0
      %952 = vmatpush1.bf16.msra.mxu0 0
      %953 = vmatprep.subr.bf16.mxu0 0
      %954 = vmatpush1.bf16.msra.mxu0 0
      %955 = vmatprep.subr.bf16.mxu0 0
      %956 = vmatpush1.bf16.msra.mxu0 0
      %957 = vmatprep.subr.bf16.mxu0 0
      %958 = vmatpush1.bf16.msra.mxu0 0
      %959 = vmatprep.subr.bf16.mxu0 0
      %960 = vmatpush1.bf16.msra.mxu0 0
      %961 = vmatprep.subr.bf16.mxu0 0
      %962 = vmatpush1.bf16.msra.mxu0 0
      %963 = vmatprep.subr.bf16.mxu0 0
      %964 = vmatpush1.bf16.msra.mxu0 %v941
      %965 = vmatprep.subr.bf16.mxu0 0
      %966 = vmatpush2.bf16.msra.mxu0 0
      %967 = vmatprep.subr.bf16.mxu0 0
      %968 = vmatpush2.bf16.msra.mxu0 0
      %969 = vmatprep.subr.bf16.mxu0 0
      %970 = vmatpush2.bf16.msra.mxu0 0
      %971 = vmatprep.subr.bf16.mxu0 0
      %972 = vmatpush2.bf16.msra.mxu0 0
      %973 = vmatprep.subr.bf16.mxu0 0
      %974 = vmatpush2.bf16.msra.mxu0 0
      %975 = vmatprep.subr.bf16.mxu0 0
      %976 = vmatpush2.bf16.msra.mxu0 0
      %977 = vmatprep.subr.bf16.mxu0 0
      %978 = vmatpush2.bf16.msra.mxu0 0
      %979 = vmatprep.subr.bf16.mxu0 0
      %980 = vmatpush2.bf16.msra.mxu0 0
      %981 = vmatprep.mubr.bf16.mxu0 0
      %982 = vmatmul.mubr.bf16.gmra.mxu0 %v944
      %v983 = vpop.f32.mrf.mxu0
      %v984 = vadd.f32 0.0, %v983
      %v985 = vpop.f32.mrf.mxu0
      %v986 = vpop.f32.mrf.mxu0
      %v987 = vadd.f32 0.0, %v986
      %v988 = vpop.f32.mrf.mxu0
      %989 = vmatprep.mubr.bf16.mxu0 0
      %990 = vmatmul.mubr.bf16.gmra.mxu0 %v947
      %v991 = vpop.f32.mrf.mxu0
      %v992 = vadd.f32 0.0, %v991
      %v993 = vpop.f32.mrf.mxu0
      %v994 = vpop.f32.mrf.mxu0
      %v995 = vadd.f32 0.0, %v994
      %v996 = vpop.f32.mrf.mxu0
      %997 = vdwg.mxu0
      %v998 = vadd.f32 %v917, %v984
      %v999 = vadd.f32 %v918, %v987
      %v1000 = vadd.f32 %v919, %v992
      %v1001 = vadd.f32 %v920, %v995
      %v1002 = vld [vmem:[%s838] sm:$0xc]
      %v1003 = vld [vmem:[%s838 + $0xc] sm:$0x7]
      %s1004 = scalar_lea.vmem %s1, 96
      %v1005 = vld [vmem:[%s1004] sm:$0xf]
      %v1006 = vld [vmem:[%s1004 + $0x4] sm:$0xf]
      %v1009 = vunpack.c.l.b16 %v1002
      %v1010 = vunpack.c.l.b16 %v1003
      %v1011 = vpack.c.b16 %v851, %v1009
      %v1012 = vpack.c.b16 %v1010, %v852
      %v1014 = vshrl.u32 %v1011, 16
      %v1016 = vrot.slane %v1014, 2
      %v1017 = vshll.u32 %v1011, 16
      %v1019 = vrot.slane %v1017, 3
      %v1020 = vor.u32 %v1016, %v1019
      %v1022 = vshrl.u32 %v1012, 16
      %v1024 = vrot.slane %v1022, 2
      %v1025 = vshll.u32 %v1012, 16
      %v1027 = vrot.slane %v1025, 3
      %v1028 = vor.u32 %v1024, %v1027
      %v1029 = vsel %vm339, %v1020, %v1028
      %v1032 = vunpack.c.l.b16 %v1005
      %v1033 = vunpack.c.l.b16 %v1006
      %v1034 = vpack.c.b16 %v1033, %v1032
      %v1037 = vsel %vm213, %v1029, 0
      %v1040 = vsel %vm213, %v1028, 0
      %1042 = vmatprep.subr.bf16.mxu0 0
      %1043 = vmatpush1.bf16.msra.mxu0 0
      %1044 = vmatprep.subr.bf16.mxu0 0
      %1045 = vmatpush1.bf16.msra.mxu0 0
      %1046 = vmatprep.subr.bf16.mxu0 0
      %1047 = vmatpush1.bf16.msra.mxu0 0
      %1048 = vmatprep.subr.bf16.mxu0 0
      %1049 = vmatpush1.bf16.msra.mxu0 0
      %1050 = vmatprep.subr.bf16.mxu0 0
      %1051 = vmatpush1.bf16.msra.mxu0 0
      %1052 = vmatprep.subr.bf16.mxu0 0
      %1053 = vmatpush1.bf16.msra.mxu0 0
      %1054 = vmatprep.subr.bf16.mxu0 0
      %1055 = vmatpush1.bf16.msra.mxu0 0
      %1056 = vmatprep.subr.bf16.mxu0 0
      %1057 = vmatpush1.bf16.msra.mxu0 %v1034
      %1058 = vmatprep.subr.bf16.mxu0 0
      %1059 = vmatpush2.bf16.msra.mxu0 0
      %1060 = vmatprep.subr.bf16.mxu0 0
      %1061 = vmatpush2.bf16.msra.mxu0 0
      %1062 = vmatprep.subr.bf16.mxu0 0
      %1063 = vmatpush2.bf16.msra.mxu0 0
      %1064 = vmatprep.subr.bf16.mxu0 0
      %1065 = vmatpush2.bf16.msra.mxu0 0
      %1066 = vmatprep.subr.bf16.mxu0 0
      %1067 = vmatpush2.bf16.msra.mxu0 0
      %1068 = vmatprep.subr.bf16.mxu0 0
      %1069 = vmatpush2.bf16.msra.mxu0 0
      %1070 = vmatprep.subr.bf16.mxu0 0
      %1071 = vmatpush2.bf16.msra.mxu0 0
      %1072 = vmatprep.subr.bf16.mxu0 0
      %1073 = vmatpush2.bf16.msra.mxu0 0
      %1074 = vmatprep.mubr.bf16.mxu0 0
      %1075 = vmatmul.mubr.bf16.gmra.mxu0 %v1037
      %v1076 = vpop.f32.mrf.mxu0
      %v1077 = vadd.f32 0.0, %v1076
      %v1078 = vpop.f32.mrf.mxu0
      %v1079 = vpop.f32.mrf.mxu0
      %v1080 = vadd.f32 0.0, %v1079
      %v1081 = vpop.f32.mrf.mxu0
      %1082 = vmatprep.mubr.bf16.mxu0 0
      %1083 = vmatmul.mubr.bf16.gmra.mxu0 %v1040
      %v1084 = vpop.f32.mrf.mxu0
      %v1085 = vadd.f32 0.0, %v1084
      %v1086 = vpop.f32.mrf.mxu0
      %v1087 = vpop.f32.mrf.mxu0
      %v1088 = vadd.f32 0.0, %v1087
      %v1089 = vpop.f32.mrf.mxu0
      %1090 = vdwg.mxu0
      %v1091 = vadd.f32 %v998, %v1077
      %v1092 = vadd.f32 %v999, %v1080
      %v1093 = vadd.f32 %v1000, %v1085
      %v1094 = vadd.f32 %v1001, %v1088
      %v1095 = vld [vmem:[%s838] sm:$0x8]
      %v1096 = vld [vmem:[%s838 + $0xc] sm:$0xf]
      %s1097 = scalar_lea.vmem %s1, 112
      %v1098 = vld [vmem:[%s1097] sm:$0xf]
      %v1099 = vld [vmem:[%s1097 + $0x4] sm:$0xf]
      %v1102 = vunpack.c.l.b16 %v1095
      %v1103 = vunpack.c.l.b16 %v1096
      %v1104 = vpack.c.b16 %v851, %v1102
      %v1105 = vpack.c.b16 %v1103, %v852
      %v1106 = vrot.slane %v1104, 3
      %v1107 = vrot.slane %v1105, 3
      %v1108 = vsel %vm433, %v1106, %v1107
      %v1111 = vunpack.c.l.b16 %v1098
      %v1112 = vunpack.c.l.b16 %v1099
      %v1113 = vpack.c.b16 %v1112, %v1111
      %v1116 = vsel %vm213, %v1108, 0
      %v1119 = vsel %vm213, %v1107, 0
      %1121 = vmatprep.subr.bf16.mxu0 0
      %1122 = vmatpush1.bf16.msra.mxu0 0
      %1123 = vmatprep.subr.bf16.mxu0 0
      %1124 = vmatpush1.bf16.msra.mxu0 0
      %1125 = vmatprep.subr.bf16.mxu0 0
      %1126 = vmatpush1.bf16.msra.mxu0 0
      %1127 = vmatprep.subr.bf16.mxu0 0
      %1128 = vmatpush1.bf16.msra.mxu0 0
      %1129 = vmatprep.subr.bf16.mxu0 0
      %1130 = vmatpush1.bf16.msra.mxu0 0
      %1131 = vmatprep.subr.bf16.mxu0 0
      %1132 = vmatpush1.bf16.msra.mxu0 0
      %1133 = vmatprep.subr.bf16.mxu0 0
      %1134 = vmatpush1.bf16.msra.mxu0 0
      %1135 = vmatprep.subr.bf16.mxu0 0
      %1136 = vmatpush1.bf16.msra.mxu0 %v1113
      %1137 = vmatprep.subr.bf16.mxu0 0
      %1138 = vmatpush2.bf16.msra.mxu0 0
      %1139 = vmatprep.subr.bf16.mxu0 0
      %1140 = vmatpush2.bf16.msra.mxu0 0
      %1141 = vmatprep.subr.bf16.mxu0 0
      %1142 = vmatpush2.bf16.msra.mxu0 0
      %1143 = vmatprep.subr.bf16.mxu0 0
      %1144 = vmatpush2.bf16.msra.mxu0 0
      %1145 = vmatprep.subr.bf16.mxu0 0
      %1146 = vmatpush2.bf16.msra.mxu0 0
      %1147 = vmatprep.subr.bf16.mxu0 0
      %1148 = vmatpush2.bf16.msra.mxu0 0
      %1149 = vmatprep.subr.bf16.mxu0 0
      %1150 = vmatpush2.bf16.msra.mxu0 0
      %1151 = vmatprep.subr.bf16.mxu0 0
      %1152 = vmatpush2.bf16.msra.mxu0 0
      %1153 = vmatprep.mubr.bf16.mxu0 0
      %1154 = vmatmul.mubr.bf16.gmra.mxu0 %v1116
      %v1155 = vpop.f32.mrf.mxu0
      %v1156 = vadd.f32 0.0, %v1155
      %v1157 = vpop.f32.mrf.mxu0
      %v1158 = vpop.f32.mrf.mxu0
      %v1159 = vadd.f32 0.0, %v1158
      %v1160 = vpop.f32.mrf.mxu0
      %1161 = vmatprep.mubr.bf16.mxu0 0
      %1162 = vmatmul.mubr.bf16.gmra.mxu0 %v1119
      %v1163 = vpop.f32.mrf.mxu0
      %v1164 = vadd.f32 0.0, %v1163
      %v1165 = vpop.f32.mrf.mxu0
      %v1166 = vpop.f32.mrf.mxu0
      %v1167 = vadd.f32 0.0, %v1166
      %v1168 = vpop.f32.mrf.mxu0
      %1169 = vdwg.mxu0
      %v1170 = vadd.f32 %v1091, %v1156
      %v1171 = vadd.f32 %v1092, %v1159
      %v1172 = vadd.f32 %v1093, %v1164
      %v1173 = vadd.f32 %v1094, %v1167
      %s1174 = scalar_lea.vmem %s165, 48
      %v1175 = vld [vmem:[%s1174] sm:$0xf]
      %v1176 = vld [vmem:[%s1174 + $0x4] sm:$0xf]
      %v1177 = vld [vmem:[%s1174 + $0x8] sm:$0xf]
      %v1178 = vld [vmem:[%s1174 + $0xc] sm:$0x1]
      %s1179 = scalar_lea.vmem %s1, 40
      %v1180 = vld [vmem:[%s1179] sm:$0xf]
      %v1181 = vld [vmem:[%s1179 + $0x4] sm:$0xf]
      %v1186 = vunpack.c.l.b16 %v1175
      %v1187 = vunpack.c.l.b16 %v1176
      %v1188 = vunpack.c.l.b16 %v1177
      %v1189 = vunpack.c.l.b16 %v1178
      %v1190 = vpack.c.b16 %v1187, %v1186
      %v1191 = vpack.c.b16 %v1189, %v1188
      %v1194 = vunpack.c.l.b16 %v1180
      %v1195 = vunpack.c.l.b16 %v1181
      %v1196 = vpack.c.b16 %v1195, %v1194
      %v1199 = vsel %vm213, %v1190, 0
      %v1202 = vsel %vm213, %v1191, 0
      %1204 = vmatprep.subr.bf16.mxu0 0
      %1205 = vmatpush1.bf16.msra.mxu0 0
      %1206 = vmatprep.subr.bf16.mxu0 0
      %1207 = vmatpush1.bf16.msra.mxu0 0
      %1208 = vmatprep.subr.bf16.mxu0 0
      %1209 = vmatpush1.bf16.msra.mxu0 0
      %1210 = vmatprep.subr.bf16.mxu0 0
      %1211 = vmatpush1.bf16.msra.mxu0 0
      %1212 = vmatprep.subr.bf16.mxu0 0
      %1213 = vmatpush1.bf16.msra.mxu0 0
      %1214 = vmatprep.subr.bf16.mxu0 0
      %1215 = vmatpush1.bf16.msra.mxu0 0
      %1216 = vmatprep.subr.bf16.mxu0 0
      %1217 = vmatpush1.bf16.msra.mxu0 0
      %1218 = vmatprep.subr.bf16.mxu0 0
      %1219 = vmatpush1.bf16.msra.mxu0 %v1196
      %1220 = vmatprep.subr.bf16.mxu0 0
      %1221 = vmatpush2.bf16.msra.mxu0 0
      %1222 = vmatprep.subr.bf16.mxu0 0
      %1223 = vmatpush2.bf16.msra.mxu0 0
      %1224 = vmatprep.subr.bf16.mxu0 0
      %1225 = vmatpush2.bf16.msra.mxu0 0
      %1226 = vmatprep.subr.bf16.mxu0 0
      %1227 = vmatpush2.bf16.msra.mxu0 0
      %1228 = vmatprep.subr.bf16.mxu0 0
      %1229 = vmatpush2.bf16.msra.mxu0 0
      %1230 = vmatprep.subr.bf16.mxu0 0
      %1231 = vmatpush2.bf16.msra.mxu0 0
      %1232 = vmatprep.subr.bf16.mxu0 0
      %1233 = vmatpush2.bf16.msra.mxu0 0
      %1234 = vmatprep.subr.bf16.mxu0 0
      %1235 = vmatpush2.bf16.msra.mxu0 0
      %1236 = vmatprep.mubr.bf16.mxu0 0
      %1237 = vmatmul.mubr.bf16.gmra.mxu0 %v1199
      %v1238 = vpop.f32.mrf.mxu0
      %v1239 = vadd.f32 0.0, %v1238
      %v1240 = vpop.f32.mrf.mxu0
      %v1241 = vpop.f32.mrf.mxu0
      %v1242 = vadd.f32 0.0, %v1241
      %v1243 = vpop.f32.mrf.mxu0
      %1244 = vmatprep.mubr.bf16.mxu0 0
      %1245 = vmatmul.mubr.bf16.gmra.mxu0 %v1202
      %v1246 = vpop.f32.mrf.mxu0
      %v1247 = vadd.f32 0.0, %v1246
      %v1248 = vpop.f32.mrf.mxu0
      %v1249 = vpop.f32.mrf.mxu0
      %v1250 = vadd.f32 0.0, %v1249
      %v1251 = vpop.f32.mrf.mxu0
      %1252 = vdwg.mxu0
      %v1253 = vadd.f32 %v1170, %v1239
      %v1254 = vadd.f32 %v1171, %v1242
      %v1255 = vadd.f32 %v1172, %v1247
      %v1256 = vadd.f32 %v1173, %v1250
      %s1257 = scalar_lea.vmem %s1, 56
      %v1258 = vld [vmem:[%s1257] sm:$0xf]
      %v1259 = vld [vmem:[%s1257 + $0x4] sm:$0xf]
      %v1260 = vshrl.u32 %v1190, 16
      %v1262 = vshll.u32 %v1190, 16
      %v1264 = vrot.slane %v1262, 1
      %v1265 = vor.u32 %v1260, %v1264
      %v1266 = vshll.u32 %v1191, 16
      %v1268 = vrot.slane %v1266, 1
      %v1269 = vsel %vm191, %v1265, %v1268
      %v1270 = vshrl.u32 %v1191, 16
      %v1272 = vor.u32 %v1270, %v1268
      %v1275 = vunpack.c.l.b16 %v1258
      %v1276 = vunpack.c.l.b16 %v1259
      %v1277 = vpack.c.b16 %v1276, %v1275
      %v1280 = vsel %vm213, %v1269, 0
      %v1283 = vsel %vm213, %v1272, 0
      %1285 = vmatprep.subr.bf16.mxu0 0
      %1286 = vmatpush1.bf16.msra.mxu0 0
      %1287 = vmatprep.subr.bf16.mxu0 0
      %1288 = vmatpush1.bf16.msra.mxu0 0
      %1289 = vmatprep.subr.bf16.mxu0 0
      %1290 = vmatpush1.bf16.msra.mxu0 0
      %1291 = vmatprep.subr.bf16.mxu0 0
      %1292 = vmatpush1.bf16.msra.mxu0 0
      %1293 = vmatprep.subr.bf16.mxu0 0
      %1294 = vmatpush1.bf16.msra.mxu0 0
      %1295 = vmatprep.subr.bf16.mxu0 0
      %1296 = vmatpush1.bf16.msra.mxu0 0
      %1297 = vmatprep.subr.bf16.mxu0 0
      %1298 = vmatpush1.bf16.msra.mxu0 0
      %1299 = vmatprep.subr.bf16.mxu0 0
      %1300 = vmatpush1.bf16.msra.mxu0 %v1277
      %1301 = vmatprep.subr.bf16.mxu0 0
      %1302 = vmatpush2.bf16.msra.mxu0 0
      %1303 = vmatprep.subr.bf16.mxu0 0
      %1304 = vmatpush2.bf16.msra.mxu0 0
      %1305 = vmatprep.subr.bf16.mxu0 0
      %1306 = vmatpush2.bf16.msra.mxu0 0
      %1307 = vmatprep.subr.bf16.mxu0 0
      %1308 = vmatpush2.bf16.msra.mxu0 0
      %1309 = vmatprep.subr.bf16.mxu0 0
      %1310 = vmatpush2.bf16.msra.mxu0 0
      %1311 = vmatprep.subr.bf16.mxu0 0
      %1312 = vmatpush2.bf16.msra.mxu0 0
      %1313 = vmatprep.subr.bf16.mxu0 0
      %1314 = vmatpush2.bf16.msra.mxu0 0
      %1315 = vmatprep.subr.bf16.mxu0 0
      %1316 = vmatpush2.bf16.msra.mxu0 0
      %1317 = vmatprep.mubr.bf16.mxu0 0
      %1318 = vmatmul.mubr.bf16.gmra.mxu0 %v1280
      %v1319 = vpop.f32.mrf.mxu0
      %v1320 = vadd.f32 0.0, %v1319
      %v1321 = vpop.f32.mrf.mxu0
      %v1322 = vpop.f32.mrf.mxu0
      %v1323 = vadd.f32 0.0, %v1322
      %v1324 = vpop.f32.mrf.mxu0
      %1325 = vmatprep.mubr.bf16.mxu0 0
      %1326 = vmatmul.mubr.bf16.gmra.mxu0 %v1283
      %v1327 = vpop.f32.mrf.mxu0
      %v1328 = vadd.f32 0.0, %v1327
      %v1329 = vpop.f32.mrf.mxu0
      %v1330 = vpop.f32.mrf.mxu0
      %v1331 = vadd.f32 0.0, %v1330
      %v1332 = vpop.f32.mrf.mxu0
      %1333 = vdwg.mxu0
      %v1334 = vadd.f32 %v1253, %v1320
      %v1335 = vadd.f32 %v1254, %v1323
      %v1336 = vadd.f32 %v1255, %v1328
      %v1337 = vadd.f32 %v1256, %v1331
      %v1338 = vld [vmem:[%s1174] sm:$0xc]
      %v1339 = vld [vmem:[%s1174 + $0xc] sm:$0x7]
      %s1340 = scalar_lea.vmem %s1, 104
      %v1341 = vld [vmem:[%s1340] sm:$0xf]
      %v1342 = vld [vmem:[%s1340 + $0x4] sm:$0xf]
      %v1345 = vunpack.c.l.b16 %v1338
      %v1346 = vunpack.c.l.b16 %v1339
      %v1347 = vpack.c.b16 %v1187, %v1345
      %v1348 = vpack.c.b16 %v1346, %v1188
      %v1350 = vshrl.u32 %v1347, 16
      %v1352 = vrot.slane %v1350, 2
      %v1353 = vshll.u32 %v1347, 16
      %v1355 = vrot.slane %v1353, 3
      %v1356 = vor.u32 %v1352, %v1355
      %v1358 = vshrl.u32 %v1348, 16
      %v1360 = vrot.slane %v1358, 2
      %v1361 = vshll.u32 %v1348, 16
      %v1363 = vrot.slane %v1361, 3
      %v1364 = vor.u32 %v1360, %v1363
      %v1365 = vsel %vm339, %v1356, %v1364
      %v1368 = vunpack.c.l.b16 %v1341
      %v1369 = vunpack.c.l.b16 %v1342
      %v1370 = vpack.c.b16 %v1369, %v1368
      %v1373 = vsel %vm213, %v1365, 0
      %v1376 = vsel %vm213, %v1364, 0
      %1378 = vmatprep.subr.bf16.mxu0 0
      %1379 = vmatpush1.bf16.msra.mxu0 0
      %1380 = vmatprep.subr.bf16.mxu0 0
      %1381 = vmatpush1.bf16.msra.mxu0 0
      %1382 = vmatprep.subr.bf16.mxu0 0
      %1383 = vmatpush1.bf16.msra.mxu0 0
      %1384 = vmatprep.subr.bf16.mxu0 0
      %1385 = vmatpush1.bf16.msra.mxu0 0
      %1386 = vmatprep.subr.bf16.mxu0 0
      %1387 = vmatpush1.bf16.msra.mxu0 0
      %1388 = vmatprep.subr.bf16.mxu0 0
      %1389 = vmatpush1.bf16.msra.mxu0 0
      %1390 = vmatprep.subr.bf16.mxu0 0
      %1391 = vmatpush1.bf16.msra.mxu0 0
      %1392 = vmatprep.subr.bf16.mxu0 0
      %1393 = vmatpush1.bf16.msra.mxu0 %v1370
      %1394 = vmatprep.subr.bf16.mxu0 0
      %1395 = vmatpush2.bf16.msra.mxu0 0
      %1396 = vmatprep.subr.bf16.mxu0 0
      %1397 = vmatpush2.bf16.msra.mxu0 0
      %1398 = vmatprep.subr.bf16.mxu0 0
      %1399 = vmatpush2.bf16.msra.mxu0 0
      %1400 = vmatprep.subr.bf16.mxu0 0
      %1401 = vmatpush2.bf16.msra.mxu0 0
      %1402 = vmatprep.subr.bf16.mxu0 0
      %1403 = vmatpush2.bf16.msra.mxu0 0
      %1404 = vmatprep.subr.bf16.mxu0 0
      %1405 = vmatpush2.bf16.msra.mxu0 0
      %1406 = vmatprep.subr.bf16.mxu0 0
      %1407 = vmatpush2.bf16.msra.mxu0 0
      %1408 = vmatprep.subr.bf16.mxu0 0
      %1409 = vmatpush2.bf16.msra.mxu0 0
      %1410 = vmatprep.mubr.bf16.mxu0 0
      %1411 = vmatmul.mubr.bf16.gmra.mxu0 %v1373
      %v1412 = vpop.f32.mrf.mxu0
      %v1413 = vadd.f32 0.0, %v1412
      %v1414 = vpop.f32.mrf.mxu0
      %v1415 = vpop.f32.mrf.mxu0
      %v1416 = vadd.f32 0.0, %v1415
      %v1417 = vpop.f32.mrf.mxu0
      %1418 = vmatprep.mubr.bf16.mxu0 0
      %1419 = vmatmul.mubr.bf16.gmra.mxu0 %v1376
      %v1420 = vpop.f32.mrf.mxu0
      %v1421 = vadd.f32 0.0, %v1420
      %v1422 = vpop.f32.mrf.mxu0
      %v1423 = vpop.f32.mrf.mxu0
      %v1424 = vadd.f32 0.0, %v1423
      %v1425 = vpop.f32.mrf.mxu0
      %1426 = vdwg.mxu0
      %v1427 = vadd.f32 %v1334, %v1413
      %v1428 = vadd.f32 %v1335, %v1416
      %v1429 = vadd.f32 %v1336, %v1421
      %v1430 = vadd.f32 %v1337, %v1424
      %v1431 = vld [vmem:[%s1174] sm:$0x8]
      %v1432 = vld [vmem:[%s1174 + $0xc] sm:$0xf]
      %s1433 = scalar_lea.vmem %s1, 120
      %v1434 = vld [vmem:[%s1433] sm:$0xf]
      %v1435 = vld [vmem:[%s1433 + $0x4] sm:$0xf]
      %v1438 = vunpack.c.l.b16 %v1431
      %v1439 = vunpack.c.l.b16 %v1432
      %v1440 = vpack.c.b16 %v1187, %v1438
      %v1441 = vpack.c.b16 %v1439, %v1188
      %v1442 = vrot.slane %v1440, 3
      %v1443 = vrot.slane %v1441, 3
      %v1444 = vsel %vm433, %v1442, %v1443
      %v1447 = vunpack.c.l.b16 %v1434
      %v1448 = vunpack.c.l.b16 %v1435
      %v1449 = vpack.c.b16 %v1448, %v1447
      %v1452 = vsel %vm213, %v1444, 0
      %v1455 = vsel %vm213, %v1443, 0
      %1457 = vmatprep.subr.bf16.mxu0 0
      %1458 = vmatpush1.bf16.msra.mxu0 0
      %1459 = vmatprep.subr.bf16.mxu0 0
      %1460 = vmatpush1.bf16.msra.mxu0 0
      %1461 = vmatprep.subr.bf16.mxu0 0
      %1462 = vmatpush1.bf16.msra.mxu0 0
      %1463 = vmatprep.subr.bf16.mxu0 0
      %1464 = vmatpush1.bf16.msra.mxu0 0
      %1465 = vmatprep.subr.bf16.mxu0 0
      %1466 = vmatpush1.bf16.msra.mxu0 0
      %1467 = vmatprep.subr.bf16.mxu0 0
      %1468 = vmatpush1.bf16.msra.mxu0 0
      %1469 = vmatprep.subr.bf16.mxu0 0
      %1470 = vmatpush1.bf16.msra.mxu0 0
      %1471 = vmatprep.subr.bf16.mxu0 0
      %1472 = vmatpush1.bf16.msra.mxu0 %v1449
      %1473 = vmatprep.subr.bf16.mxu0 0
      %1474 = vmatpush2.bf16.msra.mxu0 0
      %1475 = vmatprep.subr.bf16.mxu0 0
      %1476 = vmatpush2.bf16.msra.mxu0 0
      %1477 = vmatprep.subr.bf16.mxu0 0
      %1478 = vmatpush2.bf16.msra.mxu0 0
      %1479 = vmatprep.subr.bf16.mxu0 0
      %1480 = vmatpush2.bf16.msra.mxu0 0
      %1481 = vmatprep.subr.bf16.mxu0 0
      %1482 = vmatpush2.bf16.msra.mxu0 0
      %1483 = vmatprep.subr.bf16.mxu0 0
      %1484 = vmatpush2.bf16.msra.mxu0 0
      %1485 = vmatprep.subr.bf16.mxu0 0
      %1486 = vmatpush2.bf16.msra.mxu0 0
      %1487 = vmatprep.subr.bf16.mxu0 0
      %1488 = vmatpush2.bf16.msra.mxu0 0
      %1489 = vmatprep.mubr.bf16.mxu0 0
      %1490 = vmatmul.mubr.bf16.gmra.mxu0 %v1452
      %v1491 = vpop.f32.mrf.mxu0
      %v1492 = vadd.f32 0.0, %v1491
      %v1493 = vpop.f32.mrf.mxu0
      %v1494 = vpop.f32.mrf.mxu0
      %v1495 = vadd.f32 0.0, %v1494
      %v1496 = vpop.f32.mrf.mxu0
      %1497 = vmatprep.mubr.bf16.mxu0 0
      %1498 = vmatmul.mubr.bf16.gmra.mxu0 %v1455
      %v1499 = vpop.f32.mrf.mxu0
      %v1500 = vadd.f32 0.0, %v1499
      %v1501 = vpop.f32.mrf.mxu0
      %v1502 = vpop.f32.mrf.mxu0
      %v1503 = vadd.f32 0.0, %v1502
      %v1504 = vpop.f32.mrf.mxu0
      %1505 = vdwg.mxu0
      %v1506 = vadd.f32 %v1427, %v1492
      %v1507 = vadd.f32 %v1428, %v1495
      %v1508 = vadd.f32 %v1429, %v1500
      %v1509 = vadd.f32 %v1430, %v1503
      %v1510 = vld [vmem:[%s2] sm:$0x1]
      %v1512 = vlaneseq
      %v1513 = vshrl.u32 %v1512, 7
      %v1514 = vsub.s32 0, %v1513
      %v1515 = vrot.slane %v1510, %v1514
      %v1517 = vadd.f32 %v1506, %v1515
      %v1518 = vadd.f32 %v1507, %v1515
      %v1519 = vadd.f32 %v1508, %v1515
      %v1520 = vadd.f32 %v1509, %v1515
      %v1521 = vmax.f32 %v1517, 0.0
      %v1522 = vmax.f32 %v1518, 0.0
      %v1523 = vmax.f32 %v1519, 0.0
      %v1524 = vmax.f32 %v1520, 0.0
      %v1525 = vpack.c.bf16 %v1522, %v1521
      %v1526 = vpack.c.bf16 %v1524, %v1523
      %v1529 = vunpack.c.l.b16 %v1525
      %v1530 = vunpack.c.h.b16 %v1525
      %v1531 = vunpack.c.l.b16 %v1526
      %v1532 = vunpack.c.h.b16 %v1526
      %v1533 = vpack.c.b16 %v1529, %v1529
      %v1534 = vpack.c.b16 %v1530, %v1530
      %v1535 = vpack.c.b16 %v1531, %v1531
      %v1536 = vpack.c.b16 %v1532, %v1532
      %vm1541 = vcmask 257024
      %1542 = vst.msk [vmem:[%s170] sm:$0xf] %vm1541, %v1533
      %1543 = vst.msk [vmem:[%s170 + $0x4] sm:$0xf] %vm1541, %v1534
      %1544 = vst.msk [vmem:[%s170 + $0x8] sm:$0xf] %vm1541, %v1535
      %vm1545 = vcmask 253952
      %vm1546 = vsmask.f32 256
      %vm1547 = vmand %vm1545, %vm1546
      %v1548 = vld [vmem:[%s170 + $0xc] sm:$0x1]
      %v1549 = vsel %vm1547, %v1536, %v1548
      %1550 = vst [vmem:[%s170 + $0xc] sm:$0x1] %v1549
      %p1551 = scmp.lt.s32.totalorder %s14, 1
      %s1552 = scalar_select %p1551, %s14, 1
      %s1553 = smul.addr %s1552, 4
      %s1554 = smul.addr %s1553, 4
      %s1555 = scalar_lea.vmem %s3, %s1554
      // Predicated region
      $region33: #{encoder_forward.4} parent=31 // pred_check
        %p1556 = pneg %p100
      $region34: #{encoder_forward.4} parent=31 // pred_check_branch
        %1558 = sbr.rel (%p1556) target = $region36
      $region35: #{encoder_forward.4} parent=31 // pred_region
        _
      $region36: #{encoder_forward.4} parent=31 // pred_fallthru
        _
    $region32: #{encoder_forward.4} parent=5 // pred_fallthru
      _
    %p1559 = scmp.le.s32.totalorder 2, %s9
    // Predicated region
    $region37: #{encoder_forward.4} parent=5 // pred_check
      %p1560 = pneg %p1559
    $region38: #{encoder_forward.4} parent=5 // pred_check_branch
      %1562 = sbr.rel (%p1560) target = $region40
    $region39: #{encoder_forward.4} parent=5 // pred_region
      %s1563 = ssub.s32 %s9, 2
      // Predicated region
      $region41: #{encoder_forward.4} parent=39 // pred_check
        %p1564 = pneg %p106
      $region42: #{encoder_forward.4} parent=39 // pred_check_branch
        %1566 = sbr.rel (%p1564) target = $region44
      $region43: #{encoder_forward.4} parent=39 // pred_region
        %p1567 = scmp.lt.s32.totalorder %s15, 1
        %s1568 = scalar_select %p1567, %s15, 1
        %s1569 = smul.addr %s1568, 4
        %s1570 = smul.addr %s1569, 4
        %s1571 = scalar_lea.vmem %s3, %s1570
      $region44: #{encoder_forward.4} parent=39 // pred_fallthru
        _
    $region40: #{encoder_forward.4} parent=5 // pred_fallthru
      _
  $region6: #{encoder_forward.4} parent=0 // loop_footer
    %s13 = sadd.s32 1, %s9
  $region7: #{encoder_forward.4} parent=0 // loop_footer_branch
    %8 = sbr.rel target = $region3
  $region8: #{encoder_forward.4} parent=0 // loop_exit
    _

// kernel: encoder_forward.3
$region0: #{encoder_forward.3}
  #allocation0 [shape = 'u32[]', space=smem, size = 0x4, offset = 0x4, fixed_abs, tag = 'smem constant byte address 0x4 - core index']
  #allocation1 [shape = 'u32[144,128]{1,0:T(1,128)}', space=vmem, size = 0x12000, scoped, tag = 'internal scratch']
  %s0 = inlined_call_operand.vmem [shape: bf16[2,4,91,3], index: 0, kind: input, shape index: {}]
  %s1 = inlined_call_operand.vmem [shape: bf16[16,3,16], index: 1, kind: input, shape index: {}]
  %s2 = inlined_call_operand.vmem [shape: f32[1,16], index: 2, kind: input, shape index: {}]
  %s3 = inlined_call_operand.vmem [shape: bf16[2,81,16], index: 3, kind: output, shape index: {}]
  %s4 = sld [smem:[#allocation0]]
  $region45: #{encoder_forward.3} parent=0
    _
  %s6 = ssub.s32 1, %s4
  %s7 = scalar_select 0, %s6, %s4
  loop: start=0, step=1, limit=4
  $region2: #{encoder_forward.3} parent=0 // loop_pre_header
    _
  $region3: #{encoder_forward.3} parent=0 // loop_header
    %s9 = sphi 0, %s13
    %p10 = scmp.ge.s32.totalorder %s9, 4
    %s19 = sphi 0, %s21
    %s22 = sphi 0, %s19
    %s23 = sphi 0, %s22
    %s39 = sphi 0, %s23
    %s43 = sphi 0, %s43
    %s45 = sphi 0, %s43
    %s46 = sphi 0, %s45
    %s60 = sphi 0, %s46
    %s64 = sphi 0, %s64
    %s66 = sphi 0, %s64
    %s67 = sphi 0, %s66
    %s81 = sphi 0, %s67
    %s87 = sphi 0, %s89
    %s90 = sphi 0, %s87
    %s91 = sphi 0, %s90
    %s107 = sphi 0, %s91
  $region4: #{encoder_forward.3} parent=0 // loop_header_branch
    %12 = sbr.rel (%p10) target = $region8
  $region5: #{encoder_forward.3} parent=0 // loop_body
    %s14 = ssub.s32 %s9, 1
    %s15 = ssub.s32 %s9, 2
    %s16 = sadd.s32 %s9, 1
    %s17 = ssub.s32 %s9, %s16
    %p18 = scmp.eq.s32.totalorder %s17, 0
    %s20 = sadd.s32 %s19, 1
    %s21 = scalar_select %p18, %s19, %s20
    %p24 = pneg %p18
    %p25 = scmp.eq.s32.totalorder %s9, 1
    %p26 = por %p24, %p25
    %p27 = scmp.ne.s32.totalorder %s19, %s22
    %p28 = scmp.eq.s32.totalorder %s9, 0
    %p29 = por %p27, %p28
    %p30 = scmp.ne.s32.totalorder %s19, %s22
    %p31 = scmp.eq.s32.totalorder %s14, 1
    %p32 = por %p30, %p31
    %p33 = scmp.ne.s32.totalorder %s22, %s23
    %p34 = scmp.eq.s32.totalorder %s14, 0
    %p35 = por %p33, %p34
    %p36 = scmp.ne.s32.totalorder %s22, %s23
    %p37 = scmp.eq.s32.totalorder %s15, 1
    %p38 = por %p36, %p37
    %p40 = scmp.ne.s32.totalorder %s23, %s39
    %p41 = scmp.eq.s32.totalorder %s15, 0
    %p42 = por %p40, %p41
    %s44 = sadd.s32 %s43, 1
    %p47 = scmp.eq.s32.totalorder %s9, 1
    %p48 = scmp.ne.s32.totalorder %s43, %s45
    %p49 = scmp.eq.s32.totalorder %s9, 0
    %p50 = por %p48, %p49
    %p51 = scmp.ne.s32.totalorder %s43, %s45
    %p52 = scmp.eq.s32.totalorder %s14, 1
    %p53 = por %p51, %p52
    %p54 = scmp.ne.s32.totalorder %s45, %s46
    %p55 = scmp.eq.s32.totalorder %s14, 0
    %p56 = por %p54, %p55
    %p57 = scmp.ne.s32.totalorder %s45, %s46
    %p58 = scmp.eq.s32.totalorder %s15, 1
    %p59 = por %p57, %p58
    %p61 = scmp.ne.s32.totalorder %s46, %s60
    %p62 = scmp.eq.s32.totalorder %s15, 0
    %p63 = por %p61, %p62
    %s65 = sadd.s32 %s64, 1
    %p68 = scmp.eq.s32.totalorder %s9, 1
    %p69 = scmp.ne.s32.totalorder %s64, %s66
    %p70 = scmp.eq.s32.totalorder %s9, 0
    %p71 = por %p69, %p70
    %p72 = scmp.ne.s32.totalorder %s64, %s66
    %p73 = scmp.eq.s32.totalorder %s14, 1
    %p74 = por %p72, %p73
    %p75 = scmp.ne.s32.totalorder %s66, %s67
    %p76 = scmp.eq.s32.totalorder %s14, 0
    %p77 = por %p75, %p76
    %p78 = scmp.ne.s32.totalorder %s66, %s67
    %p79 = scmp.eq.s32.totalorder %s15, 1
    %p80 = por %p78, %p79
    %p82 = scmp.ne.s32.totalorder %s67, %s81
    %p83 = scmp.eq.s32.totalorder %s15, 0
    %p84 = por %p82, %p83
    %s85 = ssub.s32 %s9, %s16
    %p86 = scmp.eq.s32.totalorder %s85, 0
    %s88 = sadd.s32 %s87, 1
    %s89 = scalar_select %p86, %s87, %s88
    %p92 = pneg %p86
    %p93 = scmp.eq.s32.totalorder %s9, 1
    %p94 = por %p92, %p93
    %p95 = scmp.ne.s32.totalorder %s87, %s90
    %p96 = scmp.eq.s32.totalorder %s9, 0
    %p97 = por %p95, %p96
    %p98 = scmp.ne.s32.totalorder %s87, %s90
    %p99 = scmp.eq.s32.totalorder %s14, 1
    %p100 = por %p98, %p99
    %p101 = scmp.ne.s32.totalorder %s90, %s91
    %p102 = scmp.eq.s32.totalorder %s14, 0
    %p103 = por %p101, %p102
    %p104 = scmp.ne.s32.totalorder %s90, %s91
    %p105 = scmp.eq.s32.totalorder %s15, 1
    %p106 = por %p104, %p105
    %p108 = scmp.ne.s32.totalorder %s91, %s107
    %p109 = scmp.eq.s32.totalorder %s15, 0
    %p110 = por %p108, %p109
    %p111 = scmp.le.s32.totalorder 1, %s9
    %p112 = scmp.lt.s32.totalorder %s9, 3
    %p113 = pnand %p111, %p112
    %p114 = pneg %p113
    // Predicated region
    $region9: #{encoder_forward.3} parent=5 // pred_check
      _
    $region10: #{encoder_forward.3} parent=5 // pred_check_branch
      %116 = sbr.rel (%p113) target = $region12
    $region11: #{encoder_forward.3} parent=5 // pred_region
      %s117 = ssub.s32 %s9, 1
      // Predicated region
      $region13: #{encoder_forward.3} parent=11 // pred_check
        %p118 = pneg %p56
      $region14: #{encoder_forward.3} parent=11 // pred_check_branch
        %120 = sbr.rel (%p118) target = $region16
      $region15: #{encoder_forward.3} parent=11 // pred_region
        _
      $region16: #{encoder_forward.3} parent=11 // pred_fallthru
        _
      // Predicated region
      $region17: #{encoder_forward.3} parent=11 // pred_check
        %p121 = pneg %p77
      $region18: #{encoder_forward.3} parent=11 // pred_check_branch
        %123 = sbr.rel (%p121) target = $region20
      $region19: #{encoder_forward.3} parent=11 // pred_region
        _
      $region20: #{encoder_forward.3} parent=11 // pred_fallthru
        _
    $region12: #{encoder_forward.3} parent=5 // pred_fallthru
      _
    %p124 = scmp.lt.s32.totalorder %s9, 2
    // Predicated region
    $region21: #{encoder_forward.3} parent=5 // pred_check
      %p125 = pneg %p124
    $region22: #{encoder_forward.3} parent=5 // pred_check_branch
      %127 = sbr.rel (%p125) target = $region24
    $region23: #{encoder_forward.3} parent=5 // pred_region
      // Predicated region
      $region25: #{encoder_forward.3} parent=23 // pred_check
        %p128 = pneg %p29
      $region26: #{encoder_forward.3} parent=23 // pred_check_branch
        %130 = sbr.rel (%p128) target = $region28
      $region27: #{encoder_forward.3} parent=23 // pred_region
        %p131 = scmp.lt.s32.totalorder %s9, 1
        %s132 = scalar_select %p131, %s9, 1
        %s133 = smul.addr %s132, 48
        %s134 = smul.addr %s133, 4
        %s135 = scalar_lea.vmem %s0, %s134
      $region28: #{encoder_forward.3} parent=23 // pred_fallthru
        _
    $region24: #{encoder_forward.3} parent=5 // pred_fallthru
      _
    %p136 = scmp.le.s32.totalorder 1, %s9
    %p137 = scmp.lt.s32.totalorder %s9, 3
    %p138 = pnand %p136, %p137
    %p139 = pneg %p138
    // Predicated region
    $region29: #{encoder_forward.3} parent=5 // pred_check
      _
    $region30: #{encoder_forward.3} parent=5 // pred_check_branch
      %141 = sbr.rel (%p138) target = $region32
    $region31: #{encoder_forward.3} parent=5 // pred_region
      %s142 = ssub.s32 %s9, 1
      %p143 = scmp.lt.s32.totalorder %s14, 1
      %s144 = scalar_select %p143, %s14, 1
      %s145 = smul.addr %s144, 48
      %s146 = smul.addr %s145, 4
      %s147 = scalar_lea.vmem %s0, %s146
      %p148 = pneg %p35
      %p149 = pneg %p32
      %p150 = pneg %p56
      %p151 = pneg %p53
      %p152 = pneg %p77
      %p153 = pneg %p74
      %p154 = pneg %p103
      %p155 = pneg %p100
      %p156 = scmp.lt.s32.totalorder %s14, 1
      %s157 = scalar_select %p156, %s14, 1
      %s158 = smul.addr %s157, 11
      %s159 = smul.addr %s158, 4
      %s160 = scalar_lea.vmem %s3, %s159
      %p161 = scmp.lt.s32.totalorder %s14, 1
      %s162 = scalar_select %p161, %s14, 1
      %s163 = smul.addr %s162, 48
      %s164 = smul.addr %s163, 4
      %s165 = scalar_lea.vmem %s0, %s164
      %p166 = scmp.lt.s32.totalorder %s14, 1
      %s167 = scalar_select %p166, %s14, 1
      %s168 = smul.addr %s167, 11
      %s169 = smul.addr %s168, 4
      %s170 = scalar_lea.vmem %s3, %s169
      %v172 = vld [vmem:[%s165] sm:$0xf]
      %v173 = vld [vmem:[%s165 + $0x4] sm:$0xf]
      %v174 = vld [vmem:[%s165 + $0x8] sm:$0xf]
      %v175 = vld [vmem:[%s165 + $0xc] sm:$0xf]
      %v176 = vld [vmem:[%s165 + $0x10] sm:$0xf]
      %v177 = vld [vmem:[%s165 + $0x14] sm:$0xf]
      %v178 = vld [vmem:[%s165 + $0x18] sm:$0xf]
      %v179 = vld [vmem:[%s165 + $0x1c] sm:$0xf]
      %v180 = vld [vmem:[%s165 + $0x20] sm:$0xf]
      %v181 = vld [vmem:[%s165 + $0x24] sm:$0xf]
      %v182 = vld [vmem:[%s165 + $0x28] sm:$0x1]
      %v183 = vld [vmem:[%s1] sm:$0x3]
      %s184 = scalar_lea.vmem %s1, 4
      %v185 = vld [vmem:[%s184] sm:$0x3]
      %v197 = vunpack.c.l.b16 %v172
      %v198 = vunpack.c.l.b16 %v173
      %v199 = vunpack.c.l.b16 %v174
      %v200 = vunpack.c.l.b16 %v175
      %v201 = vunpack.c.l.b16 %v176
      %v202 = vunpack.c.l.b16 %v177
      %v203 = vunpack.c.l.b16 %v178
      %v204 = vunpack.c.l.b16 %v179
      %v205 = vunpack.c.l.b16 %v180
      %v206 = vunpack.c.l.b16 %v181
      %v207 = vunpack.c.l.b16 %v182
      %v208 = vpack.c.b16 %v198, %v197
      %v209 = vpack.c.b16 %v200, %v199
      %v210 = vpack.c.b16 %v202, %v201
      %v211 = vpack.c.b16 %v204, %v203
      %v212 = vpack.c.b16 %v206, %v205
      %v213 = vpack.c.b16 %v207, %v207
      %vm214 = vsmask.f32 7424
      %v216 = vshrl.u32 %v208, 16
      %v218 = vshll.u32 %v208, 16
      %v220 = vrot.slane %v218, 1
      %v221 = vor.u32 %v216, %v220
      %v223 = vshll.u32 %v209, 16
      %v225 = vrot.slane %v223, 1
      %v226 = vsel %vm214, %v221, %v225
      %v227 = vshrl.u32 %v209, 16
      %v229 = vor.u32 %v227, %v225
      %v231 = vshll.u32 %v210, 16
      %v233 = vrot.slane %v231, 1
      %v234 = vsel %vm214, %v229, %v233
      %v235 = vshrl.u32 %v210, 16
      %v237 = vor.u32 %v235, %v233
      %v239 = vshll.u32 %v211, 16
      %v241 = vrot.slane %v239, 1
      %v242 = vsel %vm214, %v237, %v241
      %v243 = vshrl.u32 %v211, 16
      %v245 = vor.u32 %v243, %v241
      %v247 = vshll.u32 %v212, 16
      %v249 = vrot.slane %v247, 1
      %v250 = vsel %vm214, %v245, %v249
      %v251 = vshrl.u32 %v212, 16
      %v253 = vor.u32 %v251, %v249
      %v255 = vshll.u32 %v213, 16
      %v257 = vrot.slane %v255, 1
      %v258 = vsel %vm214, %v253, %v257
      %v259 = vshrl.u32 %v213, 16
      %vm261 = vcmask 23552
      %v263 = vsel %vm261, %v226, 0
      %v266 = vsel %vm261, %v234, 0
      %v269 = vsel %vm261, %v242, 0
      %v272 = vsel %vm261, %v250, 0
      %v275 = vsel %vm261, %v258, 0
      %v278 = vsel %vm261, %v259, 0
      %vm280 = vcmask 1040384
      %vm281 = vcmask 1041408
      %v282 = vsel %vm280, 4294967295, 65535
      %v283 = vsel %vm281, %v282, 0
      %v285 = vand.u32 %v185, %v283
      %287 = vmatprep.subr.bf16.mxu0 0
      %288 = vmatpush1.bf16.msra.mxu0 0
      %289 = vmatprep.subr.bf16.mxu0 0
      %290 = vmatpush1.bf16.msra.mxu0 0
      %291 = vmatprep.subr.bf16.mxu0 0
      %292 = vmatpush1.bf16.msra.mxu0 0
      %293 = vmatprep.subr.bf16.mxu0 0
      %294 = vmatpush1.bf16.msra.mxu0 0
      %295 = vmatprep.subr.bf16.mxu0 0
      %296 = vmatpush1.bf16.msra.mxu0 0
      %297 = vmatprep.subr.bf16.mxu0 0
      %298 = vmatpush1.bf16.msra.mxu0 0
      %299 = vmatprep.subr.bf16.mxu0 0
      %300 = vmatpush1.bf16.msra.mxu0 0
      %301 = vmatprep.subr.bf16.mxu0 0
      %302 = vmatpush1.bf16.msra.mxu0 %v285
      %303 = vmatprep.subr.bf16.mxu0 0
      %304 = vmatpush2.bf16.msra.mxu0 0
      %305 = vmatprep.subr.bf16.mxu0 0
      %306 = vmatpush2.bf16.msra.mxu0 0
      %307 = vmatprep.subr.bf16.mxu0 0
      %308 = vmatpush2.bf16.msra.mxu0 0
      %309 = vmatprep.subr.bf16.mxu0 0
      %310 = vmatpush2.bf16.msra.mxu0 0
      %311 = vmatprep.subr.bf16.mxu0 0
      %312 = vmatpush2.bf16.msra.mxu0 0
      %313 = vmatprep.subr.bf16.mxu0 0
      %314 = vmatpush2.bf16.msra.mxu0 0
      %315 = vmatprep.subr.bf16.mxu0 0
      %316 = vmatpush2.bf16.msra.mxu0 0
      %317 = vmatprep.subr.bf16.mxu0 0
      %318 = vmatpush2.bf16.msra.mxu0 0
      %319 = vmatprep.mubr.bf16.mxu0 0
      %320 = vmatmul.mubr.bf16.gmra.mxu0 %v263
      %v321 = vpop.f32.mrf.mxu0
      %v322 = vadd.f32 0.0, %v321
      %v323 = vpop.f32.mrf.mxu0
      %v324 = vpop.f32.mrf.mxu0
      %v325 = vadd.f32 0.0, %v324
      %v326 = vpop.f32.mrf.mxu0
      %327 = vmatprep.mubr.bf16.mxu0 0
      %328 = vmatmul.mubr.bf16.gmra.mxu0 %v266
      %v329 = vpop.f32.mrf.mxu0
      %v330 = vadd.f32 0.0, %v329
      %v331 = vpop.f32.mrf.mxu0
      %v332 = vpop.f32.mrf.mxu0
      %v333 = vadd.f32 0.0, %v332
      %v334 = vpop.f32.mrf.mxu0
      %335 = vmatprep.mubr.bf16.mxu0 0
      %336 = vmatmul.mubr.bf16.gmra.mxu0 %v269
      %v337 = vpop.f32.mrf.mxu0
      %v338 = vadd.f32 0.0, %v337
      %v339 = vpop.f32.mrf.mxu0
      %v340 = vpop.f32.mrf.mxu0
      %v341 = vadd.f32 0.0, %v340
      %v342 = vpop.f32.mrf.mxu0
      %343 = vmatprep.mubr.bf16.mxu0 0
      %344 = vmatmul.mubr.bf16.gmra.mxu0 %v272
      %v345 = vpop.f32.mrf.mxu0
      %v346 = vadd.f32 0.0, %v345
      %v347 = vpop.f32.mrf.mxu0
      %v348 = vpop.f32.mrf.mxu0
      %v349 = vadd.f32 0.0, %v348
      %v350 = vpop.f32.mrf.mxu0
      %351 = vmatprep.mubr.bf16.mxu0 0
      %352 = vmatmul.mubr.bf16.gmra.mxu0 %v275
      %v353 = vpop.f32.mrf.mxu0
      %v354 = vadd.f32 0.0, %v353
      %v355 = vpop.f32.mrf.mxu0
      %v356 = vpop.f32.mrf.mxu0
      %v357 = vadd.f32 0.0, %v356
      %v358 = vpop.f32.mrf.mxu0
      %359 = vmatprep.mubr.bf16.mxu0 0
      %360 = vmatmul.mubr.bf16.gmra.mxu0 %v278
      %v361 = vpop.f32.mrf.mxu0
      %v362 = vadd.f32 0.0, %v361
      %v363 = vpop.f32.mrf.mxu0
      %v364 = vpop.f32.mrf.mxu0
      %v365 = vpop.f32.mrf.mxu0
      %366 = vdwg.mxu0
      %v367 = vsel %vm261, %v208, 0
      %v369 = vsel %vm261, %v209, 0
      %v371 = vsel %vm261, %v210, 0
      %v373 = vsel %vm261, %v211, 0
      %v375 = vsel %vm261, %v212, 0
      %v377 = vsel %vm261, %v213, 0
      %v380 = vand.u32 %v183, %v283
      %382 = vmatprep.subr.bf16.mxu0 0
      %383 = vmatpush1.bf16.msra.mxu0 0
      %384 = vmatprep.subr.bf16.mxu0 0
      %385 = vmatpush1.bf16.msra.mxu0 0
      %386 = vmatprep.subr.bf16.mxu0 0
      %387 = vmatpush1.bf16.msra.mxu0 0
      %388 = vmatprep.subr.bf16.mxu0 0
      %389 = vmatpush1.bf16.msra.mxu0 0
      %390 = vmatprep.subr.bf16.mxu0 0
      %391 = vmatpush1.bf16.msra.mxu0 0
      %392 = vmatprep.subr.bf16.mxu0 0
      %393 = vmatpush1.bf16.msra.mxu0 0
      %394 = vmatprep.subr.bf16.mxu0 0
      %395 = vmatpush1.bf16.msra.mxu0 0
      %396 = vmatprep.subr.bf16.mxu0 0
      %397 = vmatpush1.bf16.msra.mxu0 %v380
      %398 = vmatprep.subr.bf16.mxu0 0
      %399 = vmatpush2.bf16.msra.mxu0 0
      %400 = vmatprep.subr.bf16.mxu0 0
      %401 = vmatpush2.bf16.msra.mxu0 0
      %402 = vmatprep.subr.bf16.mxu0 0
      %403 = vmatpush2.bf16.msra.mxu0 0
      %404 = vmatprep.subr.bf16.mxu0 0
      %405 = vmatpush2.bf16.msra.mxu0 0
      %406 = vmatprep.subr.bf16.mxu0 0
      %407 = vmatpush2.bf16.msra.mxu0 0
      %408 = vmatprep.subr.bf16.mxu0 0
      %409 = vmatpush2.bf16.msra.mxu0 0
      %410 = vmatprep.subr.bf16.mxu0 0
      %411 = vmatpush2.bf16.msra.mxu0 0
      %412 = vmatprep.subr.bf16.mxu0 0
      %413 = vmatpush2.bf16.msra.mxu0 0
      %414 = vmatprep.mubr.bf16.mxu0 0
      %415 = vmatmul.mubr.bf16.gmra.mxu0 %v367
      %v416 = vpop.f32.mrf.mxu0
      %v417 = vadd.f32 %v322, %v416
      %v418 = vpop.f32.mrf.mxu0
      %v419 = vpop.f32.mrf.mxu0
      %v420 = vadd.f32 %v325, %v419
      %v421 = vpop.f32.mrf.mxu0
      %422 = vmatprep.mubr.bf16.mxu0 0
      %423 = vmatmul.mubr.bf16.gmra.mxu0 %v369
      %v424 = vpop.f32.mrf.mxu0
      %v425 = vadd.f32 %v330, %v424
      %v426 = vpop.f32.mrf.mxu0
      %v427 = vpop.f32.mrf.mxu0
      %v428 = vadd.f32 %v333, %v427
      %v429 = vpop.f32.mrf.mxu0
      %430 = vmatprep.mubr.bf16.mxu0 0
      %431 = vmatmul.mubr.bf16.gmra.mxu0 %v371
      %v432 = vpop.f32.mrf.mxu0
      %v433 = vadd.f32 %v338, %v432
      %v434 = vpop.f32.mrf.mxu0
      %v435 = vpop.f32.mrf.mxu0
      %v436 = vadd.f32 %v341, %v435
      %v437 = vpop.f32.mrf.mxu0
      %438 = vmatprep.mubr.bf16.mxu0 0
      %439 = vmatmul.mubr.bf16.gmra.mxu0 %v373
      %v440 = vpop.f32.mrf.mxu0
      %v441 = vadd.f32 %v346, %v440
      %v442 = vpop.f32.mrf.mxu0
      %v443 = vpop.f32.mrf.mxu0
      %v444 = vadd.f32 %v349, %v443
      %v445 = vpop.f32.mrf.mxu0
      %446 = vmatprep.mubr.bf16.mxu0 0
      %447 = vmatmul.mubr.bf16.gmra.mxu0 %v375
      %v448 = vpop.f32.mrf.mxu0
      %v449 = vadd.f32 %v354, %v448
      %v450 = vpop.f32.mrf.mxu0
      %v451 = vpop.f32.mrf.mxu0
      %v452 = vadd.f32 %v357, %v451
      %v453 = vpop.f32.mrf.mxu0
      %454 = vmatprep.mubr.bf16.mxu0 0
      %455 = vmatmul.mubr.bf16.gmra.mxu0 %v377
      %v456 = vpop.f32.mrf.mxu0
      %v457 = vadd.f32 %v362, %v456
      %v458 = vpop.f32.mrf.mxu0
      %v459 = vpop.f32.mrf.mxu0
      %v460 = vpop.f32.mrf.mxu0
      %461 = vdwg.mxu0
      %v462 = vld [vmem:[%s165 + $0x4] sm:$0xf]
      %v463 = vld [vmem:[%s165 + $0x8] sm:$0xf]
      %v464 = vld [vmem:[%s165 + $0xc] sm:$0xf]
      %v465 = vld [vmem:[%s165 + $0x10] sm:$0xf]
      %v466 = vld [vmem:[%s165 + $0x14] sm:$0xf]
      %v467 = vld [vmem:[%s165 + $0x18] sm:$0xf]
      %v468 = vld [vmem:[%s165 + $0x1c] sm:$0xf]
      %v469 = vld [vmem:[%s165 + $0x20] sm:$0xf]
      %v470 = vld [vmem:[%s165 + $0x24] sm:$0xf]
      %v471 = vld [vmem:[%s165 + $0x28] sm:$0xf]
      %v472 = vld [vmem:[%s165 + $0x2c] sm:$0x1]
      %s473 = scalar_lea.vmem %s1, 16
      %v474 = vld [vmem:[%s473] sm:$0x3]
      %v486 = vunpack.c.l.b16 %v462
      %v487 = vunpack.c.l.b16 %v463
      %v488 = vunpack.c.l.b16 %v464
      %v489 = vunpack.c.l.b16 %v465
      %v490 = vunpack.c.l.b16 %v466
      %v491 = vunpack.c.l.b16 %v467
      %v492 = vunpack.c.l.b16 %v468
      %v493 = vunpack.c.l.b16 %v469
      %v494 = vunpack.c.l.b16 %v470
      %v495 = vunpack.c.l.b16 %v471
      %v496 = vunpack.c.l.b16 %v472
      %v497 = vpack.c.b16 %v487, %v486
      %v498 = vpack.c.b16 %v489, %v488
      %v499 = vpack.c.b16 %v491, %v490
      %v500 = vpack.c.b16 %v493, %v492
      %v501 = vpack.c.b16 %v495, %v494
      %v502 = vpack.c.b16 %v496, %v496
      %v504 = vshrl.u32 %v497, 16
      %v506 = vshll.u32 %v497, 16
      %v508 = vrot.slane %v506, 1
      %v509 = vor.u32 %v504, %v508
      %v511 = vshll.u32 %v498, 16
      %v513 = vrot.slane %v511, 1
      %v514 = vsel %vm214, %v509, %v513
      %v515 = vshrl.u32 %v498, 16
      %v517 = vor.u32 %v515, %v513
      %v519 = vshll.u32 %v499, 16
      %v521 = vrot.slane %v519, 1
      %v522 = vsel %vm214, %v517, %v521
      %v523 = vshrl.u32 %v499, 16
      %v525 = vor.u32 %v523, %v521
      %v527 = vshll.u32 %v500, 16
      %v529 = vrot.slane %v527, 1
      %v530 = vsel %vm214, %v525, %v529
      %v531 = vshrl.u32 %v500, 16
      %v533 = vor.u32 %v531, %v529
      %v535 = vshll.u32 %v501, 16
      %v537 = vrot.slane %v535, 1
      %v538 = vsel %vm214, %v533, %v537
      %v539 = vshrl.u32 %v501, 16
      %v541 = vor.u32 %v539, %v537
      %v543 = vshll.u32 %v502, 16
      %v545 = vrot.slane %v543, 1
      %v546 = vsel %vm214, %v541, %v545
      %v547 = vshrl.u32 %v502, 16
      %v550 = vsel %vm261, %v514, 0
      %v553 = vsel %vm261, %v522, 0
      %v556 = vsel %vm261, %v530, 0
      %v559 = vsel %vm261, %v538, 0
      %v562 = vsel %vm261, %v546, 0
      %v565 = vsel %vm261, %v547, 0
      %v568 = vand.u32 %v474, %v283
      %570 = vmatprep.subr.bf16.mxu0 0
      %571 = vmatpush1.bf16.msra.mxu0 0
      %572 = vmatprep.subr.bf16.mxu0 0
      %573 = vmatpush1.bf16.msra.mxu0 0
      %574 = vmatprep.subr.bf16.mxu0 0
      %575 = vmatpush1.bf16.msra.mxu0 0
      %576 = vmatprep.subr.bf16.mxu0 0
      %577 = vmatpush1.bf16.msra.mxu0 0
      %578 = vmatprep.subr.bf16.mxu0 0
      %579 = vmatpush1.bf16.msra.mxu0 0
      %580 = vmatprep.subr.bf16.mxu0 0
      %581 = vmatpush1.bf16.msra.mxu0 0
      %582 = vmatprep.subr.bf16.mxu0 0
      %583 = vmatpush1.bf16.msra.mxu0 0
      %584 = vmatprep.subr.bf16.mxu0 0
      %585 = vmatpush1.bf16.msra.mxu0 %v568
      %586 = vmatprep.subr.bf16.mxu0 0
      %587 = vmatpush2.bf16.msra.mxu0 0
      %588 = vmatprep.subr.bf16.mxu0 0
      %589 = vmatpush2.bf16.msra.mxu0 0
      %590 = vmatprep.subr.bf16.mxu0 0
      %591 = vmatpush2.bf16.msra.mxu0 0
      %592 = vmatprep.subr.bf16.mxu0 0
      %593 = vmatpush2.bf16.msra.mxu0 0
      %594 = vmatprep.subr.bf16.mxu0 0
      %595 = vmatpush2.bf16.msra.mxu0 0
      %596 = vmatprep.subr.bf16.mxu0 0
      %597 = vmatpush2.bf16.msra.mxu0 0
      %598 = vmatprep.subr.bf16.mxu0 0
      %599 = vmatpush2.bf16.msra.mxu0 0
      %600 = vmatprep.subr.bf16.mxu0 0
      %601 = vmatpush2.bf16.msra.mxu0 0
      %602 = vmatprep.mubr.bf16.mxu0 0
      %603 = vmatmul.mubr.bf16.gmra.mxu0 %v550
      %v604 = vpop.f32.mrf.mxu0
      %v605 = vadd.f32 0.0, %v604
      %v606 = vpop.f32.mrf.mxu0
      %v607 = vpop.f32.mrf.mxu0
      %v608 = vadd.f32 0.0, %v607
      %v609 = vpop.f32.mrf.mxu0
      %610 = vmatprep.mubr.bf16.mxu0 0
      %611 = vmatmul.mubr.bf16.gmra.mxu0 %v553
      %v612 = vpop.f32.mrf.mxu0
      %v613 = vadd.f32 0.0, %v612
      %v614 = vpop.f32.mrf.mxu0
      %v615 = vpop.f32.mrf.mxu0
      %v616 = vadd.f32 0.0, %v615
      %v617 = vpop.f32.mrf.mxu0
      %618 = vmatprep.mubr.bf16.mxu0 0
      %619 = vmatmul.mubr.bf16.gmra.mxu0 %v556
      %v620 = vpop.f32.mrf.mxu0
      %v621 = vadd.f32 0.0, %v620
      %v622 = vpop.f32.mrf.mxu0
      %v623 = vpop.f32.mrf.mxu0
      %v624 = vadd.f32 0.0, %v623
      %v625 = vpop.f32.mrf.mxu0
      %626 = vmatprep.mubr.bf16.mxu0 0
      %627 = vmatmul.mubr.bf16.gmra.mxu0 %v559
      %v628 = vpop.f32.mrf.mxu0
      %v629 = vadd.f32 0.0, %v628
      %v630 = vpop.f32.mrf.mxu0
      %v631 = vpop.f32.mrf.mxu0
      %v632 = vadd.f32 0.0, %v631
      %v633 = vpop.f32.mrf.mxu0
      %634 = vmatprep.mubr.bf16.mxu0 0
      %635 = vmatmul.mubr.bf16.gmra.mxu0 %v562
      %v636 = vpop.f32.mrf.mxu0
      %v637 = vadd.f32 0.0, %v636
      %v638 = vpop.f32.mrf.mxu0
      %v639 = vpop.f32.mrf.mxu0
      %v640 = vadd.f32 0.0, %v639
      %v641 = vpop.f32.mrf.mxu0
      %642 = vmatprep.mubr.bf16.mxu0 0
      %643 = vmatmul.mubr.bf16.gmra.mxu0 %v565
      %v644 = vpop.f32.mrf.mxu0
      %v645 = vadd.f32 0.0, %v644
      %v646 = vpop.f32.mrf.mxu0
      %v647 = vpop.f32.mrf.mxu0
      %v648 = vpop.f32.mrf.mxu0
      %649 = vdwg.mxu0
      %v650 = vadd.f32 %v417, %v605
      %v651 = vadd.f32 %v420, %v608
      %v652 = vadd.f32 %v425, %v613
      %v653 = vadd.f32 %v428, %v616
      %v654 = vadd.f32 %v433, %v621
      %v655 = vadd.f32 %v436, %v624
      %v656 = vadd.f32 %v441, %v629
      %v657 = vadd.f32 %v444, %v632
      %v658 = vadd.f32 %v449, %v637
      %v659 = vadd.f32 %v452, %v640
      %v660 = vadd.f32 %v457, %v645
      %v661 = vld [vmem:[%s165 + $0x4] sm:$0xe]
      %v662 = vld [vmem:[%s165 + $0x2c] sm:$0x3]
      %s663 = scalar_lea.vmem %s1, 20
      %v664 = vld [vmem:[%s663] sm:$0x3]
      %v667 = vunpack.c.l.b16 %v661
      %v668 = vunpack.c.l.b16 %v662
      %v669 = vpack.c.b16 %v487, %v667
      %v670 = vpack.c.b16 %v668, %v668
      %vm671 = vcmask 1046528
      %v672 = vrot.slane %v669, 1
      %v673 = vrot.slane %v498, 1
      %v674 = vsel %vm671, %v672, %v673
      %v675 = vrot.slane %v499, 1
      %v676 = vsel %vm671, %v673, %v675
      %v677 = vrot.slane %v500, 1
      %v678 = vsel %vm671, %v675, %v677
      %v679 = vrot.slane %v501, 1
      %v680 = vsel %vm671, %v677, %v679
      %v681 = vrot.slane %v670, 1
      %v682 = vsel %vm671, %v679, %v681
      %v684 = vsel %vm261, %v674, 0
      %v687 = vsel %vm261, %v676, 0
      %v690 = vsel %vm261, %v678, 0
      %v693 = vsel %vm261, %v680, 0
      %v696 = vsel %vm261, %v682, 0
      %v699 = vsel %vm261, %v681, 0
      %v702 = vand.u32 %v664, %v283
      %704 = vmatprep.subr.bf16.mxu0 0
      %705 = vmatpush1.bf16.msra.mxu0 0
      %706 = vmatprep.subr.bf16.mxu0 0
      %707 = vmatpush1.bf16.msra.mxu0 0
      %708 = vmatprep.subr.bf16.mxu0 0
      %709 = vmatpush1.bf16.msra.mxu0 0
      %710 = vmatprep.subr.bf16.mxu0 0
      %711 = vmatpush1.bf16.msra.mxu0 0
      %712 = vmatprep.subr.bf16.mxu0 0
      %713 = vmatpush1.bf16.msra.mxu0 0
      %714 = vmatprep.subr.bf16.mxu0 0
      %715 = vmatpush1.bf16.msra.mxu0 0
      %716 = vmatprep.subr.bf16.mxu0 0
      %717 = vmatpush1.bf16.msra.mxu0 0
      %718 = vmatprep.subr.bf16.mxu0 0
      %719 = vmatpush1.bf16.msra.mxu0 %v702
      %720 = vmatprep.subr.bf16.mxu0 0
      %721 = vmatpush2.bf16.msra.mxu0 0
      %722 = vmatprep.subr.bf16.mxu0 0
      %723 = vmatpush2.bf16.msra.mxu0 0
      %724 = vmatprep.subr.bf16.mxu0 0
      %725 = vmatpush2.bf16.msra.mxu0 0
      %726 = vmatprep.subr.bf16.mxu0 0
      %727 = vmatpush2.bf16.msra.mxu0 0
      %728 = vmatprep.subr.bf16.mxu0 0
      %729 = vmatpush2.bf16.msra.mxu0 0
      %730 = vmatprep.subr.bf16.mxu0 0
      %731 = vmatpush2.bf16.msra.mxu0 0
      %732 = vmatprep.subr.bf16.mxu0 0
      %733 = vmatpush2.bf16.msra.mxu0 0
      %734 = vmatprep.subr.bf16.mxu0 0
      %735 = vmatpush2.bf16.msra.mxu0 0
      %736 = vmatprep.mubr.bf16.mxu0 0
      %737 = vmatmul.mubr.bf16.gmra.mxu0 %v684
      %v738 = vpop.f32.mrf.mxu0
      %v739 = vadd.f32 0.0, %v738
      %v740 = vpop.f32.mrf.mxu0
      %v741 = vpop.f32.mrf.mxu0
      %v742 = vadd.f32 0.0, %v741
      %v743 = vpop.f32.mrf.mxu0
      %744 = vmatprep.mubr.bf16.mxu0 0
      %745 = vmatmul.mubr.bf16.gmra.mxu0 %v687
      %v746 = vpop.f32.mrf.mxu0
      %v747 = vadd.f32 0.0, %v746
      %v748 = vpop.f32.mrf.mxu0
      %v749 = vpop.f32.mrf.mxu0
      %v750 = vadd.f32 0.0, %v749
      %v751 = vpop.f32.mrf.mxu0
      %752 = vmatprep.mubr.bf16.mxu0 0
      %753 = vmatmul.mubr.bf16.gmra.mxu0 %v690
      %v754 = vpop.f32.mrf.mxu0
      %v755 = vadd.f32 0.0, %v754
      %v756 = vpop.f32.mrf.mxu0
      %v757 = vpop.f32.mrf.mxu0
      %v758 = vadd.f32 0.0, %v757
      %v759 = vpop.f32.mrf.mxu0
      %760 = vmatprep.mubr.bf16.mxu0 0
      %761 = vmatmul.mubr.bf16.gmra.mxu0 %v693
      %v762 = vpop.f32.mrf.mxu0
      %v763 = vadd.f32 0.0, %v762
      %v764 = vpop.f32.mrf.mxu0
      %v765 = vpop.f32.mrf.mxu0
      %v766 = vadd.f32 0.0, %v765
      %v767 = vpop.f32.mrf.mxu0
      %768 = vmatprep.mubr.bf16.mxu0 0
      %769 = vmatmul.mubr.bf16.gmra.mxu0 %v696
      %v770 = vpop.f32.mrf.mxu0
      %v771 = vadd.f32 0.0, %v770
      %v772 = vpop.f32.mrf.mxu0
      %v773 = vpop.f32.mrf.mxu0
      %v774 = vadd.f32 0.0, %v773
      %v775 = vpop.f32.mrf.mxu0
      %776 = vmatprep.mubr.bf16.mxu0 0
      %777 = vmatmul.mubr.bf16.gmra.mxu0 %v699
      %v778 = vpop.f32.mrf.mxu0
      %v779 = vadd.f32 0.0, %v778
      %v780 = vpop.f32.mrf.mxu0
      %v781 = vpop.f32.mrf.mxu0
      %v782 = vpop.f32.mrf.mxu0
      %783 = vdwg.mxu0
      %v784 = vadd.f32 %v650, %v739
      %v785 = vadd.f32 %v651, %v742
      %v786 = vadd.f32 %v652, %v747
      %v787 = vadd.f32 %v653, %v750
      %v788 = vadd.f32 %v654, %v755
      %v789 = vadd.f32 %v655, %v758
      %v790 = vadd.f32 %v656, %v763
      %v791 = vadd.f32 %v657, %v766
      %v792 = vadd.f32 %v658, %v771
      %v793 = vadd.f32 %v659, %v774
      %v794 = vadd.f32 %v660, %v779
      %s795 = scalar_lea.vmem %s165, 48
      %v796 = vld [vmem:[%s795] sm:$0xf]
      %v797 = vld [vmem:[%s795 + $0x4] sm:$0xf]
      %v798 = vld [vmem:[%s795 + $0x8] sm:$0xf]
      %v799 = vld [vmem:[%s795 + $0xc] sm:$0xf]
      %v800 = vld [vmem:[%s795 + $0x10] sm:$0xf]
      %v801 = vld [vmem:[%s795 + $0x14] sm:$0xf]
      %v802 = vld [vmem:[%s795 + $0x18] sm:$0xf]
      %v803 = vld [vmem:[%s795 + $0x1c] sm:$0xf]
      %v804 = vld [vmem:[%s795 + $0x20] sm:$0xf]
      %v805 = vld [vmem:[%s795 + $0x24] sm:$0xf]
      %v806 = vld [vmem:[%s795 + $0x28] sm:$0x1]
      %s807 = scalar_lea.vmem %s1, 2
      %v808 = vld [vmem:[%s807] sm:$0x3]
      %v820 = vunpack.c.l.b16 %v796
      %v821 = vunpack.c.l.b16 %v797
      %v822 = vunpack.c.l.b16 %v798
      %v823 = vunpack.c.l.b16 %v799
      %v824 = vunpack.c.l.b16 %v800
      %v825 = vunpack.c.l.b16 %v801
      %v826 = vunpack.c.l.b16 %v802
      %v827 = vunpack.c.l.b16 %v803
      %v828 = vunpack.c.l.b16 %v804
      %v829 = vunpack.c.l.b16 %v805
      %v830 = vunpack.c.l.b16 %v806
      %v831 = vpack.c.b16 %v821, %v820
      %v832 = vpack.c.b16 %v823, %v822
      %v833 = vpack.c.b16 %v825, %v824
      %v834 = vpack.c.b16 %v827, %v826
      %v835 = vpack.c.b16 %v829, %v828
      %v836 = vpack.c.b16 %v830, %v830
      %v838 = vsel %vm261, %v831, 0
      %v841 = vsel %vm261, %v832, 0
      %v844 = vsel %vm261, %v833, 0
      %v847 = vsel %vm261, %v834, 0
      %v850 = vsel %vm261, %v835, 0
      %v853 = vsel %vm261, %v836, 0
      %v856 = vand.u32 %v808, %v283
      %858 = vmatprep.subr.bf16.mxu0 0
      %859 = vmatpush1.bf16.msra.mxu0 0
      %860 = vmatprep.subr.bf16.mxu0 0
      %861 = vmatpush1.bf16.msra.mxu0 0
      %862 = vmatprep.subr.bf16.mxu0 0
      %863 = vmatpush1.bf16.msra.mxu0 0
      %864 = vmatprep.subr.bf16.mxu0 0
      %865 = vmatpush1.bf16.msra.mxu0 0
      %866 = vmatprep.subr.bf16.mxu0 0
      %867 = vmatpush1.bf16.msra.mxu0 0
      %868 = vmatprep.subr.bf16.mxu0 0
      %869 = vmatpush1.bf16.msra.mxu0 0
      %870 = vmatprep.subr.bf16.mxu0 0
      %871 = vmatpush1.bf16.msra.mxu0 0
      %872 = vmatprep.subr.bf16.mxu0 0
      %873 = vmatpush1.bf16.msra.mxu0 %v856
      %874 = vmatprep.subr.bf16.mxu0 0
      %875 = vmatpush2.bf16.msra.mxu0 0
      %876 = vmatprep.subr.bf16.mxu0 0
      %877 = vmatpush2.bf16.msra.mxu0 0
      %878 = vmatprep.subr.bf16.mxu0 0
      %879 = vmatpush2.bf16.msra.mxu0 0
      %880 = vmatprep.subr.bf16.mxu0 0
      %881 = vmatpush2.bf16.msra.mxu0 0
      %882 = vmatprep.subr.bf16.mxu0 0
      %883 = vmatpush2.bf16.msra.mxu0 0
      %884 = vmatprep.subr.bf16.mxu0 0
      %885 = vmatpush2.bf16.msra.mxu0 0
      %886 = vmatprep.subr.bf16.mxu0 0
      %887 = vmatpush2.bf16.msra.mxu0 0
      %888 = vmatprep.subr.bf16.mxu0 0
      %889 = vmatpush2.bf16.msra.mxu0 0
      %890 = vmatprep.mubr.bf16.mxu0 0
      %891 = vmatmul.mubr.bf16.gmra.mxu0 %v838
      %v892 = vpop.f32.mrf.mxu0
      %v893 = vadd.f32 0.0, %v892
      %v894 = vpop.f32.mrf.mxu0
      %v895 = vpop.f32.mrf.mxu0
      %v896 = vadd.f32 0.0, %v895
      %v897 = vpop.f32.mrf.mxu0
      %898 = vmatprep.mubr.bf16.mxu0 0
      %899 = vmatmul.mubr.bf16.gmra.mxu0 %v841
      %v900 = vpop.f32.mrf.mxu0
      %v901 = vadd.f32 0.0, %v900
      %v902 = vpop.f32.mrf.mxu0
      %v903 = vpop.f32.mrf.mxu0
      %v904 = vadd.f32 0.0, %v903
      %v905 = vpop.f32.mrf.mxu0
      %906 = vmatprep.mubr.bf16.mxu0 0
      %907 = vmatmul.mubr.bf16.gmra.mxu0 %v844
      %v908 = vpop.f32.mrf.mxu0
      %v909 = vadd.f32 0.0, %v908
      %v910 = vpop.f32.mrf.mxu0
      %v911 = vpop.f32.mrf.mxu0
      %v912 = vadd.f32 0.0, %v911
      %v913 = vpop.f32.mrf.mxu0
      %914 = vmatprep.mubr.bf16.mxu0 0
      %915 = vmatmul.mubr.bf16.gmra.mxu0 %v847
      %v916 = vpop.f32.mrf.mxu0
      %v917 = vadd.f32 0.0, %v916
      %v918 = vpop.f32.mrf.mxu0
      %v919 = vpop.f32.mrf.mxu0
      %v920 = vadd.f32 0.0, %v919
      %v921 = vpop.f32.mrf.mxu0
      %922 = vmatprep.mubr.bf16.mxu0 0
      %923 = vmatmul.mubr.bf16.gmra.mxu0 %v850
      %v924 = vpop.f32.mrf.mxu0
      %v925 = vadd.f32 0.0, %v924
      %v926 = vpop.f32.mrf.mxu0
      %v927 = vpop.f32.mrf.mxu0
      %v928 = vadd.f32 0.0, %v927
      %v929 = vpop.f32.mrf.mxu0
      %930 = vmatprep.mubr.bf16.mxu0 0
      %931 = vmatmul.mubr.bf16.gmra.mxu0 %v853
      %v932 = vpop.f32.mrf.mxu0
      %v933 = vadd.f32 0.0, %v932
      %v934 = vpop.f32.mrf.mxu0
      %v935 = vpop.f32.mrf.mxu0
      %v936 = vpop.f32.mrf.mxu0
      %937 = vdwg.mxu0
      %v938 = vadd.f32 %v784, %v893
      %v939 = vadd.f32 %v785, %v896
      %v940 = vadd.f32 %v786, %v901
      %v941 = vadd.f32 %v787, %v904
      %v942 = vadd.f32 %v788, %v909
      %v943 = vadd.f32 %v789, %v912
      %v944 = vadd.f32 %v790, %v917
      %v945 = vadd.f32 %v791, %v920
      %v946 = vadd.f32 %v792, %v925
      %v947 = vadd.f32 %v793, %v928
      %v948 = vadd.f32 %v794, %v933
      %s949 = scalar_lea.vmem %s1, 6
      %v950 = vld [vmem:[%s949] sm:$0x3]
      %v951 = vshrl.u32 %v831, 16
      %v953 = vshll.u32 %v831, 16
      %v955 = vrot.slane %v953, 1
      %v956 = vor.u32 %v951, %v955
      %v957 = vshll.u32 %v832, 16
      %v959 = vrot.slane %v957, 1
      %v960 = vsel %vm214, %v956, %v959
      %v961 = vshrl.u32 %v832, 16
      %v963 = vor.u32 %v961, %v959
      %v964 = vshll.u32 %v833, 16
      %v966 = vrot.slane %v964, 1
      %v967 = vsel %vm214, %v963, %v966
      %v968 = vshrl.u32 %v833, 16
      %v970 = vor.u32 %v968, %v966
      %v971 = vshll.u32 %v834, 16
      %v973 = vrot.slane %v971, 1
      %v974 = vsel %vm214, %v970, %v973
      %v975 = vshrl.u32 %v834, 16
      %v977 = vor.u32 %v975, %v973
      %v978 = vshll.u32 %v835, 16
      %v980 = vrot.slane %v978, 1
      %v981 = vsel %vm214, %v977, %v980
      %v982 = vshrl.u32 %v835, 16
      %v984 = vor.u32 %v982, %v980
      %v985 = vshll.u32 %v836, 16
      %v987 = vrot.slane %v985, 1
      %v988 = vsel %vm214, %v984, %v987
      %v989 = vshrl.u32 %v836, 16
      %v992 = vsel %vm261, %v960, 0
      %v995 = vsel %vm261, %v967, 0
      %v998 = vsel %vm261, %v974, 0
      %v1001 = vsel %vm261, %v981, 0
      %v1004 = vsel %vm261, %v988, 0
      %v1007 = vsel %vm261, %v989, 0
      %v1010 = vand.u32 %v950, %v283
      %1012 = vmatprep.subr.bf16.mxu0 0
      %1013 = vmatpush1.bf16.msra.mxu0 0
      %1014 = vmatprep.subr.bf16.mxu0 0
      %1015 = vmatpush1.bf16.msra.mxu0 0
      %1016 = vmatprep.subr.bf16.mxu0 0
      %1017 = vmatpush1.bf16.msra.mxu0 0
      %1018 = vmatprep.subr.bf16.mxu0 0
      %1019 = vmatpush1.bf16.msra.mxu0 0
      %1020 = vmatprep.subr.bf16.mxu0 0
      %1021 = vmatpush1.bf16.msra.mxu0 0
      %1022 = vmatprep.subr.bf16.mxu0 0
      %1023 = vmatpush1.bf16.msra.mxu0 0
      %1024 = vmatprep.subr.bf16.mxu0 0
      %1025 = vmatpush1.bf16.msra.mxu0 0
      %1026 = vmatprep.subr.bf16.mxu0 0
      %1027 = vmatpush1.bf16.msra.mxu0 %v1010
      %1028 = vmatprep.subr.bf16.mxu0 0
      %1029 = vmatpush2.bf16.msra.mxu0 0
      %1030 = vmatprep.subr.bf16.mxu0 0
      %1031 = vmatpush2.bf16.msra.mxu0 0
      %1032 = vmatprep.subr.bf16.mxu0 0
      %1033 = vmatpush2.bf16.msra.mxu0 0
      %1034 = vmatprep.subr.bf16.mxu0 0
      %1035 = vmatpush2.bf16.msra.mxu0 0
      %1036 = vmatprep.subr.bf16.mxu0 0
      %1037 = vmatpush2.bf16.msra.mxu0 0
      %1038 = vmatprep.subr.bf16.mxu0 0
      %1039 = vmatpush2.bf16.msra.mxu0 0
      %1040 = vmatprep.subr.bf16.mxu0 0
      %1041 = vmatpush2.bf16.msra.mxu0 0
      %1042 = vmatprep.subr.bf16.mxu0 0
      %1043 = vmatpush2.bf16.msra.mxu0 0
      %1044 = vmatprep.mubr.bf16.mxu0 0
      %1045 = vmatmul.mubr.bf16.gmra.mxu0 %v992
      %v1046 = vpop.f32.mrf.mxu0
      %v1047 = vadd.f32 0.0, %v1046
      %v1048 = vpop.f32.mrf.mxu0
      %v1049 = vpop.f32.mrf.mxu0
      %v1050 = vadd.f32 0.0, %v1049
      %v1051 = vpop.f32.mrf.mxu0
      %1052 = vmatprep.mubr.bf16.mxu0 0
      %1053 = vmatmul.mubr.bf16.gmra.mxu0 %v995
      %v1054 = vpop.f32.mrf.mxu0
      %v1055 = vadd.f32 0.0, %v1054
      %v1056 = vpop.f32.mrf.mxu0
      %v1057 = vpop.f32.mrf.mxu0
      %v1058 = vadd.f32 0.0, %v1057
      %v1059 = vpop.f32.mrf.mxu0
      %1060 = vmatprep.mubr.bf16.mxu0 0
      %1061 = vmatmul.mubr.bf16.gmra.mxu0 %v998
      %v1062 = vpop.f32.mrf.mxu0
      %v1063 = vadd.f32 0.0, %v1062
      %v1064 = vpop.f32.mrf.mxu0
      %v1065 = vpop.f32.mrf.mxu0
      %v1066 = vadd.f32 0.0, %v1065
      %v1067 = vpop.f32.mrf.mxu0
      %1068 = vmatprep.mubr.bf16.mxu0 0
      %1069 = vmatmul.mubr.bf16.gmra.mxu0 %v1001
      %v1070 = vpop.f32.mrf.mxu0
      %v1071 = vadd.f32 0.0, %v1070
      %v1072 = vpop.f32.mrf.mxu0
      %v1073 = vpop.f32.mrf.mxu0
      %v1074 = vadd.f32 0.0, %v1073
      %v1075 = vpop.f32.mrf.mxu0
      %1076 = vmatprep.mubr.bf16.mxu0 0
      %1077 = vmatmul.mubr.bf16.gmra.mxu0 %v1004
      %v1078 = vpop.f32.mrf.mxu0
      %v1079 = vadd.f32 0.0, %v1078
      %v1080 = vpop.f32.mrf.mxu0
      %v1081 = vpop.f32.mrf.mxu0
      %v1082 = vadd.f32 0.0, %v1081
      %v1083 = vpop.f32.mrf.mxu0
      %1084 = vmatprep.mubr.bf16.mxu0 0
      %1085 = vmatmul.mubr.bf16.gmra.mxu0 %v1007
      %v1086 = vpop.f32.mrf.mxu0
      %v1087 = vadd.f32 0.0, %v1086
      %v1088 = vpop.f32.mrf.mxu0
      %v1089 = vpop.f32.mrf.mxu0
      %v1090 = vpop.f32.mrf.mxu0
      %1091 = vdwg.mxu0
      %v1092 = vadd.f32 %v938, %v1047
      %v1093 = vadd.f32 %v939, %v1050
      %v1094 = vadd.f32 %v940, %v1055
      %v1095 = vadd.f32 %v941, %v1058
      %v1096 = vadd.f32 %v942, %v1063
      %v1097 = vadd.f32 %v943, %v1066
      %v1098 = vadd.f32 %v944, %v1071
      %v1099 = vadd.f32 %v945, %v1074
      %v1100 = vadd.f32 %v946, %v1079
      %v1101 = vadd.f32 %v947, %v1082
      %v1102 = vadd.f32 %v948, %v1087
      %v1103 = vld [vmem:[%s795 + $0x4] sm:$0xf]
      %v1104 = vld [vmem:[%s795 + $0x8] sm:$0xf]
      %v1105 = vld [vmem:[%s795 + $0xc] sm:$0xf]
      %v1106 = vld [vmem:[%s795 + $0x10] sm:$0xf]
      %v1107 = vld [vmem:[%s795 + $0x14] sm:$0xf]
      %v1108 = vld [vmem:[%s795 + $0x18] sm:$0xf]
      %v1109 = vld [vmem:[%s795 + $0x1c] sm:$0xf]
      %v1110 = vld [vmem:[%s795 + $0x20] sm:$0xf]
      %v1111 = vld [vmem:[%s795 + $0x24] sm:$0xf]
      %v1112 = vld [vmem:[%s795 + $0x28] sm:$0xf]
      %v1113 = vld [vmem:[%s795 + $0x2c] sm:$0x1]
      %s1114 = scalar_lea.vmem %s1, 18
      %v1115 = vld [vmem:[%s1114] sm:$0x3]
      %v1127 = vunpack.c.l.b16 %v1103
      %v1128 = vunpack.c.l.b16 %v1104
      %v1129 = vunpack.c.l.b16 %v1105
      %v1130 = vunpack.c.l.b16 %v1106
      %v1131 = vunpack.c.l.b16 %v1107
      %v1132 = vunpack.c.l.b16 %v1108
      %v1133 = vunpack.c.l.b16 %v1109
      %v1134 = vunpack.c.l.b16 %v1110
      %v1135 = vunpack.c.l.b16 %v1111
      %v1136 = vunpack.c.l.b16 %v1112
      %v1137 = vunpack.c.l.b16 %v1113
      %v1138 = vpack.c.b16 %v1128, %v1127
      %v1139 = vpack.c.b16 %v1130, %v1129
      %v1140 = vpack.c.b16 %v1132, %v1131
      %v1141 = vpack.c.b16 %v1134, %v1133
      %v1142 = vpack.c.b16 %v1136, %v1135
      %v1143 = vpack.c.b16 %v1137, %v1137
      %v1145 = vshrl.u32 %v1138, 16
      %v1147 = vshll.u32 %v1138, 16
      %v1149 = vrot.slane %v1147, 1
      %v1150 = vor.u32 %v1145, %v1149
      %v1152 = vshll.u32 %v1139, 16
      %v1154 = vrot.slane %v1152, 1
      %v1155 = vsel %vm214, %v1150, %v1154
      %v1156 = vshrl.u32 %v1139, 16
      %v1158 = vor.u32 %v1156, %v1154
      %v1160 = vshll.u32 %v1140, 16
      %v1162 = vrot.slane %v1160, 1
      %v1163 = vsel %vm214, %v1158, %v1162
      %v1164 = vshrl.u32 %v1140, 16
      %v1166 = vor.u32 %v1164, %v1162
      %v1168 = vshll.u32 %v1141, 16
      %v1170 = vrot.slane %v1168, 1
      %v1171 = vsel %vm214, %v1166, %v1170
      %v1172 = vshrl.u32 %v1141, 16
      %v1174 = vor.u32 %v1172, %v1170
      %v1176 = vshll.u32 %v1142, 16
      %v1178 = vrot.slane %v1176, 1
      %v1179 = vsel %vm214, %v1174, %v1178
      %v1180 = vshrl.u32 %v1142, 16
      %v1182 = vor.u32 %v1180, %v1178
      %v1184 = vshll.u32 %v1143, 16
      %v1186 = vrot.slane %v1184, 1
      %v1187 = vsel %vm214, %v1182, %v1186
      %v1188 = vshrl.u32 %v1143, 16
      %v1191 = vsel %vm261, %v1155, 0
      %v1194 = vsel %vm261, %v1163, 0
      %v1197 = vsel %vm261, %v1171, 0
      %v1200 = vsel %vm261, %v1179, 0
      %v1203 = vsel %vm261, %v1187, 0
      %v1206 = vsel %vm261, %v1188, 0
      %v1209 = vand.u32 %v1115, %v283
      %1211 = vmatprep.subr.bf16.mxu0 0
      %1212 = vmatpush1.bf16.msra.mxu0 0
      %1213 = vmatprep.subr.bf16.mxu0 0
      %1214 = vmatpush1.bf16.msra.mxu0 0
      %1215 = vmatprep.subr.bf16.mxu0 0
      %1216 = vmatpush1.bf16.msra.mxu0 0
      %1217 = vmatprep.subr.bf16.mxu0 0
      %1218 = vmatpush1.bf16.msra.mxu0 0
      %1219 = vmatprep.subr.bf16.mxu0 0
      %1220 = vmatpush1.bf16.msra.mxu0 0
      %1221 = vmatprep.subr.bf16.mxu0 0
      %1222 = vmatpush1.bf16.msra.mxu0 0
      %1223 = vmatprep.subr.bf16.mxu0 0
      %1224 = vmatpush1.bf16.msra.mxu0 0
      %1225 = vmatprep.subr.bf16.mxu0 0
      %1226 = vmatpush1.bf16.msra.mxu0 %v1209
      %1227 = vmatprep.subr.bf16.mxu0 0
      %1228 = vmatpush2.bf16.msra.mxu0 0
      %1229 = vmatprep.subr.bf16.mxu0 0
      %1230 = vmatpush2.bf16.msra.mxu0 0
      %1231 = vmatprep.subr.bf16.mxu0 0
      %1232 = vmatpush2.bf16.msra.mxu0 0
      %1233 = vmatprep.subr.bf16.mxu0 0
      %1234 = vmatpush2.bf16.msra.mxu0 0
      %1235 = vmatprep.subr.bf16.mxu0 0
      %1236 = vmatpush2.bf16.msra.mxu0 0
      %1237 = vmatprep.subr.bf16.mxu0 0
      %1238 = vmatpush2.bf16.msra.mxu0 0
      %1239 = vmatprep.subr.bf16.mxu0 0
      %1240 = vmatpush2.bf16.msra.mxu0 0
      %1241 = vmatprep.subr.bf16.mxu0 0
      %1242 = vmatpush2.bf16.msra.mxu0 0
      %1243 = vmatprep.mubr.bf16.mxu0 0
      %1244 = vmatmul.mubr.bf16.gmra.mxu0 %v1191
      %v1245 = vpop.f32.mrf.mxu0
      %v1246 = vadd.f32 0.0, %v1245
      %v1247 = vpop.f32.mrf.mxu0
      %v1248 = vpop.f32.mrf.mxu0
      %v1249 = vadd.f32 0.0, %v1248
      %v1250 = vpop.f32.mrf.mxu0
      %1251 = vmatprep.mubr.bf16.mxu0 0
      %1252 = vmatmul.mubr.bf16.gmra.mxu0 %v1194
      %v1253 = vpop.f32.mrf.mxu0
      %v1254 = vadd.f32 0.0, %v1253
      %v1255 = vpop.f32.mrf.mxu0
      %v1256 = vpop.f32.mrf.mxu0
      %v1257 = vadd.f32 0.0, %v1256
      %v1258 = vpop.f32.mrf.mxu0
      %1259 = vmatprep.mubr.bf16.mxu0 0
      %1260 = vmatmul.mubr.bf16.gmra.mxu0 %v1197
      %v1261 = vpop.f32.mrf.mxu0
      %v1262 = vadd.f32 0.0, %v1261
      %v1263 = vpop.f32.mrf.mxu0
      %v1264 = vpop.f32.mrf.mxu0
      %v1265 = vadd.f32 0.0, %v1264
      %v1266 = vpop.f32.mrf.mxu0
      %1267 = vmatprep.mubr.bf16.mxu0 0
      %1268 = vmatmul.mubr.bf16.gmra.mxu0 %v1200
      %v1269 = vpop.f32.mrf.mxu0
      %v1270 = vadd.f32 0.0, %v1269
      %v1271 = vpop.f32.mrf.mxu0
      %v1272 = vpop.f32.mrf.mxu0
      %v1273 = vadd.f32 0.0, %v1272
      %v1274 = vpop.f32.mrf.mxu0
      %1275 = vmatprep.mubr.bf16.mxu0 0
      %1276 = vmatmul.mubr.bf16.gmra.mxu0 %v1203
      %v1277 = vpop.f32.mrf.mxu0
      %v1278 = vadd.f32 0.0, %v1277
      %v1279 = vpop.f32.mrf.mxu0
      %v1280 = vpop.f32.mrf.mxu0
      %v1281 = vadd.f32 0.0, %v1280
      %v1282 = vpop.f32.mrf.mxu0
      %1283 = vmatprep.mubr.bf16.mxu0 0
      %1284 = vmatmul.mubr.bf16.gmra.mxu0 %v1206
      %v1285 = vpop.f32.mrf.mxu0
      %v1286 = vadd.f32 0.0, %v1285
      %v1287 = vpop.f32.mrf.mxu0
      %v1288 = vpop.f32.mrf.mxu0
      %v1289 = vpop.f32.mrf.mxu0
      %1290 = vdwg.mxu0
      %v1291 = vadd.f32 %v1092, %v1246
      %v1292 = vadd.f32 %v1093, %v1249
      %v1293 = vadd.f32 %v1094, %v1254
      %v1294 = vadd.f32 %v1095, %v1257
      %v1295 = vadd.f32 %v1096, %v1262
      %v1296 = vadd.f32 %v1097, %v1265
      %v1297 = vadd.f32 %v1098, %v1270
      %v1298 = vadd.f32 %v1099, %v1273
      %v1299 = vadd.f32 %v1100, %v1278
      %v1300 = vadd.f32 %v1101, %v1281
      %v1301 = vadd.f32 %v1102, %v1286
      %v1302 = vld [vmem:[%s795 + $0x4] sm:$0xe]
      %v1303 = vld [vmem:[%s795 + $0x2c] sm:$0x3]
      %s1304 = scalar_lea.vmem %s1, 22
      %v1305 = vld [vmem:[%s1304] sm:$0x3]
      %v1308 = vunpack.c.l.b16 %v1302
      %v1309 = vunpack.c.l.b16 %v1303
      %v1310 = vpack.c.b16 %v1128, %v1308
      %v1311 = vpack.c.b16 %v1309, %v1309
      %v1312 = vrot.slane %v1310, 1
      %v1313 = vrot.slane %v1139, 1
      %v1314 = vsel %vm671, %v1312, %v1313
      %v1315 = vrot.slane %v1140, 1
      %v1316 = vsel %vm671, %v1313, %v1315
      %v1317 = vrot.slane %v1141, 1
      %v1318 = vsel %vm671, %v1315, %v1317
      %v1319 = vrot.slane %v1142, 1
      %v1320 = vsel %vm671, %v1317, %v1319
      %v1321 = vrot.slane %v1311, 1
      %v1322 = vsel %vm671, %v1319, %v1321
      %v1324 = vsel %vm261, %v1314, 0
      %v1327 = vsel %vm261, %v1316, 0
      %v1330 = vsel %vm261, %v1318, 0
      %v1333 = vsel %vm261, %v1320, 0
      %v1336 = vsel %vm261, %v1322, 0
      %v1339 = vsel %vm261, %v1321, 0
      %v1342 = vand.u32 %v1305, %v283
      %1344 = vmatprep.subr.bf16.mxu0 0
      %1345 = vmatpush1.bf16.msra.mxu0 0
      %1346 = vmatprep.subr.bf16.mxu0 0
      %1347 = vmatpush1.bf16.msra.mxu0 0
      %1348 = vmatprep.subr.bf16.mxu0 0
      %1349 = vmatpush1.bf16.msra.mxu0 0
      %1350 = vmatprep.subr.bf16.mxu0 0
      %1351 = vmatpush1.bf16.msra.mxu0 0
      %1352 = vmatprep.subr.bf16.mxu0 0
      %1353 = vmatpush1.bf16.msra.mxu0 0
      %1354 = vmatprep.subr.bf16.mxu0 0
      %1355 = vmatpush1.bf16.msra.mxu0 0
      %1356 = vmatprep.subr.bf16.mxu0 0
      %1357 = vmatpush1.bf16.msra.mxu0 0
      %1358 = vmatprep.subr.bf16.mxu0 0
      %1359 = vmatpush1.bf16.msra.mxu0 %v1342
      %1360 = vmatprep.subr.bf16.mxu0 0
      %1361 = vmatpush2.bf16.msra.mxu0 0
      %1362 = vmatprep.subr.bf16.mxu0 0
      %1363 = vmatpush2.bf16.msra.mxu0 0
      %1364 = vmatprep.subr.bf16.mxu0 0
      %1365 = vmatpush2.bf16.msra.mxu0 0
      %1366 = vmatprep.subr.bf16.mxu0 0
      %1367 = vmatpush2.bf16.msra.mxu0 0
      %1368 = vmatprep.subr.bf16.mxu0 0
      %1369 = vmatpush2.bf16.msra.mxu0 0
      %1370 = vmatprep.subr.bf16.mxu0 0
      %1371 = vmatpush2.bf16.msra.mxu0 0
      %1372 = vmatprep.subr.bf16.mxu0 0
      %1373 = vmatpush2.bf16.msra.mxu0 0
      %1374 = vmatprep.subr.bf16.mxu0 0
      %1375 = vmatpush2.bf16.msra.mxu0 0
      %1376 = vmatprep.mubr.bf16.mxu0 0
      %1377 = vmatmul.mubr.bf16.gmra.mxu0 %v1324
      %v1378 = vpop.f32.mrf.mxu0
      %v1379 = vadd.f32 0.0, %v1378
      %v1380 = vpop.f32.mrf.mxu0
      %v1381 = vpop.f32.mrf.mxu0
      %v1382 = vadd.f32 0.0, %v1381
      %v1383 = vpop.f32.mrf.mxu0
      %1384 = vmatprep.mubr.bf16.mxu0 0
      %1385 = vmatmul.mubr.bf16.gmra.mxu0 %v1327
      %v1386 = vpop.f32.mrf.mxu0
      %v1387 = vadd.f32 0.0, %v1386
      %v1388 = vpop.f32.mrf.mxu0
      %v1389 = vpop.f32.mrf.mxu0
      %v1390 = vadd.f32 0.0, %v1389
      %v1391 = vpop.f32.mrf.mxu0
      %1392 = vmatprep.mubr.bf16.mxu0 0
      %1393 = vmatmul.mubr.bf16.gmra.mxu0 %v1330
      %v1394 = vpop.f32.mrf.mxu0
      %v1395 = vadd.f32 0.0, %v1394
      %v1396 = vpop.f32.mrf.mxu0
      %v1397 = vpop.f32.mrf.mxu0
      %v1398 = vadd.f32 0.0, %v1397
      %v1399 = vpop.f32.mrf.mxu0
      %1400 = vmatprep.mubr.bf16.mxu0 0
      %1401 = vmatmul.mubr.bf16.gmra.mxu0 %v1333
      %v1402 = vpop.f32.mrf.mxu0
      %v1403 = vadd.f32 0.0, %v1402
      %v1404 = vpop.f32.mrf.mxu0
      %v1405 = vpop.f32.mrf.mxu0
      %v1406 = vadd.f32 0.0, %v1405
      %v1407 = vpop.f32.mrf.mxu0
      %1408 = vmatprep.mubr.bf16.mxu0 0
      %1409 = vmatmul.mubr.bf16.gmra.mxu0 %v1336
      %v1410 = vpop.f32.mrf.mxu0
      %v1411 = vadd.f32 0.0, %v1410
      %v1412 = vpop.f32.mrf.mxu0
      %v1413 = vpop.f32.mrf.mxu0
      %v1414 = vadd.f32 0.0, %v1413
      %v1415 = vpop.f32.mrf.mxu0
      %1416 = vmatprep.mubr.bf16.mxu0 0
      %1417 = vmatmul.mubr.bf16.gmra.mxu0 %v1339
      %v1418 = vpop.f32.mrf.mxu0
      %v1419 = vadd.f32 0.0, %v1418
      %v1420 = vpop.f32.mrf.mxu0
      %v1421 = vpop.f32.mrf.mxu0
      %v1422 = vpop.f32.mrf.mxu0
      %1423 = vdwg.mxu0
      %v1424 = vadd.f32 %v1291, %v1379
      %v1425 = vadd.f32 %v1292, %v1382
      %v1426 = vadd.f32 %v1293, %v1387
      %v1427 = vadd.f32 %v1294, %v1390
      %v1428 = vadd.f32 %v1295, %v1395
      %v1429 = vadd.f32 %v1296, %v1398
      %v1430 = vadd.f32 %v1297, %v1403
      %v1431 = vadd.f32 %v1298, %v1406
      %v1432 = vadd.f32 %v1299, %v1411
      %v1433 = vadd.f32 %v1300, %v1414
      %v1434 = vadd.f32 %v1301, %v1419
      %s1435 = scalar_lea.vmem %s165, 96
      %v1436 = vld [vmem:[%s1435] sm:$0xf]
      %v1437 = vld [vmem:[%s1435 + $0x4] sm:$0xf]
      %v1438 = vld [vmem:[%s1435 + $0x8] sm:$0xf]
      %v1439 = vld [vmem:[%s1435 + $0xc] sm:$0xf]
      %v1440 = vld [vmem:[%s1435 + $0x10] sm:$0xf]
      %v1441 = vld [vmem:[%s1435 + $0x14] sm:$0xf]
      %v1442 = vld [vmem:[%s1435 + $0x18] sm:$0xf]
      %v1443 = vld [vmem:[%s1435 + $0x1c] sm:$0xf]
      %v1444 = vld [vmem:[%s1435 + $0x20] sm:$0xf]
      %v1445 = vld [vmem:[%s1435 + $0x24] sm:$0xf]
      %v1446 = vld [vmem:[%s1435 + $0x28] sm:$0x1]
      %s1447 = scalar_lea.vmem %s1, 8
      %v1448 = vld [vmem:[%s1447] sm:$0x3]
      %v1460 = vunpack.c.l.b16 %v1436
      %v1461 = vunpack.c.l.b16 %v1437
      %v1462 = vunpack.c.l.b16 %v1438
      %v1463 = vunpack.c.l.b16 %v1439
      %v1464 = vunpack.c.l.b16 %v1440
      %v1465 = vunpack.c.l.b16 %v1441
      %v1466 = vunpack.c.l.b16 %v1442
      %v1467 = vunpack.c.l.b16 %v1443
      %v1468 = vunpack.c.l.b16 %v1444
      %v1469 = vunpack.c.l.b16 %v1445
      %v1470 = vunpack.c.l.b16 %v1446
      %v1471 = vpack.c.b16 %v1461, %v1460
      %v1472 = vpack.c.b16 %v1463, %v1462
      %v1473 = vpack.c.b16 %v1465, %v1464
      %v1474 = vpack.c.b16 %v1467, %v1466
      %v1475 = vpack.c.b16 %v1469, %v1468
      %v1476 = vpack.c.b16 %v1470, %v1470
      %v1478 = vsel %vm261, %v1471, 0
      %v1481 = vsel %vm261, %v1472, 0
      %v1484 = vsel %vm261, %v1473, 0
      %v1487 = vsel %vm261, %v1474, 0
      %v1490 = vsel %vm261, %v1475, 0
      %v1493 = vsel %vm261, %v1476, 0
      %v1496 = vand.u32 %v1448, %v283
      %1498 = vmatprep.subr.bf16.mxu0 0
      %1499 = vmatpush1.bf16.msra.mxu0 0
      %1500 = vmatprep.subr.bf16.mxu0 0
      %1501 = vmatpush1.bf16.msra.mxu0 0
      %1502 = vmatprep.subr.bf16.mxu0 0
      %1503 = vmatpush1.bf16.msra.mxu0 0
      %1504 = vmatprep.subr.bf16.mxu0 0
      %1505 = vmatpush1.bf16.msra.mxu0 0
      %1506 = vmatprep.subr.bf16.mxu0 0
      %1507 = vmatpush1.bf16.msra.mxu0 0
      %1508 = vmatprep.subr.bf16.mxu0 0
      %1509 = vmatpush1.bf16.msra.mxu0 0
      %1510 = vmatprep.subr.bf16.mxu0 0
      %1511 = vmatpush1.bf16.msra.mxu0 0
      %1512 = vmatprep.subr.bf16.mxu0 0
      %1513 = vmatpush1.bf16.msra.mxu0 %v1496
      %1514 = vmatprep.subr.bf16.mxu0 0
      %1515 = vmatpush2.bf16.msra.mxu0 0
      %1516 = vmatprep.subr.bf16.mxu0 0
      %1517 = vmatpush2.bf16.msra.mxu0 0
      %1518 = vmatprep.subr.bf16.mxu0 0
      %1519 = vmatpush2.bf16.msra.mxu0 0
      %1520 = vmatprep.subr.bf16.mxu0 0
      %1521 = vmatpush2.bf16.msra.mxu0 0
      %1522 = vmatprep.subr.bf16.mxu0 0
      %1523 = vmatpush2.bf16.msra.mxu0 0
      %1524 = vmatprep.subr.bf16.mxu0 0
      %1525 = vmatpush2.bf16.msra.mxu0 0
      %1526 = vmatprep.subr.bf16.mxu0 0
      %1527 = vmatpush2.bf16.msra.mxu0 0
      %1528 = vmatprep.subr.bf16.mxu0 0
      %1529 = vmatpush2.bf16.msra.mxu0 0
      %1530 = vmatprep.mubr.bf16.mxu0 0
      %1531 = vmatmul.mubr.bf16.gmra.mxu0 %v1478
      %v1532 = vpop.f32.mrf.mxu0
      %v1533 = vadd.f32 0.0, %v1532
      %v1534 = vpop.f32.mrf.mxu0
      %v1535 = vpop.f32.mrf.mxu0
      %v1536 = vadd.f32 0.0, %v1535
      %v1537 = vpop.f32.mrf.mxu0
      %1538 = vmatprep.mubr.bf16.mxu0 0
      %1539 = vmatmul.mubr.bf16.gmra.mxu0 %v1481
      %v1540 = vpop.f32.mrf.mxu0
      %v1541 = vadd.f32 0.0, %v1540
      %v1542 = vpop.f32.mrf.mxu0
      %v1543 = vpop.f32.mrf.mxu0
      %v1544 = vadd.f32 0.0, %v1543
      %v1545 = vpop.f32.mrf.mxu0
      %1546 = vmatprep.mubr.bf16.mxu0 0
      %1547 = vmatmul.mubr.bf16.gmra.mxu0 %v1484
      %v1548 = vpop.f32.mrf.mxu0
      %v1549 = vadd.f32 0.0, %v1548
      %v1550 = vpop.f32.mrf.mxu0
      %v1551 = vpop.f32.mrf.mxu0
      %v1552 = vadd.f32 0.0, %v1551
      %v1553 = vpop.f32.mrf.mxu0
      %1554 = vmatprep.mubr.bf16.mxu0 0
      %1555 = vmatmul.mubr.bf16.gmra.mxu0 %v1487
      %v1556 = vpop.f32.mrf.mxu0
      %v1557 = vadd.f32 0.0, %v1556
      %v1558 = vpop.f32.mrf.mxu0
      %v1559 = vpop.f32.mrf.mxu0
      %v1560 = vadd.f32 0.0, %v1559
      %v1561 = vpop.f32.mrf.mxu0
      %1562 = vmatprep.mubr.bf16.mxu0 0
      %1563 = vmatmul.mubr.bf16.gmra.mxu0 %v1490
      %v1564 = vpop.f32.mrf.mxu0
      %v1565 = vadd.f32 0.0, %v1564
      %v1566 = vpop.f32.mrf.mxu0
      %v1567 = vpop.f32.mrf.mxu0
      %v1568 = vadd.f32 0.0, %v1567
      %v1569 = vpop.f32.mrf.mxu0
      %1570 = vmatprep.mubr.bf16.mxu0 0
      %1571 = vmatmul.mubr.bf16.gmra.mxu0 %v1493
      %v1572 = vpop.f32.mrf.mxu0
      %v1573 = vadd.f32 0.0, %v1572
      %v1574 = vpop.f32.mrf.mxu0
      %v1575 = vpop.f32.mrf.mxu0
      %v1576 = vpop.f32.mrf.mxu0
      %1577 = vdwg.mxu0
      %v1578 = vadd.f32 %v1424, %v1533
      %v1579 = vadd.f32 %v1425, %v1536
      %v1580 = vadd.f32 %v1426, %v1541
      %v1581 = vadd.f32 %v1427, %v1544
      %v1582 = vadd.f32 %v1428, %v1549
      %v1583 = vadd.f32 %v1429, %v1552
      %v1584 = vadd.f32 %v1430, %v1557
      %v1585 = vadd.f32 %v1431, %v1560
      %v1586 = vadd.f32 %v1432, %v1565
      %v1587 = vadd.f32 %v1433, %v1568
      %v1588 = vadd.f32 %v1434, %v1573
      %s1589 = scalar_lea.vmem %s1, 12
      %v1590 = vld [vmem:[%s1589] sm:$0x3]
      %v1591 = vshrl.u32 %v1471, 16
      %v1593 = vshll.u32 %v1471, 16
      %v1595 = vrot.slane %v1593, 1
      %v1596 = vor.u32 %v1591, %v1595
      %v1597 = vshll.u32 %v1472, 16
      %v1599 = vrot.slane %v1597, 1
      %v1600 = vsel %vm214, %v1596, %v1599
      %v1601 = vshrl.u32 %v1472, 16
      %v1603 = vor.u32 %v1601, %v1599
      %v1604 = vshll.u32 %v1473, 16
      %v1606 = vrot.slane %v1604, 1
      %v1607 = vsel %vm214, %v1603, %v1606
      %v1608 = vshrl.u32 %v1473, 16
      %v1610 = vor.u32 %v1608, %v1606
      %v1611 = vshll.u32 %v1474, 16
      %v1613 = vrot.slane %v1611, 1
      %v1614 = vsel %vm214, %v1610, %v1613
      %v1615 = vshrl.u32 %v1474, 16
      %v1617 = vor.u32 %v1615, %v1613
      %v1618 = vshll.u32 %v1475, 16
      %v1620 = vrot.slane %v1618, 1
      %v1621 = vsel %vm214, %v1617, %v1620
      %v1622 = vshrl.u32 %v1475, 16
      %v1624 = vor.u32 %v1622, %v1620
      %v1625 = vshll.u32 %v1476, 16
      %v1627 = vrot.slane %v1625, 1
      %v1628 = vsel %vm214, %v1624, %v1627
      %v1629 = vshrl.u32 %v1476, 16
      %v1632 = vsel %vm261, %v1600, 0
      %v1635 = vsel %vm261, %v1607, 0
      %v1638 = vsel %vm261, %v1614, 0
      %v1641 = vsel %vm261, %v1621, 0
      %v1644 = vsel %vm261, %v1628, 0
      %v1647 = vsel %vm261, %v1629, 0
      %v1650 = vand.u32 %v1590, %v283
      %1652 = vmatprep.subr.bf16.mxu0 0
      %1653 = vmatpush1.bf16.msra.mxu0 0
      %1654 = vmatprep.subr.bf16.mxu0 0
      %1655 = vmatpush1.bf16.msra.mxu0 0
      %1656 = vmatprep.subr.bf16.mxu0 0
      %1657 = vmatpush1.bf16.msra.mxu0 0
      %1658 = vmatprep.subr.bf16.mxu0 0
      %1659 = vmatpush1.bf16.msra.mxu0 0
      %1660 = vmatprep.subr.bf16.mxu0 0
      %1661 = vmatpush1.bf16.msra.mxu0 0
      %1662 = vmatprep.subr.bf16.mxu0 0
      %1663 = vmatpush1.bf16.msra.mxu0 0
      %1664 = vmatprep.subr.bf16.mxu0 0
      %1665 = vmatpush1.bf16.msra.mxu0 0
      %1666 = vmatprep.subr.bf16.mxu0 0
      %1667 = vmatpush1.bf16.msra.mxu0 %v1650
      %1668 = vmatprep.subr.bf16.mxu0 0
      %1669 = vmatpush2.bf16.msra.mxu0 0
      %1670 = vmatprep.subr.bf16.mxu0 0
      %1671 = vmatpush2.bf16.msra.mxu0 0
      %1672 = vmatprep.subr.bf16.mxu0 0
      %1673 = vmatpush2.bf16.msra.mxu0 0
      %1674 = vmatprep.subr.bf16.mxu0 0
      %1675 = vmatpush2.bf16.msra.mxu0 0
      %1676 = vmatprep.subr.bf16.mxu0 0
      %1677 = vmatpush2.bf16.msra.mxu0 0
      %1678 = vmatprep.subr.bf16.mxu0 0
      %1679 = vmatpush2.bf16.msra.mxu0 0
      %1680 = vmatprep.subr.bf16.mxu0 0
      %1681 = vmatpush2.bf16.msra.mxu0 0
      %1682 = vmatprep.subr.bf16.mxu0 0
      %1683 = vmatpush2.bf16.msra.mxu0 0
      %1684 = vmatprep.mubr.bf16.mxu0 0
      %1685 = vmatmul.mubr.bf16.gmra.mxu0 %v1632
      %v1686 = vpop.f32.mrf.mxu0
      %v1687 = vadd.f32 0.0, %v1686
      %v1688 = vpop.f32.mrf.mxu0
      %v1689 = vpop.f32.mrf.mxu0
      %v1690 = vadd.f32 0.0, %v1689
      %v1691 = vpop.f32.mrf.mxu0
      %1692 = vmatprep.mubr.bf16.mxu0 0
      %1693 = vmatmul.mubr.bf16.gmra.mxu0 %v1635
      %v1694 = vpop.f32.mrf.mxu0
      %v1695 = vadd.f32 0.0, %v1694
      %v1696 = vpop.f32.mrf.mxu0
      %v1697 = vpop.f32.mrf.mxu0
      %v1698 = vadd.f32 0.0, %v1697
      %v1699 = vpop.f32.mrf.mxu0
      %1700 = vmatprep.mubr.bf16.mxu0 0
      %1701 = vmatmul.mubr.bf16.gmra.mxu0 %v1638
      %v1702 = vpop.f32.mrf.mxu0
      %v1703 = vadd.f32 0.0, %v1702
      %v1704 = vpop.f32.mrf.mxu0
      %v1705 = vpop.f32.mrf.mxu0
      %v1706 = vadd.f32 0.0, %v1705
      %v1707 = vpop.f32.mrf.mxu0
      %1708 = vmatprep.mubr.bf16.mxu0 0
      %1709 = vmatmul.mubr.bf16.gmra.mxu0 %v1641
      %v1710 = vpop.f32.mrf.mxu0
      %v1711 = vadd.f32 0.0, %v1710
      %v1712 = vpop.f32.mrf.mxu0
      %v1713 = vpop.f32.mrf.mxu0
      %v1714 = vadd.f32 0.0, %v1713
      %v1715 = vpop.f32.mrf.mxu0
      %1716 = vmatprep.mubr.bf16.mxu0 0
      %1717 = vmatmul.mubr.bf16.gmra.mxu0 %v1644
      %v1718 = vpop.f32.mrf.mxu0
      %v1719 = vadd.f32 0.0, %v1718
      %v1720 = vpop.f32.mrf.mxu0
      %v1721 = vpop.f32.mrf.mxu0
      %v1722 = vadd.f32 0.0, %v1721
      %v1723 = vpop.f32.mrf.mxu0
      %1724 = vmatprep.mubr.bf16.mxu0 0
      %1725 = vmatmul.mubr.bf16.gmra.mxu0 %v1647
      %v1726 = vpop.f32.mrf.mxu0
      %v1727 = vadd.f32 0.0, %v1726
      %v1728 = vpop.f32.mrf.mxu0
      %v1729 = vpop.f32.mrf.mxu0
      %v1730 = vpop.f32.mrf.mxu0
      %1731 = vdwg.mxu0
      %v1732 = vadd.f32 %v1578, %v1687
      %v1733 = vadd.f32 %v1579, %v1690
      %v1734 = vadd.f32 %v1580, %v1695
      %v1735 = vadd.f32 %v1581, %v1698
      %v1736 = vadd.f32 %v1582, %v1703
      %v1737 = vadd.f32 %v1583, %v1706
      %v1738 = vadd.f32 %v1584, %v1711
      %v1739 = vadd.f32 %v1585, %v1714
      %v1740 = vadd.f32 %v1586, %v1719
      %v1741 = vadd.f32 %v1587, %v1722
      %v1742 = vadd.f32 %v1588, %v1727
      %v1743 = vld [vmem:[%s1435 + $0x4] sm:$0xf]
      %v1744 = vld [vmem:[%s1435 + $0x8] sm:$0xf]
      %v1745 = vld [vmem:[%s1435 + $0xc] sm:$0xf]
      %v1746 = vld [vmem:[%s1435 + $0x10] sm:$0xf]
      %v1747 = vld [vmem:[%s1435 + $0x14] sm:$0xf]
      %v1748 = vld [vmem:[%s1435 + $0x18] sm:$0xf]
      %v1749 = vld [vmem:[%s1435 + $0x1c] sm:$0xf]
      %v1750 = vld [vmem:[%s1435 + $0x20] sm:$0xf]
      %v1751 = vld [vmem:[%s1435 + $0x24] sm:$0xf]
      %v1752 = vld [vmem:[%s1435 + $0x28] sm:$0xf]
      %v1753 = vld [vmem:[%s1435 + $0x2c] sm:$0x1]
      %s1754 = scalar_lea.vmem %s1, 24
      %v1755 = vld [vmem:[%s1754] sm:$0x3]
      %v1767 = vunpack.c.l.b16 %v1743
      %v1768 = vunpack.c.l.b16 %v1744
      %v1769 = vunpack.c.l.b16 %v1745
      %v1770 = vunpack.c.l.b16 %v1746
      %v1771 = vunpack.c.l.b16 %v1747
      %v1772 = vunpack.c.l.b16 %v1748
      %v1773 = vunpack.c.l.b16 %v1749
      %v1774 = vunpack.c.l.b16 %v1750
      %v1775 = vunpack.c.l.b16 %v1751
      %v1776 = vunpack.c.l.b16 %v1752
      %v1777 = vunpack.c.l.b16 %v1753
      %v1778 = vpack.c.b16 %v1768, %v1767
      %v1779 = vpack.c.b16 %v1770, %v1769
      %v1780 = vpack.c.b16 %v1772, %v1771
      %v1781 = vpack.c.b16 %v1774, %v1773
      %v1782 = vpack.c.b16 %v1776, %v1775
      %v1783 = vpack.c.b16 %v1777, %v1777
      %v1785 = vshrl.u32 %v1778, 16
      %v1787 = vshll.u32 %v1778, 16
      %v1789 = vrot.slane %v1787, 1
      %v1790 = vor.u32 %v1785, %v1789
      %v1792 = vshll.u32 %v1779, 16
      %v1794 = vrot.slane %v1792, 1
      %v1795 = vsel %vm214, %v1790, %v1794
      %v1796 = vshrl.u32 %v1779, 16
      %v1798 = vor.u32 %v1796, %v1794
      %v1800 = vshll.u32 %v1780, 16
      %v1802 = vrot.slane %v1800, 1
      %v1803 = vsel %vm214, %v1798, %v1802
      %v1804 = vshrl.u32 %v1780, 16
      %v1806 = vor.u32 %v1804, %v1802
      %v1808 = vshll.u32 %v1781, 16
      %v1810 = vrot.slane %v1808, 1
      %v1811 = vsel %vm214, %v1806, %v1810
      %v1812 = vshrl.u32 %v1781, 16
      %v1814 = vor.u32 %v1812, %v1810
      %v1816 = vshll.u32 %v1782, 16
      %v1818 = vrot.slane %v1816, 1
      %v1819 = vsel %vm214, %v1814, %v1818
      %v1820 = vshrl.u32 %v1782, 16
      %v1822 = vor.u32 %v1820, %v1818
      %v1824 = vshll.u32 %v1783, 16
      %v1826 = vrot.slane %v1824, 1
      %v1827 = vsel %vm214, %v1822, %v1826
      %v1828 = vshrl.u32 %v1783, 16
      %v1831 = vsel %vm261, %v1795, 0
      %v1834 = vsel %vm261, %v1803, 0
      %v1837 = vsel %vm261, %v1811, 0
      %v1840 = vsel %vm261, %v1819, 0
      %v1843 = vsel %vm261, %v1827, 0
      %v1846 = vsel %vm261, %v1828, 0
      %v1849 = vand.u32 %v1755, %v283
      %1851 = vmatprep.subr.bf16.mxu0 0
      %1852 = vmatpush1.bf16.msra.mxu0 0
      %1853 = vmatprep.subr.bf16.mxu0 0
      %1854 = vmatpush1.bf16.msra.mxu0 0
      %1855 = vmatprep.subr.bf16.mxu0 0
      %1856 = vmatpush1.bf16.msra.mxu0 0
      %1857 = vmatprep.subr.bf16.mxu0 0
      %1858 = vmatpush1.bf16.msra.mxu0 0
      %1859 = vmatprep.subr.bf16.mxu0 0
      %1860 = vmatpush1.bf16.msra.mxu0 0
      %1861 = vmatprep.subr.bf16.mxu0 0
      %1862 = vmatpush1.bf16.msra.mxu0 0
      %1863 = vmatprep.subr.bf16.mxu0 0
      %1864 = vmatpush1.bf16.msra.mxu0 0
      %1865 = vmatprep.subr.bf16.mxu0 0
      %1866 = vmatpush1.bf16.msra.mxu0 %v1849
      %1867 = vmatprep.subr.bf16.mxu0 0
      %1868 = vmatpush2.bf16.msra.mxu0 0
      %1869 = vmatprep.subr.bf16.mxu0 0
      %1870 = vmatpush2.bf16.msra.mxu0 0
      %1871 = vmatprep.subr.bf16.mxu0 0
      %1872 = vmatpush2.bf16.msra.mxu0 0
      %1873 = vmatprep.subr.bf16.mxu0 0
      %1874 = vmatpush2.bf16.msra.mxu0 0
      %1875 = vmatprep.subr.bf16.mxu0 0
      %1876 = vmatpush2.bf16.msra.mxu0 0
      %1877 = vmatprep.subr.bf16.mxu0 0
      %1878 = vmatpush2.bf16.msra.mxu0 0
      %1879 = vmatprep.subr.bf16.mxu0 0
      %1880 = vmatpush2.bf16.msra.mxu0 0
      %1881 = vmatprep.subr.bf16.mxu0 0
      %1882 = vmatpush2.bf16.msra.mxu0 0
      %1883 = vmatprep.mubr.bf16.mxu0 0
      %1884 = vmatmul.mubr.bf16.gmra.mxu0 %v1831
      %v1885 = vpop.f32.mrf.mxu0
      %v1886 = vadd.f32 0.0, %v1885
      %v1887 = vpop.f32.mrf.mxu0
      %v1888 = vpop.f32.mrf.mxu0
      %v1889 = vadd.f32 0.0, %v1888
      %v1890 = vpop.f32.mrf.mxu0
      %1891 = vmatprep.mubr.bf16.mxu0 0
      %1892 = vmatmul.mubr.bf16.gmra.mxu0 %v1834
      %v1893 = vpop.f32.mrf.mxu0
      %v1894 = vadd.f32 0.0, %v1893
      %v1895 = vpop.f32.mrf.mxu0
      %v1896 = vpop.f32.mrf.mxu0
      %v1897 = vadd.f32 0.0, %v1896
      %v1898 = vpop.f32.mrf.mxu0
      %1899 = vmatprep.mubr.bf16.mxu0 0
      %1900 = vmatmul.mubr.bf16.gmra.mxu0 %v1837
      %v1901 = vpop.f32.mrf.mxu0
      %v1902 = vadd.f32 0.0, %v1901
      %v1903 = vpop.f32.mrf.mxu0
      %v1904 = vpop.f32.mrf.mxu0
      %v1905 = vadd.f32 0.0, %v1904
      %v1906 = vpop.f32.mrf.mxu0
      %1907 = vmatprep.mubr.bf16.mxu0 0
      %1908 = vmatmul.mubr.bf16.gmra.mxu0 %v1840
      %v1909 = vpop.f32.mrf.mxu0
      %v1910 = vadd.f32 0.0, %v1909
      %v1911 = vpop.f32.mrf.mxu0
      %v1912 = vpop.f32.mrf.mxu0
      %v1913 = vadd.f32 0.0, %v1912
      %v1914 = vpop.f32.mrf.mxu0
      %1915 = vmatprep.mubr.bf16.mxu0 0
      %1916 = vmatmul.mubr.bf16.gmra.mxu0 %v1843
      %v1917 = vpop.f32.mrf.mxu0
      %v1918 = vadd.f32 0.0, %v1917
      %v1919 = vpop.f32.mrf.mxu0
      %v1920 = vpop.f32.mrf.mxu0
      %v1921 = vadd.f32 0.0, %v1920
      %v1922 = vpop.f32.mrf.mxu0
      %1923 = vmatprep.mubr.bf16.mxu0 0
      %1924 = vmatmul.mubr.bf16.gmra.mxu0 %v1846
      %v1925 = vpop.f32.mrf.mxu0
      %v1926 = vadd.f32 0.0, %v1925
      %v1927 = vpop.f32.mrf.mxu0
      %v1928 = vpop.f32.mrf.mxu0
      %v1929 = vpop.f32.mrf.mxu0
      %1930 = vdwg.mxu0
      %v1931 = vadd.f32 %v1732, %v1886
      %v1932 = vadd.f32 %v1733, %v1889
      %v1933 = vadd.f32 %v1734, %v1894
      %v1934 = vadd.f32 %v1735, %v1897
      %v1935 = vadd.f32 %v1736, %v1902
      %v1936 = vadd.f32 %v1737, %v1905
      %v1937 = vadd.f32 %v1738, %v1910
      %v1938 = vadd.f32 %v1739, %v1913
      %v1939 = vadd.f32 %v1740, %v1918
      %v1940 = vadd.f32 %v1741, %v1921
      %v1941 = vadd.f32 %v1742, %v1926
      %v1942 = vld [vmem:[%s1435 + $0x4] sm:$0xe]
      %v1943 = vld [vmem:[%s1435 + $0x2c] sm:$0x3]
      %s1944 = scalar_lea.vmem %s1, 28
      %v1945 = vld [vmem:[%s1944] sm:$0x3]
      %v1948 = vunpack.c.l.b16 %v1942
      %v1949 = vunpack.c.l.b16 %v1943
      %v1950 = vpack.c.b16 %v1768, %v1948
      %v1951 = vpack.c.b16 %v1949, %v1949
      %v1952 = vrot.slane %v1950, 1
      %v1953 = vrot.slane %v1779, 1
      %v1954 = vsel %vm671, %v1952, %v1953
      %v1955 = vrot.slane %v1780, 1
      %v1956 = vsel %vm671, %v1953, %v1955
      %v1957 = vrot.slane %v1781, 1
      %v1958 = vsel %vm671, %v1955, %v1957
      %v1959 = vrot.slane %v1782, 1
      %v1960 = vsel %vm671, %v1957, %v1959
      %v1961 = vrot.slane %v1951, 1
      %v1962 = vsel %vm671, %v1959, %v1961
      %v1964 = vsel %vm261, %v1954, 0
      %v1967 = vsel %vm261, %v1956, 0
      %v1970 = vsel %vm261, %v1958, 0
      %v1973 = vsel %vm261, %v1960, 0
      %v1976 = vsel %vm261, %v1962, 0
      %v1979 = vsel %vm261, %v1961, 0
      %v1982 = vand.u32 %v1945, %v283
      %1984 = vmatprep.subr.bf16.mxu0 0
      %1985 = vmatpush1.bf16.msra.mxu0 0
      %1986 = vmatprep.subr.bf16.mxu0 0
      %1987 = vmatpush1.bf16.msra.mxu0 0
      %1988 = vmatprep.subr.bf16.mxu0 0
      %1989 = vmatpush1.bf16.msra.mxu0 0
      %1990 = vmatprep.subr.bf16.mxu0 0
      %1991 = vmatpush1.bf16.msra.mxu0 0
      %1992 = vmatprep.subr.bf16.mxu0 0
      %1993 = vmatpush1.bf16.msra.mxu0 0
      %1994 = vmatprep.subr.bf16.mxu0 0
      %1995 = vmatpush1.bf16.msra.mxu0 0
      %1996 = vmatprep.subr.bf16.mxu0 0
      %1997 = vmatpush1.bf16.msra.mxu0 0
      %1998 = vmatprep.subr.bf16.mxu0 0
      %1999 = vmatpush1.bf16.msra.mxu0 %v1982
      %2000 = vmatprep.subr.bf16.mxu0 0
      %2001 = vmatpush2.bf16.msra.mxu0 0
      %2002 = vmatprep.subr.bf16.mxu0 0
      %2003 = vmatpush2.bf16.msra.mxu0 0
      %2004 = vmatprep.subr.bf16.mxu0 0
      %2005 = vmatpush2.bf16.msra.mxu0 0
      %2006 = vmatprep.subr.bf16.mxu0 0
      %2007 = vmatpush2.bf16.msra.mxu0 0
      %2008 = vmatprep.subr.bf16.mxu0 0
      %2009 = vmatpush2.bf16.msra.mxu0 0
      %2010 = vmatprep.subr.bf16.mxu0 0
      %2011 = vmatpush2.bf16.msra.mxu0 0
      %2012 = vmatprep.subr.bf16.mxu0 0
      %2013 = vmatpush2.bf16.msra.mxu0 0
      %2014 = vmatprep.subr.bf16.mxu0 0
      %2015 = vmatpush2.bf16.msra.mxu0 0
      %2016 = vmatprep.mubr.bf16.mxu0 0
      %2017 = vmatmul.mubr.bf16.gmra.mxu0 %v1964
      %v2018 = vpop.f32.mrf.mxu0
      %v2019 = vadd.f32 0.0, %v2018
      %v2020 = vpop.f32.mrf.mxu0
      %v2021 = vpop.f32.mrf.mxu0
      %v2022 = vadd.f32 0.0, %v2021
      %v2023 = vpop.f32.mrf.mxu0
      %2024 = vmatprep.mubr.bf16.mxu0 0
      %2025 = vmatmul.mubr.bf16.gmra.mxu0 %v1967
      %v2026 = vpop.f32.mrf.mxu0
      %v2027 = vadd.f32 0.0, %v2026
      %v2028 = vpop.f32.mrf.mxu0
      %v2029 = vpop.f32.mrf.mxu0
      %v2030 = vadd.f32 0.0, %v2029
      %v2031 = vpop.f32.mrf.mxu0
      %2032 = vmatprep.mubr.bf16.mxu0 0
      %2033 = vmatmul.mubr.bf16.gmra.mxu0 %v1970
      %v2034 = vpop.f32.mrf.mxu0
      %v2035 = vadd.f32 0.0, %v2034
      %v2036 = vpop.f32.mrf.mxu0
      %v2037 = vpop.f32.mrf.mxu0
      %v2038 = vadd.f32 0.0, %v2037
      %v2039 = vpop.f32.mrf.mxu0
      %2040 = vmatprep.mubr.bf16.mxu0 0
      %2041 = vmatmul.mubr.bf16.gmra.mxu0 %v1973
      %v2042 = vpop.f32.mrf.mxu0
      %v2043 = vadd.f32 0.0, %v2042
      %v2044 = vpop.f32.mrf.mxu0
      %v2045 = vpop.f32.mrf.mxu0
      %v2046 = vadd.f32 0.0, %v2045
      %v2047 = vpop.f32.mrf.mxu0
      %2048 = vmatprep.mubr.bf16.mxu0 0
      %2049 = vmatmul.mubr.bf16.gmra.mxu0 %v1976
      %v2050 = vpop.f32.mrf.mxu0
      %v2051 = vadd.f32 0.0, %v2050
      %v2052 = vpop.f32.mrf.mxu0
      %v2053 = vpop.f32.mrf.mxu0
      %v2054 = vadd.f32 0.0, %v2053
      %v2055 = vpop.f32.mrf.mxu0
      %2056 = vmatprep.mubr.bf16.mxu0 0
      %2057 = vmatmul.mubr.bf16.gmra.mxu0 %v1979
      %v2058 = vpop.f32.mrf.mxu0
      %v2059 = vadd.f32 0.0, %v2058
      %v2060 = vpop.f32.mrf.mxu0
      %v2061 = vpop.f32.mrf.mxu0
      %v2062 = vpop.f32.mrf.mxu0
      %2063 = vdwg.mxu0
      %v2064 = vadd.f32 %v1931, %v2019
      %v2065 = vadd.f32 %v1932, %v2022
      %v2066 = vadd.f32 %v1933, %v2027
      %v2067 = vadd.f32 %v1934, %v2030
      %v2068 = vadd.f32 %v1935, %v2035
      %v2069 = vadd.f32 %v1936, %v2038
      %v2070 = vadd.f32 %v1937, %v2043
      %v2071 = vadd.f32 %v1938, %v2046
      %v2072 = vadd.f32 %v1939, %v2051
      %v2073 = vadd.f32 %v1940, %v2054
      %v2074 = vadd.f32 %v1941, %v2059
      %s2075 = scalar_lea.vmem %s165, 144
      %v2076 = vld [vmem:[%s2075] sm:$0xf]
      %v2077 = vld [vmem:[%s2075 + $0x4] sm:$0xf]
      %v2078 = vld [vmem:[%s2075 + $0x8] sm:$0xf]
      %v2079 = vld [vmem:[%s2075 + $0xc] sm:$0xf]
      %v2080 = vld [vmem:[%s2075 + $0x10] sm:$0xf]
      %v2081 = vld [vmem:[%s2075 + $0x14] sm:$0xf]
      %v2082 = vld [vmem:[%s2075 + $0x18] sm:$0xf]
      %v2083 = vld [vmem:[%s2075 + $0x1c] sm:$0xf]
      %v2084 = vld [vmem:[%s2075 + $0x20] sm:$0xf]
      %v2085 = vld [vmem:[%s2075 + $0x24] sm:$0xf]
      %v2086 = vld [vmem:[%s2075 + $0x28] sm:$0x1]
      %s2087 = scalar_lea.vmem %s1, 10
      %v2088 = vld [vmem:[%s2087] sm:$0x3]
      %v2100 = vunpack.c.l.b16 %v2076
      %v2101 = vunpack.c.l.b16 %v2077
      %v2102 = vunpack.c.l.b16 %v2078
      %v2103 = vunpack.c.l.b16 %v2079
      %v2104 = vunpack.c.l.b16 %v2080
      %v2105 = vunpack.c.l.b16 %v2081
      %v2106 = vunpack.c.l.b16 %v2082
      %v2107 = vunpack.c.l.b16 %v2083
      %v2108 = vunpack.c.l.b16 %v2084
      %v2109 = vunpack.c.l.b16 %v2085
      %v2110 = vunpack.c.l.b16 %v2086
      %v2111 = vpack.c.b16 %v2101, %v2100
      %v2112 = vpack.c.b16 %v2103, %v2102
      %v2113 = vpack.c.b16 %v2105, %v2104
      %v2114 = vpack.c.b16 %v2107, %v2106
      %v2115 = vpack.c.b16 %v2109, %v2108
      %v2116 = vpack.c.b16 %v2110, %v2110
      %v2118 = vsel %vm261, %v2111, 0
      %v2121 = vsel %vm261, %v2112, 0
      %v2124 = vsel %vm261, %v2113, 0
      %v2127 = vsel %vm261, %v2114, 0
      %v2130 = vsel %vm261, %v2115, 0
      %v2133 = vsel %vm261, %v2116, 0
      %v2136 = vand.u32 %v2088, %v283
      %2138 = vmatprep.subr.bf16.mxu0 0
      %2139 = vmatpush1.bf16.msra.mxu0 0
      %2140 = vmatprep.subr.bf16.mxu0 0
      %2141 = vmatpush1.bf16.msra.mxu0 0
      %2142 = vmatprep.subr.bf16.mxu0 0
      %2143 = vmatpush1.bf16.msra.mxu0 0
      %2144 = vmatprep.subr.bf16.mxu0 0
      %2145 = vmatpush1.bf16.msra.mxu0 0
      %2146 = vmatprep.subr.bf16.mxu0 0
      %2147 = vmatpush1.bf16.msra.mxu0 0
      %2148 = vmatprep.subr.bf16.mxu0 0
      %2149 = vmatpush1.bf16.msra.mxu0 0
      %2150 = vmatprep.subr.bf16.mxu0 0
      %2151 = vmatpush1.bf16.msra.mxu0 0
      %2152 = vmatprep.subr.bf16.mxu0 0
      %2153 = vmatpush1.bf16.msra.mxu0 %v2136
      %2154 = vmatprep.subr.bf16.mxu0 0
      %2155 = vmatpush2.bf16.msra.mxu0 0
      %2156 = vmatprep.subr.bf16.mxu0 0
      %2157 = vmatpush2.bf16.msra.mxu0 0
      %2158 = vmatprep.subr.bf16.mxu0 0
      %2159 = vmatpush2.bf16.msra.mxu0 0
      %2160 = vmatprep.subr.bf16.mxu0 0
      %2161 = vmatpush2.bf16.msra.mxu0 0
      %2162 = vmatprep.subr.bf16.mxu0 0
      %2163 = vmatpush2.bf16.msra.mxu0 0
      %2164 = vmatprep.subr.bf16.mxu0 0
      %2165 = vmatpush2.bf16.msra.mxu0 0
      %2166 = vmatprep.subr.bf16.mxu0 0
      %2167 = vmatpush2.bf16.msra.mxu0 0
      %2168 = vmatprep.subr.bf16.mxu0 0
      %2169 = vmatpush2.bf16.msra.mxu0 0
      %2170 = vmatprep.mubr.bf16.mxu0 0
      %2171 = vmatmul.mubr.bf16.gmra.mxu0 %v2118
      %v2172 = vpop.f32.mrf.mxu0
      %v2173 = vadd.f32 0.0, %v2172
      %v2174 = vpop.f32.mrf.mxu0
      %v2175 = vpop.f32.mrf.mxu0
      %v2176 = vadd.f32 0.0, %v2175
      %v2177 = vpop.f32.mrf.mxu0
      %2178 = vmatprep.mubr.bf16.mxu0 0
      %2179 = vmatmul.mubr.bf16.gmra.mxu0 %v2121
      %v2180 = vpop.f32.mrf.mxu0
      %v2181 = vadd.f32 0.0, %v2180
      %v2182 = vpop.f32.mrf.mxu0
      %v2183 = vpop.f32.mrf.mxu0
      %v2184 = vadd.f32 0.0, %v2183
      %v2185 = vpop.f32.mrf.mxu0
      %2186 = vmatprep.mubr.bf16.mxu0 0
      %2187 = vmatmul.mubr.bf16.gmra.mxu0 %v2124
      %v2188 = vpop.f32.mrf.mxu0
      %v2189 = vadd.f32 0.0, %v2188
      %v2190 = vpop.f32.mrf.mxu0
      %v2191 = vpop.f32.mrf.mxu0
      %v2192 = vadd.f32 0.0, %v2191
      %v2193 = vpop.f32.mrf.mxu0
      %2194 = vmatprep.mubr.bf16.mxu0 0
      %2195 = vmatmul.mubr.bf16.gmra.mxu0 %v2127
      %v2196 = vpop.f32.mrf.mxu0
      %v2197 = vadd.f32 0.0, %v2196
      %v2198 = vpop.f32.mrf.mxu0
      %v2199 = vpop.f32.mrf.mxu0
      %v2200 = vadd.f32 0.0, %v2199
      %v2201 = vpop.f32.mrf.mxu0
      %2202 = vmatprep.mubr.bf16.mxu0 0
      %2203 = vmatmul.mubr.bf16.gmra.mxu0 %v2130
      %v2204 = vpop.f32.mrf.mxu0
      %v2205 = vadd.f32 0.0, %v2204
      %v2206 = vpop.f32.mrf.mxu0
      %v2207 = vpop.f32.mrf.mxu0
      %v2208 = vadd.f32 0.0, %v2207
      %v2209 = vpop.f32.mrf.mxu0
      %2210 = vmatprep.mubr.bf16.mxu0 0
      %2211 = vmatmul.mubr.bf16.gmra.mxu0 %v2133
      %v2212 = vpop.f32.mrf.mxu0
      %v2213 = vadd.f32 0.0, %v2212
      %v2214 = vpop.f32.mrf.mxu0
      %v2215 = vpop.f32.mrf.mxu0
      %v2216 = vpop.f32.mrf.mxu0
      %2217 = vdwg.mxu0
      %v2218 = vadd.f32 %v2064, %v2173
      %v2219 = vadd.f32 %v2065, %v2176
      %v2220 = vadd.f32 %v2066, %v2181
      %v2221 = vadd.f32 %v2067, %v2184
      %v2222 = vadd.f32 %v2068, %v2189
      %v2223 = vadd.f32 %v2069, %v2192
      %v2224 = vadd.f32 %v2070, %v2197
      %v2225 = vadd.f32 %v2071, %v2200
      %v2226 = vadd.f32 %v2072, %v2205
      %v2227 = vadd.f32 %v2073, %v2208
      %v2228 = vadd.f32 %v2074, %v2213
      %s2229 = scalar_lea.vmem %s1, 14
      %v2230 = vld [vmem:[%s2229] sm:$0x3]
      %v2231 = vshrl.u32 %v2111, 16
      %v2233 = vshll.u32 %v2111, 16
      %v2235 = vrot.slane %v2233, 1
      %v2236 = vor.u32 %v2231, %v2235
      %v2237 = vshll.u32 %v2112, 16
      %v2239 = vrot.slane %v2237, 1
      %v2240 = vsel %vm214, %v2236, %v2239
      %v2241 = vshrl.u32 %v2112, 16
      %v2243 = vor.u32 %v2241, %v2239
      %v2244 = vshll.u32 %v2113, 16
      %v2246 = vrot.slane %v2244, 1
      %v2247 = vsel %vm214, %v2243, %v2246
      %v2248 = vshrl.u32 %v2113, 16
      %v2250 = vor.u32 %v2248, %v2246
      %v2251 = vshll.u32 %v2114, 16
      %v2253 = vrot.slane %v2251, 1
      %v2254 = vsel %vm214, %v2250, %v2253
      %v2255 = vshrl.u32 %v2114, 16
      %v2257 = vor.u32 %v2255, %v2253
      %v2258 = vshll.u32 %v2115, 16
      %v2260 = vrot.slane %v2258, 1
      %v2261 = vsel %vm214, %v2257, %v2260
      %v2262 = vshrl.u32 %v2115, 16
      %v2264 = vor.u32 %v2262, %v2260
      %v2265 = vshll.u32 %v2116, 16
      %v2267 = vrot.slane %v2265, 1
      %v2268 = vsel %vm214, %v2264, %v2267
      %v2269 = vshrl.u32 %v2116, 16
      %v2272 = vsel %vm261, %v2240, 0
      %v2275 = vsel %vm261, %v2247, 0
      %v2278 = vsel %vm261, %v2254, 0
      %v2281 = vsel %vm261, %v2261, 0
      %v2284 = vsel %vm261, %v2268, 0
      %v2287 = vsel %vm261, %v2269, 0
      %v2290 = vand.u32 %v2230, %v283
      %2292 = vmatprep.subr.bf16.mxu0 0
      %2293 = vmatpush1.bf16.msra.mxu0 0
      %2294 = vmatprep.subr.bf16.mxu0 0
      %2295 = vmatpush1.bf16.msra.mxu0 0
      %2296 = vmatprep.subr.bf16.mxu0 0
      %2297 = vmatpush1.bf16.msra.mxu0 0
      %2298 = vmatprep.subr.bf16.mxu0 0
      %2299 = vmatpush1.bf16.msra.mxu0 0
      %2300 = vmatprep.subr.bf16.mxu0 0
      %2301 = vmatpush1.bf16.msra.mxu0 0
      %2302 = vmatprep.subr.bf16.mxu0 0
      %2303 = vmatpush1.bf16.msra.mxu0 0
      %2304 = vmatprep.subr.bf16.mxu0 0
      %2305 = vmatpush1.bf16.msra.mxu0 0
      %2306 = vmatprep.subr.bf16.mxu0 0
      %2307 = vmatpush1.bf16.msra.mxu0 %v2290
      %2308 = vmatprep.subr.bf16.mxu0 0
      %2309 = vmatpush2.bf16.msra.mxu0 0
      %2310 = vmatprep.subr.bf16.mxu0 0
      %2311 = vmatpush2.bf16.msra.mxu0 0
      %2312 = vmatprep.subr.bf16.mxu0 0
      %2313 = vmatpush2.bf16.msra.mxu0 0
      %2314 = vmatprep.subr.bf16.mxu0 0
      %2315 = vmatpush2.bf16.msra.mxu0 0
      %2316 = vmatprep.subr.bf16.mxu0 0
      %2317 = vmatpush2.bf16.msra.mxu0 0
      %2318 = vmatprep.subr.bf16.mxu0 0
      %2319 = vmatpush2.bf16.msra.mxu0 0
      %2320 = vmatprep.subr.bf16.mxu0 0
      %2321 = vmatpush2.bf16.msra.mxu0 0
      %2322 = vmatprep.subr.bf16.mxu0 0
      %2323 = vmatpush2.bf16.msra.mxu0 0
      %2324 = vmatprep.mubr.bf16.mxu0 0
      %2325 = vmatmul.mubr.bf16.gmra.mxu0 %v2272
      %v2326 = vpop.f32.mrf.mxu0
      %v2327 = vadd.f32 0.0, %v2326
      %v2328 = vpop.f32.mrf.mxu0
      %v2329 = vpop.f32.mrf.mxu0
      %v2330 = vadd.f32 0.0, %v2329
      %v2331 = vpop.f32.mrf.mxu0
      %2332 = vmatprep.mubr.bf16.mxu0 0
      %2333 = vmatmul.mubr.bf16.gmra.mxu0 %v2275
      %v2334 = vpop.f32.mrf.mxu0
      %v2335 = vadd.f32 0.0, %v2334
      %v2336 = vpop.f32.mrf.mxu0
      %v2337 = vpop.f32.mrf.mxu0
      %v2338 = vadd.f32 0.0, %v2337
      %v2339 = vpop.f32.mrf.mxu0
      %2340 = vmatprep.mubr.bf16.mxu0 0
      %2341 = vmatmul.mubr.bf16.gmra.mxu0 %v2278
      %v2342 = vpop.f32.mrf.mxu0
      %v2343 = vadd.f32 0.0, %v2342
      %v2344 = vpop.f32.mrf.mxu0
      %v2345 = vpop.f32.mrf.mxu0
      %v2346 = vadd.f32 0.0, %v2345
      %v2347 = vpop.f32.mrf.mxu0
      %2348 = vmatprep.mubr.bf16.mxu0 0
      %2349 = vmatmul.mubr.bf16.gmra.mxu0 %v2281
      %v2350 = vpop.f32.mrf.mxu0
      %v2351 = vadd.f32 0.0, %v2350
      %v2352 = vpop.f32.mrf.mxu0
      %v2353 = vpop.f32.mrf.mxu0
      %v2354 = vadd.f32 0.0, %v2353
      %v2355 = vpop.f32.mrf.mxu0
      %2356 = vmatprep.mubr.bf16.mxu0 0
      %2357 = vmatmul.mubr.bf16.gmra.mxu0 %v2284
      %v2358 = vpop.f32.mrf.mxu0
      %v2359 = vadd.f32 0.0, %v2358
      %v2360 = vpop.f32.mrf.mxu0
      %v2361 = vpop.f32.mrf.mxu0
      %v2362 = vadd.f32 0.0, %v2361
      %v2363 = vpop.f32.mrf.mxu0
      %2364 = vmatprep.mubr.bf16.mxu0 0
      %2365 = vmatmul.mubr.bf16.gmra.mxu0 %v2287
      %v2366 = vpop.f32.mrf.mxu0
      %v2367 = vadd.f32 0.0, %v2366
      %v2368 = vpop.f32.mrf.mxu0
      %v2369 = vpop.f32.mrf.mxu0
      %v2370 = vpop.f32.mrf.mxu0
      %2371 = vdwg.mxu0
      %v2372 = vadd.f32 %v2218, %v2327
      %v2373 = vadd.f32 %v2219, %v2330
      %v2374 = vadd.f32 %v2220, %v2335
      %v2375 = vadd.f32 %v2221, %v2338
      %v2376 = vadd.f32 %v2222, %v2343
      %v2377 = vadd.f32 %v2223, %v2346
      %v2378 = vadd.f32 %v2224, %v2351
      %v2379 = vadd.f32 %v2225, %v2354
      %v2380 = vadd.f32 %v2226, %v2359
      %v2381 = vadd.f32 %v2227, %v2362
      %v2382 = vadd.f32 %v2228, %v2367
      %v2383 = vld [vmem:[%s2075 + $0x4] sm:$0xf]
      %v2384 = vld [vmem:[%s2075 + $0x8] sm:$0xf]
      %v2385 = vld [vmem:[%s2075 + $0xc] sm:$0xf]
      %v2386 = vld [vmem:[%s2075 + $0x10] sm:$0xf]
      %v2387 = vld [vmem:[%s2075 + $0x14] sm:$0xf]
      %v2388 = vld [vmem:[%s2075 + $0x18] sm:$0xf]
      %v2389 = vld [vmem:[%s2075 + $0x1c] sm:$0xf]
      %v2390 = vld [vmem:[%s2075 + $0x20] sm:$0xf]
      %v2391 = vld [vmem:[%s2075 + $0x24] sm:$0xf]
      %v2392 = vld [vmem:[%s2075 + $0x28] sm:$0xf]
      %v2393 = vld [vmem:[%s2075 + $0x2c] sm:$0x1]
      %s2394 = scalar_lea.vmem %s1, 26
      %v2395 = vld [vmem:[%s2394] sm:$0x3]
      %v2407 = vunpack.c.l.b16 %v2383
      %v2408 = vunpack.c.l.b16 %v2384
      %v2409 = vunpack.c.l.b16 %v2385
      %v2410 = vunpack.c.l.b16 %v2386
      %v2411 = vunpack.c.l.b16 %v2387
      %v2412 = vunpack.c.l.b16 %v2388
      %v2413 = vunpack.c.l.b16 %v2389
      %v2414 = vunpack.c.l.b16 %v2390
      %v2415 = vunpack.c.l.b16 %v2391
      %v2416 = vunpack.c.l.b16 %v2392
      %v2417 = vunpack.c.l.b16 %v2393
      %v2418 = vpack.c.b16 %v2408, %v2407
      %v2419 = vpack.c.b16 %v2410, %v2409
      %v2420 = vpack.c.b16 %v2412, %v2411
      %v2421 = vpack.c.b16 %v2414, %v2413
      %v2422 = vpack.c.b16 %v2416, %v2415
      %v2423 = vpack.c.b16 %v2417, %v2417
      %v2425 = vshrl.u32 %v2418, 16
      %v2427 = vshll.u32 %v2418, 16
      %v2429 = vrot.slane %v2427, 1
      %v2430 = vor.u32 %v2425, %v2429
      %v2432 = vshll.u32 %v2419, 16
      %v2434 = vrot.slane %v2432, 1
      %v2435 = vsel %vm214, %v2430, %v2434
      %v2436 = vshrl.u32 %v2419, 16
      %v2438 = vor.u32 %v2436, %v2434
      %v2440 = vshll.u32 %v2420, 16
      %v2442 = vrot.slane %v2440, 1
      %v2443 = vsel %vm214, %v2438, %v2442
      %v2444 = vshrl.u32 %v2420, 16
      %v2446 = vor.u32 %v2444, %v2442
      %v2448 = vshll.u32 %v2421, 16
      %v2450 = vrot.slane %v2448, 1
      %v2451 = vsel %vm214, %v2446, %v2450
      %v2452 = vshrl.u32 %v2421, 16
      %v2454 = vor.u32 %v2452, %v2450
      %v2456 = vshll.u32 %v2422, 16
      %v2458 = vrot.slane %v2456, 1
      %v2459 = vsel %vm214, %v2454, %v2458
      %v2460 = vshrl.u32 %v2422, 16
      %v2462 = vor.u32 %v2460, %v2458
      %v2464 = vshll.u32 %v2423, 16
      %v2466 = vrot.slane %v2464, 1
      %v2467 = vsel %vm214, %v2462, %v2466
      %v2468 = vshrl.u32 %v2423, 16
      %v2471 = vsel %vm261, %v2435, 0
      %v2474 = vsel %vm261, %v2443, 0
      %v2477 = vsel %vm261, %v2451, 0
      %v2480 = vsel %vm261, %v2459, 0
      %v2483 = vsel %vm261, %v2467, 0
      %v2486 = vsel %vm261, %v2468, 0
      %v2489 = vand.u32 %v2395, %v283
      %2491 = vmatprep.subr.bf16.mxu0 0
      %2492 = vmatpush1.bf16.msra.mxu0 0
      %2493 = vmatprep.subr.bf16.mxu0 0
      %2494 = vmatpush1.bf16.msra.mxu0 0
      %2495 = vmatprep.subr.bf16.mxu0 0
      %2496 = vmatpush1.bf16.msra.mxu0 0
      %2497 = vmatprep.subr.bf16.mxu0 0
      %2498 = vmatpush1.bf16.msra.mxu0 0
      %2499 = vmatprep.subr.bf16.mxu0 0
      %2500 = vmatpush1.bf16.msra.mxu0 0
      %2501 = vmatprep.subr.bf16.mxu0 0
      %2502 = vmatpush1.bf16.msra.mxu0 0
      %2503 = vmatprep.subr.bf16.mxu0 0
      %2504 = vmatpush1.bf16.msra.mxu0 0
      %2505 = vmatprep.subr.bf16.mxu0 0
      %2506 = vmatpush1.bf16.msra.mxu0 %v2489
      %2507 = vmatprep.subr.bf16.mxu0 0
      %2508 = vmatpush2.bf16.msra.mxu0 0
      %2509 = vmatprep.subr.bf16.mxu0 0
      %2510 = vmatpush2.bf16.msra.mxu0 0
      %2511 = vmatprep.subr.bf16.mxu0 0
      %2512 = vmatpush2.bf16.msra.mxu0 0
      %2513 = vmatprep.subr.bf16.mxu0 0
      %2514 = vmatpush2.bf16.msra.mxu0 0
      %2515 = vmatprep.subr.bf16.mxu0 0
      %2516 = vmatpush2.bf16.msra.mxu0 0
      %2517 = vmatprep.subr.bf16.mxu0 0
      %2518 = vmatpush2.bf16.msra.mxu0 0
      %2519 = vmatprep.subr.bf16.mxu0 0
      %2520 = vmatpush2.bf16.msra.mxu0 0
      %2521 = vmatprep.subr.bf16.mxu0 0
      %2522 = vmatpush2.bf16.msra.mxu0 0
      %2523 = vmatprep.mubr.bf16.mxu0 0
      %2524 = vmatmul.mubr.bf16.gmra.mxu0 %v2471
      %v2525 = vpop.f32.mrf.mxu0
      %v2526 = vadd.f32 0.0, %v2525
      %v2527 = vpop.f32.mrf.mxu0
      %v2528 = vpop.f32.mrf.mxu0
      %v2529 = vadd.f32 0.0, %v2528
      %v2530 = vpop.f32.mrf.mxu0
      %2531 = vmatprep.mubr.bf16.mxu0 0
      %2532 = vmatmul.mubr.bf16.gmra.mxu0 %v2474
      %v2533 = vpop.f32.mrf.mxu0
      %v2534 = vadd.f32 0.0, %v2533
      %v2535 = vpop.f32.mrf.mxu0
      %v2536 = vpop.f32.mrf.mxu0
      %v2537 = vadd.f32 0.0, %v2536
      %v2538 = vpop.f32.mrf.mxu0
      %2539 = vmatprep.mubr.bf16.mxu0 0
      %2540 = vmatmul.mubr.bf16.gmra.mxu0 %v2477
      %v2541 = vpop.f32.mrf.mxu0
      %v2542 = vadd.f32 0.0, %v2541
      %v2543 = vpop.f32.mrf.mxu0
      %v2544 = vpop.f32.mrf.mxu0
      %v2545 = vadd.f32 0.0, %v2544
      %v2546 = vpop.f32.mrf.mxu0
      %2547 = vmatprep.mubr.bf16.mxu0 0
      %2548 = vmatmul.mubr.bf16.gmra.mxu0 %v2480
      %v2549 = vpop.f32.mrf.mxu0
      %v2550 = vadd.f32 0.0, %v2549
      %v2551 = vpop.f32.mrf.mxu0
      %v2552 = vpop.f32.mrf.mxu0
      %v2553 = vadd.f32 0.0, %v2552
      %v2554 = vpop.f32.mrf.mxu0
      %2555 = vmatprep.mubr.bf16.mxu0 0
      %2556 = vmatmul.mubr.bf16.gmra.mxu0 %v2483
      %v2557 = vpop.f32.mrf.mxu0
      %v2558 = vadd.f32 0.0, %v2557
      %v2559 = vpop.f32.mrf.mxu0
      %v2560 = vpop.f32.mrf.mxu0
      %v2561 = vadd.f32 0.0, %v2560
      %v2562 = vpop.f32.mrf.mxu0
      %2563 = vmatprep.mubr.bf16.mxu0 0
      %2564 = vmatmul.mubr.bf16.gmra.mxu0 %v2486
      %v2565 = vpop.f32.mrf.mxu0
      %v2566 = vadd.f32 0.0, %v2565
      %v2567 = vpop.f32.mrf.mxu0
      %v2568 = vpop.f32.mrf.mxu0
      %v2569 = vpop.f32.mrf.mxu0
      %2570 = vdwg.mxu0
      %v2571 = vadd.f32 %v2372, %v2526
      %v2572 = vadd.f32 %v2373, %v2529
      %v2573 = vadd.f32 %v2374, %v2534
      %v2574 = vadd.f32 %v2375, %v2537
      %v2575 = vadd.f32 %v2376, %v2542
      %v2576 = vadd.f32 %v2377, %v2545
      %v2577 = vadd.f32 %v2378, %v2550
      %v2578 = vadd.f32 %v2379, %v2553
      %v2579 = vadd.f32 %v2380, %v2558
      %v2580 = vadd.f32 %v2381, %v2561
      %v2581 = vadd.f32 %v2382, %v2566
      %v2582 = vld [vmem:[%s2075 + $0x4] sm:$0xe]
      %v2583 = vld [vmem:[%s2075 + $0x2c] sm:$0x3]
      %s2584 = scalar_lea.vmem %s1, 30
      %v2585 = vld [vmem:[%s2584] sm:$0x3]
      %v2588 = vunpack.c.l.b16 %v2582
      %v2589 = vunpack.c.l.b16 %v2583
      %v2590 = vpack.c.b16 %v2408, %v2588
      %v2591 = vpack.c.b16 %v2589, %v2589
      %v2592 = vrot.slane %v2590, 1
      %v2593 = vrot.slane %v2419, 1
      %v2594 = vsel %vm671, %v2592, %v2593
      %v2595 = vrot.slane %v2420, 1
      %v2596 = vsel %vm671, %v2593, %v2595
      %v2597 = vrot.slane %v2421, 1
      %v2598 = vsel %vm671, %v2595, %v2597
      %v2599 = vrot.slane %v2422, 1
      %v2600 = vsel %vm671, %v2597, %v2599
      %v2601 = vrot.slane %v2591, 1
      %v2602 = vsel %vm671, %v2599, %v2601
      %v2604 = vsel %vm261, %v2594, 0
      %v2607 = vsel %vm261, %v2596, 0
      %v2610 = vsel %vm261, %v2598, 0
      %v2613 = vsel %vm261, %v2600, 0
      %v2616 = vsel %vm261, %v2602, 0
      %v2619 = vsel %vm261, %v2601, 0
      %v2622 = vand.u32 %v2585, %v283
      %2624 = vmatprep.subr.bf16.mxu0 0
      %2625 = vmatpush1.bf16.msra.mxu0 0
      %2626 = vmatprep.subr.bf16.mxu0 0
      %2627 = vmatpush1.bf16.msra.mxu0 0
      %2628 = vmatprep.subr.bf16.mxu0 0
      %2629 = vmatpush1.bf16.msra.mxu0 0
      %2630 = vmatprep.subr.bf16.mxu0 0
      %2631 = vmatpush1.bf16.msra.mxu0 0
      %2632 = vmatprep.subr.bf16.mxu0 0
      %2633 = vmatpush1.bf16.msra.mxu0 0
      %2634 = vmatprep.subr.bf16.mxu0 0
      %2635 = vmatpush1.bf16.msra.mxu0 0
      %2636 = vmatprep.subr.bf16.mxu0 0
      %2637 = vmatpush1.bf16.msra.mxu0 0
      %2638 = vmatprep.subr.bf16.mxu0 0
      %2639 = vmatpush1.bf16.msra.mxu0 %v2622
      %2640 = vmatprep.subr.bf16.mxu0 0
      %2641 = vmatpush2.bf16.msra.mxu0 0
      %2642 = vmatprep.subr.bf16.mxu0 0
      %2643 = vmatpush2.bf16.msra.mxu0 0
      %2644 = vmatprep.subr.bf16.mxu0 0
      %2645 = vmatpush2.bf16.msra.mxu0 0
      %2646 = vmatprep.subr.bf16.mxu0 0
      %2647 = vmatpush2.bf16.msra.mxu0 0
      %2648 = vmatprep.subr.bf16.mxu0 0
      %2649 = vmatpush2.bf16.msra.mxu0 0
      %2650 = vmatprep.subr.bf16.mxu0 0
      %2651 = vmatpush2.bf16.msra.mxu0 0
      %2652 = vmatprep.subr.bf16.mxu0 0
      %2653 = vmatpush2.bf16.msra.mxu0 0
      %2654 = vmatprep.subr.bf16.mxu0 0
      %2655 = vmatpush2.bf16.msra.mxu0 0
      %2656 = vmatprep.mubr.bf16.mxu0 0
      %2657 = vmatmul.mubr.bf16.gmra.mxu0 %v2604
      %v2658 = vpop.f32.mrf.mxu0
      %v2659 = vadd.f32 0.0, %v2658
      %v2660 = vpop.f32.mrf.mxu0
      %v2661 = vpop.f32.mrf.mxu0
      %v2662 = vadd.f32 0.0, %v2661
      %v2663 = vpop.f32.mrf.mxu0
      %2664 = vmatprep.mubr.bf16.mxu0 0
      %2665 = vmatmul.mubr.bf16.gmra.mxu0 %v2607
      %v2666 = vpop.f32.mrf.mxu0
      %v2667 = vadd.f32 0.0, %v2666
      %v2668 = vpop.f32.mrf.mxu0
      %v2669 = vpop.f32.mrf.mxu0
      %v2670 = vadd.f32 0.0, %v2669
      %v2671 = vpop.f32.mrf.mxu0
      %2672 = vmatprep.mubr.bf16.mxu0 0
      %2673 = vmatmul.mubr.bf16.gmra.mxu0 %v2610
      %v2674 = vpop.f32.mrf.mxu0
      %v2675 = vadd.f32 0.0, %v2674
      %v2676 = vpop.f32.mrf.mxu0
      %v2677 = vpop.f32.mrf.mxu0
      %v2678 = vadd.f32 0.0, %v2677
      %v2679 = vpop.f32.mrf.mxu0
      %2680 = vmatprep.mubr.bf16.mxu0 0
      %2681 = vmatmul.mubr.bf16.gmra.mxu0 %v2613
      %v2682 = vpop.f32.mrf.mxu0
      %v2683 = vadd.f32 0.0, %v2682
      %v2684 = vpop.f32.mrf.mxu0
      %v2685 = vpop.f32.mrf.mxu0
      %v2686 = vadd.f32 0.0, %v2685
      %v2687 = vpop.f32.mrf.mxu0
      %2688 = vmatprep.mubr.bf16.mxu0 0
      %2689 = vmatmul.mubr.bf16.gmra.mxu0 %v2616
      %v2690 = vpop.f32.mrf.mxu0
      %v2691 = vadd.f32 0.0, %v2690
      %v2692 = vpop.f32.mrf.mxu0
      %v2693 = vpop.f32.mrf.mxu0
      %v2694 = vadd.f32 0.0, %v2693
      %v2695 = vpop.f32.mrf.mxu0
      %2696 = vmatprep.mubr.bf16.mxu0 0
      %2697 = vmatmul.mubr.bf16.gmra.mxu0 %v2619
      %v2698 = vpop.f32.mrf.mxu0
      %v2699 = vadd.f32 0.0, %v2698
      %v2700 = vpop.f32.mrf.mxu0
      %v2701 = vpop.f32.mrf.mxu0
      %v2702 = vpop.f32.mrf.mxu0
      %2703 = vdwg.mxu0
      %v2704 = vadd.f32 %v2571, %v2659
      %v2705 = vadd.f32 %v2572, %v2662
      %v2706 = vadd.f32 %v2573, %v2667
      %v2707 = vadd.f32 %v2574, %v2670
      %v2708 = vadd.f32 %v2575, %v2675
      %v2709 = vadd.f32 %v2576, %v2678
      %v2710 = vadd.f32 %v2577, %v2683
      %v2711 = vadd.f32 %v2578, %v2686
      %v2712 = vadd.f32 %v2579, %v2691
      %v2713 = vadd.f32 %v2580, %v2694
      %v2714 = vadd.f32 %v2581, %v2699
      %v2715 = vld [vmem:[%s2] sm:$0x1]
      %v2717 = vlaneseq
      %v2718 = vshrl.u32 %v2717, 7
      %v2719 = vsub.s32 0, %v2718
      %v2720 = vrot.slane %v2715, %v2719
      %v2722 = vadd.f32 %v2704, %v2720
      %v2723 = vadd.f32 %v2705, %v2720
      %v2724 = vadd.f32 %v2706, %v2720
      %v2725 = vadd.f32 %v2707, %v2720
      %v2726 = vadd.f32 %v2708, %v2720
      %v2727 = vadd.f32 %v2709, %v2720
      %v2728 = vadd.f32 %v2710, %v2720
      %v2729 = vadd.f32 %v2711, %v2720
      %v2730 = vadd.f32 %v2712, %v2720
      %v2731 = vadd.f32 %v2713, %v2720
      %v2732 = vadd.f32 %v2714, %v2720
      %v2733 = vmax.f32 %v2722, 0.0
      %v2734 = vmax.f32 %v2723, 0.0
      %v2735 = vmax.f32 %v2724, 0.0
      %v2736 = vmax.f32 %v2725, 0.0
      %v2737 = vmax.f32 %v2726, 0.0
      %v2738 = vmax.f32 %v2727, 0.0
      %v2739 = vmax.f32 %v2728, 0.0
      %v2740 = vmax.f32 %v2729, 0.0
      %v2741 = vmax.f32 %v2730, 0.0
      %v2742 = vmax.f32 %v2731, 0.0
      %v2743 = vmax.f32 %v2732, 0.0
      %v2744 = vpack.c.bf16 %v2734, %v2733
      %v2745 = vpack.c.bf16 %v2736, %v2735
      %v2746 = vpack.c.bf16 %v2738, %v2737
      %v2747 = vpack.c.bf16 %v2740, %v2739
      %v2748 = vpack.c.bf16 %v2742, %v2741
      %v2749 = vpack.c.bf16 %v2743, %v2743
      %v2756 = vunpack.c.l.b16 %v2744
      %v2757 = vunpack.c.h.b16 %v2744
      %v2758 = vunpack.c.l.b16 %v2745
      %v2759 = vunpack.c.h.b16 %v2745
      %v2760 = vunpack.c.l.b16 %v2746
      %v2761 = vunpack.c.h.b16 %v2746
      %v2762 = vunpack.c.l.b16 %v2747
      %v2763 = vunpack.c.h.b16 %v2747
      %v2764 = vunpack.c.l.b16 %v2748
      %v2765 = vunpack.c.h.b16 %v2748
      %v2766 = vunpack.c.l.b16 %v2749
      %v2767 = vpack.c.b16 %v2756, %v2756
      %v2768 = vpack.c.b16 %v2757, %v2757
      %v2769 = vpack.c.b16 %v2758, %v2758
      %v2770 = vpack.c.b16 %v2759, %v2759
      %v2771 = vpack.c.b16 %v2760, %v2760
      %v2772 = vpack.c.b16 %v2761, %v2761
      %v2773 = vpack.c.b16 %v2762, %v2762
      %v2774 = vpack.c.b16 %v2763, %v2763
      %v2775 = vpack.c.b16 %v2764, %v2764
      %v2776 = vpack.c.b16 %v2765, %v2765
      %v2777 = vpack.c.b16 %v2766, %v2766
      %vm2789 = vcmask 125952
      %2790 = vst.msk [vmem:[%s170] sm:$0xf] %vm2789, %v2767
      %2791 = vst.msk [vmem:[%s170 + $0x4] sm:$0xf] %vm2789, %v2768
      %2792 = vst.msk [vmem:[%s170 + $0x8] sm:$0xf] %vm2789, %v2769
      %2793 = vst.msk [vmem:[%s170 + $0xc] sm:$0xf] %vm2789, %v2770
      %2794 = vst.msk [vmem:[%s170 + $0x10] sm:$0xf] %vm2789, %v2771
      %2795 = vst.msk [vmem:[%s170 + $0x14] sm:$0xf] %vm2789, %v2772
      %2796 = vst.msk [vmem:[%s170 + $0x18] sm:$0xf] %vm2789, %v2773
      %2797 = vst.msk [vmem:[%s170 + $0x1c] sm:$0xf] %vm2789, %v2774
      %2798 = vst.msk [vmem:[%s170 + $0x20] sm:$0xf] %vm2789, %v2775
      %2799 = vst.msk [vmem:[%s170 + $0x24] sm:$0xf] %vm2789, %v2776
      %vm2800 = vcmask 122880
      %vm2801 = vsmask.f32 256
      %vm2802 = vmand %vm2800, %vm2801
      %v2803 = vld [vmem:[%s170 + $0x28] sm:$0x1]
      %v2804 = vsel %vm2802, %v2777, %v2803
      %2805 = vst [vmem:[%s170 + $0x28] sm:$0x1] %v2804
      %p2806 = scmp.lt.s32.totalorder %s14, 1
      %s2807 = scalar_select %p2806, %s14, 1
      %s2808 = smul.addr %s2807, 11
      %s2809 = smul.addr %s2808, 4
      %s2810 = scalar_lea.vmem %s3, %s2809
      // Predicated region
      $region33: #{encoder_forward.3} parent=31 // pred_check
        %p2811 = pneg %p100
      $region34: #{encoder_forward.3} parent=31 // pred_check_branch
        %2813 = sbr.rel (%p2811) target = $region36
      $region35: #{encoder_forward.3} parent=31 // pred_region
        _
      $region36: #{encoder_forward.3} parent=31 // pred_fallthru
        _
    $region32: #{encoder_forward.3} parent=5 // pred_fallthru
      _
    %p2814 = scmp.le.s32.totalorder 2, %s9
    // Predicated region
    $region37: #{encoder_forward.3} parent=5 // pred_check
      %p2815 = pneg %p2814
    $region38: #{encoder_forward.3} parent=5 // pred_check_branch
      %2817 = sbr.rel (%p2815) target = $region40
    $region39: #{encoder_forward.3} parent=5 // pred_region
      %s2818 = ssub.s32 %s9, 2
      // Predicated region
      $region41: #{encoder_forward.3} parent=39 // pred_check
        %p2819 = pneg %p106
      $region42: #{encoder_forward.3} parent=39 // pred_check_branch
        %2821 = sbr.rel (%p2819) target = $region44
      $region43: #{encoder_forward.3} parent=39 // pred_region
        %p2822 = scmp.lt.s32.totalorder %s15, 1
        %s2823 = scalar_select %p2822, %s15, 1
        %s2824 = smul.addr %s2823, 11
        %s2825 = smul.addr %s2824, 4
        %s2826 = scalar_lea.vmem %s3, %s2825
      $region44: #{encoder_forward.3} parent=39 // pred_fallthru
        _
    $region40: #{encoder_forward.3} parent=5 // pred_fallthru
      _
  $region6: #{encoder_forward.3} parent=0 // loop_footer
    %s13 = sadd.s32 1, %s9
  $region7: #{encoder_forward.3} parent=0 // loop_footer_branch
    %8 = sbr.rel target = $region3
  $region8: #{encoder_forward.3} parent=0 // loop_exit
    _

// kernel: encoder_forward.5
$region0: #{encoder_forward.5}
  #allocation0 [shape = 'u32[]', space=smem, size = 0x4, offset = 0x4, fixed_abs, tag = 'smem constant byte address 0x4 - core index']
  #allocation1 [shape = 'u32[144,128]{1,0:T(1,128)}', space=vmem, size = 0x12000, scoped, tag = 'internal scratch']
  #allocation2 [shape = 'bf16[50,32]{1,0:T(8,128)(2,1)}', space=vmem, size = 0x3800, scoped, tag = 'scratch operand']
  %s0 = inlined_call_operand.vmem [shape: bf16[2,36,32], index: 0, kind: input, shape index: {}]
  %s1 = inlined_call_operand.vmem [shape: f32[36,1], index: 1, kind: input, shape index: {}]
  %s2 = inlined_call_operand.vmem [shape: bf16[9,32,32], index: 2, kind: input, shape index: {}]
  %s3 = inlined_call_operand.vmem [shape: f32[1,32], index: 3, kind: input, shape index: {}]
  %s4 = inlined_call_operand.vmem [shape: bf16[9,32,8], index: 4, kind: input, shape index: {}]
  %s5 = inlined_call_operand.vmem [shape: bf16[8,32], index: 5, kind: input, shape index: {}]
  %s6 = inlined_call_operand.vmem [shape: f32[2,36,32], index: 6, kind: output, shape index: {}]
  %s7 = sld [smem:[#allocation0]]
  $region57: #{encoder_forward.5} parent=0
    _
  %s9 = ssub.s32 1, %s7
  %s10 = scalar_select 0, %s9, %s7
  loop: start=0, step=1, limit=4
  $region2: #{encoder_forward.5} parent=0 // loop_pre_header
    _
  $region3: #{encoder_forward.5} parent=0 // loop_header
    %s12 = sphi 0, %s16
    %p13 = scmp.ge.s32.totalorder %s12, 4
    %s22 = sphi 0, %s24
    %s25 = sphi 0, %s22
    %s26 = sphi 0, %s25
    %s42 = sphi 0, %s26
    %s46 = sphi 0, %s46
    %s48 = sphi 0, %s46
    %s49 = sphi 0, %s48
    %s63 = sphi 0, %s49
    %s67 = sphi 0, %s67
    %s69 = sphi 0, %s67
    %s70 = sphi 0, %s69
    %s84 = sphi 0, %s70
    %s88 = sphi 0, %s88
    %s90 = sphi 0, %s88
    %s91 = sphi 0, %s90
    %s105 = sphi 0, %s91
    %s109 = sphi 0, %s109
    %s111 = sphi 0, %s109
    %s112 = sphi 0, %s111
    %s126 = sphi 0, %s112
    %s130 = sphi 0, %s130
    %s132 = sphi 0, %s130
    %s133 = sphi 0, %s132
    %s147 = sphi 0, %s133
    %s153 = sphi 0, %s155
    %s156 = sphi 0, %s153
    %s157 = sphi 0, %s156
    %s173 = sphi 0, %s157
  $region4: #{encoder_forward.5} parent=0 // loop_header_branch
    %15 = sbr.rel (%p13) target = $region8
  $region5: #{encoder_forward.5} parent=0 // loop_body
    %s17 = ssub.s32 %s12, 1
    %s18 = ssub.s32 %s12, 2
    %s19 = sadd.s32 %s12, 1
    %s20 = ssub.s32 %s12, %s19
    %p21 = scmp.eq.s32.totalorder %s20, 0
    %s23 = sadd.s32 %s22, 1
    %s24 = scalar_select %p21, %s22, %s23
    %p27 = pneg %p21
    %p28 = scmp.eq.s32.totalorder %s12, 1
    %p29 = por %p27, %p28
    %p30 = scmp.ne.s32.totalorder %s22, %s25
    %p31 = scmp.eq.s32.totalorder %s12, 0
    %p32 = por %p30, %p31
    %p33 = scmp.ne.s32.totalorder %s22, %s25
    %p34 = scmp.eq.s32.totalorder %s17, 1
    %p35 = por %p33, %p34
    %p36 = scmp.ne.s32.totalorder %s25, %s26
    %p37 = scmp.eq.s32.totalorder %s17, 0
    %p38 = por %p36, %p37
    %p39 = scmp.ne.s32.totalorder %s25, %s26
    %p40 = scmp.eq.s32.totalorder %s18, 1
    %p41 = por %p39, %p40
    %p43 = scmp.ne.s32.totalorder %s26, %s42
    %p44 = scmp.eq.s32.totalorder %s18, 0
    %p45 = por %p43, %p44
    %s47 = sadd.s32 %s46, 1
    %p50 = scmp.eq.s32.totalorder %s12, 1
    %p51 = scmp.ne.s32.totalorder %s46, %s48
    %p52 = scmp.eq.s32.totalorder %s12, 0
    %p53 = por %p51, %p52
    %p54 = scmp.ne.s32.totalorder %s46, %s48
    %p55 = scmp.eq.s32.totalorder %s17, 1
    %p56 = por %p54, %p55
    %p57 = scmp.ne.s32.totalorder %s48, %s49
    %p58 = scmp.eq.s32.totalorder %s17, 0
    %p59 = por %p57, %p58
    %p60 = scmp.ne.s32.totalorder %s48, %s49
    %p61 = scmp.eq.s32.totalorder %s18, 1
    %p62 = por %p60, %p61
    %p64 = scmp.ne.s32.totalorder %s49, %s63
    %p65 = scmp.eq.s32.totalorder %s18, 0
    %p66 = por %p64, %p65
    %s68 = sadd.s32 %s67, 1
    %p71 = scmp.eq.s32.totalorder %s12, 1
    %p72 = scmp.ne.s32.totalorder %s67, %s69
    %p73 = scmp.eq.s32.totalorder %s12, 0
    %p74 = por %p72, %p73
    %p75 = scmp.ne.s32.totalorder %s67, %s69
    %p76 = scmp.eq.s32.totalorder %s17, 1
    %p77 = por %p75, %p76
    %p78 = scmp.ne.s32.totalorder %s69, %s70
    %p79 = scmp.eq.s32.totalorder %s17, 0
    %p80 = por %p78, %p79
    %p81 = scmp.ne.s32.totalorder %s69, %s70
    %p82 = scmp.eq.s32.totalorder %s18, 1
    %p83 = por %p81, %p82
    %p85 = scmp.ne.s32.totalorder %s70, %s84
    %p86 = scmp.eq.s32.totalorder %s18, 0
    %p87 = por %p85, %p86
    %s89 = sadd.s32 %s88, 1
    %p92 = scmp.eq.s32.totalorder %s12, 1
    %p93 = scmp.ne.s32.totalorder %s88, %s90
    %p94 = scmp.eq.s32.totalorder %s12, 0
    %p95 = por %p93, %p94
    %p96 = scmp.ne.s32.totalorder %s88, %s90
    %p97 = scmp.eq.s32.totalorder %s17, 1
    %p98 = por %p96, %p97
    %p99 = scmp.ne.s32.totalorder %s90, %s91
    %p100 = scmp.eq.s32.totalorder %s17, 0
    %p101 = por %p99, %p100
    %p102 = scmp.ne.s32.totalorder %s90, %s91
    %p103 = scmp.eq.s32.totalorder %s18, 1
    %p104 = por %p102, %p103
    %p106 = scmp.ne.s32.totalorder %s91, %s105
    %p107 = scmp.eq.s32.totalorder %s18, 0
    %p108 = por %p106, %p107
    %s110 = sadd.s32 %s109, 1
    %p113 = scmp.eq.s32.totalorder %s12, 1
    %p114 = scmp.ne.s32.totalorder %s109, %s111
    %p115 = scmp.eq.s32.totalorder %s12, 0
    %p116 = por %p114, %p115
    %p117 = scmp.ne.s32.totalorder %s109, %s111
    %p118 = scmp.eq.s32.totalorder %s17, 1
    %p119 = por %p117, %p118
    %p120 = scmp.ne.s32.totalorder %s111, %s112
    %p121 = scmp.eq.s32.totalorder %s17, 0
    %p122 = por %p120, %p121
    %p123 = scmp.ne.s32.totalorder %s111, %s112
    %p124 = scmp.eq.s32.totalorder %s18, 1
    %p125 = por %p123, %p124
    %p127 = scmp.ne.s32.totalorder %s112, %s126
    %p128 = scmp.eq.s32.totalorder %s18, 0
    %p129 = por %p127, %p128
    %s131 = sadd.s32 %s130, 1
    %p134 = scmp.eq.s32.totalorder %s12, 1
    %p135 = scmp.ne.s32.totalorder %s130, %s132
    %p136 = scmp.eq.s32.totalorder %s12, 0
    %p137 = por %p135, %p136
    %p138 = scmp.ne.s32.totalorder %s130, %s132
    %p139 = scmp.eq.s32.totalorder %s17, 1
    %p140 = por %p138, %p139
    %p141 = scmp.ne.s32.totalorder %s132, %s133
    %p142 = scmp.eq.s32.totalorder %s17, 0
    %p143 = por %p141, %p142
    %p144 = scmp.ne.s32.totalorder %s132, %s133
    %p145 = scmp.eq.s32.totalorder %s18, 1
    %p146 = por %p144, %p145
    %p148 = scmp.ne.s32.totalorder %s133, %s147
    %p149 = scmp.eq.s32.totalorder %s18, 0
    %p150 = por %p148, %p149
    %s151 = ssub.s32 %s12, %s19
    %p152 = scmp.eq.s32.totalorder %s151, 0
    %s154 = sadd.s32 %s153, 1
    %s155 = scalar_select %p152, %s153, %s154
    %p158 = pneg %p152
    %p159 = scmp.eq.s32.totalorder %s12, 1
    %p160 = por %p158, %p159
    %p161 = scmp.ne.s32.totalorder %s153, %s156
    %p162 = scmp.eq.s32.totalorder %s12, 0
    %p163 = por %p161, %p162
    %p164 = scmp.ne.s32.totalorder %s153, %s156
    %p165 = scmp.eq.s32.totalorder %s17, 1
    %p166 = por %p164, %p165
    %p167 = scmp.ne.s32.totalorder %s156, %s157
    %p168 = scmp.eq.s32.totalorder %s17, 0
    %p169 = por %p167, %p168
    %p170 = scmp.ne.s32.totalorder %s156, %s157
    %p171 = scmp.eq.s32.totalorder %s18, 1
    %p172 = por %p170, %p171
    %p174 = scmp.ne.s32.totalorder %s157, %s173
    %p175 = scmp.eq.s32.totalorder %s18, 0
    %p176 = por %p174, %p175
    %p177 = scmp.le.s32.totalorder 1, %s12
    %p178 = scmp.lt.s32.totalorder %s12, 3
    %p179 = pnand %p177, %p178
    %p180 = pneg %p179
    // Predicated region
    $region9: #{encoder_forward.5} parent=5 // pred_check
      _
    $region10: #{encoder_forward.5} parent=5 // pred_check_branch
      %182 = sbr.rel (%p179) target = $region12
    $region11: #{encoder_forward.5} parent=5 // pred_region
      %s183 = ssub.s32 %s12, 1
      // Predicated region
      $region13: #{encoder_forward.5} parent=11 // pred_check
        %p184 = pneg %p59
      $region14: #{encoder_forward.5} parent=11 // pred_check_branch
        %186 = sbr.rel (%p184) target = $region16
      $region15: #{encoder_forward.5} parent=11 // pred_region
        _
      $region16: #{encoder_forward.5} parent=11 // pred_fallthru
        _
      // Predicated region
      $region17: #{encoder_forward.5} parent=11 // pred_check
        %p187 = pneg %p80
      $region18: #{encoder_forward.5} parent=11 // pred_check_branch
        %189 = sbr.rel (%p187) target = $region20
      $region19: #{encoder_forward.5} parent=11 // pred_region
        _
      $region20: #{encoder_forward.5} parent=11 // pred_fallthru
        _
      // Predicated region
      $region21: #{encoder_forward.5} parent=11 // pred_check
        %p190 = pneg %p101
      $region22: #{encoder_forward.5} parent=11 // pred_check_branch
        %192 = sbr.rel (%p190) target = $region24
      $region23: #{encoder_forward.5} parent=11 // pred_region
        _
      $region24: #{encoder_forward.5} parent=11 // pred_fallthru
        _
      // Predicated region
      $region25: #{encoder_forward.5} parent=11 // pred_check
        %p193 = pneg %p122
      $region26: #{encoder_forward.5} parent=11 // pred_check_branch
        %195 = sbr.rel (%p193) target = $region28
      $region27: #{encoder_forward.5} parent=11 // pred_region
        _
      $region28: #{encoder_forward.5} parent=11 // pred_fallthru
        _
      // Predicated region
      $region29: #{encoder_forward.5} parent=11 // pred_check
        %p196 = pneg %p143
      $region30: #{encoder_forward.5} parent=11 // pred_check_branch
        %198 = sbr.rel (%p196) target = $region32
      $region31: #{encoder_forward.5} parent=11 // pred_region
        _
      $region32: #{encoder_forward.5} parent=11 // pred_fallthru
        _
    $region12: #{encoder_forward.5} parent=5 // pred_fallthru
      _
    %p199 = scmp.lt.s32.totalorder %s12, 2
    // Predicated region
    $region33: #{encoder_forward.5} parent=5 // pred_check
      %p200 = pneg %p199
    $region34: #{encoder_forward.5} parent=5 // pred_check_branch
      %202 = sbr.rel (%p200) target = $region36
    $region35: #{encoder_forward.5} parent=5 // pred_region
      // Predicated region
      $region37: #{encoder_forward.5} parent=35 // pred_check
        %p203 = pneg %p32
      $region38: #{encoder_forward.5} parent=35 // pred_check_branch
        %205 = sbr.rel (%p203) target = $region40
      $region39: #{encoder_forward.5} parent=35 // pred_region
        %p206 = scmp.lt.s32.totalorder %s12, 1
        %s207 = scalar_select %p206, %s12, 1
        %s208 = smul.addr %s207, 5
        %s209 = smul.addr %s208, 4
        %s210 = scalar_lea.vmem %s0, %s209
      $region40: #{encoder_forward.5} parent=35 // pred_fallthru
        _
    $region36: #{encoder_forward.5} parent=5 // pred_fallthru
      _
    %p211 = scmp.le.s32.totalorder 1, %s12
    %p212 = scmp.lt.s32.totalorder %s12, 3
    %p213 = pnand %p211, %p212
    %p214 = pneg %p213
    // Predicated region
    $region41: #{encoder_forward.5} parent=5 // pred_check
      _
    $region42: #{encoder_forward.5} parent=5 // pred_check_branch
      %216 = sbr.rel (%p213) target = $region44
    $region43: #{encoder_forward.5} parent=5 // pred_region
      %s217 = ssub.s32 %s12, 1
      %p218 = scmp.lt.s32.totalorder %s17, 1
      %s219 = scalar_select %p218, %s17, 1
      %s220 = smul.addr %s219, 5
      %s221 = smul.addr %s220, 4
      %s222 = scalar_lea.vmem %s0, %s221
      %p223 = pneg %p38
      %p224 = pneg %p35
      %p225 = pneg %p59
      %p226 = pneg %p56
      %p227 = pneg %p80
      %p228 = pneg %p77
      %p229 = pneg %p101
      %p230 = pneg %p98
      %p231 = pneg %p122
      %p232 = pneg %p119
      %p233 = pneg %p143
      %p234 = pneg %p140
      %p235 = pneg %p169
      %p236 = pneg %p166
      %p237 = scmp.lt.s32.totalorder %s17, 1
      %s238 = scalar_select %p237, %s17, 1
      %s239 = smul.addr %s238, 5
      %s240 = smul.addr %s239, 8
      %s241 = scalar_lea.vmem %s6, %s240
      %p242 = scmp.lt.s32.totalorder %s17, 1
      %s243 = scalar_select %p242, %s17, 1
      %s244 = smul.addr %s243, 5
      %s245 = smul.addr %s244, 4
      %s246 = scalar_lea.vmem %s0, %s245
      %p247 = scmp.lt.s32.totalorder %s17, 1
      %s248 = scalar_select %p247, %s17, 1
      %s249 = smul.addr %s248, 5
      %s250 = smul.addr %s249, 8
      %s251 = scalar_lea.vmem %s6, %s250
      %vm253 = vcmask 257024
      %254 = vst.msk [vmem:[#allocation2] sm:$0xf] %vm253, 0
      %255 = vst.msk [vmem:[#allocation2 + $0x4] sm:$0xf] %vm253, 0
      %256 = vst.msk [vmem:[#allocation2 + $0x8] sm:$0xf] %vm253, 0
      %257 = vst.msk [vmem:[#allocation2 + $0xc] sm:$0xf] %vm253, 0
      %258 = vst.msk [vmem:[#allocation2 + $0x10] sm:$0xf] %vm253, 0
      %259 = vst.msk [vmem:[#allocation2 + $0x14] sm:$0xf] %vm253, 0
      %vm260 = vcmask 253952
      %261 = vst.msk [vmem:[#allocation2 + $0x18] sm:$0x1] %vm260, 0
      %v262 = vld [vmem:[%s246] sm:$0xf]
      %v263 = vld [vmem:[%s246 + $0x4] sm:$0xf]
      %v264 = vld [vmem:[%s246 + $0x8] sm:$0xf]
      %v265 = vld [vmem:[%s246 + $0xc] sm:$0xf]
      %v266 = vld [vmem:[%s246 + $0x10] sm:$0x3]
      %vm267 = vsmask.f32 3328
      %vm268 = vsmask.f32 7440
      %vm269 = vmor %vm267, %vm268
      %v271 = vshll.u32 %v262, 16
      %v273 = vrot.slane %v271, 5
      %v274 = vshrl.u32 %v262, 16
      %v276 = vrot.slane %v274, 4
      %v277 = vor.u32 %v276, %v273
      %v278 = vrot.slane %v277, 4
      %v280 = vshll.u32 %v263, 16
      %v282 = vrot.slane %v280, 5
      %v283 = vsel %vm269, %v278, %v282
      %v284 = vshrl.u32 %v263, 16
      %v286 = vrot.slane %v284, 4
      %v287 = vor.u32 %v286, %v282
      %v288 = vrot.slane %v287, 4
      %v290 = vshll.u32 %v264, 16
      %v292 = vrot.slane %v290, 5
      %v293 = vsel %vm269, %v288, %v292
      %v294 = vshrl.u32 %v264, 16
      %v296 = vrot.slane %v294, 4
      %v297 = vor.u32 %v296, %v292
      %v298 = vrot.slane %v297, 4
      %v300 = vshll.u32 %v265, 16
      %v302 = vrot.slane %v300, 5
      %v303 = vsel %vm269, %v298, %v302
      %v304 = vshrl.u32 %v265, 16
      %v306 = vrot.slane %v304, 4
      %v307 = vor.u32 %v306, %v302
      %v308 = vrot.slane %v307, 4
      %v310 = vshll.u32 %v266, 16
      %v312 = vrot.slane %v310, 5
      %v313 = vsel %vm269, %v308, %v312
      %v314 = vshrl.u32 %v266, 16
      %v316 = vrot.slane %v314, 4
      %v317 = vor.u32 %v316, %v312
      %v318 = vrot.slane %v317, 4
      %vm325 = vcmask 257027
      %vm326 = vsmask.f32 7950
      %vm327 = vmand %vm325, %vm326
      %v328 = vld [vmem:[#allocation2] sm:$0x8]
      %v329 = vsel %vm327, %v273, %v328
      %330 = vst [vmem:[#allocation2] sm:$0x8] %v329
      %331 = vst.msk [vmem:[#allocation2 + $0x4] sm:$0xf] %vm253, %v283
      %332 = vst.msk [vmem:[#allocation2 + $0x8] sm:$0xf] %vm253, %v293
      %333 = vst.msk [vmem:[#allocation2 + $0xc] sm:$0xf] %vm253, %v303
      %334 = vst.msk [vmem:[#allocation2 + $0x10] sm:$0xf] %vm253, %v313
      %vm335 = vcmask 254976
      %vm336 = vsmask.f32 1280
      %vm337 = vmand %vm335, %vm336
      %v338 = vld [vmem:[#allocation2 + $0x14] sm:$0x3]
      %v339 = vsel %vm337, %v318, %v338
      %340 = vst [vmem:[#allocation2 + $0x14] sm:$0x3] %v339
      %v341 = vld [vmem:[#allocation2] sm:$0xf]
      %v342 = vld [vmem:[#allocation2 + $0x4] sm:$0xf]
      %v343 = vld [vmem:[#allocation2 + $0x8] sm:$0xf]
      %v344 = vld [vmem:[#allocation2 + $0xc] sm:$0xf]
      %v345 = vld [vmem:[#allocation2 + $0x10] sm:$0x3]
      %v346 = vld [vmem:[%s2] sm:$0xf]
      %v347 = vld [vmem:[%s2 + $0x4] sm:$0xf]
      %v348 = vld [vmem:[%s2 + $0x8] sm:$0xf]
      %v349 = vld [vmem:[%s2 + $0xc] sm:$0xf]
      %v350 = vld [vmem:[#allocation2 + $0x10] sm:$0x7]
      %s351 = scalar_lea.vmem %s2, 16
      %v352 = vld [vmem:[%s351] sm:$0xf]
      %v353 = vld [vmem:[%s351 + $0x4] sm:$0xf]
      %v354 = vld [vmem:[%s351 + $0x8] sm:$0xf]
      %v355 = vld [vmem:[%s351 + $0xc] sm:$0xf]
      %v361 = vunpack.c.l.b16 %v341
      %v362 = vunpack.c.l.b16 %v342
      %v363 = vunpack.c.l.b16 %v343
      %v364 = vunpack.c.l.b16 %v344
      %v365 = vunpack.c.l.b16 %v350
      %v366 = vpack.c.b16 %v362, %v361
      %v367 = vpack.c.b16 %v364, %v363
      %v368 = vpack.c.b16 %v365, %v365
      %vm369 = vsmask.f32 7424
      %v371 = vshrl.u32 %v366, 16
      %v373 = vshll.u32 %v366, 16
      %v375 = vrot.slane %v373, 1
      %v376 = vor.u32 %v371, %v375
      %v378 = vshll.u32 %v367, 16
      %v380 = vrot.slane %v378, 1
      %v381 = vsel %vm369, %v376, %v380
      %v382 = vshrl.u32 %v367, 16
      %v384 = vor.u32 %v382, %v380
      %v386 = vshll.u32 %v368, 16
      %v388 = vrot.slane %v386, 1
      %v389 = vsel %vm369, %v384, %v388
      %v390 = vshrl.u32 %v368, 16
      %v392 = vor.u32 %v390, %v388
      %v397 = vunpack.c.l.b16 %v352
      %v398 = vunpack.c.l.b16 %v353
      %v399 = vunpack.c.l.b16 %v354
      %v400 = vunpack.c.l.b16 %v355
      %v401 = vpack.c.b16 %v398, %v397
      %v402 = vpack.c.b16 %v400, %v399
      %vm405 = vcmask 261120
      %v407 = vsel %vm405, %v381, 0
      %v410 = vsel %vm405, %v389, 0
      %v413 = vsel %vm405, %v392, 0
      %415 = vmatprep.subr.bf16.mxu0 0
      %416 = vmatpush1.bf16.msra.mxu0 0
      %417 = vmatprep.subr.bf16.mxu0 0
      %418 = vmatpush1.bf16.msra.mxu0 0
      %419 = vmatprep.subr.bf16.mxu0 0
      %420 = vmatpush1.bf16.msra.mxu0 0
      %421 = vmatprep.subr.bf16.mxu0 0
      %422 = vmatpush1.bf16.msra.mxu0 0
      %423 = vmatprep.subr.bf16.mxu0 0
      %424 = vmatpush1.bf16.msra.mxu0 0
      %425 = vmatprep.subr.bf16.mxu0 0
      %426 = vmatpush1.bf16.msra.mxu0 0
      %427 = vmatprep.subr.bf16.mxu0 0
      %428 = vmatpush1.bf16.msra.mxu0 %v402
      %429 = vmatprep.subr.bf16.mxu0 0
      %430 = vmatpush1.bf16.msra.mxu0 %v401
      %431 = vmatprep.subr.bf16.mxu0 0
      %432 = vmatpush2.bf16.msra.mxu0 0
      %433 = vmatprep.subr.bf16.mxu0 0
      %434 = vmatpush2.bf16.msra.mxu0 0
      %435 = vmatprep.subr.bf16.mxu0 0
      %436 = vmatpush2.bf16.msra.mxu0 0
      %437 = vmatprep.subr.bf16.mxu0 0
      %438 = vmatpush2.bf16.msra.mxu0 0
      %439 = vmatprep.subr.bf16.mxu0 0
      %440 = vmatpush2.bf16.msra.mxu0 0
      %441 = vmatprep.subr.bf16.mxu0 0
      %442 = vmatpush2.bf16.msra.mxu0 0
      %443 = vmatprep.subr.bf16.mxu0 0
      %444 = vmatpush2.bf16.msra.mxu0 0
      %445 = vmatprep.subr.bf16.mxu0 0
      %446 = vmatpush2.bf16.msra.mxu0 0
      %447 = vmatprep.mubr.bf16.mxu0 0
      %448 = vmatmul.mubr.bf16.gmra.mxu0 %v407
      %v449 = vpop.f32.mrf.mxu0
      %v450 = vadd.f32 0.0, %v449
      %v451 = vpop.f32.mrf.mxu0
      %v452 = vpop.f32.mrf.mxu0
      %v453 = vadd.f32 0.0, %v452
      %v454 = vpop.f32.mrf.mxu0
      %455 = vmatprep.mubr.bf16.mxu0 0
      %456 = vmatmul.mubr.bf16.gmra.mxu0 %v410
      %v457 = vpop.f32.mrf.mxu0
      %v458 = vadd.f32 0.0, %v457
      %v459 = vpop.f32.mrf.mxu0
      %v460 = vpop.f32.mrf.mxu0
      %v461 = vadd.f32 0.0, %v460
      %v462 = vpop.f32.mrf.mxu0
      %463 = vmatprep.mubr.bf16.mxu0 0
      %464 = vmatmul.mubr.bf16.gmra.mxu0 %v413
      %v465 = vpop.f32.mrf.mxu0
      %v466 = vadd.f32 0.0, %v465
      %v467 = vpop.f32.mrf.mxu0
      %v468 = vpop.f32.mrf.mxu0
      %v469 = vpop.f32.mrf.mxu0
      %470 = vdwg.mxu0
      %v472 = vunpack.c.l.b16 %v345
      %v473 = vpack.c.b16 %v472, %v472
      %v478 = vunpack.c.l.b16 %v346
      %v479 = vunpack.c.l.b16 %v347
      %v480 = vunpack.c.l.b16 %v348
      %v481 = vunpack.c.l.b16 %v349
      %v482 = vpack.c.b16 %v479, %v478
      %v483 = vpack.c.b16 %v481, %v480
      %v486 = vsel %vm405, %v366, 0
      %v488 = vsel %vm405, %v367, 0
      %v491 = vsel %vm405, %v473, 0
      %493 = vmatprep.subr.bf16.mxu0 0
      %494 = vmatpush1.bf16.msra.mxu0 0
      %495 = vmatprep.subr.bf16.mxu0 0
      %496 = vmatpush1.bf16.msra.mxu0 0
      %497 = vmatprep.subr.bf16.mxu0 0
      %498 = vmatpush1.bf16.msra.mxu0 0
      %499 = vmatprep.subr.bf16.mxu0 0
      %500 = vmatpush1.bf16.msra.mxu0 0
      %501 = vmatprep.subr.bf16.mxu0 0
      %502 = vmatpush1.bf16.msra.mxu0 0
      %503 = vmatprep.subr.bf16.mxu0 0
      %504 = vmatpush1.bf16.msra.mxu0 0
      %505 = vmatprep.subr.bf16.mxu0 0
      %506 = vmatpush1.bf16.msra.mxu0 %v483
      %507 = vmatprep.subr.bf16.mxu0 0
      %508 = vmatpush1.bf16.msra.mxu0 %v482
      %509 = vmatprep.subr.bf16.mxu0 0
      %510 = vmatpush2.bf16.msra.mxu0 0
      %511 = vmatprep.subr.bf16.mxu0 0
      %512 = vmatpush2.bf16.msra.mxu0 0
      %513 = vmatprep.subr.bf16.mxu0 0
      %514 = vmatpush2.bf16.msra.mxu0 0
      %515 = vmatprep.subr.bf16.mxu0 0
      %516 = vmatpush2.bf16.msra.mxu0 0
      %517 = vmatprep.subr.bf16.mxu0 0
      %518 = vmatpush2.bf16.msra.mxu0 0
      %519 = vmatprep.subr.bf16.mxu0 0
      %520 = vmatpush2.bf16.msra.mxu0 0
      %521 = vmatprep.subr.bf16.mxu0 0
      %522 = vmatpush2.bf16.msra.mxu0 0
      %523 = vmatprep.subr.bf16.mxu0 0
      %524 = vmatpush2.bf16.msra.mxu0 0
      %525 = vmatprep.mubr.bf16.mxu0 0
      %526 = vmatmul.mubr.bf16.gmra.mxu0 %v486
      %v527 = vpop.f32.mrf.mxu0
      %v528 = vadd.f32 %v450, %v527
      %v529 = vpop.f32.mrf.mxu0
      %v530 = vpop.f32.mrf.mxu0
      %v531 = vadd.f32 %v453, %v530
      %v532 = vpop.f32.mrf.mxu0
      %533 = vmatprep.mubr.bf16.mxu0 0
      %534 = vmatmul.mubr.bf16.gmra.mxu0 %v488
      %v535 = vpop.f32.mrf.mxu0
      %v536 = vadd.f32 %v458, %v535
      %v537 = vpop.f32.mrf.mxu0
      %v538 = vpop.f32.mrf.mxu0
      %v539 = vadd.f32 %v461, %v538
      %v540 = vpop.f32.mrf.mxu0
      %541 = vmatprep.mubr.bf16.mxu0 0
      %542 = vmatmul.mubr.bf16.gmra.mxu0 %v491
      %v543 = vpop.f32.mrf.mxu0
      %v544 = vadd.f32 %v466, %v543
      %v545 = vpop.f32.mrf.mxu0
      %v546 = vpop.f32.mrf.mxu0
      %v547 = vpop.f32.mrf.mxu0
      %548 = vdwg.mxu0
      %v549 = vld [vmem:[#allocation2] sm:$0xe]
      %s550 = scalar_lea.vmem %s2, 32
      %v551 = vld [vmem:[%s550] sm:$0xf]
      %v552 = vld [vmem:[%s550 + $0x4] sm:$0xf]
      %v553 = vld [vmem:[%s550 + $0x8] sm:$0xf]
      %v554 = vld [vmem:[%s550 + $0xc] sm:$0xf]
      %v556 = vunpack.c.l.b16 %v549
      %v557 = vpack.c.b16 %v362, %v556
      %vm558 = vcmask 1046528
      %v559 = vrot.slane %v557, 1
      %v560 = vrot.slane %v367, 1
      %v561 = vsel %vm558, %v559, %v560
      %v562 = vrot.slane %v368, 1
      %v563 = vsel %vm558, %v560, %v562
      %v568 = vunpack.c.l.b16 %v551
      %v569 = vunpack.c.l.b16 %v552
      %v570 = vunpack.c.l.b16 %v553
      %v571 = vunpack.c.l.b16 %v554
      %v572 = vpack.c.b16 %v569, %v568
      %v573 = vpack.c.b16 %v571, %v570
      %v577 = vsel %vm405, %v561, 0
      %v580 = vsel %vm405, %v563, 0
      %v583 = vsel %vm405, %v562, 0
      %585 = vmatprep.subr.bf16.mxu0 0
      %586 = vmatpush1.bf16.msra.mxu0 0
      %587 = vmatprep.subr.bf16.mxu0 0
      %588 = vmatpush1.bf16.msra.mxu0 0
      %589 = vmatprep.subr.bf16.mxu0 0
      %590 = vmatpush1.bf16.msra.mxu0 0
      %591 = vmatprep.subr.bf16.mxu0 0
      %592 = vmatpush1.bf16.msra.mxu0 0
      %593 = vmatprep.subr.bf16.mxu0 0
      %594 = vmatpush1.bf16.msra.mxu0 0
      %595 = vmatprep.subr.bf16.mxu0 0
      %596 = vmatpush1.bf16.msra.mxu0 0
      %597 = vmatprep.subr.bf16.mxu0 0
      %598 = vmatpush1.bf16.msra.mxu0 %v573
      %599 = vmatprep.subr.bf16.mxu0 0
      %600 = vmatpush1.bf16.msra.mxu0 %v572
      %601 = vmatprep.subr.bf16.mxu0 0
      %602 = vmatpush2.bf16.msra.mxu0 0
      %603 = vmatprep.subr.bf16.mxu0 0
      %604 = vmatpush2.bf16.msra.mxu0 0
      %605 = vmatprep.subr.bf16.mxu0 0
      %606 = vmatpush2.bf16.msra.mxu0 0
      %607 = vmatprep.subr.bf16.mxu0 0
      %608 = vmatpush2.bf16.msra.mxu0 0
      %609 = vmatprep.subr.bf16.mxu0 0
      %610 = vmatpush2.bf16.msra.mxu0 0
      %611 = vmatprep.subr.bf16.mxu0 0
      %612 = vmatpush2.bf16.msra.mxu0 0
      %613 = vmatprep.subr.bf16.mxu0 0
      %614 = vmatpush2.bf16.msra.mxu0 0
      %615 = vmatprep.subr.bf16.mxu0 0
      %616 = vmatpush2.bf16.msra.mxu0 0
      %617 = vmatprep.mubr.bf16.mxu0 0
      %618 = vmatmul.mubr.bf16.gmra.mxu0 %v577
      %v619 = vpop.f32.mrf.mxu0
      %v620 = vadd.f32 0.0, %v619
      %v621 = vpop.f32.mrf.mxu0
      %v622 = vpop.f32.mrf.mxu0
      %v623 = vadd.f32 0.0, %v622
      %v624 = vpop.f32.mrf.mxu0
      %625 = vmatprep.mubr.bf16.mxu0 0
      %626 = vmatmul.mubr.bf16.gmra.mxu0 %v580
      %v627 = vpop.f32.mrf.mxu0
      %v628 = vadd.f32 0.0, %v627
      %v629 = vpop.f32.mrf.mxu0
      %v630 = vpop.f32.mrf.mxu0
      %v631 = vadd.f32 0.0, %v630
      %v632 = vpop.f32.mrf.mxu0
      %633 = vmatprep.mubr.bf16.mxu0 0
      %634 = vmatmul.mubr.bf16.gmra.mxu0 %v583
      %v635 = vpop.f32.mrf.mxu0
      %v636 = vadd.f32 0.0, %v635
      %v637 = vpop.f32.mrf.mxu0
      %v638 = vpop.f32.mrf.mxu0
      %v639 = vpop.f32.mrf.mxu0
      %640 = vdwg.mxu0
      %v641 = vadd.f32 %v528, %v620
      %v642 = vadd.f32 %v531, %v623
      %v643 = vadd.f32 %v536, %v628
      %v644 = vadd.f32 %v539, %v631
      %v645 = vadd.f32 %v544, %v636
      %v646 = vld [vmem:[#allocation2] sm:$0x8]
      %v647 = vld [vmem:[#allocation2 + $0x4] sm:$0xf]
      %v648 = vld [vmem:[#allocation2 + $0x8] sm:$0xf]
      %v649 = vld [vmem:[#allocation2 + $0xc] sm:$0xf]
      %v650 = vld [vmem:[#allocation2 + $0x10] sm:$0xf]
      %v651 = vld [vmem:[#allocation2 + $0x14] sm:$0x1]
      %s652 = scalar_lea.vmem %s2, 48
      %v653 = vld [vmem:[%s652] sm:$0xf]
      %v654 = vld [vmem:[%s652 + $0x4] sm:$0xf]
      %v655 = vld [vmem:[%s652 + $0x8] sm:$0xf]
      %v656 = vld [vmem:[%s652 + $0xc] sm:$0xf]
      %v663 = vunpack.c.l.b16 %v646
      %v664 = vunpack.c.l.b16 %v647
      %v665 = vunpack.c.l.b16 %v648
      %v666 = vunpack.c.l.b16 %v649
      %v667 = vunpack.c.l.b16 %v650
      %v668 = vunpack.c.l.b16 %v651
      %v669 = vpack.c.b16 %v664, %v663
      %v670 = vpack.c.b16 %v666, %v665
      %v671 = vpack.c.b16 %v668, %v667
      %vm672 = vcmask 1044480
      %v673 = vrot.slane %v669, 3
      %v674 = vrot.slane %v670, 3
      %v675 = vsel %vm672, %v673, %v674
      %v676 = vrot.slane %v671, 3
      %v677 = vsel %vm672, %v674, %v676
      %v682 = vunpack.c.l.b16 %v653
      %v683 = vunpack.c.l.b16 %v654
      %v684 = vunpack.c.l.b16 %v655
      %v685 = vunpack.c.l.b16 %v656
      %v686 = vpack.c.b16 %v683, %v682
      %v687 = vpack.c.b16 %v685, %v684
      %v691 = vsel %vm405, %v675, 0
      %v694 = vsel %vm405, %v677, 0
      %v697 = vsel %vm405, %v676, 0
      %699 = vmatprep.subr.bf16.mxu0 0
      %700 = vmatpush1.bf16.msra.mxu0 0
      %701 = vmatprep.subr.bf16.mxu0 0
      %702 = vmatpush1.bf16.msra.mxu0 0
      %703 = vmatprep.subr.bf16.mxu0 0
      %704 = vmatpush1.bf16.msra.mxu0 0
      %705 = vmatprep.subr.bf16.mxu0 0
      %706 = vmatpush1.bf16.msra.mxu0 0
      %707 = vmatprep.subr.bf16.mxu0 0
      %708 = vmatpush1.bf16.msra.mxu0 0
      %709 = vmatprep.subr.bf16.mxu0 0
      %710 = vmatpush1.bf16.msra.mxu0 0
      %711 = vmatprep.subr.bf16.mxu0 0
      %712 = vmatpush1.bf16.msra.mxu0 %v687
      %713 = vmatprep.subr.bf16.mxu0 0
      %714 = vmatpush1.bf16.msra.mxu0 %v686
      %715 = vmatprep.subr.bf16.mxu0 0
      %716 = vmatpush2.bf16.msra.mxu0 0
      %717 = vmatprep.subr.bf16.mxu0 0
      %718 = vmatpush2.bf16.msra.mxu0 0
      %719 = vmatprep.subr.bf16.mxu0 0
      %720 = vmatpush2.bf16.msra.mxu0 0
      %721 = vmatprep.subr.bf16.mxu0 0
      %722 = vmatpush2.bf16.msra.mxu0 0
      %723 = vmatprep.subr.bf16.mxu0 0
      %724 = vmatpush2.bf16.msra.mxu0 0
      %725 = vmatprep.subr.bf16.mxu0 0
      %726 = vmatpush2.bf16.msra.mxu0 0
      %727 = vmatprep.subr.bf16.mxu0 0
      %728 = vmatpush2.bf16.msra.mxu0 0
      %729 = vmatprep.subr.bf16.mxu0 0
      %730 = vmatpush2.bf16.msra.mxu0 0
      %731 = vmatprep.mubr.bf16.mxu0 0
      %732 = vmatmul.mubr.bf16.gmra.mxu0 %v691
      %v733 = vpop.f32.mrf.mxu0
      %v734 = vadd.f32 0.0, %v733
      %v735 = vpop.f32.mrf.mxu0
      %v736 = vpop.f32.mrf.mxu0
      %v737 = vadd.f32 0.0, %v736
      %v738 = vpop.f32.mrf.mxu0
      %739 = vmatprep.mubr.bf16.mxu0 0
      %740 = vmatmul.mubr.bf16.gmra.mxu0 %v694
      %v741 = vpop.f32.mrf.mxu0
      %v742 = vadd.f32 0.0, %v741
      %v743 = vpop.f32.mrf.mxu0
      %v744 = vpop.f32.mrf.mxu0
      %v745 = vadd.f32 0.0, %v744
      %v746 = vpop.f32.mrf.mxu0
      %747 = vmatprep.mubr.bf16.mxu0 0
      %748 = vmatmul.mubr.bf16.gmra.mxu0 %v697
      %v749 = vpop.f32.mrf.mxu0
      %v750 = vadd.f32 0.0, %v749
      %v751 = vpop.f32.mrf.mxu0
      %v752 = vpop.f32.mrf.mxu0
      %v753 = vpop.f32.mrf.mxu0
      %754 = vdwg.mxu0
      %v755 = vadd.f32 %v641, %v734
      %v756 = vadd.f32 %v642, %v737
      %v757 = vadd.f32 %v643, %v742
      %v758 = vadd.f32 %v644, %v745
      %v759 = vadd.f32 %v645, %v750
      %v760 = vld [vmem:[#allocation2 + $0x14] sm:$0x3]
      %s761 = scalar_lea.vmem %s2, 64
      %v762 = vld [vmem:[%s761] sm:$0xf]
      %v763 = vld [vmem:[%s761 + $0x4] sm:$0xf]
      %v764 = vld [vmem:[%s761 + $0x8] sm:$0xf]
      %v765 = vld [vmem:[%s761 + $0xc] sm:$0xf]
      %v767 = vunpack.c.l.b16 %v760
      %v768 = vpack.c.b16 %v767, %v667
      %vm769 = vsmask.f32 4352
      %v771 = vshrl.u32 %v669, 16
      %v773 = vrot.slane %v771, 3
      %v774 = vshll.u32 %v669, 16
      %v776 = vrot.slane %v774, 4
      %v777 = vor.u32 %v773, %v776
      %v779 = vshrl.u32 %v670, 16
      %v781 = vrot.slane %v779, 3
      %v782 = vshll.u32 %v670, 16
      %v784 = vrot.slane %v782, 4
      %v785 = vor.u32 %v781, %v784
      %v786 = vsel %vm769, %v777, %v785
      %v788 = vshrl.u32 %v768, 16
      %v790 = vrot.slane %v788, 3
      %v791 = vshll.u32 %v768, 16
      %v793 = vrot.slane %v791, 4
      %v794 = vor.u32 %v790, %v793
      %v795 = vsel %vm769, %v785, %v794
      %v800 = vunpack.c.l.b16 %v762
      %v801 = vunpack.c.l.b16 %v763
      %v802 = vunpack.c.l.b16 %v764
      %v803 = vunpack.c.l.b16 %v765
      %v804 = vpack.c.b16 %v801, %v800
      %v805 = vpack.c.b16 %v803, %v802
      %v809 = vsel %vm405, %v786, 0
      %v812 = vsel %vm405, %v795, 0
      %v815 = vsel %vm405, %v794, 0
      %817 = vmatprep.subr.bf16.mxu0 0
      %818 = vmatpush1.bf16.msra.mxu0 0
      %819 = vmatprep.subr.bf16.mxu0 0
      %820 = vmatpush1.bf16.msra.mxu0 0
      %821 = vmatprep.subr.bf16.mxu0 0
      %822 = vmatpush1.bf16.msra.mxu0 0
      %823 = vmatprep.subr.bf16.mxu0 0
      %824 = vmatpush1.bf16.msra.mxu0 0
      %825 = vmatprep.subr.bf16.mxu0 0
      %826 = vmatpush1.bf16.msra.mxu0 0
      %827 = vmatprep.subr.bf16.mxu0 0
      %828 = vmatpush1.bf16.msra.mxu0 0
      %829 = vmatprep.subr.bf16.mxu0 0
      %830 = vmatpush1.bf16.msra.mxu0 %v805
      %831 = vmatprep.subr.bf16.mxu0 0
      %832 = vmatpush1.bf16.msra.mxu0 %v804
      %833 = vmatprep.subr.bf16.mxu0 0
      %834 = vmatpush2.bf16.msra.mxu0 0
      %835 = vmatprep.subr.bf16.mxu0 0
      %836 = vmatpush2.bf16.msra.mxu0 0
      %837 = vmatprep.subr.bf16.mxu0 0
      %838 = vmatpush2.bf16.msra.mxu0 0
      %839 = vmatprep.subr.bf16.mxu0 0
      %840 = vmatpush2.bf16.msra.mxu0 0
      %841 = vmatprep.subr.bf16.mxu0 0
      %842 = vmatpush2.bf16.msra.mxu0 0
      %843 = vmatprep.subr.bf16.mxu0 0
      %844 = vmatpush2.bf16.msra.mxu0 0
      %845 = vmatprep.subr.bf16.mxu0 0
      %846 = vmatpush2.bf16.msra.mxu0 0
      %847 = vmatprep.subr.bf16.mxu0 0
      %848 = vmatpush2.bf16.msra.mxu0 0
      %849 = vmatprep.mubr.bf16.mxu0 0
      %850 = vmatmul.mubr.bf16.gmra.mxu0 %v809
      %v851 = vpop.f32.mrf.mxu0
      %v852 = vadd.f32 0.0, %v851
      %v853 = vpop.f32.mrf.mxu0
      %v854 = vpop.f32.mrf.mxu0
      %v855 = vadd.f32 0.0, %v854
      %v856 = vpop.f32.mrf.mxu0
      %857 = vmatprep.mubr.bf16.mxu0 0
      %858 = vmatmul.mubr.bf16.gmra.mxu0 %v812
      %v859 = vpop.f32.mrf.mxu0
      %v860 = vadd.f32 0.0, %v859
      %v861 = vpop.f32.mrf.mxu0
      %v862 = vpop.f32.mrf.mxu0
      %v863 = vadd.f32 0.0, %v862
      %v864 = vpop.f32.mrf.mxu0
      %865 = vmatprep.mubr.bf16.mxu0 0
      %866 = vmatmul.mubr.bf16.gmra.mxu0 %v815
      %v867 = vpop.f32.mrf.mxu0
      %v868 = vadd.f32 0.0, %v867
      %v869 = vpop.f32.mrf.mxu0
      %v870 = vpop.f32.mrf.mxu0
      %v871 = vpop.f32.mrf.mxu0
      %872 = vdwg.mxu0
      %v873 = vadd.f32 %v755, %v852
      %v874 = vadd.f32 %v756, %v855
      %v875 = vadd.f32 %v757, %v860
      %v876 = vadd.f32 %v758, %v863
      %v877 = vadd.f32 %v759, %v868
      %s878 = scalar_lea.vmem %s2, 80
      %v879 = vld [vmem:[%s878] sm:$0xf]
      %v880 = vld [vmem:[%s878 + $0x4] sm:$0xf]
      %v881 = vld [vmem:[%s878 + $0x8] sm:$0xf]
      %v882 = vld [vmem:[%s878 + $0xc] sm:$0xf]
      %v883 = vpack.c.b16 %v665, %v664
      %v884 = vpack.c.b16 %v667, %v666
      %v885 = vpack.c.b16 %v767, %v767
      %v890 = vunpack.c.l.b16 %v879
      %v891 = vunpack.c.l.b16 %v880
      %v892 = vunpack.c.l.b16 %v881
      %v893 = vunpack.c.l.b16 %v882
      %v894 = vpack.c.b16 %v891, %v890
      %v895 = vpack.c.b16 %v893, %v892
      %v899 = vsel %vm405, %v883, 0
      %v902 = vsel %vm405, %v884, 0
      %v905 = vsel %vm405, %v885, 0
      %907 = vmatprep.subr.bf16.mxu0 0
      %908 = vmatpush1.bf16.msra.mxu0 0
      %909 = vmatprep.subr.bf16.mxu0 0
      %910 = vmatpush1.bf16.msra.mxu0 0
      %911 = vmatprep.subr.bf16.mxu0 0
      %912 = vmatpush1.bf16.msra.mxu0 0
      %913 = vmatprep.subr.bf16.mxu0 0
      %914 = vmatpush1.bf16.msra.mxu0 0
      %915 = vmatprep.subr.bf16.mxu0 0
      %916 = vmatpush1.bf16.msra.mxu0 0
      %917 = vmatprep.subr.bf16.mxu0 0
      %918 = vmatpush1.bf16.msra.mxu0 0
      %919 = vmatprep.subr.bf16.mxu0 0
      %920 = vmatpush1.bf16.msra.mxu0 %v895
      %921 = vmatprep.subr.bf16.mxu0 0
      %922 = vmatpush1.bf16.msra.mxu0 %v894
      %923 = vmatprep.subr.bf16.mxu0 0
      %924 = vmatpush2.bf16.msra.mxu0 0
      %925 = vmatprep.subr.bf16.mxu0 0
      %926 = vmatpush2.bf16.msra.mxu0 0
      %927 = vmatprep.subr.bf16.mxu0 0
      %928 = vmatpush2.bf16.msra.mxu0 0
      %929 = vmatprep.subr.bf16.mxu0 0
      %930 = vmatpush2.bf16.msra.mxu0 0
      %931 = vmatprep.subr.bf16.mxu0 0
      %932 = vmatpush2.bf16.msra.mxu0 0
      %933 = vmatprep.subr.bf16.mxu0 0
      %934 = vmatpush2.bf16.msra.mxu0 0
      %935 = vmatprep.subr.bf16.mxu0 0
      %936 = vmatpush2.bf16.msra.mxu0 0
      %937 = vmatprep.subr.bf16.mxu0 0
      %938 = vmatpush2.bf16.msra.mxu0 0
      %939 = vmatprep.mubr.bf16.mxu0 0
      %940 = vmatmul.mubr.bf16.gmra.mxu0 %v899
      %v941 = vpop.f32.mrf.mxu0
      %v942 = vadd.f32 0.0, %v941
      %v943 = vpop.f32.mrf.mxu0
      %v944 = vpop.f32.mrf.mxu0
      %v945 = vadd.f32 0.0, %v944
      %v946 = vpop.f32.mrf.mxu0
      %947 = vmatprep.mubr.bf16.mxu0 0
      %948 = vmatmul.mubr.bf16.gmra.mxu0 %v902
      %v949 = vpop.f32.mrf.mxu0
      %v950 = vadd.f32 0.0, %v949
      %v951 = vpop.f32.mrf.mxu0
      %v952 = vpop.f32.mrf.mxu0
      %v953 = vadd.f32 0.0, %v952
      %v954 = vpop.f32.mrf.mxu0
      %955 = vmatprep.mubr.bf16.mxu0 0
      %956 = vmatmul.mubr.bf16.gmra.mxu0 %v905
      %v957 = vpop.f32.mrf.mxu0
      %v958 = vadd.f32 0.0, %v957
      %v959 = vpop.f32.mrf.mxu0
      %v960 = vpop.f32.mrf.mxu0
      %v961 = vpop.f32.mrf.mxu0
      %962 = vdwg.mxu0
      %v963 = vadd.f32 %v873, %v942
      %v964 = vadd.f32 %v874, %v945
      %v965 = vadd.f32 %v875, %v950
      %v966 = vadd.f32 %v876, %v953
      %v967 = vadd.f32 %v877, %v958
      %v968 = vld [vmem:[#allocation2 + $0x4] sm:$0xc]
      %v969 = vld [vmem:[#allocation2 + $0x14] sm:$0xf]
      %s970 = scalar_lea.vmem %s2, 96
      %v971 = vld [vmem:[%s970] sm:$0xf]
      %v972 = vld [vmem:[%s970 + $0x4] sm:$0xf]
      %v973 = vld [vmem:[%s970 + $0x8] sm:$0xf]
      %v974 = vld [vmem:[%s970 + $0xc] sm:$0xf]
      %v977 = vunpack.c.l.b16 %v968
      %v978 = vunpack.c.l.b16 %v969
      %v979 = vpack.c.b16 %v665, %v977
      %v980 = vpack.c.b16 %v978, %v978
      %vm981 = vcmask 1045504
      %v982 = vrot.slane %v979, 2
      %v983 = vrot.slane %v884, 2
      %v984 = vsel %vm981, %v982, %v983
      %v985 = vrot.slane %v980, 2
      %v986 = vsel %vm981, %v983, %v985
      %v991 = vunpack.c.l.b16 %v971
      %v992 = vunpack.c.l.b16 %v972
      %v993 = vunpack.c.l.b16 %v973
      %v994 = vunpack.c.l.b16 %v974
      %v995 = vpack.c.b16 %v992, %v991
      %v996 = vpack.c.b16 %v994, %v993
      %v1000 = vsel %vm405, %v984, 0
      %v1003 = vsel %vm405, %v986, 0
      %v1006 = vsel %vm405, %v985, 0
      %1008 = vmatprep.subr.bf16.mxu0 0
      %1009 = vmatpush1.bf16.msra.mxu0 0
      %1010 = vmatprep.subr.bf16.mxu0 0
      %1011 = vmatpush1.bf16.msra.mxu0 0
      %1012 = vmatprep.subr.bf16.mxu0 0
      %1013 = vmatpush1.bf16.msra.mxu0 0
      %1014 = vmatprep.subr.bf16.mxu0 0
      %1015 = vmatpush1.bf16.msra.mxu0 0
      %1016 = vmatprep.subr.bf16.mxu0 0
      %1017 = vmatpush1.bf16.msra.mxu0 0
      %1018 = vmatprep.subr.bf16.mxu0 0
      %1019 = vmatpush1.bf16.msra.mxu0 0
      %1020 = vmatprep.subr.bf16.mxu0 0
      %1021 = vmatpush1.bf16.msra.mxu0 %v996
      %1022 = vmatprep.subr.bf16.mxu0 0
      %1023 = vmatpush1.bf16.msra.mxu0 %v995
      %1024 = vmatprep.subr.bf16.mxu0 0
      %1025 = vmatpush2.bf16.msra.mxu0 0
      %1026 = vmatprep.subr.bf16.mxu0 0
      %1027 = vmatpush2.bf16.msra.mxu0 0
      %1028 = vmatprep.subr.bf16.mxu0 0
      %1029 = vmatpush2.bf16.msra.mxu0 0
      %1030 = vmatprep.subr.bf16.mxu0 0
      %1031 = vmatpush2.bf16.msra.mxu0 0
      %1032 = vmatprep.subr.bf16.mxu0 0
      %1033 = vmatpush2.bf16.msra.mxu0 0
      %1034 = vmatprep.subr.bf16.mxu0 0
      %1035 = vmatpush2.bf16.msra.mxu0 0
      %1036 = vmatprep.subr.bf16.mxu0 0
      %1037 = vmatpush2.bf16.msra.mxu0 0
      %1038 = vmatprep.subr.bf16.mxu0 0
      %1039 = vmatpush2.bf16.msra.mxu0 0
      %1040 = vmatprep.mubr.bf16.mxu0 0
      %1041 = vmatmul.mubr.bf16.gmra.mxu0 %v1000
      %v1042 = vpop.f32.mrf.mxu0
      %v1043 = vadd.f32 0.0, %v1042
      %v1044 = vpop.f32.mrf.mxu0
      %v1045 = vpop.f32.mrf.mxu0
      %v1046 = vadd.f32 0.0, %v1045
      %v1047 = vpop.f32.mrf.mxu0
      %1048 = vmatprep.mubr.bf16.mxu0 0
      %1049 = vmatmul.mubr.bf16.gmra.mxu0 %v1003
      %v1050 = vpop.f32.mrf.mxu0
      %v1051 = vadd.f32 0.0, %v1050
      %v1052 = vpop.f32.mrf.mxu0
      %v1053 = vpop.f32.mrf.mxu0
      %v1054 = vadd.f32 0.0, %v1053
      %v1055 = vpop.f32.mrf.mxu0
      %1056 = vmatprep.mubr.bf16.mxu0 0
      %1057 = vmatmul.mubr.bf16.gmra.mxu0 %v1006
      %v1058 = vpop.f32.mrf.mxu0
      %v1059 = vadd.f32 0.0, %v1058
      %v1060 = vpop.f32.mrf.mxu0
      %v1061 = vpop.f32.mrf.mxu0
      %v1062 = vpop.f32.mrf.mxu0
      %1063 = vdwg.mxu0
      %v1064 = vadd.f32 %v963, %v1043
      %v1065 = vadd.f32 %v964, %v1046
      %v1066 = vadd.f32 %v965, %v1051
      %v1067 = vadd.f32 %v966, %v1054
      %v1068 = vadd.f32 %v967, %v1059
      %v1069 = vld [vmem:[#allocation2 + $0x4] sm:$0xc]
      %v1070 = vld [vmem:[#allocation2 + $0x8] sm:$0xf]
      %v1071 = vld [vmem:[#allocation2 + $0xc] sm:$0xf]
      %v1072 = vld [vmem:[#allocation2 + $0x10] sm:$0xf]
      %v1073 = vld [vmem:[#allocation2 + $0x14] sm:$0xf]
      %v1074 = vld [vmem:[#allocation2 + $0x18] sm:$0x1]
      %s1075 = scalar_lea.vmem %s2, 112
      %v1076 = vld [vmem:[%s1075] sm:$0xf]
      %v1077 = vld [vmem:[%s1075 + $0x4] sm:$0xf]
      %v1078 = vld [vmem:[%s1075 + $0x8] sm:$0xf]
      %v1079 = vld [vmem:[%s1075 + $0xc] sm:$0xf]
      %v1086 = vunpack.c.l.b16 %v1069
      %v1087 = vunpack.c.l.b16 %v1070
      %v1088 = vunpack.c.l.b16 %v1071
      %v1089 = vunpack.c.l.b16 %v1072
      %v1090 = vunpack.c.l.b16 %v1073
      %v1091 = vunpack.c.l.b16 %v1074
      %v1092 = vpack.c.b16 %v1087, %v1086
      %v1093 = vpack.c.b16 %v1089, %v1088
      %v1094 = vpack.c.b16 %v1091, %v1090
      %vm1095 = vsmask.f32 5376
      %v1097 = vshrl.u32 %v1092, 16
      %v1099 = vrot.slane %v1097, 2
      %v1100 = vshll.u32 %v1092, 16
      %v1102 = vrot.slane %v1100, 3
      %v1103 = vor.u32 %v1099, %v1102
      %v1105 = vshrl.u32 %v1093, 16
      %v1107 = vrot.slane %v1105, 2
      %v1108 = vshll.u32 %v1093, 16
      %v1110 = vrot.slane %v1108, 3
      %v1111 = vor.u32 %v1107, %v1110
      %v1112 = vsel %vm1095, %v1103, %v1111
      %v1114 = vshrl.u32 %v1094, 16
      %v1116 = vrot.slane %v1114, 2
      %v1117 = vshll.u32 %v1094, 16
      %v1119 = vrot.slane %v1117, 3
      %v1120 = vor.u32 %v1116, %v1119
      %v1121 = vsel %vm1095, %v1111, %v1120
      %v1126 = vunpack.c.l.b16 %v1076
      %v1127 = vunpack.c.l.b16 %v1077
      %v1128 = vunpack.c.l.b16 %v1078
      %v1129 = vunpack.c.l.b16 %v1079
      %v1130 = vpack.c.b16 %v1127, %v1126
      %v1131 = vpack.c.b16 %v1129, %v1128
      %v1135 = vsel %vm405, %v1112, 0
      %v1138 = vsel %vm405, %v1121, 0
      %v1141 = vsel %vm405, %v1120, 0
      %1143 = vmatprep.subr.bf16.mxu0 0
      %1144 = vmatpush1.bf16.msra.mxu0 0
      %1145 = vmatprep.subr.bf16.mxu0 0
      %1146 = vmatpush1.bf16.msra.mxu0 0
      %1147 = vmatprep.subr.bf16.mxu0 0
      %1148 = vmatpush1.bf16.msra.mxu0 0
      %1149 = vmatprep.subr.bf16.mxu0 0
      %1150 = vmatpush1.bf16.msra.mxu0 0
      %1151 = vmatprep.subr.bf16.mxu0 0
      %1152 = vmatpush1.bf16.msra.mxu0 0
      %1153 = vmatprep.subr.bf16.mxu0 0
      %1154 = vmatpush1.bf16.msra.mxu0 0
      %1155 = vmatprep.subr.bf16.mxu0 0
      %1156 = vmatpush1.bf16.msra.mxu0 %v1131
      %1157 = vmatprep.subr.bf16.mxu0 0
      %1158 = vmatpush1.bf16.msra.mxu0 %v1130
      %1159 = vmatprep.subr.bf16.mxu0 0
      %1160 = vmatpush2.bf16.msra.mxu0 0
      %1161 = vmatprep.subr.bf16.mxu0 0
      %1162 = vmatpush2.bf16.msra.mxu0 0
      %1163 = vmatprep.subr.bf16.mxu0 0
      %1164 = vmatpush2.bf16.msra.mxu0 0
      %1165 = vmatprep.subr.bf16.mxu0 0
      %1166 = vmatpush2.bf16.msra.mxu0 0
      %1167 = vmatprep.subr.bf16.mxu0 0
      %1168 = vmatpush2.bf16.msra.mxu0 0
      %1169 = vmatprep.subr.bf16.mxu0 0
      %1170 = vmatpush2.bf16.msra.mxu0 0
      %1171 = vmatprep.subr.bf16.mxu0 0
      %1172 = vmatpush2.bf16.msra.mxu0 0
      %1173 = vmatprep.subr.bf16.mxu0 0
      %1174 = vmatpush2.bf16.msra.mxu0 0
      %1175 = vmatprep.mubr.bf16.mxu0 0
      %1176 = vmatmul.mubr.bf16.gmra.mxu0 %v1135
      %v1177 = vpop.f32.mrf.mxu0
      %v1178 = vadd.f32 0.0, %v1177
      %v1179 = vpop.f32.mrf.mxu0
      %v1180 = vpop.f32.mrf.mxu0
      %v1181 = vadd.f32 0.0, %v1180
      %v1182 = vpop.f32.mrf.mxu0
      %1183 = vmatprep.mubr.bf16.mxu0 0
      %1184 = vmatmul.mubr.bf16.gmra.mxu0 %v1138
      %v1185 = vpop.f32.mrf.mxu0
      %v1186 = vadd.f32 0.0, %v1185
      %v1187 = vpop.f32.mrf.mxu0
      %v1188 = vpop.f32.mrf.mxu0
      %v1189 = vadd.f32 0.0, %v1188
      %v1190 = vpop.f32.mrf.mxu0
      %1191 = vmatprep.mubr.bf16.mxu0 0
      %1192 = vmatmul.mubr.bf16.gmra.mxu0 %v1141
      %v1193 = vpop.f32.mrf.mxu0
      %v1194 = vadd.f32 0.0, %v1193
      %v1195 = vpop.f32.mrf.mxu0
      %v1196 = vpop.f32.mrf.mxu0
      %v1197 = vpop.f32.mrf.mxu0
      %1198 = vdwg.mxu0
      %v1199 = vadd.f32 %v1064, %v1178
      %v1200 = vadd.f32 %v1065, %v1181
      %v1201 = vadd.f32 %v1066, %v1186
      %v1202 = vadd.f32 %v1067, %v1189
      %v1203 = vadd.f32 %v1068, %v1194
      %v1204 = vld [vmem:[#allocation2 + $0x4] sm:$0x8]
      %s1205 = scalar_lea.vmem %s2, 128
      %v1206 = vld [vmem:[%s1205] sm:$0xf]
      %v1207 = vld [vmem:[%s1205 + $0x4] sm:$0xf]
      %v1208 = vld [vmem:[%s1205 + $0x8] sm:$0xf]
      %v1209 = vld [vmem:[%s1205 + $0xc] sm:$0xf]
      %v1211 = vunpack.c.l.b16 %v1204
      %v1212 = vpack.c.b16 %v1087, %v1211
      %v1213 = vrot.slane %v1212, 3
      %v1214 = vrot.slane %v1093, 3
      %v1215 = vsel %vm672, %v1213, %v1214
      %v1216 = vrot.slane %v1094, 3
      %v1217 = vsel %vm672, %v1214, %v1216
      %v1222 = vunpack.c.l.b16 %v1206
      %v1223 = vunpack.c.l.b16 %v1207
      %v1224 = vunpack.c.l.b16 %v1208
      %v1225 = vunpack.c.l.b16 %v1209
      %v1226 = vpack.c.b16 %v1223, %v1222
      %v1227 = vpack.c.b16 %v1225, %v1224
      %v1231 = vsel %vm405, %v1215, 0
      %v1234 = vsel %vm405, %v1217, 0
      %v1237 = vsel %vm405, %v1216, 0
      %1239 = vmatprep.subr.bf16.mxu0 0
      %1240 = vmatpush1.bf16.msra.mxu0 0
      %1241 = vmatprep.subr.bf16.mxu0 0
      %1242 = vmatpush1.bf16.msra.mxu0 0
      %1243 = vmatprep.subr.bf16.mxu0 0
      %1244 = vmatpush1.bf16.msra.mxu0 0
      %1245 = vmatprep.subr.bf16.mxu0 0
      %1246 = vmatpush1.bf16.msra.mxu0 0
      %1247 = vmatprep.subr.bf16.mxu0 0
      %1248 = vmatpush1.bf16.msra.mxu0 0
      %1249 = vmatprep.subr.bf16.mxu0 0
      %1250 = vmatpush1.bf16.msra.mxu0 0
      %1251 = vmatprep.subr.bf16.mxu0 0
      %1252 = vmatpush1.bf16.msra.mxu0 %v1227
      %1253 = vmatprep.subr.bf16.mxu0 0
      %1254 = vmatpush1.bf16.msra.mxu0 %v1226
      %1255 = vmatprep.subr.bf16.mxu0 0
      %1256 = vmatpush2.bf16.msra.mxu0 0
      %1257 = vmatprep.subr.bf16.mxu0 0
      %1258 = vmatpush2.bf16.msra.mxu0 0
      %1259 = vmatprep.subr.bf16.mxu0 0
      %1260 = vmatpush2.bf16.msra.mxu0 0
      %1261 = vmatprep.subr.bf16.mxu0 0
      %1262 = vmatpush2.bf16.msra.mxu0 0
      %1263 = vmatprep.subr.bf16.mxu0 0
      %1264 = vmatpush2.bf16.msra.mxu0 0
      %1265 = vmatprep.subr.bf16.mxu0 0
      %1266 = vmatpush2.bf16.msra.mxu0 0
      %1267 = vmatprep.subr.bf16.mxu0 0
      %1268 = vmatpush2.bf16.msra.mxu0 0
      %1269 = vmatprep.subr.bf16.mxu0 0
      %1270 = vmatpush2.bf16.msra.mxu0 0
      %1271 = vmatprep.mubr.bf16.mxu0 0
      %1272 = vmatmul.mubr.bf16.gmra.mxu0 %v1231
      %v1273 = vpop.f32.mrf.mxu0
      %v1274 = vadd.f32 0.0, %v1273
      %v1275 = vpop.f32.mrf.mxu0
      %v1276 = vpop.f32.mrf.mxu0
      %v1277 = vadd.f32 0.0, %v1276
      %v1278 = vpop.f32.mrf.mxu0
      %1279 = vmatprep.mubr.bf16.mxu0 0
      %1280 = vmatmul.mubr.bf16.gmra.mxu0 %v1234
      %v1281 = vpop.f32.mrf.mxu0
      %v1282 = vadd.f32 0.0, %v1281
      %v1283 = vpop.f32.mrf.mxu0
      %v1284 = vpop.f32.mrf.mxu0
      %v1285 = vadd.f32 0.0, %v1284
      %v1286 = vpop.f32.mrf.mxu0
      %1287 = vmatprep.mubr.bf16.mxu0 0
      %1288 = vmatmul.mubr.bf16.gmra.mxu0 %v1237
      %v1289 = vpop.f32.mrf.mxu0
      %v1290 = vadd.f32 0.0, %v1289
      %v1291 = vpop.f32.mrf.mxu0
      %v1292 = vpop.f32.mrf.mxu0
      %v1293 = vpop.f32.mrf.mxu0
      %1294 = vdwg.mxu0
      %v1295 = vadd.f32 %v1199, %v1274
      %v1296 = vadd.f32 %v1200, %v1277
      %v1297 = vadd.f32 %v1201, %v1282
      %v1298 = vadd.f32 %v1202, %v1285
      %v1299 = vadd.f32 %v1203, %v1290
      %v1300 = vld [vmem:[%s3] sm:$0x1]
      %v1302 = vlaneseq
      %v1303 = vshrl.u32 %v1302, 7
      %v1304 = vsub.s32 0, %v1303
      %v1305 = vrot.slane %v1300, %v1304
      %v1307 = vadd.f32 %v1295, %v1305
      %v1308 = vadd.f32 %v1296, %v1305
      %v1309 = vadd.f32 %v1297, %v1305
      %v1310 = vadd.f32 %v1298, %v1305
      %v1311 = vadd.f32 %v1299, %v1305
      %v1312 = vld [vmem:[%s1] sm:$0xff]
      %v1313 = vld [vmem:[%s1 + $0x8] sm:$0xff]
      %v1314 = vld [vmem:[%s1 + $0x10] sm:$0xff]
      %v1315 = vld [vmem:[%s1 + $0x18] sm:$0xff]
      %v1316 = vld [vmem:[%s1 + $0x20] sm:$0xf]
      %v1317 = vmax.f32 %v1307, 0.0
      %v1318 = vmax.f32 %v1308, 0.0
      %v1319 = vmax.f32 %v1309, 0.0
      %v1320 = vmax.f32 %v1310, 0.0
      %v1321 = vmax.f32 %v1311, 0.0
      %1323 = vset.pattern.permute.xlu0 0
      %1324 = vperm.xlu0 %1323, %v1312
      %v1325 = vpop.permute.xlu0 %1324
      %1328 = vset.pattern.permute.xlu0 0
      %1329 = vperm.xlu0 %1328, %v1313
      %v1330 = vpop.permute.xlu0 %1329
      %1333 = vset.pattern.permute.xlu0 0
      %1334 = vperm.xlu0 %1333, %v1314
      %v1335 = vpop.permute.xlu0 %1334
      %1338 = vset.pattern.permute.xlu0 0
      %1339 = vperm.xlu0 %1338, %v1315
      %v1340 = vpop.permute.xlu0 %1339
      %1343 = vset.pattern.permute.xlu0 0
      %1344 = vperm.xlu0 %1343, %v1316
      %v1345 = vpop.permute.xlu0 %1344
      %v1347 = vmul.f32 %v1317, %v1325
      %v1348 = vmul.f32 %v1318, %v1330
      %v1349 = vmul.f32 %v1319, %v1335
      %v1350 = vmul.f32 %v1320, %v1340
      %v1351 = vmul.f32 %v1321, %v1345
      %v1352 = vpack.c.bf16 %v1348, %v1347
      %v1353 = vpack.c.bf16 %v1350, %v1349
      %v1354 = vpack.c.bf16 %v1351, %v1351
      %v1358 = vunpack.c.l.b16 %v1352
      %v1359 = vunpack.c.h.b16 %v1352
      %v1360 = vunpack.c.l.b16 %v1353
      %v1361 = vunpack.c.h.b16 %v1353
      %v1362 = vunpack.c.l.b16 %v1354
      %v1363 = vpack.c.b16 %v1358, %v1358
      %v1364 = vpack.c.b16 %v1359, %v1359
      %v1365 = vpack.c.b16 %v1360, %v1360
      %v1366 = vpack.c.b16 %v1361, %v1361
      %v1367 = vpack.c.b16 %v1362, %v1362
      %v1369 = vshll.u32 %v1363, 16
      %v1371 = vrot.slane %v1369, 5
      %v1372 = vshrl.u32 %v1363, 16
      %v1374 = vrot.slane %v1372, 4
      %v1375 = vor.u32 %v1374, %v1371
      %v1376 = vrot.slane %v1375, 4
      %v1378 = vshll.u32 %v1364, 16
      %v1380 = vrot.slane %v1378, 5
      %v1381 = vsel %vm269, %v1376, %v1380
      %v1382 = vshrl.u32 %v1364, 16
      %v1384 = vrot.slane %v1382, 4
      %v1385 = vor.u32 %v1384, %v1380
      %v1386 = vrot.slane %v1385, 4
      %v1388 = vshll.u32 %v1365, 16
      %v1390 = vrot.slane %v1388, 5
      %v1391 = vsel %vm269, %v1386, %v1390
      %v1392 = vshrl.u32 %v1365, 16
      %v1394 = vrot.slane %v1392, 4
      %v1395 = vor.u32 %v1394, %v1390
      %v1396 = vrot.slane %v1395, 4
      %v1398 = vshll.u32 %v1366, 16
      %v1400 = vrot.slane %v1398, 5
      %v1401 = vsel %vm269, %v1396, %v1400
      %v1402 = vshrl.u32 %v1366, 16
      %v1404 = vrot.slane %v1402, 4
      %v1405 = vor.u32 %v1404, %v1400
      %v1406 = vrot.slane %v1405, 4
      %v1408 = vshll.u32 %v1367, 16
      %v1410 = vrot.slane %v1408, 5
      %v1411 = vsel %vm269, %v1406, %v1410
      %v1412 = vshrl.u32 %v1367, 16
      %v1414 = vrot.slane %v1412, 4
      %v1415 = vor.u32 %v1414, %v1410
      %v1416 = vrot.slane %v1415, 4
      %v1423 = vsel %vm327, %v1371, %v646
      %1424 = vst [vmem:[#allocation2] sm:$0x8] %v1423
      %1425 = vst.msk [vmem:[#allocation2 + $0x4] sm:$0xf] %vm253, %v1381
      %1426 = vst.msk [vmem:[#allocation2 + $0x8] sm:$0xf] %vm253, %v1391
      %1427 = vst.msk [vmem:[#allocation2 + $0xc] sm:$0xf] %vm253, %v1401
      %1428 = vst.msk [vmem:[#allocation2 + $0x10] sm:$0xf] %vm253, %v1411
      %v1429 = vld [vmem:[#allocation2 + $0x14] sm:$0x3]
      %v1430 = vsel %vm337, %v1416, %v1429
      %1431 = vst [vmem:[#allocation2 + $0x14] sm:$0x3] %v1430
      %v1432 = vld [vmem:[#allocation2] sm:$0xf]
      %v1433 = vld [vmem:[#allocation2 + $0x4] sm:$0xf]
      %v1434 = vld [vmem:[#allocation2 + $0x8] sm:$0xf]
      %v1435 = vld [vmem:[#allocation2 + $0xc] sm:$0xf]
      %v1436 = vld [vmem:[#allocation2 + $0x10] sm:$0x3]
      %v1437 = vld [vmem:[%s4] sm:$0xf]
      %v1438 = vld [vmem:[%s4 + $0x4] sm:$0xf]
      %v1439 = vld [vmem:[%s4 + $0x8] sm:$0xf]
      %v1440 = vld [vmem:[%s4 + $0xc] sm:$0xf]
      %v1441 = vld [vmem:[#allocation2 + $0x10] sm:$0x7]
      %s1442 = scalar_lea.vmem %s4, 16
      %v1443 = vld [vmem:[%s1442] sm:$0xf]
      %v1444 = vld [vmem:[%s1442 + $0x4] sm:$0xf]
      %v1445 = vld [vmem:[%s1442 + $0x8] sm:$0xf]
      %v1446 = vld [vmem:[%s1442 + $0xc] sm:$0xf]
      %v1452 = vunpack.c.l.b16 %v1432
      %v1453 = vunpack.c.l.b16 %v1433
      %v1454 = vunpack.c.l.b16 %v1434
      %v1455 = vunpack.c.l.b16 %v1435
      %v1456 = vunpack.c.l.b16 %v1441
      %v1457 = vpack.c.b16 %v1453, %v1452
      %v1458 = vpack.c.b16 %v1455, %v1454
      %v1459 = vpack.c.b16 %v1456, %v1456
      %v1461 = vshrl.u32 %v1457, 16
      %v1463 = vshll.u32 %v1457, 16
      %v1465 = vrot.slane %v1463, 1
      %v1466 = vor.u32 %v1461, %v1465
      %v1468 = vshll.u32 %v1458, 16
      %v1470 = vrot.slane %v1468, 1
      %v1471 = vsel %vm369, %v1466, %v1470
      %v1472 = vshrl.u32 %v1458, 16
      %v1474 = vor.u32 %v1472, %v1470
      %v1476 = vshll.u32 %v1459, 16
      %v1478 = vrot.slane %v1476, 1
      %v1479 = vsel %vm369, %v1474, %v1478
      %v1480 = vshrl.u32 %v1459, 16
      %v1482 = vor.u32 %v1480, %v1478
      %v1487 = vunpack.c.l.b16 %v1443
      %v1488 = vunpack.c.l.b16 %v1444
      %v1489 = vunpack.c.l.b16 %v1445
      %v1490 = vunpack.c.l.b16 %v1446
      %v1491 = vpack.c.b16 %v1488, %v1487
      %v1492 = vpack.c.b16 %v1490, %v1489
      %v1496 = vsel %vm405, %v1471, 0
      %v1499 = vsel %vm405, %v1479, 0
      %v1502 = vsel %vm405, %v1482, 0
      %1504 = vmatprep.subr.bf16.mxu0 0
      %1505 = vmatpush1.bf16.msra.mxu0 0
      %1506 = vmatprep.subr.bf16.mxu0 0
      %1507 = vmatpush1.bf16.msra.mxu0 0
      %1508 = vmatprep.subr.bf16.mxu0 0
      %1509 = vmatpush1.bf16.msra.mxu0 0
      %1510 = vmatprep.subr.bf16.mxu0 0
      %1511 = vmatpush1.bf16.msra.mxu0 0
      %1512 = vmatprep.subr.bf16.mxu0 0
      %1513 = vmatpush1.bf16.msra.mxu0 0
      %1514 = vmatprep.subr.bf16.mxu0 0
      %1515 = vmatpush1.bf16.msra.mxu0 0
      %1516 = vmatprep.subr.bf16.mxu0 0
      %1517 = vmatpush1.bf16.msra.mxu0 %v1492
      %1518 = vmatprep.subr.bf16.mxu0 0
      %1519 = vmatpush1.bf16.msra.mxu0 %v1491
      %1520 = vmatprep.subr.bf16.mxu0 0
      %1521 = vmatpush2.bf16.msra.mxu0 0
      %1522 = vmatprep.subr.bf16.mxu0 0
      %1523 = vmatpush2.bf16.msra.mxu0 0
      %1524 = vmatprep.subr.bf16.mxu0 0
      %1525 = vmatpush2.bf16.msra.mxu0 0
      %1526 = vmatprep.subr.bf16.mxu0 0
      %1527 = vmatpush2.bf16.msra.mxu0 0
      %1528 = vmatprep.subr.bf16.mxu0 0
      %1529 = vmatpush2.bf16.msra.mxu0 0
      %1530 = vmatprep.subr.bf16.mxu0 0
      %1531 = vmatpush2.bf16.msra.mxu0 0
      %1532 = vmatprep.subr.bf16.mxu0 0
      %1533 = vmatpush2.bf16.msra.mxu0 0
      %1534 = vmatprep.subr.bf16.mxu0 0
      %1535 = vmatpush2.bf16.msra.mxu0 0
      %1536 = vmatprep.mubr.bf16.mxu0 0
      %1537 = vmatmul.mubr.bf16.gmra.mxu0 %v1496
      %v1538 = vpop.f32.mrf.mxu0
      %v1539 = vadd.f32 0.0, %v1538
      %v1540 = vpop.f32.mrf.mxu0
      %v1541 = vpop.f32.mrf.mxu0
      %v1542 = vadd.f32 0.0, %v1541
      %v1543 = vpop.f32.mrf.mxu0
      %1544 = vmatprep.mubr.bf16.mxu0 0
      %1545 = vmatmul.mubr.bf16.gmra.mxu0 %v1499
      %v1546 = vpop.f32.mrf.mxu0
      %v1547 = vadd.f32 0.0, %v1546
      %v1548 = vpop.f32.mrf.mxu0
      %v1549 = vpop.f32.mrf.mxu0
      %v1550 = vadd.f32 0.0, %v1549
      %v1551 = vpop.f32.mrf.mxu0
      %1552 = vmatprep.mubr.bf16.mxu0 0
      %1553 = vmatmul.mubr.bf16.gmra.mxu0 %v1502
      %v1554 = vpop.f32.mrf.mxu0
      %v1555 = vadd.f32 0.0, %v1554
      %v1556 = vpop.f32.mrf.mxu0
      %v1557 = vpop.f32.mrf.mxu0
      %v1558 = vpop.f32.mrf.mxu0
      %1559 = vdwg.mxu0
      %v1561 = vunpack.c.l.b16 %v1436
      %v1562 = vpack.c.b16 %v1561, %v1561
      %v1567 = vunpack.c.l.b16 %v1437
      %v1568 = vunpack.c.l.b16 %v1438
      %v1569 = vunpack.c.l.b16 %v1439
      %v1570 = vunpack.c.l.b16 %v1440
      %v1571 = vpack.c.b16 %v1568, %v1567
      %v1572 = vpack.c.b16 %v1570, %v1569
      %v1575 = vsel %vm405, %v1457, 0
      %v1577 = vsel %vm405, %v1458, 0
      %v1580 = vsel %vm405, %v1562, 0
      %1582 = vmatprep.subr.bf16.mxu0 0
      %1583 = vmatpush1.bf16.msra.mxu0 0
      %1584 = vmatprep.subr.bf16.mxu0 0
      %1585 = vmatpush1.bf16.msra.mxu0 0
      %1586 = vmatprep.subr.bf16.mxu0 0
      %1587 = vmatpush1.bf16.msra.mxu0 0
      %1588 = vmatprep.subr.bf16.mxu0 0
      %1589 = vmatpush1.bf16.msra.mxu0 0
      %1590 = vmatprep.subr.bf16.mxu0 0
      %1591 = vmatpush1.bf16.msra.mxu0 0
      %1592 = vmatprep.subr.bf16.mxu0 0
      %1593 = vmatpush1.bf16.msra.mxu0 0
      %1594 = vmatprep.subr.bf16.mxu0 0
      %1595 = vmatpush1.bf16.msra.mxu0 %v1572
      %1596 = vmatprep.subr.bf16.mxu0 0
      %1597 = vmatpush1.bf16.msra.mxu0 %v1571
      %1598 = vmatprep.subr.bf16.mxu0 0
      %1599 = vmatpush2.bf16.msra.mxu0 0
      %1600 = vmatprep.subr.bf16.mxu0 0
      %1601 = vmatpush2.bf16.msra.mxu0 0
      %1602 = vmatprep.subr.bf16.mxu0 0
      %1603 = vmatpush2.bf16.msra.mxu0 0
      %1604 = vmatprep.subr.bf16.mxu0 0
      %1605 = vmatpush2.bf16.msra.mxu0 0
      %1606 = vmatprep.subr.bf16.mxu0 0
      %1607 = vmatpush2.bf16.msra.mxu0 0
      %1608 = vmatprep.subr.bf16.mxu0 0
      %1609 = vmatpush2.bf16.msra.mxu0 0
      %1610 = vmatprep.subr.bf16.mxu0 0
      %1611 = vmatpush2.bf16.msra.mxu0 0
      %1612 = vmatprep.subr.bf16.mxu0 0
      %1613 = vmatpush2.bf16.msra.mxu0 0
      %1614 = vmatprep.mubr.bf16.mxu0 0
      %1615 = vmatmul.mubr.bf16.gmra.mxu0 %v1575
      %v1616 = vpop.f32.mrf.mxu0
      %v1617 = vadd.f32 %v1539, %v1616
      %v1618 = vpop.f32.mrf.mxu0
      %v1619 = vpop.f32.mrf.mxu0
      %v1620 = vadd.f32 %v1542, %v1619
      %v1621 = vpop.f32.mrf.mxu0
      %1622 = vmatprep.mubr.bf16.mxu0 0
      %1623 = vmatmul.mubr.bf16.gmra.mxu0 %v1577
      %v1624 = vpop.f32.mrf.mxu0
      %v1625 = vadd.f32 %v1547, %v1624
      %v1626 = vpop.f32.mrf.mxu0
      %v1627 = vpop.f32.mrf.mxu0
      %v1628 = vadd.f32 %v1550, %v1627
      %v1629 = vpop.f32.mrf.mxu0
      %1630 = vmatprep.mubr.bf16.mxu0 0
      %1631 = vmatmul.mubr.bf16.gmra.mxu0 %v1580
      %v1632 = vpop.f32.mrf.mxu0
      %v1633 = vadd.f32 %v1555, %v1632
      %v1634 = vpop.f32.mrf.mxu0
      %v1635 = vpop.f32.mrf.mxu0
      %v1636 = vpop.f32.mrf.mxu0
      %1637 = vdwg.mxu0
      %v1638 = vld [vmem:[#allocation2] sm:$0xe]
      %s1639 = scalar_lea.vmem %s4, 32
      %v1640 = vld [vmem:[%s1639] sm:$0xf]
      %v1641 = vld [vmem:[%s1639 + $0x4] sm:$0xf]
      %v1642 = vld [vmem:[%s1639 + $0x8] sm:$0xf]
      %v1643 = vld [vmem:[%s1639 + $0xc] sm:$0xf]
      %v1645 = vunpack.c.l.b16 %v1638
      %v1646 = vpack.c.b16 %v1453, %v1645
      %v1647 = vrot.slane %v1646, 1
      %v1648 = vrot.slane %v1458, 1
      %v1649 = vsel %vm558, %v1647, %v1648
      %v1650 = vrot.slane %v1459, 1
      %v1651 = vsel %vm558, %v1648, %v1650
      %v1656 = vunpack.c.l.b16 %v1640
      %v1657 = vunpack.c.l.b16 %v1641
      %v1658 = vunpack.c.l.b16 %v1642
      %v1659 = vunpack.c.l.b16 %v1643
      %v1660 = vpack.c.b16 %v1657, %v1656
      %v1661 = vpack.c.b16 %v1659, %v1658
      %v1665 = vsel %vm405, %v1649, 0
      %v1668 = vsel %vm405, %v1651, 0
      %v1671 = vsel %vm405, %v1650, 0
      %1673 = vmatprep.subr.bf16.mxu0 0
      %1674 = vmatpush1.bf16.msra.mxu0 0
      %1675 = vmatprep.subr.bf16.mxu0 0
      %1676 = vmatpush1.bf16.msra.mxu0 0
      %1677 = vmatprep.subr.bf16.mxu0 0
      %1678 = vmatpush1.bf16.msra.mxu0 0
      %1679 = vmatprep.subr.bf16.mxu0 0
      %1680 = vmatpush1.bf16.msra.mxu0 0
      %1681 = vmatprep.subr.bf16.mxu0 0
      %1682 = vmatpush1.bf16.msra.mxu0 0
      %1683 = vmatprep.subr.bf16.mxu0 0
      %1684 = vmatpush1.bf16.msra.mxu0 0
      %1685 = vmatprep.subr.bf16.mxu0 0
      %1686 = vmatpush1.bf16.msra.mxu0 %v1661
      %1687 = vmatprep.subr.bf16.mxu0 0
      %1688 = vmatpush1.bf16.msra.mxu0 %v1660
      %1689 = vmatprep.subr.bf16.mxu0 0
      %1690 = vmatpush2.bf16.msra.mxu0 0
      %1691 = vmatprep.subr.bf16.mxu0 0
      %1692 = vmatpush2.bf16.msra.mxu0 0
      %1693 = vmatprep.subr.bf16.mxu0 0
      %1694 = vmatpush2.bf16.msra.mxu0 0
      %1695 = vmatprep.subr.bf16.mxu0 0
      %1696 = vmatpush2.bf16.msra.mxu0 0
      %1697 = vmatprep.subr.bf16.mxu0 0
      %1698 = vmatpush2.bf16.msra.mxu0 0
      %1699 = vmatprep.subr.bf16.mxu0 0
      %1700 = vmatpush2.bf16.msra.mxu0 0
      %1701 = vmatprep.subr.bf16.mxu0 0
      %1702 = vmatpush2.bf16.msra.mxu0 0
      %1703 = vmatprep.subr.bf16.mxu0 0
      %1704 = vmatpush2.bf16.msra.mxu0 0
      %1705 = vmatprep.mubr.bf16.mxu0 0
      %1706 = vmatmul.mubr.bf16.gmra.mxu0 %v1665
      %v1707 = vpop.f32.mrf.mxu0
      %v1708 = vadd.f32 0.0, %v1707
      %v1709 = vpop.f32.mrf.mxu0
      %v1710 = vpop.f32.mrf.mxu0
      %v1711 = vadd.f32 0.0, %v1710
      %v1712 = vpop.f32.mrf.mxu0
      %1713 = vmatprep.mubr.bf16.mxu0 0
      %1714 = vmatmul.mubr.bf16.gmra.mxu0 %v1668
      %v1715 = vpop.f32.mrf.mxu0
      %v1716 = vadd.f32 0.0, %v1715
      %v1717 = vpop.f32.mrf.mxu0
      %v1718 = vpop.f32.mrf.mxu0
      %v1719 = vadd.f32 0.0, %v1718
      %v1720 = vpop.f32.mrf.mxu0
      %1721 = vmatprep.mubr.bf16.mxu0 0
      %1722 = vmatmul.mubr.bf16.gmra.mxu0 %v1671
      %v1723 = vpop.f32.mrf.mxu0
      %v1724 = vadd.f32 0.0, %v1723
      %v1725 = vpop.f32.mrf.mxu0
      %v1726 = vpop.f32.mrf.mxu0
      %v1727 = vpop.f32.mrf.mxu0
      %1728 = vdwg.mxu0
      %v1729 = vadd.f32 %v1617, %v1708
      %v1730 = vadd.f32 %v1620, %v1711
      %v1731 = vadd.f32 %v1625, %v1716
      %v1732 = vadd.f32 %v1628, %v1719
      %v1733 = vadd.f32 %v1633, %v1724
      %v1734 = vld [vmem:[#allocation2] sm:$0x8]
      %v1735 = vld [vmem:[#allocation2 + $0x4] sm:$0xf]
      %v1736 = vld [vmem:[#allocation2 + $0x8] sm:$0xf]
      %v1737 = vld [vmem:[#allocation2 + $0xc] sm:$0xf]
      %v1738 = vld [vmem:[#allocation2 + $0x10] sm:$0xf]
      %v1739 = vld [vmem:[#allocation2 + $0x14] sm:$0x1]
      %s1740 = scalar_lea.vmem %s4, 48
      %v1741 = vld [vmem:[%s1740] sm:$0xf]
      %v1742 = vld [vmem:[%s1740 + $0x4] sm:$0xf]
      %v1743 = vld [vmem:[%s1740 + $0x8] sm:$0xf]
      %v1744 = vld [vmem:[%s1740 + $0xc] sm:$0xf]
      %v1751 = vunpack.c.l.b16 %v1734
      %v1752 = vunpack.c.l.b16 %v1735
      %v1753 = vunpack.c.l.b16 %v1736
      %v1754 = vunpack.c.l.b16 %v1737
      %v1755 = vunpack.c.l.b16 %v1738
      %v1756 = vunpack.c.l.b16 %v1739
      %v1757 = vpack.c.b16 %v1752, %v1751
      %v1758 = vpack.c.b16 %v1754, %v1753
      %v1759 = vpack.c.b16 %v1756, %v1755
      %v1760 = vrot.slane %v1757, 3
      %v1761 = vrot.slane %v1758, 3
      %v1762 = vsel %vm672, %v1760, %v1761
      %v1763 = vrot.slane %v1759, 3
      %v1764 = vsel %vm672, %v1761, %v1763
      %v1769 = vunpack.c.l.b16 %v1741
      %v1770 = vunpack.c.l.b16 %v1742
      %v1771 = vunpack.c.l.b16 %v1743
      %v1772 = vunpack.c.l.b16 %v1744
      %v1773 = vpack.c.b16 %v1770, %v1769
      %v1774 = vpack.c.b16 %v1772, %v1771
      %v1778 = vsel %vm405, %v1762, 0
      %v1781 = vsel %vm405, %v1764, 0
      %v1784 = vsel %vm405, %v1763, 0
      %1786 = vmatprep.subr.bf16.mxu0 0
      %1787 = vmatpush1.bf16.msra.mxu0 0
      %1788 = vmatprep.subr.bf16.mxu0 0
      %1789 = vmatpush1.bf16.msra.mxu0 0
      %1790 = vmatprep.subr.bf16.mxu0 0
      %1791 = vmatpush1.bf16.msra.mxu0 0
      %1792 = vmatprep.subr.bf16.mxu0 0
      %1793 = vmatpush1.bf16.msra.mxu0 0
      %1794 = vmatprep.subr.bf16.mxu0 0
      %1795 = vmatpush1.bf16.msra.mxu0 0
      %1796 = vmatprep.subr.bf16.mxu0 0
      %1797 = vmatpush1.bf16.msra.mxu0 0
      %1798 = vmatprep.subr.bf16.mxu0 0
      %1799 = vmatpush1.bf16.msra.mxu0 %v1774
      %1800 = vmatprep.subr.bf16.mxu0 0
      %1801 = vmatpush1.bf16.msra.mxu0 %v1773
      %1802 = vmatprep.subr.bf16.mxu0 0
      %1803 = vmatpush2.bf16.msra.mxu0 0
      %1804 = vmatprep.subr.bf16.mxu0 0
      %1805 = vmatpush2.bf16.msra.mxu0 0
      %1806 = vmatprep.subr.bf16.mxu0 0
      %1807 = vmatpush2.bf16.msra.mxu0 0
      %1808 = vmatprep.subr.bf16.mxu0 0
      %1809 = vmatpush2.bf16.msra.mxu0 0
      %1810 = vmatprep.subr.bf16.mxu0 0
      %1811 = vmatpush2.bf16.msra.mxu0 0
      %1812 = vmatprep.subr.bf16.mxu0 0
      %1813 = vmatpush2.bf16.msra.mxu0 0
      %1814 = vmatprep.subr.bf16.mxu0 0
      %1815 = vmatpush2.bf16.msra.mxu0 0
      %1816 = vmatprep.subr.bf16.mxu0 0
      %1817 = vmatpush2.bf16.msra.mxu0 0
      %1818 = vmatprep.mubr.bf16.mxu0 0
      %1819 = vmatmul.mubr.bf16.gmra.mxu0 %v1778
      %v1820 = vpop.f32.mrf.mxu0
      %v1821 = vadd.f32 0.0, %v1820
      %v1822 = vpop.f32.mrf.mxu0
      %v1823 = vpop.f32.mrf.mxu0
      %v1824 = vadd.f32 0.0, %v1823
      %v1825 = vpop.f32.mrf.mxu0
      %1826 = vmatprep.mubr.bf16.mxu0 0
      %1827 = vmatmul.mubr.bf16.gmra.mxu0 %v1781
      %v1828 = vpop.f32.mrf.mxu0
      %v1829 = vadd.f32 0.0, %v1828
      %v1830 = vpop.f32.mrf.mxu0
      %v1831 = vpop.f32.mrf.mxu0
      %v1832 = vadd.f32 0.0, %v1831
      %v1833 = vpop.f32.mrf.mxu0
      %1834 = vmatprep.mubr.bf16.mxu0 0
      %1835 = vmatmul.mubr.bf16.gmra.mxu0 %v1784
      %v1836 = vpop.f32.mrf.mxu0
      %v1837 = vadd.f32 0.0, %v1836
      %v1838 = vpop.f32.mrf.mxu0
      %v1839 = vpop.f32.mrf.mxu0
      %v1840 = vpop.f32.mrf.mxu0
      %1841 = vdwg.mxu0
      %v1842 = vadd.f32 %v1729, %v1821
      %v1843 = vadd.f32 %v1730, %v1824
      %v1844 = vadd.f32 %v1731, %v1829
      %v1845 = vadd.f32 %v1732, %v1832
      %v1846 = vadd.f32 %v1733, %v1837
      %v1847 = vld [vmem:[#allocation2 + $0x14] sm:$0x3]
      %s1848 = scalar_lea.vmem %s4, 64
      %v1849 = vld [vmem:[%s1848] sm:$0xf]
      %v1850 = vld [vmem:[%s1848 + $0x4] sm:$0xf]
      %v1851 = vld [vmem:[%s1848 + $0x8] sm:$0xf]
      %v1852 = vld [vmem:[%s1848 + $0xc] sm:$0xf]
      %v1854 = vunpack.c.l.b16 %v1847
      %v1855 = vpack.c.b16 %v1854, %v1755
      %v1857 = vshrl.u32 %v1757, 16
      %v1859 = vrot.slane %v1857, 3
      %v1860 = vshll.u32 %v1757, 16
      %v1862 = vrot.slane %v1860, 4
      %v1863 = vor.u32 %v1859, %v1862
      %v1865 = vshrl.u32 %v1758, 16
      %v1867 = vrot.slane %v1865, 3
      %v1868 = vshll.u32 %v1758, 16
      %v1870 = vrot.slane %v1868, 4
      %v1871 = vor.u32 %v1867, %v1870
      %v1872 = vsel %vm769, %v1863, %v1871
      %v1874 = vshrl.u32 %v1855, 16
      %v1876 = vrot.slane %v1874, 3
      %v1877 = vshll.u32 %v1855, 16
      %v1879 = vrot.slane %v1877, 4
      %v1880 = vor.u32 %v1876, %v1879
      %v1881 = vsel %vm769, %v1871, %v1880
      %v1886 = vunpack.c.l.b16 %v1849
      %v1887 = vunpack.c.l.b16 %v1850
      %v1888 = vunpack.c.l.b16 %v1851
      %v1889 = vunpack.c.l.b16 %v1852
      %v1890 = vpack.c.b16 %v1887, %v1886
      %v1891 = vpack.c.b16 %v1889, %v1888
      %v1895 = vsel %vm405, %v1872, 0
      %v1898 = vsel %vm405, %v1881, 0
      %v1901 = vsel %vm405, %v1880, 0
      %1903 = vmatprep.subr.bf16.mxu0 0
      %1904 = vmatpush1.bf16.msra.mxu0 0
      %1905 = vmatprep.subr.bf16.mxu0 0
      %1906 = vmatpush1.bf16.msra.mxu0 0
      %1907 = vmatprep.subr.bf16.mxu0 0
      %1908 = vmatpush1.bf16.msra.mxu0 0
      %1909 = vmatprep.subr.bf16.mxu0 0
      %1910 = vmatpush1.bf16.msra.mxu0 0
      %1911 = vmatprep.subr.bf16.mxu0 0
      %1912 = vmatpush1.bf16.msra.mxu0 0
      %1913 = vmatprep.subr.bf16.mxu0 0
      %1914 = vmatpush1.bf16.msra.mxu0 0
      %1915 = vmatprep.subr.bf16.mxu0 0
      %1916 = vmatpush1.bf16.msra.mxu0 %v1891
      %1917 = vmatprep.subr.bf16.mxu0 0
      %1918 = vmatpush1.bf16.msra.mxu0 %v1890
      %1919 = vmatprep.subr.bf16.mxu0 0
      %1920 = vmatpush2.bf16.msra.mxu0 0
      %1921 = vmatprep.subr.bf16.mxu0 0
      %1922 = vmatpush2.bf16.msra.mxu0 0
      %1923 = vmatprep.subr.bf16.mxu0 0
      %1924 = vmatpush2.bf16.msra.mxu0 0
      %1925 = vmatprep.subr.bf16.mxu0 0
      %1926 = vmatpush2.bf16.msra.mxu0 0
      %1927 = vmatprep.subr.bf16.mxu0 0
      %1928 = vmatpush2.bf16.msra.mxu0 0
      %1929 = vmatprep.subr.bf16.mxu0 0
      %1930 = vmatpush2.bf16.msra.mxu0 0
      %1931 = vmatprep.subr.bf16.mxu0 0
      %1932 = vmatpush2.bf16.msra.mxu0 0
      %1933 = vmatprep.subr.bf16.mxu0 0
      %1934 = vmatpush2.bf16.msra.mxu0 0
      %1935 = vmatprep.mubr.bf16.mxu0 0
      %1936 = vmatmul.mubr.bf16.gmra.mxu0 %v1895
      %v1937 = vpop.f32.mrf.mxu0
      %v1938 = vadd.f32 0.0, %v1937
      %v1939 = vpop.f32.mrf.mxu0
      %v1940 = vpop.f32.mrf.mxu0
      %v1941 = vadd.f32 0.0, %v1940
      %v1942 = vpop.f32.mrf.mxu0
      %1943 = vmatprep.mubr.bf16.mxu0 0
      %1944 = vmatmul.mubr.bf16.gmra.mxu0 %v1898
      %v1945 = vpop.f32.mrf.mxu0
      %v1946 = vadd.f32 0.0, %v1945
      %v1947 = vpop.f32.mrf.mxu0
      %v1948 = vpop.f32.mrf.mxu0
      %v1949 = vadd.f32 0.0, %v1948
      %v1950 = vpop.f32.mrf.mxu0
      %1951 = vmatprep.mubr.bf16.mxu0 0
      %1952 = vmatmul.mubr.bf16.gmra.mxu0 %v1901
      %v1953 = vpop.f32.mrf.mxu0
      %v1954 = vadd.f32 0.0, %v1953
      %v1955 = vpop.f32.mrf.mxu0
      %v1956 = vpop.f32.mrf.mxu0
      %v1957 = vpop.f32.mrf.mxu0
      %1958 = vdwg.mxu0
      %v1959 = vadd.f32 %v1842, %v1938
      %v1960 = vadd.f32 %v1843, %v1941
      %v1961 = vadd.f32 %v1844, %v1946
      %v1962 = vadd.f32 %v1845, %v1949
      %v1963 = vadd.f32 %v1846, %v1954
      %s1964 = scalar_lea.vmem %s4, 80
      %v1965 = vld [vmem:[%s1964] sm:$0xf]
      %v1966 = vld [vmem:[%s1964 + $0x4] sm:$0xf]
      %v1967 = vld [vmem:[%s1964 + $0x8] sm:$0xf]
      %v1968 = vld [vmem:[%s1964 + $0xc] sm:$0xf]
      %v1969 = vpack.c.b16 %v1753, %v1752
      %v1970 = vpack.c.b16 %v1755, %v1754
      %v1971 = vpack.c.b16 %v1854, %v1854
      %v1976 = vunpack.c.l.b16 %v1965
      %v1977 = vunpack.c.l.b16 %v1966
      %v1978 = vunpack.c.l.b16 %v1967
      %v1979 = vunpack.c.l.b16 %v1968
      %v1980 = vpack.c.b16 %v1977, %v1976
      %v1981 = vpack.c.b16 %v1979, %v1978
      %v1985 = vsel %vm405, %v1969, 0
      %v1988 = vsel %vm405, %v1970, 0
      %v1991 = vsel %vm405, %v1971, 0
      %1993 = vmatprep.subr.bf16.mxu0 0
      %1994 = vmatpush1.bf16.msra.mxu0 0
      %1995 = vmatprep.subr.bf16.mxu0 0
      %1996 = vmatpush1.bf16.msra.mxu0 0
      %1997 = vmatprep.subr.bf16.mxu0 0
      %1998 = vmatpush1.bf16.msra.mxu0 0
      %1999 = vmatprep.subr.bf16.mxu0 0
      %2000 = vmatpush1.bf16.msra.mxu0 0
      %2001 = vmatprep.subr.bf16.mxu0 0
      %2002 = vmatpush1.bf16.msra.mxu0 0
      %2003 = vmatprep.subr.bf16.mxu0 0
      %2004 = vmatpush1.bf16.msra.mxu0 0
      %2005 = vmatprep.subr.bf16.mxu0 0
      %2006 = vmatpush1.bf16.msra.mxu0 %v1981
      %2007 = vmatprep.subr.bf16.mxu0 0
      %2008 = vmatpush1.bf16.msra.mxu0 %v1980
      %2009 = vmatprep.subr.bf16.mxu0 0
      %2010 = vmatpush2.bf16.msra.mxu0 0
      %2011 = vmatprep.subr.bf16.mxu0 0
      %2012 = vmatpush2.bf16.msra.mxu0 0
      %2013 = vmatprep.subr.bf16.mxu0 0
      %2014 = vmatpush2.bf16.msra.mxu0 0
      %2015 = vmatprep.subr.bf16.mxu0 0
      %2016 = vmatpush2.bf16.msra.mxu0 0
      %2017 = vmatprep.subr.bf16.mxu0 0
      %2018 = vmatpush2.bf16.msra.mxu0 0
      %2019 = vmatprep.subr.bf16.mxu0 0
      %2020 = vmatpush2.bf16.msra.mxu0 0
      %2021 = vmatprep.subr.bf16.mxu0 0
      %2022 = vmatpush2.bf16.msra.mxu0 0
      %2023 = vmatprep.subr.bf16.mxu0 0
      %2024 = vmatpush2.bf16.msra.mxu0 0
      %2025 = vmatprep.mubr.bf16.mxu0 0
      %2026 = vmatmul.mubr.bf16.gmra.mxu0 %v1985
      %v2027 = vpop.f32.mrf.mxu0
      %v2028 = vadd.f32 0.0, %v2027
      %v2029 = vpop.f32.mrf.mxu0
      %v2030 = vpop.f32.mrf.mxu0
      %v2031 = vadd.f32 0.0, %v2030
      %v2032 = vpop.f32.mrf.mxu0
      %2033 = vmatprep.mubr.bf16.mxu0 0
      %2034 = vmatmul.mubr.bf16.gmra.mxu0 %v1988
      %v2035 = vpop.f32.mrf.mxu0
      %v2036 = vadd.f32 0.0, %v2035
      %v2037 = vpop.f32.mrf.mxu0
      %v2038 = vpop.f32.mrf.mxu0
      %v2039 = vadd.f32 0.0, %v2038
      %v2040 = vpop.f32.mrf.mxu0
      %2041 = vmatprep.mubr.bf16.mxu0 0
      %2042 = vmatmul.mubr.bf16.gmra.mxu0 %v1991
      %v2043 = vpop.f32.mrf.mxu0
      %v2044 = vadd.f32 0.0, %v2043
      %v2045 = vpop.f32.mrf.mxu0
      %v2046 = vpop.f32.mrf.mxu0
      %v2047 = vpop.f32.mrf.mxu0
      %2048 = vdwg.mxu0
      %v2049 = vadd.f32 %v1959, %v2028
      %v2050 = vadd.f32 %v1960, %v2031
      %v2051 = vadd.f32 %v1961, %v2036
      %v2052 = vadd.f32 %v1962, %v2039
      %v2053 = vadd.f32 %v1963, %v2044
      %v2054 = vld [vmem:[#allocation2 + $0x4] sm:$0xc]
      %v2055 = vld [vmem:[#allocation2 + $0x14] sm:$0xf]
      %s2056 = scalar_lea.vmem %s4, 96
      %v2057 = vld [vmem:[%s2056] sm:$0xf]
      %v2058 = vld [vmem:[%s2056 + $0x4] sm:$0xf]
      %v2059 = vld [vmem:[%s2056 + $0x8] sm:$0xf]
      %v2060 = vld [vmem:[%s2056 + $0xc] sm:$0xf]
      %v2063 = vunpack.c.l.b16 %v2054
      %v2064 = vunpack.c.l.b16 %v2055
      %v2065 = vpack.c.b16 %v1753, %v2063
      %v2066 = vpack.c.b16 %v2064, %v2064
      %v2067 = vrot.slane %v2065, 2
      %v2068 = vrot.slane %v1970, 2
      %v2069 = vsel %vm981, %v2067, %v2068
      %v2070 = vrot.slane %v2066, 2
      %v2071 = vsel %vm981, %v2068, %v2070
      %v2076 = vunpack.c.l.b16 %v2057
      %v2077 = vunpack.c.l.b16 %v2058
      %v2078 = vunpack.c.l.b16 %v2059
      %v2079 = vunpack.c.l.b16 %v2060
      %v2080 = vpack.c.b16 %v2077, %v2076
      %v2081 = vpack.c.b16 %v2079, %v2078
      %v2085 = vsel %vm405, %v2069, 0
      %v2088 = vsel %vm405, %v2071, 0
      %v2091 = vsel %vm405, %v2070, 0
      %2093 = vmatprep.subr.bf16.mxu0 0
      %2094 = vmatpush1.bf16.msra.mxu0 0
      %2095 = vmatprep.subr.bf16.mxu0 0
      %2096 = vmatpush1.bf16.msra.mxu0 0
      %2097 = vmatprep.subr.bf16.mxu0 0
      %2098 = vmatpush1.bf16.msra.mxu0 0
      %2099 = vmatprep.subr.bf16.mxu0 0
      %2100 = vmatpush1.bf16.msra.mxu0 0
      %2101 = vmatprep.subr.bf16.mxu0 0
      %2102 = vmatpush1.bf16.msra.mxu0 0
      %2103 = vmatprep.subr.bf16.mxu0 0
      %2104 = vmatpush1.bf16.msra.mxu0 0
      %2105 = vmatprep.subr.bf16.mxu0 0
      %2106 = vmatpush1.bf16.msra.mxu0 %v2081
      %2107 = vmatprep.subr.bf16.mxu0 0
      %2108 = vmatpush1.bf16.msra.mxu0 %v2080
      %2109 = vmatprep.subr.bf16.mxu0 0
      %2110 = vmatpush2.bf16.msra.mxu0 0
      %2111 = vmatprep.subr.bf16.mxu0 0
      %2112 = vmatpush2.bf16.msra.mxu0 0
      %2113 = vmatprep.subr.bf16.mxu0 0
      %2114 = vmatpush2.bf16.msra.mxu0 0
      %2115 = vmatprep.subr.bf16.mxu0 0
      %2116 = vmatpush2.bf16.msra.mxu0 0
      %2117 = vmatprep.subr.bf16.mxu0 0
      %2118 = vmatpush2.bf16.msra.mxu0 0
      %2119 = vmatprep.subr.bf16.mxu0 0
      %2120 = vmatpush2.bf16.msra.mxu0 0
      %2121 = vmatprep.subr.bf16.mxu0 0
      %2122 = vmatpush2.bf16.msra.mxu0 0
      %2123 = vmatprep.subr.bf16.mxu0 0
      %2124 = vmatpush2.bf16.msra.mxu0 0
      %2125 = vmatprep.mubr.bf16.mxu0 0
      %2126 = vmatmul.mubr.bf16.gmra.mxu0 %v2085
      %v2127 = vpop.f32.mrf.mxu0
      %v2128 = vadd.f32 0.0, %v2127
      %v2129 = vpop.f32.mrf.mxu0
      %v2130 = vpop.f32.mrf.mxu0
      %v2131 = vadd.f32 0.0, %v2130
      %v2132 = vpop.f32.mrf.mxu0
      %2133 = vmatprep.mubr.bf16.mxu0 0
      %2134 = vmatmul.mubr.bf16.gmra.mxu0 %v2088
      %v2135 = vpop.f32.mrf.mxu0
      %v2136 = vadd.f32 0.0, %v2135
      %v2137 = vpop.f32.mrf.mxu0
      %v2138 = vpop.f32.mrf.mxu0
      %v2139 = vadd.f32 0.0, %v2138
      %v2140 = vpop.f32.mrf.mxu0
      %2141 = vmatprep.mubr.bf16.mxu0 0
      %2142 = vmatmul.mubr.bf16.gmra.mxu0 %v2091
      %v2143 = vpop.f32.mrf.mxu0
      %v2144 = vadd.f32 0.0, %v2143
      %v2145 = vpop.f32.mrf.mxu0
      %v2146 = vpop.f32.mrf.mxu0
      %v2147 = vpop.f32.mrf.mxu0
      %2148 = vdwg.mxu0
      %v2149 = vadd.f32 %v2049, %v2128
      %v2150 = vadd.f32 %v2050, %v2131
      %v2151 = vadd.f32 %v2051, %v2136
      %v2152 = vadd.f32 %v2052, %v2139
      %v2153 = vadd.f32 %v2053, %v2144
      %v2154 = vld [vmem:[#allocation2 + $0x4] sm:$0xc]
      %v2155 = vld [vmem:[#allocation2 + $0x8] sm:$0xf]
      %v2156 = vld [vmem:[#allocation2 + $0xc] sm:$0xf]
      %v2157 = vld [vmem:[#allocation2 + $0x10] sm:$0xf]
      %v2158 = vld [vmem:[#allocation2 + $0x14] sm:$0xf]
      %v2159 = vld [vmem:[#allocation2 + $0x18] sm:$0x1]
      %s2160 = scalar_lea.vmem %s4, 112
      %v2161 = vld [vmem:[%s2160] sm:$0xf]
      %v2162 = vld [vmem:[%s2160 + $0x4] sm:$0xf]
      %v2163 = vld [vmem:[%s2160 + $0x8] sm:$0xf]
      %v2164 = vld [vmem:[%s2160 + $0xc] sm:$0xf]
      %v2171 = vunpack.c.l.b16 %v2154
      %v2172 = vunpack.c.l.b16 %v2155
      %v2173 = vunpack.c.l.b16 %v2156
      %v2174 = vunpack.c.l.b16 %v2157
      %v2175 = vunpack.c.l.b16 %v2158
      %v2176 = vunpack.c.l.b16 %v2159
      %v2177 = vpack.c.b16 %v2172, %v2171
      %v2178 = vpack.c.b16 %v2174, %v2173
      %v2179 = vpack.c.b16 %v2176, %v2175
      %v2181 = vshrl.u32 %v2177, 16
      %v2183 = vrot.slane %v2181, 2
      %v2184 = vshll.u32 %v2177, 16
      %v2186 = vrot.slane %v2184, 3
      %v2187 = vor.u32 %v2183, %v2186
      %v2189 = vshrl.u32 %v2178, 16
      %v2191 = vrot.slane %v2189, 2
      %v2192 = vshll.u32 %v2178, 16
      %v2194 = vrot.slane %v2192, 3
      %v2195 = vor.u32 %v2191, %v2194
      %v2196 = vsel %vm1095, %v2187, %v2195
      %v2198 = vshrl.u32 %v2179, 16
      %v2200 = vrot.slane %v2198, 2
      %v2201 = vshll.u32 %v2179, 16
      %v2203 = vrot.slane %v2201, 3
      %v2204 = vor.u32 %v2200, %v2203
      %v2205 = vsel %vm1095, %v2195, %v2204
      %v2210 = vunpack.c.l.b16 %v2161
      %v2211 = vunpack.c.l.b16 %v2162
      %v2212 = vunpack.c.l.b16 %v2163
      %v2213 = vunpack.c.l.b16 %v2164
      %v2214 = vpack.c.b16 %v2211, %v2210
      %v2215 = vpack.c.b16 %v2213, %v2212
      %v2219 = vsel %vm405, %v2196, 0
      %v2222 = vsel %vm405, %v2205, 0
      %v2225 = vsel %vm405, %v2204, 0
      %2227 = vmatprep.subr.bf16.mxu0 0
      %2228 = vmatpush1.bf16.msra.mxu0 0
      %2229 = vmatprep.subr.bf16.mxu0 0
      %2230 = vmatpush1.bf16.msra.mxu0 0
      %2231 = vmatprep.subr.bf16.mxu0 0
      %2232 = vmatpush1.bf16.msra.mxu0 0
      %2233 = vmatprep.subr.bf16.mxu0 0
      %2234 = vmatpush1.bf16.msra.mxu0 0
      %2235 = vmatprep.subr.bf16.mxu0 0
      %2236 = vmatpush1.bf16.msra.mxu0 0
      %2237 = vmatprep.subr.bf16.mxu0 0
      %2238 = vmatpush1.bf16.msra.mxu0 0
      %2239 = vmatprep.subr.bf16.mxu0 0
      %2240 = vmatpush1.bf16.msra.mxu0 %v2215
      %2241 = vmatprep.subr.bf16.mxu0 0
      %2242 = vmatpush1.bf16.msra.mxu0 %v2214
      %2243 = vmatprep.subr.bf16.mxu0 0
      %2244 = vmatpush2.bf16.msra.mxu0 0
      %2245 = vmatprep.subr.bf16.mxu0 0
      %2246 = vmatpush2.bf16.msra.mxu0 0
      %2247 = vmatprep.subr.bf16.mxu0 0
      %2248 = vmatpush2.bf16.msra.mxu0 0
      %2249 = vmatprep.subr.bf16.mxu0 0
      %2250 = vmatpush2.bf16.msra.mxu0 0
      %2251 = vmatprep.subr.bf16.mxu0 0
      %2252 = vmatpush2.bf16.msra.mxu0 0
      %2253 = vmatprep.subr.bf16.mxu0 0
      %2254 = vmatpush2.bf16.msra.mxu0 0
      %2255 = vmatprep.subr.bf16.mxu0 0
      %2256 = vmatpush2.bf16.msra.mxu0 0
      %2257 = vmatprep.subr.bf16.mxu0 0
      %2258 = vmatpush2.bf16.msra.mxu0 0
      %2259 = vmatprep.mubr.bf16.mxu0 0
      %2260 = vmatmul.mubr.bf16.gmra.mxu0 %v2219
      %v2261 = vpop.f32.mrf.mxu0
      %v2262 = vadd.f32 0.0, %v2261
      %v2263 = vpop.f32.mrf.mxu0
      %v2264 = vpop.f32.mrf.mxu0
      %v2265 = vadd.f32 0.0, %v2264
      %v2266 = vpop.f32.mrf.mxu0
      %2267 = vmatprep.mubr.bf16.mxu0 0
      %2268 = vmatmul.mubr.bf16.gmra.mxu0 %v2222
      %v2269 = vpop.f32.mrf.mxu0
      %v2270 = vadd.f32 0.0, %v2269
      %v2271 = vpop.f32.mrf.mxu0
      %v2272 = vpop.f32.mrf.mxu0
      %v2273 = vadd.f32 0.0, %v2272
      %v2274 = vpop.f32.mrf.mxu0
      %2275 = vmatprep.mubr.bf16.mxu0 0
      %2276 = vmatmul.mubr.bf16.gmra.mxu0 %v2225
      %v2277 = vpop.f32.mrf.mxu0
      %v2278 = vadd.f32 0.0, %v2277
      %v2279 = vpop.f32.mrf.mxu0
      %v2280 = vpop.f32.mrf.mxu0
      %v2281 = vpop.f32.mrf.mxu0
      %2282 = vdwg.mxu0
      %v2283 = vadd.f32 %v2149, %v2262
      %v2284 = vadd.f32 %v2150, %v2265
      %v2285 = vadd.f32 %v2151, %v2270
      %v2286 = vadd.f32 %v2152, %v2273
      %v2287 = vadd.f32 %v2153, %v2278
      %v2288 = vld [vmem:[#allocation2 + $0x4] sm:$0x8]
      %s2289 = scalar_lea.vmem %s4, 128
      %v2290 = vld [vmem:[%s2289] sm:$0xf]
      %v2291 = vld [vmem:[%s2289 + $0x4] sm:$0xf]
      %v2292 = vld [vmem:[%s2289 + $0x8] sm:$0xf]
      %v2293 = vld [vmem:[%s2289 + $0xc] sm:$0xf]
      %v2295 = vunpack.c.l.b16 %v2288
      %v2296 = vpack.c.b16 %v2172, %v2295
      %v2297 = vrot.slane %v2296, 3
      %v2298 = vrot.slane %v2178, 3
      %v2299 = vsel %vm672, %v2297, %v2298
      %v2300 = vrot.slane %v2179, 3
      %v2301 = vsel %vm672, %v2298, %v2300
      %v2306 = vunpack.c.l.b16 %v2290
      %v2307 = vunpack.c.l.b16 %v2291
      %v2308 = vunpack.c.l.b16 %v2292
      %v2309 = vunpack.c.l.b16 %v2293
      %v2310 = vpack.c.b16 %v2307, %v2306
      %v2311 = vpack.c.b16 %v2309, %v2308
      %v2315 = vsel %vm405, %v2299, 0
      %v2318 = vsel %vm405, %v2301, 0
      %v2321 = vsel %vm405, %v2300, 0
      %2323 = vmatprep.subr.bf16.mxu0 0
      %2324 = vmatpush1.bf16.msra.mxu0 0
      %2325 = vmatprep.subr.bf16.mxu0 0
      %2326 = vmatpush1.bf16.msra.mxu0 0
      %2327 = vmatprep.subr.bf16.mxu0 0
      %2328 = vmatpush1.bf16.msra.mxu0 0
      %2329 = vmatprep.subr.bf16.mxu0 0
      %2330 = vmatpush1.bf16.msra.mxu0 0
      %2331 = vmatprep.subr.bf16.mxu0 0
      %2332 = vmatpush1.bf16.msra.mxu0 0
      %2333 = vmatprep.subr.bf16.mxu0 0
      %2334 = vmatpush1.bf16.msra.mxu0 0
      %2335 = vmatprep.subr.bf16.mxu0 0
      %2336 = vmatpush1.bf16.msra.mxu0 %v2311
      %2337 = vmatprep.subr.bf16.mxu0 0
      %2338 = vmatpush1.bf16.msra.mxu0 %v2310
      %2339 = vmatprep.subr.bf16.mxu0 0
      %2340 = vmatpush2.bf16.msra.mxu0 0
      %2341 = vmatprep.subr.bf16.mxu0 0
      %2342 = vmatpush2.bf16.msra.mxu0 0
      %2343 = vmatprep.subr.bf16.mxu0 0
      %2344 = vmatpush2.bf16.msra.mxu0 0
      %2345 = vmatprep.subr.bf16.mxu0 0
      %2346 = vmatpush2.bf16.msra.mxu0 0
      %2347 = vmatprep.subr.bf16.mxu0 0
      %2348 = vmatpush2.bf16.msra.mxu0 0
      %2349 = vmatprep.subr.bf16.mxu0 0
      %2350 = vmatpush2.bf16.msra.mxu0 0
      %2351 = vmatprep.subr.bf16.mxu0 0
      %2352 = vmatpush2.bf16.msra.mxu0 0
      %2353 = vmatprep.subr.bf16.mxu0 0
      %2354 = vmatpush2.bf16.msra.mxu0 0
      %2355 = vmatprep.mubr.bf16.mxu0 0
      %2356 = vmatmul.mubr.bf16.gmra.mxu0 %v2315
      %v2357 = vpop.f32.mrf.mxu0
      %v2358 = vadd.f32 0.0, %v2357
      %v2359 = vpop.f32.mrf.mxu0
      %v2360 = vpop.f32.mrf.mxu0
      %v2361 = vadd.f32 0.0, %v2360
      %v2362 = vpop.f32.mrf.mxu0
      %2363 = vmatprep.mubr.bf16.mxu0 0
      %2364 = vmatmul.mubr.bf16.gmra.mxu0 %v2318
      %v2365 = vpop.f32.mrf.mxu0
      %v2366 = vadd.f32 0.0, %v2365
      %v2367 = vpop.f32.mrf.mxu0
      %v2368 = vpop.f32.mrf.mxu0
      %v2369 = vadd.f32 0.0, %v2368
      %v2370 = vpop.f32.mrf.mxu0
      %2371 = vmatprep.mubr.bf16.mxu0 0
      %2372 = vmatmul.mubr.bf16.gmra.mxu0 %v2321
      %v2373 = vpop.f32.mrf.mxu0
      %v2374 = vadd.f32 0.0, %v2373
      %v2375 = vpop.f32.mrf.mxu0
      %v2376 = vpop.f32.mrf.mxu0
      %v2377 = vpop.f32.mrf.mxu0
      %2378 = vdwg.mxu0
      %v2379 = vadd.f32 %v2283, %v2358
      %v2380 = vadd.f32 %v2284, %v2361
      %v2381 = vadd.f32 %v2285, %v2366
      %v2382 = vadd.f32 %v2286, %v2369
      %v2383 = vadd.f32 %v2287, %v2374
      %v2384 = vmax.f32 %v2379, 0.0
      %v2385 = vmax.f32 %v2380, 0.0
      %v2386 = vmax.f32 %v2381, 0.0
      %v2387 = vmax.f32 %v2382, 0.0
      %v2388 = vmax.f32 %v2383, 0.0
      %v2389 = vpack.c.bf16 %v2385, %v2384
      %v2390 = vpack.c.bf16 %v2387, %v2386
      %v2391 = vpack.c.bf16 %v2388, %v2388
      %v2392 = vld [vmem:[%s5] sm:$0xf]
      %vm2393 = vcmask 64512
      %v2395 = vsel %vm2393, %v2389, 0
      %v2398 = vsel %vm2393, %v2390, 0
      %v2401 = vsel %vm2393, %v2391, 0
      %vm2403 = vcmask 1043456
      %v2405 = vsel %vm2403, %v2392, 0
      %2407 = vmatprep.subr.bf16.mxu0 0
      %2408 = vmatpush1.bf16.msra.mxu0 0
      %2409 = vmatprep.subr.bf16.mxu0 0
      %2410 = vmatpush1.bf16.msra.mxu0 0
      %2411 = vmatprep.subr.bf16.mxu0 0
      %2412 = vmatpush1.bf16.msra.mxu0 0
      %2413 = vmatprep.subr.bf16.mxu0 0
      %2414 = vmatpush1.bf16.msra.mxu0 0
      %2415 = vmatprep.subr.bf16.mxu0 0
      %2416 = vmatpush1.bf16.msra.mxu0 0
      %2417 = vmatprep.subr.bf16.mxu0 0
      %2418 = vmatpush1.bf16.msra.mxu0 0
      %2419 = vmatprep.subr.bf16.mxu0 0
      %2420 = vmatpush1.bf16.msra.mxu0 0
      %2421 = vmatprep.subr.bf16.mxu0 0
      %2422 = vmatpush1.bf16.msra.mxu0 %v2405
      %2423 = vmatprep.subr.bf16.mxu0 0
      %2424 = vmatpush2.bf16.msra.mxu0 0
      %2425 = vmatprep.subr.bf16.mxu0 0
      %2426 = vmatpush2.bf16.msra.mxu0 0
      %2427 = vmatprep.subr.bf16.mxu0 0
      %2428 = vmatpush2.bf16.msra.mxu0 0
      %2429 = vmatprep.subr.bf16.mxu0 0
      %2430 = vmatpush2.bf16.msra.mxu0 0
      %2431 = vmatprep.subr.bf16.mxu0 0
      %2432 = vmatpush2.bf16.msra.mxu0 0
      %2433 = vmatprep.subr.bf16.mxu0 0
      %2434 = vmatpush2.bf16.msra.mxu0 0
      %2435 = vmatprep.subr.bf16.mxu0 0
      %2436 = vmatpush2.bf16.msra.mxu0 0
      %2437 = vmatprep.subr.bf16.mxu0 0
      %2438 = vmatpush2.bf16.msra.mxu0 0
      %2439 = vmatprep.mubr.bf16.mxu0 0
      %2440 = vmatmul.mubr.bf16.gmra.mxu0 %v2395
      %v2441 = vpop.f32.mrf.mxu0
      %v2442 = vadd.f32 0.0, %v2441
      %v2443 = vpop.f32.mrf.mxu0
      %v2444 = vpop.f32.mrf.mxu0
      %v2445 = vadd.f32 0.0, %v2444
      %v2446 = vpop.f32.mrf.mxu0
      %2447 = vmatprep.mubr.bf16.mxu0 0
      %2448 = vmatmul.mubr.bf16.gmra.mxu0 %v2398
      %v2449 = vpop.f32.mrf.mxu0
      %v2450 = vadd.f32 0.0, %v2449
      %v2451 = vpop.f32.mrf.mxu0
      %v2452 = vpop.f32.mrf.mxu0
      %v2453 = vadd.f32 0.0, %v2452
      %v2454 = vpop.f32.mrf.mxu0
      %2455 = vmatprep.mubr.bf16.mxu0 0
      %2456 = vmatmul.mubr.bf16.gmra.mxu0 %v2401
      %v2457 = vpop.f32.mrf.mxu0
      %v2458 = vadd.f32 0.0, %v2457
      %v2459 = vpop.f32.mrf.mxu0
      %v2460 = vpop.f32.mrf.mxu0
      %v2461 = vpop.f32.mrf.mxu0
      %2462 = vdwg.mxu0
      %v2463 = vadd.f32 %v1307, %v2442
      %v2464 = vadd.f32 %v1308, %v2445
      %v2465 = vadd.f32 %v1309, %v2450
      %v2466 = vadd.f32 %v1310, %v2453
      %v2467 = vadd.f32 %v1311, %v2458
      %v2468 = vmax.f32 %v2463, 0.0
      %v2469 = vmax.f32 %v2464, 0.0
      %v2470 = vmax.f32 %v2465, 0.0
      %v2471 = vmax.f32 %v2466, 0.0
      %v2472 = vmax.f32 %v2467, 0.0
      %v2473 = vmul.f32 %v2468, %v1325
      %v2474 = vmul.f32 %v2469, %v1330
      %v2475 = vmul.f32 %v2470, %v1335
      %v2476 = vmul.f32 %v2471, %v1340
      %v2477 = vmul.f32 %v2472, %v1345
      %v2478 = vpack.c.bf16 %v2474, %v2473
      %v2479 = vpack.c.bf16 %v2476, %v2475
      %v2480 = vpack.c.bf16 %v2477, %v2477
      %v2484 = vunpack.c.l.b16 %v2478
      %v2485 = vunpack.c.h.b16 %v2478
      %v2486 = vunpack.c.l.b16 %v2479
      %v2487 = vunpack.c.h.b16 %v2479
      %v2488 = vunpack.c.l.b16 %v2480
      %v2489 = vpack.c.b16 %v2484, %v2484
      %v2490 = vpack.c.b16 %v2485, %v2485
      %v2491 = vpack.c.b16 %v2486, %v2486
      %v2492 = vpack.c.b16 %v2487, %v2487
      %v2493 = vpack.c.b16 %v2488, %v2488
      %v2495 = vshll.u32 %v2489, 16
      %v2497 = vrot.slane %v2495, 5
      %v2498 = vshrl.u32 %v2489, 16
      %v2500 = vrot.slane %v2498, 4
      %v2501 = vor.u32 %v2500, %v2497
      %v2502 = vrot.slane %v2501, 4
      %v2504 = vshll.u32 %v2490, 16
      %v2506 = vrot.slane %v2504, 5
      %v2507 = vsel %vm269, %v2502, %v2506
      %v2508 = vshrl.u32 %v2490, 16
      %v2510 = vrot.slane %v2508, 4
      %v2511 = vor.u32 %v2510, %v2506
      %v2512 = vrot.slane %v2511, 4
      %v2514 = vshll.u32 %v2491, 16
      %v2516 = vrot.slane %v2514, 5
      %v2517 = vsel %vm269, %v2512, %v2516
      %v2518 = vshrl.u32 %v2491, 16
      %v2520 = vrot.slane %v2518, 4
      %v2521 = vor.u32 %v2520, %v2516
      %v2522 = vrot.slane %v2521, 4
      %v2524 = vshll.u32 %v2492, 16
      %v2526 = vrot.slane %v2524, 5
      %v2527 = vsel %vm269, %v2522, %v2526
      %v2528 = vshrl.u32 %v2492, 16
      %v2530 = vrot.slane %v2528, 4
      %v2531 = vor.u32 %v2530, %v2526
      %v2532 = vrot.slane %v2531, 4
      %v2534 = vshll.u32 %v2493, 16
      %v2536 = vrot.slane %v2534, 5
      %v2537 = vsel %vm269, %v2532, %v2536
      %v2538 = vshrl.u32 %v2493, 16
      %v2540 = vrot.slane %v2538, 4
      %v2541 = vor.u32 %v2540, %v2536
      %v2542 = vrot.slane %v2541, 4
      %v2549 = vsel %vm327, %v2497, %v1734
      %2550 = vst [vmem:[#allocation2] sm:$0x8] %v2549
      %2551 = vst.msk [vmem:[#allocation2 + $0x4] sm:$0xf] %vm253, %v2507
      %2552 = vst.msk [vmem:[#allocation2 + $0x8] sm:$0xf] %vm253, %v2517
      %2553 = vst.msk [vmem:[#allocation2 + $0xc] sm:$0xf] %vm253, %v2527
      %2554 = vst.msk [vmem:[#allocation2 + $0x10] sm:$0xf] %vm253, %v2537
      %v2555 = vld [vmem:[#allocation2 + $0x14] sm:$0x3]
      %v2556 = vsel %vm337, %v2542, %v2555
      %2557 = vst [vmem:[#allocation2 + $0x14] sm:$0x3] %v2556
      %v2558 = vld [vmem:[#allocation2] sm:$0xf]
      %v2559 = vld [vmem:[#allocation2 + $0x4] sm:$0xf]
      %v2560 = vld [vmem:[#allocation2 + $0x8] sm:$0xf]
      %v2561 = vld [vmem:[#allocation2 + $0xc] sm:$0xf]
      %v2562 = vld [vmem:[#allocation2 + $0x10] sm:$0x3]
      %v2563 = vld [vmem:[%s4] sm:$0xf]
      %v2564 = vld [vmem:[%s4 + $0x4] sm:$0xf]
      %v2565 = vld [vmem:[%s4 + $0x8] sm:$0xf]
      %v2566 = vld [vmem:[%s4 + $0xc] sm:$0xf]
      %v2567 = vld [vmem:[#allocation2 + $0x10] sm:$0x7]
      %v2568 = vld [vmem:[%s1442] sm:$0xf]
      %v2569 = vld [vmem:[%s1442 + $0x4] sm:$0xf]
      %v2570 = vld [vmem:[%s1442 + $0x8] sm:$0xf]
      %v2571 = vld [vmem:[%s1442 + $0xc] sm:$0xf]
      %v2577 = vunpack.c.l.b16 %v2558
      %v2578 = vunpack.c.l.b16 %v2559
      %v2579 = vunpack.c.l.b16 %v2560
      %v2580 = vunpack.c.l.b16 %v2561
      %v2581 = vunpack.c.l.b16 %v2567
      %v2582 = vpack.c.b16 %v2578, %v2577
      %v2583 = vpack.c.b16 %v2580, %v2579
      %v2584 = vpack.c.b16 %v2581, %v2581
      %v2586 = vshrl.u32 %v2582, 16
      %v2588 = vshll.u32 %v2582, 16
      %v2590 = vrot.slane %v2588, 1
      %v2591 = vor.u32 %v2586, %v2590
      %v2593 = vshll.u32 %v2583, 16
      %v2595 = vrot.slane %v2593, 1
      %v2596 = vsel %vm369, %v2591, %v2595
      %v2597 = vshrl.u32 %v2583, 16
      %v2599 = vor.u32 %v2597, %v2595
      %v2601 = vshll.u32 %v2584, 16
      %v2603 = vrot.slane %v2601, 1
      %v2604 = vsel %vm369, %v2599, %v2603
      %v2605 = vshrl.u32 %v2584, 16
      %v2607 = vor.u32 %v2605, %v2603
      %v2612 = vunpack.c.l.b16 %v2568
      %v2613 = vunpack.c.l.b16 %v2569
      %v2614 = vunpack.c.l.b16 %v2570
      %v2615 = vunpack.c.l.b16 %v2571
      %v2616 = vpack.c.b16 %v2613, %v2612
      %v2617 = vpack.c.b16 %v2615, %v2614
      %v2621 = vsel %vm405, %v2596, 0
      %v2624 = vsel %vm405, %v2604, 0
      %v2627 = vsel %vm405, %v2607, 0
      %2629 = vmatprep.subr.bf16.mxu0 0
      %2630 = vmatpush1.bf16.msra.mxu0 0
      %2631 = vmatprep.subr.bf16.mxu0 0
      %2632 = vmatpush1.bf16.msra.mxu0 0
      %2633 = vmatprep.subr.bf16.mxu0 0
      %2634 = vmatpush1.bf16.msra.mxu0 0
      %2635 = vmatprep.subr.bf16.mxu0 0
      %2636 = vmatpush1.bf16.msra.mxu0 0
      %2637 = vmatprep.subr.bf16.mxu0 0
      %2638 = vmatpush1.bf16.msra.mxu0 0
      %2639 = vmatprep.subr.bf16.mxu0 0
      %2640 = vmatpush1.bf16.msra.mxu0 0
      %2641 = vmatprep.subr.bf16.mxu0 0
      %2642 = vmatpush1.bf16.msra.mxu0 %v2617
      %2643 = vmatprep.subr.bf16.mxu0 0
      %2644 = vmatpush1.bf16.msra.mxu0 %v2616
      %2645 = vmatprep.subr.bf16.mxu0 0
      %2646 = vmatpush2.bf16.msra.mxu0 0
      %2647 = vmatprep.subr.bf16.mxu0 0
      %2648 = vmatpush2.bf16.msra.mxu0 0
      %2649 = vmatprep.subr.bf16.mxu0 0
      %2650 = vmatpush2.bf16.msra.mxu0 0
      %2651 = vmatprep.subr.bf16.mxu0 0
      %2652 = vmatpush2.bf16.msra.mxu0 0
      %2653 = vmatprep.subr.bf16.mxu0 0
      %2654 = vmatpush2.bf16.msra.mxu0 0
      %2655 = vmatprep.subr.bf16.mxu0 0
      %2656 = vmatpush2.bf16.msra.mxu0 0
      %2657 = vmatprep.subr.bf16.mxu0 0
      %2658 = vmatpush2.bf16.msra.mxu0 0
      %2659 = vmatprep.subr.bf16.mxu0 0
      %2660 = vmatpush2.bf16.msra.mxu0 0
      %2661 = vmatprep.mubr.bf16.mxu0 0
      %2662 = vmatmul.mubr.bf16.gmra.mxu0 %v2621
      %v2663 = vpop.f32.mrf.mxu0
      %v2664 = vadd.f32 0.0, %v2663
      %v2665 = vpop.f32.mrf.mxu0
      %v2666 = vpop.f32.mrf.mxu0
      %v2667 = vadd.f32 0.0, %v2666
      %v2668 = vpop.f32.mrf.mxu0
      %2669 = vmatprep.mubr.bf16.mxu0 0
      %2670 = vmatmul.mubr.bf16.gmra.mxu0 %v2624
      %v2671 = vpop.f32.mrf.mxu0
      %v2672 = vadd.f32 0.0, %v2671
      %v2673 = vpop.f32.mrf.mxu0
      %v2674 = vpop.f32.mrf.mxu0
      %v2675 = vadd.f32 0.0, %v2674
      %v2676 = vpop.f32.mrf.mxu0
      %2677 = vmatprep.mubr.bf16.mxu0 0
      %2678 = vmatmul.mubr.bf16.gmra.mxu0 %v2627
      %v2679 = vpop.f32.mrf.mxu0
      %v2680 = vadd.f32 0.0, %v2679
      %v2681 = vpop.f32.mrf.mxu0
      %v2682 = vpop.f32.mrf.mxu0
      %v2683 = vpop.f32.mrf.mxu0
      %2684 = vdwg.mxu0
      %v2686 = vunpack.c.l.b16 %v2562
      %v2687 = vpack.c.b16 %v2686, %v2686
      %v2692 = vunpack.c.l.b16 %v2563
      %v2693 = vunpack.c.l.b16 %v2564
      %v2694 = vunpack.c.l.b16 %v2565
      %v2695 = vunpack.c.l.b16 %v2566
      %v2696 = vpack.c.b16 %v2693, %v2692
      %v2697 = vpack.c.b16 %v2695, %v2694
      %v2700 = vsel %vm405, %v2582, 0
      %v2702 = vsel %vm405, %v2583, 0
      %v2705 = vsel %vm405, %v2687, 0
      %2707 = vmatprep.subr.bf16.mxu0 0
      %2708 = vmatpush1.bf16.msra.mxu0 0
      %2709 = vmatprep.subr.bf16.mxu0 0
      %2710 = vmatpush1.bf16.msra.mxu0 0
      %2711 = vmatprep.subr.bf16.mxu0 0
      %2712 = vmatpush1.bf16.msra.mxu0 0
      %2713 = vmatprep.subr.bf16.mxu0 0
      %2714 = vmatpush1.bf16.msra.mxu0 0
      %2715 = vmatprep.subr.bf16.mxu0 0
      %2716 = vmatpush1.bf16.msra.mxu0 0
      %2717 = vmatprep.subr.bf16.mxu0 0
      %2718 = vmatpush1.bf16.msra.mxu0 0
      %2719 = vmatprep.subr.bf16.mxu0 0
      %2720 = vmatpush1.bf16.msra.mxu0 %v2697
      %2721 = vmatprep.subr.bf16.mxu0 0
      %2722 = vmatpush1.bf16.msra.mxu0 %v2696
      %2723 = vmatprep.subr.bf16.mxu0 0
      %2724 = vmatpush2.bf16.msra.mxu0 0
      %2725 = vmatprep.subr.bf16.mxu0 0
      %2726 = vmatpush2.bf16.msra.mxu0 0
      %2727 = vmatprep.subr.bf16.mxu0 0
      %2728 = vmatpush2.bf16.msra.mxu0 0
      %2729 = vmatprep.subr.bf16.mxu0 0
      %2730 = vmatpush2.bf16.msra.mxu0 0
      %2731 = vmatprep.subr.bf16.mxu0 0
      %2732 = vmatpush2.bf16.msra.mxu0 0
      %2733 = vmatprep.subr.bf16.mxu0 0
      %2734 = vmatpush2.bf16.msra.mxu0 0
      %2735 = vmatprep.subr.bf16.mxu0 0
      %2736 = vmatpush2.bf16.msra.mxu0 0
      %2737 = vmatprep.subr.bf16.mxu0 0
      %2738 = vmatpush2.bf16.msra.mxu0 0
      %2739 = vmatprep.mubr.bf16.mxu0 0
      %2740 = vmatmul.mubr.bf16.gmra.mxu0 %v2700
      %v2741 = vpop.f32.mrf.mxu0
      %v2742 = vadd.f32 %v2664, %v2741
      %v2743 = vpop.f32.mrf.mxu0
      %v2744 = vpop.f32.mrf.mxu0
      %v2745 = vadd.f32 %v2667, %v2744
      %v2746 = vpop.f32.mrf.mxu0
      %2747 = vmatprep.mubr.bf16.mxu0 0
      %2748 = vmatmul.mubr.bf16.gmra.mxu0 %v2702
      %v2749 = vpop.f32.mrf.mxu0
      %v2750 = vadd.f32 %v2672, %v2749
      %v2751 = vpop.f32.mrf.mxu0
      %v2752 = vpop.f32.mrf.mxu0
      %v2753 = vadd.f32 %v2675, %v2752
      %v2754 = vpop.f32.mrf.mxu0
      %2755 = vmatprep.mubr.bf16.mxu0 0
      %2756 = vmatmul.mubr.bf16.gmra.mxu0 %v2705
      %v2757 = vpop.f32.mrf.mxu0
      %v2758 = vadd.f32 %v2680, %v2757
      %v2759 = vpop.f32.mrf.mxu0
      %v2760 = vpop.f32.mrf.mxu0
      %v2761 = vpop.f32.mrf.mxu0
      %2762 = vdwg.mxu0
      %v2763 = vld [vmem:[#allocation2] sm:$0xe]
      %v2764 = vld [vmem:[%s1639] sm:$0xf]
      %v2765 = vld [vmem:[%s1639 + $0x4] sm:$0xf]
      %v2766 = vld [vmem:[%s1639 + $0x8] sm:$0xf]
      %v2767 = vld [vmem:[%s1639 + $0xc] sm:$0xf]
      %v2769 = vunpack.c.l.b16 %v2763
      %v2770 = vpack.c.b16 %v2578, %v2769
      %v2771 = vrot.slane %v2770, 1
      %v2772 = vrot.slane %v2583, 1
      %v2773 = vsel %vm558, %v2771, %v2772
      %v2774 = vrot.slane %v2584, 1
      %v2775 = vsel %vm558, %v2772, %v2774
      %v2780 = vunpack.c.l.b16 %v2764
      %v2781 = vunpack.c.l.b16 %v2765
      %v2782 = vunpack.c.l.b16 %v2766
      %v2783 = vunpack.c.l.b16 %v2767
      %v2784 = vpack.c.b16 %v2781, %v2780
      %v2785 = vpack.c.b16 %v2783, %v2782
      %v2789 = vsel %vm405, %v2773, 0
      %v2792 = vsel %vm405, %v2775, 0
      %v2795 = vsel %vm405, %v2774, 0
      %2797 = vmatprep.subr.bf16.mxu0 0
      %2798 = vmatpush1.bf16.msra.mxu0 0
      %2799 = vmatprep.subr.bf16.mxu0 0
      %2800 = vmatpush1.bf16.msra.mxu0 0
      %2801 = vmatprep.subr.bf16.mxu0 0
      %2802 = vmatpush1.bf16.msra.mxu0 0
      %2803 = vmatprep.subr.bf16.mxu0 0
      %2804 = vmatpush1.bf16.msra.mxu0 0
      %2805 = vmatprep.subr.bf16.mxu0 0
      %2806 = vmatpush1.bf16.msra.mxu0 0
      %2807 = vmatprep.subr.bf16.mxu0 0
      %2808 = vmatpush1.bf16.msra.mxu0 0
      %2809 = vmatprep.subr.bf16.mxu0 0
      %2810 = vmatpush1.bf16.msra.mxu0 %v2785
      %2811 = vmatprep.subr.bf16.mxu0 0
      %2812 = vmatpush1.bf16.msra.mxu0 %v2784
      %2813 = vmatprep.subr.bf16.mxu0 0
      %2814 = vmatpush2.bf16.msra.mxu0 0
      %2815 = vmatprep.subr.bf16.mxu0 0
      %2816 = vmatpush2.bf16.msra.mxu0 0
      %2817 = vmatprep.subr.bf16.mxu0 0
      %2818 = vmatpush2.bf16.msra.mxu0 0
      %2819 = vmatprep.subr.bf16.mxu0 0
      %2820 = vmatpush2.bf16.msra.mxu0 0
      %2821 = vmatprep.subr.bf16.mxu0 0
      %2822 = vmatpush2.bf16.msra.mxu0 0
      %2823 = vmatprep.subr.bf16.mxu0 0
      %2824 = vmatpush2.bf16.msra.mxu0 0
      %2825 = vmatprep.subr.bf16.mxu0 0
      %2826 = vmatpush2.bf16.msra.mxu0 0
      %2827 = vmatprep.subr.bf16.mxu0 0
      %2828 = vmatpush2.bf16.msra.mxu0 0
      %2829 = vmatprep.mubr.bf16.mxu0 0
      %2830 = vmatmul.mubr.bf16.gmra.mxu0 %v2789
      %v2831 = vpop.f32.mrf.mxu0
      %v2832 = vadd.f32 0.0, %v2831
      %v2833 = vpop.f32.mrf.mxu0
      %v2834 = vpop.f32.mrf.mxu0
      %v2835 = vadd.f32 0.0, %v2834
      %v2836 = vpop.f32.mrf.mxu0
      %2837 = vmatprep.mubr.bf16.mxu0 0
      %2838 = vmatmul.mubr.bf16.gmra.mxu0 %v2792
      %v2839 = vpop.f32.mrf.mxu0
      %v2840 = vadd.f32 0.0, %v2839
      %v2841 = vpop.f32.mrf.mxu0
      %v2842 = vpop.f32.mrf.mxu0
      %v2843 = vadd.f32 0.0, %v2842
      %v2844 = vpop.f32.mrf.mxu0
      %2845 = vmatprep.mubr.bf16.mxu0 0
      %2846 = vmatmul.mubr.bf16.gmra.mxu0 %v2795
      %v2847 = vpop.f32.mrf.mxu0
      %v2848 = vadd.f32 0.0, %v2847
      %v2849 = vpop.f32.mrf.mxu0
      %v2850 = vpop.f32.mrf.mxu0
      %v2851 = vpop.f32.mrf.mxu0
      %2852 = vdwg.mxu0
      %v2853 = vadd.f32 %v2742, %v2832
      %v2854 = vadd.f32 %v2745, %v2835
      %v2855 = vadd.f32 %v2750, %v2840
      %v2856 = vadd.f32 %v2753, %v2843
      %v2857 = vadd.f32 %v2758, %v2848
      %v2858 = vld [vmem:[#allocation2] sm:$0x8]
      %v2859 = vld [vmem:[#allocation2 + $0x4] sm:$0xf]
      %v2860 = vld [vmem:[#allocation2 + $0x8] sm:$0xf]
      %v2861 = vld [vmem:[#allocation2 + $0xc] sm:$0xf]
      %v2862 = vld [vmem:[#allocation2 + $0x10] sm:$0xf]
      %v2863 = vld [vmem:[#allocation2 + $0x14] sm:$0x1]
      %v2864 = vld [vmem:[%s1740] sm:$0xf]
      %v2865 = vld [vmem:[%s1740 + $0x4] sm:$0xf]
      %v2866 = vld [vmem:[%s1740 + $0x8] sm:$0xf]
      %v2867 = vld [vmem:[%s1740 + $0xc] sm:$0xf]
      %v2874 = vunpack.c.l.b16 %v2858
      %v2875 = vunpack.c.l.b16 %v2859
      %v2876 = vunpack.c.l.b16 %v2860
      %v2877 = vunpack.c.l.b16 %v2861
      %v2878 = vunpack.c.l.b16 %v2862
      %v2879 = vunpack.c.l.b16 %v2863
      %v2880 = vpack.c.b16 %v2875, %v2874
      %v2881 = vpack.c.b16 %v2877, %v2876
      %v2882 = vpack.c.b16 %v2879, %v2878
      %v2883 = vrot.slane %v2880, 3
      %v2884 = vrot.slane %v2881, 3
      %v2885 = vsel %vm672, %v2883, %v2884
      %v2886 = vrot.slane %v2882, 3
      %v2887 = vsel %vm672, %v2884, %v2886
      %v2892 = vunpack.c.l.b16 %v2864
      %v2893 = vunpack.c.l.b16 %v2865
      %v2894 = vunpack.c.l.b16 %v2866
      %v2895 = vunpack.c.l.b16 %v2867
      %v2896 = vpack.c.b16 %v2893, %v2892
      %v2897 = vpack.c.b16 %v2895, %v2894
      %v2901 = vsel %vm405, %v2885, 0
      %v2904 = vsel %vm405, %v2887, 0
      %v2907 = vsel %vm405, %v2886, 0
      %2909 = vmatprep.subr.bf16.mxu0 0
      %2910 = vmatpush1.bf16.msra.mxu0 0
      %2911 = vmatprep.subr.bf16.mxu0 0
      %2912 = vmatpush1.bf16.msra.mxu0 0
      %2913 = vmatprep.subr.bf16.mxu0 0
      %2914 = vmatpush1.bf16.msra.mxu0 0
      %2915 = vmatprep.subr.bf16.mxu0 0
      %2916 = vmatpush1.bf16.msra.mxu0 0
      %2917 = vmatprep.subr.bf16.mxu0 0
      %2918 = vmatpush1.bf16.msra.mxu0 0
      %2919 = vmatprep.subr.bf16.mxu0 0
      %2920 = vmatpush1.bf16.msra.mxu0 0
      %2921 = vmatprep.subr.bf16.mxu0 0
      %2922 = vmatpush1.bf16.msra.mxu0 %v2897
      %2923 = vmatprep.subr.bf16.mxu0 0
      %2924 = vmatpush1.bf16.msra.mxu0 %v2896
      %2925 = vmatprep.subr.bf16.mxu0 0
      %2926 = vmatpush2.bf16.msra.mxu0 0
      %2927 = vmatprep.subr.bf16.mxu0 0
      %2928 = vmatpush2.bf16.msra.mxu0 0
      %2929 = vmatprep.subr.bf16.mxu0 0
      %2930 = vmatpush2.bf16.msra.mxu0 0
      %2931 = vmatprep.subr.bf16.mxu0 0
      %2932 = vmatpush2.bf16.msra.mxu0 0
      %2933 = vmatprep.subr.bf16.mxu0 0
      %2934 = vmatpush2.bf16.msra.mxu0 0
      %2935 = vmatprep.subr.bf16.mxu0 0
      %2936 = vmatpush2.bf16.msra.mxu0 0
      %2937 = vmatprep.subr.bf16.mxu0 0
      %2938 = vmatpush2.bf16.msra.mxu0 0
      %2939 = vmatprep.subr.bf16.mxu0 0
      %2940 = vmatpush2.bf16.msra.mxu0 0
      %2941 = vmatprep.mubr.bf16.mxu0 0
      %2942 = vmatmul.mubr.bf16.gmra.mxu0 %v2901
      %v2943 = vpop.f32.mrf.mxu0
      %v2944 = vadd.f32 0.0, %v2943
      %v2945 = vpop.f32.mrf.mxu0
      %v2946 = vpop.f32.mrf.mxu0
      %v2947 = vadd.f32 0.0, %v2946
      %v2948 = vpop.f32.mrf.mxu0
      %2949 = vmatprep.mubr.bf16.mxu0 0
      %2950 = vmatmul.mubr.bf16.gmra.mxu0 %v2904
      %v2951 = vpop.f32.mrf.mxu0
      %v2952 = vadd.f32 0.0, %v2951
      %v2953 = vpop.f32.mrf.mxu0
      %v2954 = vpop.f32.mrf.mxu0
      %v2955 = vadd.f32 0.0, %v2954
      %v2956 = vpop.f32.mrf.mxu0
      %2957 = vmatprep.mubr.bf16.mxu0 0
      %2958 = vmatmul.mubr.bf16.gmra.mxu0 %v2907
      %v2959 = vpop.f32.mrf.mxu0
      %v2960 = vadd.f32 0.0, %v2959
      %v2961 = vpop.f32.mrf.mxu0
      %v2962 = vpop.f32.mrf.mxu0
      %v2963 = vpop.f32.mrf.mxu0
      %2964 = vdwg.mxu0
      %v2965 = vadd.f32 %v2853, %v2944
      %v2966 = vadd.f32 %v2854, %v2947
      %v2967 = vadd.f32 %v2855, %v2952
      %v2968 = vadd.f32 %v2856, %v2955
      %v2969 = vadd.f32 %v2857, %v2960
      %v2970 = vld [vmem:[#allocation2 + $0x14] sm:$0x3]
      %v2971 = vld [vmem:[%s1848] sm:$0xf]
      %v2972 = vld [vmem:[%s1848 + $0x4] sm:$0xf]
      %v2973 = vld [vmem:[%s1848 + $0x8] sm:$0xf]
      %v2974 = vld [vmem:[%s1848 + $0xc] sm:$0xf]
      %v2976 = vunpack.c.l.b16 %v2970
      %v2977 = vpack.c.b16 %v2976, %v2878
      %v2979 = vshrl.u32 %v2880, 16
      %v2981 = vrot.slane %v2979, 3
      %v2982 = vshll.u32 %v2880, 16
      %v2984 = vrot.slane %v2982, 4
      %v2985 = vor.u32 %v2981, %v2984
      %v2987 = vshrl.u32 %v2881, 16
      %v2989 = vrot.slane %v2987, 3
      %v2990 = vshll.u32 %v2881, 16
      %v2992 = vrot.slane %v2990, 4
      %v2993 = vor.u32 %v2989, %v2992
      %v2994 = vsel %vm769, %v2985, %v2993
      %v2996 = vshrl.u32 %v2977, 16
      %v2998 = vrot.slane %v2996, 3
      %v2999 = vshll.u32 %v2977, 16
      %v3001 = vrot.slane %v2999, 4
      %v3002 = vor.u32 %v2998, %v3001
      %v3003 = vsel %vm769, %v2993, %v3002
      %v3008 = vunpack.c.l.b16 %v2971
      %v3009 = vunpack.c.l.b16 %v2972
      %v3010 = vunpack.c.l.b16 %v2973
      %v3011 = vunpack.c.l.b16 %v2974
      %v3012 = vpack.c.b16 %v3009, %v3008
      %v3013 = vpack.c.b16 %v3011, %v3010
      %v3017 = vsel %vm405, %v2994, 0
      %v3020 = vsel %vm405, %v3003, 0
      %v3023 = vsel %vm405, %v3002, 0
      %3025 = vmatprep.subr.bf16.mxu0 0
      %3026 = vmatpush1.bf16.msra.mxu0 0
      %3027 = vmatprep.subr.bf16.mxu0 0
      %3028 = vmatpush1.bf16.msra.mxu0 0
      %3029 = vmatprep.subr.bf16.mxu0 0
      %3030 = vmatpush1.bf16.msra.mxu0 0
      %3031 = vmatprep.subr.bf16.mxu0 0
      %3032 = vmatpush1.bf16.msra.mxu0 0
      %3033 = vmatprep.subr.bf16.mxu0 0
      %3034 = vmatpush1.bf16.msra.mxu0 0
      %3035 = vmatprep.subr.bf16.mxu0 0
      %3036 = vmatpush1.bf16.msra.mxu0 0
      %3037 = vmatprep.subr.bf16.mxu0 0
      %3038 = vmatpush1.bf16.msra.mxu0 %v3013
      %3039 = vmatprep.subr.bf16.mxu0 0
      %3040 = vmatpush1.bf16.msra.mxu0 %v3012
      %3041 = vmatprep.subr.bf16.mxu0 0
      %3042 = vmatpush2.bf16.msra.mxu0 0
      %3043 = vmatprep.subr.bf16.mxu0 0
      %3044 = vmatpush2.bf16.msra.mxu0 0
      %3045 = vmatprep.subr.bf16.mxu0 0
      %3046 = vmatpush2.bf16.msra.mxu0 0
      %3047 = vmatprep.subr.bf16.mxu0 0
      %3048 = vmatpush2.bf16.msra.mxu0 0
      %3049 = vmatprep.subr.bf16.mxu0 0
      %3050 = vmatpush2.bf16.msra.mxu0 0
      %3051 = vmatprep.subr.bf16.mxu0 0
      %3052 = vmatpush2.bf16.msra.mxu0 0
      %3053 = vmatprep.subr.bf16.mxu0 0
      %3054 = vmatpush2.bf16.msra.mxu0 0
      %3055 = vmatprep.subr.bf16.mxu0 0
      %3056 = vmatpush2.bf16.msra.mxu0 0
      %3057 = vmatprep.mubr.bf16.mxu0 0
      %3058 = vmatmul.mubr.bf16.gmra.mxu0 %v3017
      %v3059 = vpop.f32.mrf.mxu0
      %v3060 = vadd.f32 0.0, %v3059
      %v3061 = vpop.f32.mrf.mxu0
      %v3062 = vpop.f32.mrf.mxu0
      %v3063 = vadd.f32 0.0, %v3062
      %v3064 = vpop.f32.mrf.mxu0
      %3065 = vmatprep.mubr.bf16.mxu0 0
      %3066 = vmatmul.mubr.bf16.gmra.mxu0 %v3020
      %v3067 = vpop.f32.mrf.mxu0
      %v3068 = vadd.f32 0.0, %v3067
      %v3069 = vpop.f32.mrf.mxu0
      %v3070 = vpop.f32.mrf.mxu0
      %v3071 = vadd.f32 0.0, %v3070
      %v3072 = vpop.f32.mrf.mxu0
      %3073 = vmatprep.mubr.bf16.mxu0 0
      %3074 = vmatmul.mubr.bf16.gmra.mxu0 %v3023
      %v3075 = vpop.f32.mrf.mxu0
      %v3076 = vadd.f32 0.0, %v3075
      %v3077 = vpop.f32.mrf.mxu0
      %v3078 = vpop.f32.mrf.mxu0
      %v3079 = vpop.f32.mrf.mxu0
      %3080 = vdwg.mxu0
      %v3081 = vadd.f32 %v2965, %v3060
      %v3082 = vadd.f32 %v2966, %v3063
      %v3083 = vadd.f32 %v2967, %v3068
      %v3084 = vadd.f32 %v2968, %v3071
      %v3085 = vadd.f32 %v2969, %v3076
      %v3086 = vld [vmem:[%s1964] sm:$0xf]
      %v3087 = vld [vmem:[%s1964 + $0x4] sm:$0xf]
      %v3088 = vld [vmem:[%s1964 + $0x8] sm:$0xf]
      %v3089 = vld [vmem:[%s1964 + $0xc] sm:$0xf]
      %v3090 = vpack.c.b16 %v2876, %v2875
      %v3091 = vpack.c.b16 %v2878, %v2877
      %v3092 = vpack.c.b16 %v2976, %v2976
      %v3097 = vunpack.c.l.b16 %v3086
      %v3098 = vunpack.c.l.b16 %v3087
      %v3099 = vunpack.c.l.b16 %v3088
      %v3100 = vunpack.c.l.b16 %v3089
      %v3101 = vpack.c.b16 %v3098, %v3097
      %v3102 = vpack.c.b16 %v3100, %v3099
      %v3106 = vsel %vm405, %v3090, 0
      %v3109 = vsel %vm405, %v3091, 0
      %v3112 = vsel %vm405, %v3092, 0
      %3114 = vmatprep.subr.bf16.mxu0 0
      %3115 = vmatpush1.bf16.msra.mxu0 0
      %3116 = vmatprep.subr.bf16.mxu0 0
      %3117 = vmatpush1.bf16.msra.mxu0 0
      %3118 = vmatprep.subr.bf16.mxu0 0
      %3119 = vmatpush1.bf16.msra.mxu0 0
      %3120 = vmatprep.subr.bf16.mxu0 0
      %3121 = vmatpush1.bf16.msra.mxu0 0
      %3122 = vmatprep.subr.bf16.mxu0 0
      %3123 = vmatpush1.bf16.msra.mxu0 0
      %3124 = vmatprep.subr.bf16.mxu0 0
      %3125 = vmatpush1.bf16.msra.mxu0 0
      %3126 = vmatprep.subr.bf16.mxu0 0
      %3127 = vmatpush1.bf16.msra.mxu0 %v3102
      %3128 = vmatprep.subr.bf16.mxu0 0
      %3129 = vmatpush1.bf16.msra.mxu0 %v3101
      %3130 = vmatprep.subr.bf16.mxu0 0
      %3131 = vmatpush2.bf16.msra.mxu0 0
      %3132 = vmatprep.subr.bf16.mxu0 0
      %3133 = vmatpush2.bf16.msra.mxu0 0
      %3134 = vmatprep.subr.bf16.mxu0 0
      %3135 = vmatpush2.bf16.msra.mxu0 0
      %3136 = vmatprep.subr.bf16.mxu0 0
      %3137 = vmatpush2.bf16.msra.mxu0 0
      %3138 = vmatprep.subr.bf16.mxu0 0
      %3139 = vmatpush2.bf16.msra.mxu0 0
      %3140 = vmatprep.subr.bf16.mxu0 0
      %3141 = vmatpush2.bf16.msra.mxu0 0
      %3142 = vmatprep.subr.bf16.mxu0 0
      %3143 = vmatpush2.bf16.msra.mxu0 0
      %3144 = vmatprep.subr.bf16.mxu0 0
      %3145 = vmatpush2.bf16.msra.mxu0 0
      %3146 = vmatprep.mubr.bf16.mxu0 0
      %3147 = vmatmul.mubr.bf16.gmra.mxu0 %v3106
      %v3148 = vpop.f32.mrf.mxu0
      %v3149 = vadd.f32 0.0, %v3148
      %v3150 = vpop.f32.mrf.mxu0
      %v3151 = vpop.f32.mrf.mxu0
      %v3152 = vadd.f32 0.0, %v3151
      %v3153 = vpop.f32.mrf.mxu0
      %3154 = vmatprep.mubr.bf16.mxu0 0
      %3155 = vmatmul.mubr.bf16.gmra.mxu0 %v3109
      %v3156 = vpop.f32.mrf.mxu0
      %v3157 = vadd.f32 0.0, %v3156
      %v3158 = vpop.f32.mrf.mxu0
      %v3159 = vpop.f32.mrf.mxu0
      %v3160 = vadd.f32 0.0, %v3159
      %v3161 = vpop.f32.mrf.mxu0
      %3162 = vmatprep.mubr.bf16.mxu0 0
      %3163 = vmatmul.mubr.bf16.gmra.mxu0 %v3112
      %v3164 = vpop.f32.mrf.mxu0
      %v3165 = vadd.f32 0.0, %v3164
      %v3166 = vpop.f32.mrf.mxu0
      %v3167 = vpop.f32.mrf.mxu0
      %v3168 = vpop.f32.mrf.mxu0
      %3169 = vdwg.mxu0
      %v3170 = vadd.f32 %v3081, %v3149
      %v3171 = vadd.f32 %v3082, %v3152
      %v3172 = vadd.f32 %v3083, %v3157
      %v3173 = vadd.f32 %v3084, %v3160
      %v3174 = vadd.f32 %v3085, %v3165
      %v3175 = vld [vmem:[#allocation2 + $0x4] sm:$0xc]
      %v3176 = vld [vmem:[#allocation2 + $0x14] sm:$0xf]
      %v3177 = vld [vmem:[%s2056] sm:$0xf]
      %v3178 = vld [vmem:[%s2056 + $0x4] sm:$0xf]
      %v3179 = vld [vmem:[%s2056 + $0x8] sm:$0xf]
      %v3180 = vld [vmem:[%s2056 + $0xc] sm:$0xf]
      %v3183 = vunpack.c.l.b16 %v3175
      %v3184 = vunpack.c.l.b16 %v3176
      %v3185 = vpack.c.b16 %v2876, %v3183
      %v3186 = vpack.c.b16 %v3184, %v3184
      %v3187 = vrot.slane %v3185, 2
      %v3188 = vrot.slane %v3091, 2
      %v3189 = vsel %vm981, %v3187, %v3188
      %v3190 = vrot.slane %v3186, 2
      %v3191 = vsel %vm981, %v3188, %v3190
      %v3196 = vunpack.c.l.b16 %v3177
      %v3197 = vunpack.c.l.b16 %v3178
      %v3198 = vunpack.c.l.b16 %v3179
      %v3199 = vunpack.c.l.b16 %v3180
      %v3200 = vpack.c.b16 %v3197, %v3196
      %v3201 = vpack.c.b16 %v3199, %v3198
      %v3205 = vsel %vm405, %v3189, 0
      %v3208 = vsel %vm405, %v3191, 0
      %v3211 = vsel %vm405, %v3190, 0
      %3213 = vmatprep.subr.bf16.mxu0 0
      %3214 = vmatpush1.bf16.msra.mxu0 0
      %3215 = vmatprep.subr.bf16.mxu0 0
      %3216 = vmatpush1.bf16.msra.mxu0 0
      %3217 = vmatprep.subr.bf16.mxu0 0
      %3218 = vmatpush1.bf16.msra.mxu0 0
      %3219 = vmatprep.subr.bf16.mxu0 0
      %3220 = vmatpush1.bf16.msra.mxu0 0
      %3221 = vmatprep.subr.bf16.mxu0 0
      %3222 = vmatpush1.bf16.msra.mxu0 0
      %3223 = vmatprep.subr.bf16.mxu0 0
      %3224 = vmatpush1.bf16.msra.mxu0 0
      %3225 = vmatprep.subr.bf16.mxu0 0
      %3226 = vmatpush1.bf16.msra.mxu0 %v3201
      %3227 = vmatprep.subr.bf16.mxu0 0
      %3228 = vmatpush1.bf16.msra.mxu0 %v3200
      %3229 = vmatprep.subr.bf16.mxu0 0
      %3230 = vmatpush2.bf16.msra.mxu0 0
      %3231 = vmatprep.subr.bf16.mxu0 0
      %3232 = vmatpush2.bf16.msra.mxu0 0
      %3233 = vmatprep.subr.bf16.mxu0 0
      %3234 = vmatpush2.bf16.msra.mxu0 0
      %3235 = vmatprep.subr.bf16.mxu0 0
      %3236 = vmatpush2.bf16.msra.mxu0 0
      %3237 = vmatprep.subr.bf16.mxu0 0
      %3238 = vmatpush2.bf16.msra.mxu0 0
      %3239 = vmatprep.subr.bf16.mxu0 0
      %3240 = vmatpush2.bf16.msra.mxu0 0
      %3241 = vmatprep.subr.bf16.mxu0 0
      %3242 = vmatpush2.bf16.msra.mxu0 0
      %3243 = vmatprep.subr.bf16.mxu0 0
      %3244 = vmatpush2.bf16.msra.mxu0 0
      %3245 = vmatprep.mubr.bf16.mxu0 0
      %3246 = vmatmul.mubr.bf16.gmra.mxu0 %v3205
      %v3247 = vpop.f32.mrf.mxu0
      %v3248 = vadd.f32 0.0, %v3247
      %v3249 = vpop.f32.mrf.mxu0
      %v3250 = vpop.f32.mrf.mxu0
      %v3251 = vadd.f32 0.0, %v3250
      %v3252 = vpop.f32.mrf.mxu0
      %3253 = vmatprep.mubr.bf16.mxu0 0
      %3254 = vmatmul.mubr.bf16.gmra.mxu0 %v3208
      %v3255 = vpop.f32.mrf.mxu0
      %v3256 = vadd.f32 0.0, %v3255
      %v3257 = vpop.f32.mrf.mxu0
      %v3258 = vpop.f32.mrf.mxu0
      %v3259 = vadd.f32 0.0, %v3258
      %v3260 = vpop.f32.mrf.mxu0
      %3261 = vmatprep.mubr.bf16.mxu0 0
      %3262 = vmatmul.mubr.bf16.gmra.mxu0 %v3211
      %v3263 = vpop.f32.mrf.mxu0
      %v3264 = vadd.f32 0.0, %v3263
      %v3265 = vpop.f32.mrf.mxu0
      %v3266 = vpop.f32.mrf.mxu0
      %v3267 = vpop.f32.mrf.mxu0
      %3268 = vdwg.mxu0
      %v3269 = vadd.f32 %v3170, %v3248
      %v3270 = vadd.f32 %v3171, %v3251
      %v3271 = vadd.f32 %v3172, %v3256
      %v3272 = vadd.f32 %v3173, %v3259
      %v3273 = vadd.f32 %v3174, %v3264
      %v3274 = vld [vmem:[#allocation2 + $0x4] sm:$0xc]
      %v3275 = vld [vmem:[#allocation2 + $0x8] sm:$0xf]
      %v3276 = vld [vmem:[#allocation2 + $0xc] sm:$0xf]
      %v3277 = vld [vmem:[#allocation2 + $0x10] sm:$0xf]
      %v3278 = vld [vmem:[#allocation2 + $0x14] sm:$0xf]
      %v3279 = vld [vmem:[#allocation2 + $0x18] sm:$0x1]
      %v3280 = vld [vmem:[%s2160] sm:$0xf]
      %v3281 = vld [vmem:[%s2160 + $0x4] sm:$0xf]
      %v3282 = vld [vmem:[%s2160 + $0x8] sm:$0xf]
      %v3283 = vld [vmem:[%s2160 + $0xc] sm:$0xf]
      %v3290 = vunpack.c.l.b16 %v3274
      %v3291 = vunpack.c.l.b16 %v3275
      %v3292 = vunpack.c.l.b16 %v3276
      %v3293 = vunpack.c.l.b16 %v3277
      %v3294 = vunpack.c.l.b16 %v3278
      %v3295 = vunpack.c.l.b16 %v3279
      %v3296 = vpack.c.b16 %v3291, %v3290
      %v3297 = vpack.c.b16 %v3293, %v3292
      %v3298 = vpack.c.b16 %v3295, %v3294
      %v3300 = vshrl.u32 %v3296, 16
      %v3302 = vrot.slane %v3300, 2
      %v3303 = vshll.u32 %v3296, 16
      %v3305 = vrot.slane %v3303, 3
      %v3306 = vor.u32 %v3302, %v3305
      %v3308 = vshrl.u32 %v3297, 16
      %v3310 = vrot.slane %v3308, 2
      %v3311 = vshll.u32 %v3297, 16
      %v3313 = vrot.slane %v3311, 3
      %v3314 = vor.u32 %v3310, %v3313
      %v3315 = vsel %vm1095, %v3306, %v3314
      %v3317 = vshrl.u32 %v3298, 16
      %v3319 = vrot.slane %v3317, 2
      %v3320 = vshll.u32 %v3298, 16
      %v3322 = vrot.slane %v3320, 3
      %v3323 = vor.u32 %v3319, %v3322
      %v3324 = vsel %vm1095, %v3314, %v3323
      %v3329 = vunpack.c.l.b16 %v3280
      %v3330 = vunpack.c.l.b16 %v3281
      %v3331 = vunpack.c.l.b16 %v3282
      %v3332 = vunpack.c.l.b16 %v3283
      %v3333 = vpack.c.b16 %v3330, %v3329
      %v3334 = vpack.c.b16 %v3332, %v3331
      %v3338 = vsel %vm405, %v3315, 0
      %v3341 = vsel %vm405, %v3324, 0
      %v3344 = vsel %vm405, %v3323, 0
      %3346 = vmatprep.subr.bf16.mxu0 0
      %3347 = vmatpush1.bf16.msra.mxu0 0
      %3348 = vmatprep.subr.bf16.mxu0 0
      %3349 = vmatpush1.bf16.msra.mxu0 0
      %3350 = vmatprep.subr.bf16.mxu0 0
      %3351 = vmatpush1.bf16.msra.mxu0 0
      %3352 = vmatprep.subr.bf16.mxu0 0
      %3353 = vmatpush1.bf16.msra.mxu0 0
      %3354 = vmatprep.subr.bf16.mxu0 0
      %3355 = vmatpush1.bf16.msra.mxu0 0
      %3356 = vmatprep.subr.bf16.mxu0 0
      %3357 = vmatpush1.bf16.msra.mxu0 0
      %3358 = vmatprep.subr.bf16.mxu0 0
      %3359 = vmatpush1.bf16.msra.mxu0 %v3334
      %3360 = vmatprep.subr.bf16.mxu0 0
      %3361 = vmatpush1.bf16.msra.mxu0 %v3333
      %3362 = vmatprep.subr.bf16.mxu0 0
      %3363 = vmatpush2.bf16.msra.mxu0 0
      %3364 = vmatprep.subr.bf16.mxu0 0
      %3365 = vmatpush2.bf16.msra.mxu0 0
      %3366 = vmatprep.subr.bf16.mxu0 0
      %3367 = vmatpush2.bf16.msra.mxu0 0
      %3368 = vmatprep.subr.bf16.mxu0 0
      %3369 = vmatpush2.bf16.msra.mxu0 0
      %3370 = vmatprep.subr.bf16.mxu0 0
      %3371 = vmatpush2.bf16.msra.mxu0 0
      %3372 = vmatprep.subr.bf16.mxu0 0
      %3373 = vmatpush2.bf16.msra.mxu0 0
      %3374 = vmatprep.subr.bf16.mxu0 0
      %3375 = vmatpush2.bf16.msra.mxu0 0
      %3376 = vmatprep.subr.bf16.mxu0 0
      %3377 = vmatpush2.bf16.msra.mxu0 0
      %3378 = vmatprep.mubr.bf16.mxu0 0
      %3379 = vmatmul.mubr.bf16.gmra.mxu0 %v3338
      %v3380 = vpop.f32.mrf.mxu0
      %v3381 = vadd.f32 0.0, %v3380
      %v3382 = vpop.f32.mrf.mxu0
      %v3383 = vpop.f32.mrf.mxu0
      %v3384 = vadd.f32 0.0, %v3383
      %v3385 = vpop.f32.mrf.mxu0
      %3386 = vmatprep.mubr.bf16.mxu0 0
      %3387 = vmatmul.mubr.bf16.gmra.mxu0 %v3341
      %v3388 = vpop.f32.mrf.mxu0
      %v3389 = vadd.f32 0.0, %v3388
      %v3390 = vpop.f32.mrf.mxu0
      %v3391 = vpop.f32.mrf.mxu0
      %v3392 = vadd.f32 0.0, %v3391
      %v3393 = vpop.f32.mrf.mxu0
      %3394 = vmatprep.mubr.bf16.mxu0 0
      %3395 = vmatmul.mubr.bf16.gmra.mxu0 %v3344
      %v3396 = vpop.f32.mrf.mxu0
      %v3397 = vadd.f32 0.0, %v3396
      %v3398 = vpop.f32.mrf.mxu0
      %v3399 = vpop.f32.mrf.mxu0
      %v3400 = vpop.f32.mrf.mxu0
      %3401 = vdwg.mxu0
      %v3402 = vadd.f32 %v3269, %v3381
      %v3403 = vadd.f32 %v3270, %v3384
      %v3404 = vadd.f32 %v3271, %v3389
      %v3405 = vadd.f32 %v3272, %v3392
      %v3406 = vadd.f32 %v3273, %v3397
      %v3407 = vld [vmem:[#allocation2 + $0x4] sm:$0x8]
      %v3408 = vld [vmem:[%s2289] sm:$0xf]
      %v3409 = vld [vmem:[%s2289 + $0x4] sm:$0xf]
      %v3410 = vld [vmem:[%s2289 + $0x8] sm:$0xf]
      %v3411 = vld [vmem:[%s2289 + $0xc] sm:$0xf]
      %v3413 = vunpack.c.l.b16 %v3407
      %v3414 = vpack.c.b16 %v3291, %v3413
      %v3415 = vrot.slane %v3414, 3
      %v3416 = vrot.slane %v3297, 3
      %v3417 = vsel %vm672, %v3415, %v3416
      %v3418 = vrot.slane %v3298, 3
      %v3419 = vsel %vm672, %v3416, %v3418
      %v3424 = vunpack.c.l.b16 %v3408
      %v3425 = vunpack.c.l.b16 %v3409
      %v3426 = vunpack.c.l.b16 %v3410
      %v3427 = vunpack.c.l.b16 %v3411
      %v3428 = vpack.c.b16 %v3425, %v3424
      %v3429 = vpack.c.b16 %v3427, %v3426
      %v3433 = vsel %vm405, %v3417, 0
      %v3436 = vsel %vm405, %v3419, 0
      %v3439 = vsel %vm405, %v3418, 0
      %3441 = vmatprep.subr.bf16.mxu0 0
      %3442 = vmatpush1.bf16.msra.mxu0 0
      %3443 = vmatprep.subr.bf16.mxu0 0
      %3444 = vmatpush1.bf16.msra.mxu0 0
      %3445 = vmatprep.subr.bf16.mxu0 0
      %3446 = vmatpush1.bf16.msra.mxu0 0
      %3447 = vmatprep.subr.bf16.mxu0 0
      %3448 = vmatpush1.bf16.msra.mxu0 0
      %3449 = vmatprep.subr.bf16.mxu0 0
      %3450 = vmatpush1.bf16.msra.mxu0 0
      %3451 = vmatprep.subr.bf16.mxu0 0
      %3452 = vmatpush1.bf16.msra.mxu0 0
      %3453 = vmatprep.subr.bf16.mxu0 0
      %3454 = vmatpush1.bf16.msra.mxu0 %v3429
      %3455 = vmatprep.subr.bf16.mxu0 0
      %3456 = vmatpush1.bf16.msra.mxu0 %v3428
      %3457 = vmatprep.subr.bf16.mxu0 0
      %3458 = vmatpush2.bf16.msra.mxu0 0
      %3459 = vmatprep.subr.bf16.mxu0 0
      %3460 = vmatpush2.bf16.msra.mxu0 0
      %3461 = vmatprep.subr.bf16.mxu0 0
      %3462 = vmatpush2.bf16.msra.mxu0 0
      %3463 = vmatprep.subr.bf16.mxu0 0
      %3464 = vmatpush2.bf16.msra.mxu0 0
      %3465 = vmatprep.subr.bf16.mxu0 0
      %3466 = vmatpush2.bf16.msra.mxu0 0
      %3467 = vmatprep.subr.bf16.mxu0 0
      %3468 = vmatpush2.bf16.msra.mxu0 0
      %3469 = vmatprep.subr.bf16.mxu0 0
      %3470 = vmatpush2.bf16.msra.mxu0 0
      %3471 = vmatprep.subr.bf16.mxu0 0
      %3472 = vmatpush2.bf16.msra.mxu0 0
      %3473 = vmatprep.mubr.bf16.mxu0 0
      %3474 = vmatmul.mubr.bf16.gmra.mxu0 %v3433
      %v3475 = vpop.f32.mrf.mxu0
      %v3476 = vadd.f32 0.0, %v3475
      %v3477 = vpop.f32.mrf.mxu0
      %v3478 = vpop.f32.mrf.mxu0
      %v3479 = vadd.f32 0.0, %v3478
      %v3480 = vpop.f32.mrf.mxu0
      %3481 = vmatprep.mubr.bf16.mxu0 0
      %3482 = vmatmul.mubr.bf16.gmra.mxu0 %v3436
      %v3483 = vpop.f32.mrf.mxu0
      %v3484 = vadd.f32 0.0, %v3483
      %v3485 = vpop.f32.mrf.mxu0
      %v3486 = vpop.f32.mrf.mxu0
      %v3487 = vadd.f32 0.0, %v3486
      %v3488 = vpop.f32.mrf.mxu0
      %3489 = vmatprep.mubr.bf16.mxu0 0
      %3490 = vmatmul.mubr.bf16.gmra.mxu0 %v3439
      %v3491 = vpop.f32.mrf.mxu0
      %v3492 = vadd.f32 0.0, %v3491
      %v3493 = vpop.f32.mrf.mxu0
      %v3494 = vpop.f32.mrf.mxu0
      %v3495 = vpop.f32.mrf.mxu0
      %3496 = vdwg.mxu0
      %v3497 = vadd.f32 %v3402, %v3476
      %v3498 = vadd.f32 %v3403, %v3479
      %v3499 = vadd.f32 %v3404, %v3484
      %v3500 = vadd.f32 %v3405, %v3487
      %v3501 = vadd.f32 %v3406, %v3492
      %v3502 = vmax.f32 %v3497, 0.0
      %v3503 = vmax.f32 %v3498, 0.0
      %v3504 = vmax.f32 %v3499, 0.0
      %v3505 = vmax.f32 %v3500, 0.0
      %v3506 = vmax.f32 %v3501, 0.0
      %v3507 = vpack.c.bf16 %v3503, %v3502
      %v3508 = vpack.c.bf16 %v3505, %v3504
      %v3509 = vpack.c.bf16 %v3506, %v3506
      %v3510 = vld [vmem:[%s5] sm:$0xf]
      %v3512 = vsel %vm2393, %v3507, 0
      %v3515 = vsel %vm2393, %v3508, 0
      %v3518 = vsel %vm2393, %v3509, 0
      %v3521 = vsel %vm2403, %v3510, 0
      %3523 = vmatprep.subr.bf16.mxu0 0
      %3524 = vmatpush1.bf16.msra.mxu0 0
      %3525 = vmatprep.subr.bf16.mxu0 0
      %3526 = vmatpush1.bf16.msra.mxu0 0
      %3527 = vmatprep.subr.bf16.mxu0 0
      %3528 = vmatpush1.bf16.msra.mxu0 0
      %3529 = vmatprep.subr.bf16.mxu0 0
      %3530 = vmatpush1.bf16.msra.mxu0 0
      %3531 = vmatprep.subr.bf16.mxu0 0
      %3532 = vmatpush1.bf16.msra.mxu0 0
      %3533 = vmatprep.subr.bf16.mxu0 0
      %3534 = vmatpush1.bf16.msra.mxu0 0
      %3535 = vmatprep.subr.bf16.mxu0 0
      %3536 = vmatpush1.bf16.msra.mxu0 0
      %3537 = vmatprep.subr.bf16.mxu0 0
      %3538 = vmatpush1.bf16.msra.mxu0 %v3521
      %3539 = vmatprep.subr.bf16.mxu0 0
      %3540 = vmatpush2.bf16.msra.mxu0 0
      %3541 = vmatprep.subr.bf16.mxu0 0
      %3542 = vmatpush2.bf16.msra.mxu0 0
      %3543 = vmatprep.subr.bf16.mxu0 0
      %3544 = vmatpush2.bf16.msra.mxu0 0
      %3545 = vmatprep.subr.bf16.mxu0 0
      %3546 = vmatpush2.bf16.msra.mxu0 0
      %3547 = vmatprep.subr.bf16.mxu0 0
      %3548 = vmatpush2.bf16.msra.mxu0 0
      %3549 = vmatprep.subr.bf16.mxu0 0
      %3550 = vmatpush2.bf16.msra.mxu0 0
      %3551 = vmatprep.subr.bf16.mxu0 0
      %3552 = vmatpush2.bf16.msra.mxu0 0
      %3553 = vmatprep.subr.bf16.mxu0 0
      %3554 = vmatpush2.bf16.msra.mxu0 0
      %3555 = vmatprep.mubr.bf16.mxu0 0
      %3556 = vmatmul.mubr.bf16.gmra.mxu0 %v3512
      %v3557 = vpop.f32.mrf.mxu0
      %v3558 = vadd.f32 0.0, %v3557
      %v3559 = vpop.f32.mrf.mxu0
      %v3560 = vpop.f32.mrf.mxu0
      %v3561 = vadd.f32 0.0, %v3560
      %v3562 = vpop.f32.mrf.mxu0
      %3563 = vmatprep.mubr.bf16.mxu0 0
      %3564 = vmatmul.mubr.bf16.gmra.mxu0 %v3515
      %v3565 = vpop.f32.mrf.mxu0
      %v3566 = vadd.f32 0.0, %v3565
      %v3567 = vpop.f32.mrf.mxu0
      %v3568 = vpop.f32.mrf.mxu0
      %v3569 = vadd.f32 0.0, %v3568
      %v3570 = vpop.f32.mrf.mxu0
      %3571 = vmatprep.mubr.bf16.mxu0 0
      %3572 = vmatmul.mubr.bf16.gmra.mxu0 %v3518
      %v3573 = vpop.f32.mrf.mxu0
      %v3574 = vadd.f32 0.0, %v3573
      %v3575 = vpop.f32.mrf.mxu0
      %v3576 = vpop.f32.mrf.mxu0
      %v3577 = vpop.f32.mrf.mxu0
      %3578 = vdwg.mxu0
      %v3579 = vadd.f32 %v2463, %v3558
      %v3580 = vadd.f32 %v2464, %v3561
      %v3581 = vadd.f32 %v2465, %v3566
      %v3582 = vadd.f32 %v2466, %v3569
      %v3583 = vadd.f32 %v2467, %v3574
      %v3584 = vmax.f32 %v3579, 0.0
      %v3585 = vmax.f32 %v3580, 0.0
      %v3586 = vmax.f32 %v3581, 0.0
      %v3587 = vmax.f32 %v3582, 0.0
      %v3588 = vmax.f32 %v3583, 0.0
      %3589 = vst.msk [vmem:[%s251] sm:$0xff] %vm405, %v3584
      %3590 = vst.msk [vmem:[%s251 + $0x8] sm:$0xff] %vm405, %v3585
      %3591 = vst.msk [vmem:[%s251 + $0x10] sm:$0xff] %vm405, %v3586
      %3592 = vst.msk [vmem:[%s251 + $0x18] sm:$0xff] %vm405, %v3587
      %3593 = vst.msk [vmem:[%s251 + $0x20] sm:$0xf] %vm253, %v3588
      %p3594 = scmp.lt.s32.totalorder %s17, 1
      %s3595 = scalar_select %p3594, %s17, 1
      %s3596 = smul.addr %s3595, 5
      %s3597 = smul.addr %s3596, 8
      %s3598 = scalar_lea.vmem %s6, %s3597
      // Predicated region
      $region45: #{encoder_forward.5} parent=43 // pred_check
        %p3599 = pneg %p166
      $region46: #{encoder_forward.5} parent=43 // pred_check_branch
        %3601 = sbr.rel (%p3599) target = $region48
      $region47: #{encoder_forward.5} parent=43 // pred_region
        _
      $region48: #{encoder_forward.5} parent=43 // pred_fallthru
        _
    $region44: #{encoder_forward.5} parent=5 // pred_fallthru
      _
    %p3602 = scmp.le.s32.totalorder 2, %s12
    // Predicated region
    $region49: #{encoder_forward.5} parent=5 // pred_check
      %p3603 = pneg %p3602
    $region50: #{encoder_forward.5} parent=5 // pred_check_branch
      %3605 = sbr.rel (%p3603) target = $region52
    $region51: #{encoder_forward.5} parent=5 // pred_region
      %s3606 = ssub.s32 %s12, 2
      // Predicated region
      $region53: #{encoder_forward.5} parent=51 // pred_check
        %p3607 = pneg %p172
      $region54: #{encoder_forward.5} parent=51 // pred_check_branch
        %3609 = sbr.rel (%p3607) target = $region56
      $region55: #{encoder_forward.5} parent=51 // pred_region
        %p3610 = scmp.lt.s32.totalorder %s18, 1
        %s3611 = scalar_select %p3610, %s18, 1
        %s3612 = smul.addr %s3611, 5
        %s3613 = smul.addr %s3612, 8
        %s3614 = scalar_lea.vmem %s6, %s3613
      $region56: #{encoder_forward.5} parent=51 // pred_fallthru
        _
    $region52: #{encoder_forward.5} parent=5 // pred_fallthru
      _
  $region6: #{encoder_forward.5} parent=0 // loop_footer
    %s16 = sadd.s32 1, %s12
  $region7: #{encoder_forward.5} parent=0 // loop_footer_branch
    %11 = sbr.rel target = $region3
  $region8: #{encoder_forward.5} parent=0 // loop_exit
    _

</llo_original>
